<compile_context>
chip_gen: v6e
topology: v6e:2x2x1
jax: 0.10.0
libtpu: 0.0.40
codegen_flags: <defaults>
</compile_context>

<pallas_src>
import numpy as np
import jax
import jax.numpy as jnp
from jax import lax
from jax.experimental import pallas as pl
from jax.experimental.pallas import tpu as pltpu

NUM_HEADING_BIN = 12
BOX_OUT = 3 + NUM_HEADING_BIN * 2 + 1 * 3      # 30
OUT_LANES = 128                                # lane-dense packed output width


# ---------------------------------------------------------------------------
# shared math helpers (used by BOTH the Pallas kernel and the JAX reference so
# the two computations share the exact same definition / dtype behaviour)
# ---------------------------------------------------------------------------
def _relu(x):
    return jnp.maximum(x, 0.0)


def _mm(a, w):
    # bf16 MXU operands, f32 accumulation.
    return jnp.dot(a.astype(w.dtype), w, preferred_element_type=jnp.float32)


def _b(layer):
    return layer[1].astype(jnp.float32)


def _conv_k3(x, w, b):
    # K=3 "conv1" as 3 VPU broadcast-FMAs instead of a 3-deep MXU contraction.
    wf = w.astype(jnp.float32)
    return _relu(x[:, 0:1] * wf[0:1, :] + x[:, 1:2] * wf[1:2, :]
                 + x[:, 2:3] * wf[2:3, :] + b.astype(jnp.float32))


def _conv_chain(x, layers):
    # x: (M, 3) f32; layers[0] has K=3, the rest are MXU matmuls with f32 accum.
    h = _conv_k3(x, *layers[0])
    for (w, bias) in layers[1:]:
        h = _relu(_mm(h, w) + bias.astype(jnp.float32))
    return h


def _stn_head(feat, hot, p):
    # fc1 over cat([feat, one_hot]) implemented as split matmuls.
    g = _relu(_mm(feat, p["fa1"][0]) + _mm(hot, p["fh1"][0]) + _b(p["fa1"]))
    g = _relu(_mm(g, p["fc2"][0]) + _b(p["fc2"]))
    return _mm(g, p["fc3"][0]) + _b(p["fc3"])                 # center_delta (., 3)


def _est_head(gfeat, hot, cen, p):
    hot_emb = _relu(_mm(hot, p["cls"][0]) + _b(p["cls"]))
    cen_emb = _relu(_mm(cen, p["dist"][0]) + _b(p["dist"]))
    # fc1 over cat([gfeat, hot_emb, cen_emb]) as split matmuls.
    g = _relu(_mm(gfeat, p["fa"][0]) + _mm(hot_emb, p["fh"][0])
              + _mm(cen_emb, p["fcn"][0]) + _b(p["fa"]))
    g = _relu(_mm(g, p["fc2"][0]) + _b(p["fc2"]))
    g = _relu(_mm(g, p["fc3"][0]) + _b(p["fc3"]))
    return _mm(g, p["fc4"][0]) + _b(p["fc4"])                 # box_pred (., 30)


def _unpack(slab, meta):
    # Works both on a host jnp array and on a VMEM Ref (static slices).
    out = {}
    for name, (off, k, n) in meta.items():
        out[name] = (slab[off:off + k, :n], slab[off + k:off + k + 1, :n])
    return out


# ---------------------------------------------------------------------------
# fused Pallas kernel (one program per batch block of BB elements)
# ---------------------------------------------------------------------------
def _make_kernel(BB, n_pts, PT, stn_meta, est_meta):
    n_chunks = n_pts // PT

    def chunked_feat(pts_ref, center, layers):
        """Global max-pool of the conv chain, chunked over the point dimension."""
        c_out = layers[-1][0].shape[1]

        def chunk_feat(start):
            chunk = pts_ref[:, pl.ds(start, PT), :]                  # (BB, PT, 3)
            x = (chunk - center[:, None, :]).reshape(BB * PT, 3)     # fold batch into M
            h = _conv_chain(x, layers)                               # (BB*PT, C)
            return jnp.max(h.reshape(BB, PT, c_out), axis=1)         # (BB, C)

        if n_chunks == 1:
            return chunk_feat(0)

        def body(c, running):
            start = pl.multiple_of(c * PT, PT)
            return jnp.maximum(running, chunk_feat(start))

        init = jnp.full((BB, c_out), -jnp.inf, jnp.float32)
        return lax.fori_loop(0, n_chunks, body, init, unroll=n_chunks <= 8)

    def kernel(pts_ref, hot_ref, stn_ref, est_ref, out_ref):
        hot = hot_ref[...]                                           # (BB, 3)
        # TODO(synk): point_cloud_process not provided; assumed mean-centering.
        mean = jnp.mean(pts_ref[...], axis=1)                        # (BB, 3)

        # ---------------- STNxyz ----------------
        stn = _unpack(stn_ref, stn_meta)
        feat = chunked_feat(pts_ref, mean, [stn["c1"], stn["c2"], stn["c3"]])
        delta = _stn_head(feat, hot, stn)                            # (BB, 3)
        stage1 = delta + mean                                        # stage1_center

        # ------------- PointNetEstimation -------------
        # object_pts_xyz_new = (pts - mean) - delta = pts - stage1_center
        est = _unpack(est_ref, est_meta)
        gfeat = chunked_feat(
            pts_ref, stage1,
            [est["c1"], est["c2"], est["c3"], est["c4"], est["c5"]])
        box = _est_head(gfeat, hot, stage1, est)                     # (BB, 30)

        # single packed lane-dense output block -> one full-width writeback DMA
        out_ref[...] = jnp.zeros((BB, OUT_LANES), jnp.float32)
        out_ref[:, :BOX_OUT] = box
        out_ref[:, BOX_OUT:BOX_OUT + 3] = stage1

    return kernel


def _pick_bb(bs):
    return 2 if bs % 2 == 0 else 1


def _pick_pt(n_pts, BB):
    # Aim for BB*PT == 256 rows per conv-chain matmul (fills v6e/v7x MXU).
    target = max(8, 256 // BB)
    if n_pts <= target:
        return n_pts
    for pt in range(target, 7, -1):
        if n_pts % pt == 0 and pt % 8 == 0:
            return pt
    return n_pts


def amodal3d_forward(features, one_hot, params):
    # features: (bs, num_point, 6).  PyTorch permutes to NCW and takes :3 channels;
    # in our channels-last layout that is simply features[:, :, :3].
    pts = features[:, :, :3].astype(jnp.float32)
    one_hot = one_hot.astype(jnp.float32)
    bs, n_pts, _ = pts.shape

    BB = _pick_bb(bs)
    PT = _pick_pt(n_pts, BB)
    kernel = _make_kernel(BB, n_pts, PT, params["stn_meta"], params["est_meta"])

    stn_slab, est_slab = params["stn_slab"], params["est_slab"]
    out = pl.pallas_call(
        kernel,
        grid=(bs // BB,),
        in_specs=[
            pl.BlockSpec((BB, n_pts, 3), lambda i: (i, 0, 0)),
            pl.BlockSpec((BB, 3), lambda i: (i, 0)),
            pl.BlockSpec(stn_slab.shape, lambda i: (0, 0)),   # grid-invariant: DMA'd once
            pl.BlockSpec(est_slab.shape, lambda i: (0, 0)),   # grid-invariant: DMA'd once
        ],
        out_specs=pl.BlockSpec((BB, OUT_LANES), lambda i: (i, 0)),
        out_shape=jax.ShapeDtypeStruct((bs, OUT_LANES), jnp.float32),
        compiler_params=pltpu.CompilerParams(
            dimension_semantics=("parallel",),   # v7x: shard batch blocks over 2 TCs
        ),
    )(pts, one_hot, stn_slab, est_slab)

    box_pred = out[:, :BOX_OUT]
    stage1_center = out[:, BOX_OUT:BOX_OUT + 3]
    # TODO(synk): parse_output_to_tensors / calculate_corner / PointNetLoss not
    # provided in the source module; return raw box_pred + stage1_center.
    return box_pred, stage1_center


# ---------------------------------------------------------------------------
# parameter construction: PyTorch-style init, BN folding, lane-dense bf16 slabs
# ---------------------------------------------------------------------------
def _make_linear(key, out_d, in_d):
    kw, kb = jax.random.split(key)
    bound = 1.0 / np.sqrt(in_d)
    w = jax.random.uniform(kw, (out_d, in_d), jnp.float32, -bound, bound)
    b = jax.random.uniform(kb, (out_d,), jnp.float32, -bound, bound)
    return w, b


def _make_bn(key, d):
    kg, kb, km, kv = jax.random.split(key, 4)
    gamma = jax.random.uniform(kg, (d,), jnp.float32, 0.5, 1.5)
    beta = jax.random.uniform(kb, (d,), jnp.float32, -0.1, 0.1)
    mean = jax.random.uniform(km, (d,), jnp.float32, -0.1, 0.1)
    var = jax.random.uniform(kv, (d,), jnp.float32, 0.5, 1.5)
    return gamma, beta, mean, var


def _fold_bn(w, b, bn, eps=1e-5):
    # eval-mode BN folded into the preceding conv/linear; returns (in,out) W for x @ W.
    gamma, beta, mean, var = bn
    scale = gamma / jnp.sqrt(var + eps)
    return (w * scale[:, None]).T, scale * (b - mean) + beta


def _fold_plain(w, b):
    return w.T, b


def _pack(layers, lane_width, dtype=jnp.bfloat16):
    """Pack [(name, (W(in,out), b(out))), ...] into one lane-dense slab.
    Each segment = W rows followed by one bias row, padded to 16-row alignment."""
    segs, meta, row = [], {}, 0
    for name, (w, bias) in layers:
        w = np.asarray(w, np.float32)
        bias = np.asarray(bias, np.float32).reshape(-1)
        k, n = w.shape
        rows = ((k + 1 + 15) // 16) * 16
        seg = np.zeros((rows, lane_width), np.float32)
        seg[:k, :n] = w
        seg[k, :n] = bias
        meta[name] = (row, k, n)
        segs.append(seg)
        row += rows
    slab = jnp.asarray(np.concatenate(segs, axis=0)).astype(dtype)
    return slab, meta


def init_params(key):
    keys = jax.random.split(key, 32)
    it = iter(keys)
    nk = lambda: next(it)

    # ---------------- STNxyz ----------------
    c1, bn1 = _make_linear(nk(), 128, 3), _make_bn(nk(), 128)
    c2, bn2 = _make_linear(nk(), 128, 128), _make_bn(nk(), 128)
    c3, bn3 = _make_linear(nk(), 256, 128), _make_bn(nk(), 256)
    fc1, fcbn1 = _make_linear(nk(), 256, 256 + 3), _make_bn(nk(), 256)
    fc2, fcbn2 = _make_linear(nk(), 128, 256), _make_bn(nk(), 128)
    fc3 = (jnp.zeros((3, 128), jnp.float32), jnp.zeros((3,), jnp.float32))  # init.zeros_

    f1w, f1b = _fold_bn(*fc1, fcbn1)
    stn_layers = [
        ("c1", _fold_bn(*c1, bn1)),
        ("c2", _fold_bn(*c2, bn2)),
        ("c3", _fold_bn(*c3, bn3)),
        ("fa1", (f1w[:256], f1b)),                                   # fc1: global-feat part
        ("fh1", (f1w[256:], jnp.zeros((256,), jnp.float32))),        # fc1: one-hot part
        ("fc2", _fold_bn(*fc2, fcbn2)),
        ("fc3", _fold_plain(*fc3)),
    ]
    stn_slab, stn_meta = _pack(stn_layers, 256)

    # ------------- PointNetEstimation -------------
    e1, ebn1 = _make_linear(nk(), 64, 3), _make_bn(nk(), 64)
    e2, ebn2 = _make_linear(nk(), 128, 64), _make_bn(nk(), 128)
    e3, ebn3 = _make_linear(nk(), 128, 128), _make_bn(nk(), 128)
    e4, ebn4 = _make_linear(nk(), 256, 128), _make_bn(nk(), 256)
    e5, ebn5 = _make_linear(nk(), 512, 256), _make_bn(nk(), 512)
    class_fc = _make_linear(nk(), 32, 3)
    dist_fc, fcbn_dist = _make_linear(nk(), 32, 3), _make_bn(nk(), 32)
    efc1, efcbn1 = _make_linear(nk(), 512, 512 + 32 + 32), _make_bn(nk(), 512)
    efc2, efcbn2 = _make_linear(nk(), 256, 512), _make_bn(nk(), 256)
    efc3, efcbn3 = _make_linear(nk(), 64, 256), _make_bn(nk(), 64)
    efc4 = _make_linear(nk(), BOX_OUT, 64)

    ef1w, ef1b = _fold_bn(*efc1, efcbn1)
    zeros512 = jnp.zeros((512,), jnp.float32)
    est_layers = [
        ("c1", _fold_bn(*e1, ebn1)),
        ("c2", _fold_bn(*e2, ebn2)),
        ("c3", _fold_bn(*e3, ebn3)),
        ("c4", _fold_bn(*e4, ebn4)),
        ("c5", _fold_bn(*e5, ebn5)),
        ("cls", _fold_plain(*class_fc)),
        ("dist", _fold_bn(*dist_fc, fcbn_dist)),
        ("fa", (ef1w[:512], ef1b)),                                  # fc1: global-feat part
        ("fh", (ef1w[512:544], zeros512)),                           # fc1: one-hot-embed part
        ("fcn", (ef1w[544:576], zeros512)),                          # fc1: center-embed part
        ("fc2", _fold_bn(*efc2, efcbn2)),
        ("fc3", _fold_bn(*efc3, efcbn3)),
        ("fc4", _fold_plain(*efc4)),
    ]
    est_slab, est_meta = _pack(est_layers, 512)

    return dict(stn_slab=stn_slab, stn_meta=stn_meta,
                est_slab=est_slab, est_meta=est_meta)


# ---------------------------------------------------------------------------
# pure-JAX reference (same packed bf16 weights, same math helpers)
# ---------------------------------------------------------------------------
def reference_forward(features, one_hot, params):
    pts = features[:, :, :3].astype(jnp.float32)
    hot = one_hot.astype(jnp.float32)
    bs, n_pts, _ = pts.shape
    stn = _unpack(params["stn_slab"], params["stn_meta"])
    est = _unpack(params["est_slab"], params["est_meta"])

    mean = pts.mean(axis=1)                                          # (bs, 3)
    x = (pts - mean[:, None, :]).reshape(bs * n_pts, 3)
    h = _conv_chain(x, [stn["c1"], stn["c2"], stn["c3"]])
    feat = h.reshape(bs, n_pts, -1).max(axis=1)
    delta = _stn_head(feat, hot, stn)
    stage1 = delta + mean

    x = (pts - stage1[:, None, :]).reshape(bs * n_pts, 3)
    h = _conv_chain(x, [est["c1"], est["c2"], est["c3"], est["c4"], est["c5"]])
    gfeat = h.reshape(bs, n_pts, -1).max(axis=1)
    box = _est_head(gfeat, hot, stage1, est)
    return box, stage1


# ---------------------------------------------------------------------------
if __name__ == "__main__":
    key = jax.random.PRNGKey(0)
    kf, kh, kp = jax.random.split(key, 3)

    bs, n_pts = 2, 128
    features = jax.random.normal(kf, (bs, n_pts, 6), jnp.float32)
    cls_idx = jax.random.randint(kh, (bs,), 0, 3)
    one_hot = jax.nn.one_hot(cls_idx, 3, dtype=jnp.float32)

    params = init_params(kp)

    box_pred, stage1_center = amodal3d_forward(features, one_hot, params)
    jax.block_until_ready((box_pred, stage1_center))

    ref_box, ref_center = reference_forward(features, one_hot, params)
    assert box_pred.shape == (bs, BOX_OUT) and stage1_center.shape == (bs, 3)
    assert np.allclose(np.asarray(box_pred), np.asarray(ref_box), rtol=1e-2, atol=1e-2)
    assert np.allclose(np.asarray(stage1_center), np.asarray(ref_center), rtol=1e-2, atol=1e-2)

    print("KERNEL_OK")
</pallas_src>

<mosaic_0001>
module attributes {stable_mosaic.version = 11 : i64} {
  func.func @kernel(%arg0: i32, %arg1: memref<2x128x3xf32, #tpu.memory_space<vmem>>, %arg2: memref<2x3xf32, #tpu.memory_space<vmem>>, %arg3: memref<1008x256xbf16, #tpu.memory_space<vmem>>, %arg4: memref<2192x512xbf16, #tpu.memory_space<vmem>>, %arg5: memref<2x128xf32, #tpu.memory_space<vmem>>) attributes {dimension_semantics = [#tpu.dimension_semantics<parallel>], iteration_bounds = array<i64: 1>, scalar_prefetch = 0 : i64, scratch_operands = 0 : i64, tpu.core_type = #tpu.core_type<tc>, window_params = [{transform_indices = @transform_0, window_bounds = array<i64: 2, 128, 3>}, {transform_indices = @transform_1, window_bounds = array<i64: 2, 3>}, {pipeline_mode = #tpu.pipeline_mode<synchronous>, transform_indices = @transform_2, window_bounds = array<i64: 1008, 256>}, {pipeline_mode = #tpu.pipeline_mode<synchronous>, transform_indices = @transform_3, window_bounds = array<i64: 2192, 512>}, {transform_indices = @transform_4, window_bounds = array<i64: 2, 128>}]} {
    %c0 = arith.constant 0 : index
    %c0_0 = arith.constant 0 : index
    %0 = vector.load %arg2[%c0, %c0_0] : memref<2x3xf32, #tpu.memory_space<vmem>>, vector<2x3xf32>
    %c0_1 = arith.constant 0 : index
    %c0_2 = arith.constant 0 : index
    %c0_3 = arith.constant 0 : index
    %1 = vector.load %arg1[%c0_1, %c0_2, %c0_3] : memref<2x128x3xf32, #tpu.memory_space<vmem>>, vector<2x128x3xf32>
    %cst = arith.constant dense<0.000000e+00> : vector<2x3xf32>
    %2 = vector.multi_reduction <add>, %1, %cst [1] : vector<2x128x3xf32> to vector<2x3xf32>
    %cst_4 = arith.constant 1.280000e+02 : f32
    %3 = vector.broadcast %cst_4 : f32 to vector<2x3xf32>
    %4 = arith.divf %2, %3 : vector<2x3xf32>
    %c0_5 = arith.constant 0 : index
    %c0_6 = arith.constant 0 : index
    %5 = vector.load %arg3[%c0_5, %c0_6] : memref<1008x256xbf16, #tpu.memory_space<vmem>>, vector<3x128xbf16>
    %c3 = arith.constant 3 : index
    %c0_7 = arith.constant 0 : index
    %6 = vector.load %arg3[%c3, %c0_7] : memref<1008x256xbf16, #tpu.memory_space<vmem>>, vector<1x128xbf16>
    %c16 = arith.constant 16 : index
    %c0_8 = arith.constant 0 : index
    %7 = vector.load %arg3[%c16, %c0_8] : memref<1008x256xbf16, #tpu.memory_space<vmem>>, vector<128x128xbf16>
    %c144 = arith.constant 144 : index
    %c0_9 = arith.constant 0 : index
    %8 = vector.load %arg3[%c144, %c0_9] : memref<1008x256xbf16, #tpu.memory_space<vmem>>, vector<1x128xbf16>
    %c160 = arith.constant 160 : index
    %c0_10 = arith.constant 0 : index
    %9 = vector.load %arg3[%c160, %c0_10] : memref<1008x256xbf16, #tpu.memory_space<vmem>>, vector<128x256xbf16>
    %c288 = arith.constant 288 : index
    %c0_11 = arith.constant 0 : index
    %10 = vector.load %arg3[%c288, %c0_11] : memref<1008x256xbf16, #tpu.memory_space<vmem>>, vector<1x256xbf16>
    %c304 = arith.constant 304 : index
    %c0_12 = arith.constant 0 : index
    %11 = vector.load %arg3[%c304, %c0_12] : memref<1008x256xbf16, #tpu.memory_space<vmem>>, vector<256x256xbf16>
    %c560 = arith.constant 560 : index
    %c0_13 = arith.constant 0 : index
    %12 = vector.load %arg3[%c560, %c0_13] : memref<1008x256xbf16, #tpu.memory_space<vmem>>, vector<1x256xbf16>
    %c576 = arith.constant 576 : index
    %c0_14 = arith.constant 0 : index
    %13 = vector.load %arg3[%c576, %c0_14] : memref<1008x256xbf16, #tpu.memory_space<vmem>>, vector<3x256xbf16>
    %c592 = arith.constant 592 : index
    %c0_15 = arith.constant 0 : index
    %14 = vector.load %arg3[%c592, %c0_15] : memref<1008x256xbf16, #tpu.memory_space<vmem>>, vector<256x128xbf16>
    %c848 = arith.constant 848 : index
    %c0_16 = arith.constant 0 : index
    %15 = vector.load %arg3[%c848, %c0_16] : memref<1008x256xbf16, #tpu.memory_space<vmem>>, vector<1x128xbf16>
    %c864 = arith.constant 864 : index
    %c0_17 = arith.constant 0 : index
    %16 = vector.load %arg3[%c864, %c0_17] : memref<1008x256xbf16, #tpu.memory_space<vmem>>, vector<128x3xbf16>
    %c992 = arith.constant 992 : index
    %c0_18 = arith.constant 0 : index
    %17 = vector.load %arg3[%c992, %c0_18] : memref<1008x256xbf16, #tpu.memory_space<vmem>>, vector<1x3xbf16>
    %c0_19 = arith.constant 0 : index
    %c0_20 = arith.constant 0 : index
    %c0_21 = arith.constant 0 : index
    %18 = vector.load %arg1[%c0_19, %c0_20, %c0_21] : memref<2x128x3xf32, #tpu.memory_space<vmem>>, vector<2x128x3xf32>
    %19 = vector.shape_cast %4 : vector<2x3xf32> to vector<2x1x3xf32>
    %20 = vector.broadcast %19 : vector<2x1x3xf32> to vector<2x128x3xf32>
    %21 = arith.subf %18, %20 : vector<2x128x3xf32>
    %22 = vector.shape_cast %21 : vector<2x128x3xf32> to vector<256x3xf32>
    %23 = arith.extf %5 : vector<3x128xbf16> to vector<3x128xf32>
    %24 = vector.extract_strided_slice %22 {offsets = [0, 0], sizes = [256, 1], strides = [1, 1]} : vector<256x3xf32> to vector<256x1xf32>
    %25 = vector.extract_strided_slice %23 {offsets = [0, 0], sizes = [1, 128], strides = [1, 1]} : vector<3x128xf32> to vector<1x128xf32>
    %26 = vector.broadcast %24 : vector<256x1xf32> to vector<256x128xf32>
    %27 = vector.broadcast %25 : vector<1x128xf32> to vector<256x128xf32>
    %28 = arith.mulf %26, %27 : vector<256x128xf32>
    %29 = vector.extract_strided_slice %22 {offsets = [0, 1], sizes = [256, 1], strides = [1, 1]} : vector<256x3xf32> to vector<256x1xf32>
    %30 = vector.extract_strided_slice %23 {offsets = [1, 0], sizes = [1, 128], strides = [1, 1]} : vector<3x128xf32> to vector<1x128xf32>
    %31 = vector.broadcast %29 : vector<256x1xf32> to vector<256x128xf32>
    %32 = vector.broadcast %30 : vector<1x128xf32> to vector<256x128xf32>
    %33 = arith.mulf %31, %32 : vector<256x128xf32>
    %34 = arith.addf %28, %33 : vector<256x128xf32>
    %35 = vector.extract_strided_slice %22 {offsets = [0, 2], sizes = [256, 1], strides = [1, 1]} : vector<256x3xf32> to vector<256x1xf32>
    %36 = vector.extract_strided_slice %23 {offsets = [2, 0], sizes = [1, 128], strides = [1, 1]} : vector<3x128xf32> to vector<1x128xf32>
    %37 = vector.broadcast %35 : vector<256x1xf32> to vector<256x128xf32>
    %38 = vector.broadcast %36 : vector<1x128xf32> to vector<256x128xf32>
    %39 = arith.mulf %37, %38 : vector<256x128xf32>
    %40 = arith.addf %34, %39 : vector<256x128xf32>
    %41 = arith.extf %6 : vector<1x128xbf16> to vector<1x128xf32>
    %42 = vector.broadcast %41 : vector<1x128xf32> to vector<256x128xf32>
    %43 = arith.addf %40, %42 : vector<256x128xf32>
    %cst_22 = arith.constant 0.000000e+00 : f32
    %44 = vector.broadcast %cst_22 : f32 to vector<256x128xf32>
    %45 = arith.maximumf %43, %44 : vector<256x128xf32>
    %46 = arith.truncf %45 : vector<256x128xf32> to vector<256x128xbf16>
    %cst_23 = arith.constant dense<0.000000e+00> : vector<256x128xf32>
    %47 = tpu.matmul %46, %7, %cst_23 {dimension_numbers = #tpu.dot_dimension_numbers<[1], [0], [0], [1], [0, 0, 1, 1], [], []>} : vector<256x128xbf16>, vector<128x128xbf16>, vector<256x128xf32> -> vector<256x128xf32>
    %48 = arith.extf %8 : vector<1x128xbf16> to vector<1x128xf32>
    %49 = vector.broadcast %48 : vector<1x128xf32> to vector<256x128xf32>
    %50 = arith.addf %47, %49 : vector<256x128xf32>
    %cst_24 = arith.constant 0.000000e+00 : f32
    %51 = vector.broadcast %cst_24 : f32 to vector<256x128xf32>
    %52 = arith.maximumf %50, %51 : vector<256x128xf32>
    %53 = arith.truncf %52 : vector<256x128xf32> to vector<256x128xbf16>
    %cst_25 = arith.constant dense<0.000000e+00> : vector<256x256xf32>
    %54 = tpu.matmul %53, %9, %cst_25 {dimension_numbers = #tpu.dot_dimension_numbers<[1], [0], [0], [1], [0, 0, 1, 1], [], []>} : vector<256x128xbf16>, vector<128x256xbf16>, vector<256x256xf32> -> vector<256x256xf32>
    %55 = arith.extf %10 : vector<1x256xbf16> to vector<1x256xf32>
    %56 = vector.broadcast %55 : vector<1x256xf32> to vector<256x256xf32>
    %57 = arith.addf %54, %56 : vector<256x256xf32>
    %cst_26 = arith.constant 0.000000e+00 : f32
    %58 = vector.broadcast %cst_26 : f32 to vector<256x256xf32>
    %59 = arith.maximumf %57, %58 : vector<256x256xf32>
    %60 = vector.shape_cast %59 : vector<256x256xf32> to vector<2x128x256xf32>
    %cst_27 = arith.constant dense<0xFF800000> : vector<2x256xf32>
    %61 = vector.multi_reduction <maximumf>, %60, %cst_27 [1] : vector<2x128x256xf32> to vector<2x256xf32>
    %62 = arith.truncf %61 : vector<2x256xf32> to vector<2x256xbf16>
    %cst_28 = arith.constant dense<0.000000e+00> : vector<2x256xf32>
    %63 = tpu.matmul %62, %11, %cst_28 {dimension_numbers = #tpu.dot_dimension_numbers<[1], [0], [0], [1], [0, 0, 1, 1], [], []>} : vector<2x256xbf16>, vector<256x256xbf16>, vector<2x256xf32> -> vector<2x256xf32>
    %64 = arith.truncf %0 : vector<2x3xf32> to vector<2x3xbf16>
    %cst_29 = arith.constant dense<0.000000e+00> : vector<2x256xf32>
    %65 = tpu.matmul %64, %13, %cst_29 {dimension_numbers = #tpu.dot_dimension_numbers<[1], [0], [0], [1], [0, 0, 1, 1], [], []>} : vector<2x3xbf16>, vector<3x256xbf16>, vector<2x256xf32> -> vector<2x256xf32>
    %66 = arith.addf %63, %65 : vector<2x256xf32>
    %67 = arith.extf %12 : vector<1x256xbf16> to vector<1x256xf32>
    %68 = vector.broadcast %67 : vector<1x256xf32> to vector<2x256xf32>
    %69 = arith.addf %66, %68 : vector<2x256xf32>
    %cst_30 = arith.constant 0.000000e+00 : f32
    %70 = vector.broadcast %cst_30 : f32 to vector<2x256xf32>
    %71 = arith.maximumf %69, %70 : vector<2x256xf32>
    %72 = arith.truncf %71 : vector<2x256xf32> to vector<2x256xbf16>
    %cst_31 = arith.constant dense<0.000000e+00> : vector<2x128xf32>
    %73 = tpu.matmul %72, %14, %cst_31 {dimension_numbers = #tpu.dot_dimension_numbers<[1], [0], [0], [1], [0, 0, 1, 1], [], []>} : vector<2x256xbf16>, vector<256x128xbf16>, vector<2x128xf32> -> vector<2x128xf32>
    %74 = arith.extf %15 : vector<1x128xbf16> to vector<1x128xf32>
    %75 = vector.broadcast %74 : vector<1x128xf32> to vector<2x128xf32>
    %76 = arith.addf %73, %75 : vector<2x128xf32>
    %cst_32 = arith.constant 0.000000e+00 : f32
    %77 = vector.broadcast %cst_32 : f32 to vector<2x128xf32>
    %78 = arith.maximumf %76, %77 : vector<2x128xf32>
    %79 = arith.truncf %78 : vector<2x128xf32> to vector<2x128xbf16>
    %cst_33 = arith.constant dense<0.000000e+00> : vector<2x3xf32>
    %80 = tpu.matmul %79, %16, %cst_33 {dimension_numbers = #tpu.dot_dimension_numbers<[1], [0], [0], [1], [0, 0, 1, 1], [], []>} : vector<2x128xbf16>, vector<128x3xbf16>, vector<2x3xf32> -> vector<2x3xf32>
    %81 = arith.extf %17 : vector<1x3xbf16> to vector<1x3xf32>
    %82 = vector.broadcast %81 : vector<1x3xf32> to vector<2x3xf32>
    %83 = arith.addf %80, %82 : vector<2x3xf32>
    %84 = arith.addf %83, %4 : vector<2x3xf32>
    %c0_34 = arith.constant 0 : index
    %c0_35 = arith.constant 0 : index
    %85 = vector.load %arg4[%c0_34, %c0_35] : memref<2192x512xbf16, #tpu.memory_space<vmem>>, vector<3x64xbf16>
    %c3_36 = arith.constant 3 : index
    %c0_37 = arith.constant 0 : index
    %86 = vector.load %arg4[%c3_36, %c0_37] : memref<2192x512xbf16, #tpu.memory_space<vmem>>, vector<1x64xbf16>
    %c16_38 = arith.constant 16 : index
    %c0_39 = arith.constant 0 : index
    %87 = vector.load %arg4[%c16_38, %c0_39] : memref<2192x512xbf16, #tpu.memory_space<vmem>>, vector<64x128xbf16>
    %c80 = arith.constant 80 : index
    %c0_40 = arith.constant 0 : index
    %88 = vector.load %arg4[%c80, %c0_40] : memref<2192x512xbf16, #tpu.memory_space<vmem>>, vector<1x128xbf16>
    %c96 = arith.constant 96 : index
    %c0_41 = arith.constant 0 : index
    %89 = vector.load %arg4[%c96, %c0_41] : memref<2192x512xbf16, #tpu.memory_space<vmem>>, vector<128x128xbf16>
    %c224 = arith.constant 224 : index
    %c0_42 = arith.constant 0 : index
    %90 = vector.load %arg4[%c224, %c0_42] : memref<2192x512xbf16, #tpu.memory_space<vmem>>, vector<1x128xbf16>
    %c240 = arith.constant 240 : index
    %c0_43 = arith.constant 0 : index
    %91 = vector.load %arg4[%c240, %c0_43] : memref<2192x512xbf16, #tpu.memory_space<vmem>>, vector<128x256xbf16>
    %c368 = arith.constant 368 : index
    %c0_44 = arith.constant 0 : index
    %92 = vector.load %arg4[%c368, %c0_44] : memref<2192x512xbf16, #tpu.memory_space<vmem>>, vector<1x256xbf16>
    %c384 = arith.constant 384 : index
    %c0_45 = arith.constant 0 : index
    %93 = vector.load %arg4[%c384, %c0_45] : memref<2192x512xbf16, #tpu.memory_space<vmem>>, vector<256x512xbf16>
    %c640 = arith.constant 640 : index
    %c0_46 = arith.constant 0 : index
    %94 = vector.load %arg4[%c640, %c0_46] : memref<2192x512xbf16, #tpu.memory_space<vmem>>, vector<1x512xbf16>
    %c656 = arith.constant 656 : index
    %c0_47 = arith.constant 0 : index
    %95 = vector.load %arg4[%c656, %c0_47] : memref<2192x512xbf16, #tpu.memory_space<vmem>>, vector<3x32xbf16>
    %c659 = arith.constant 659 : index
    %c0_48 = arith.constant 0 : index
    %96 = vector.load %arg4[%c659, %c0_48] : memref<2192x512xbf16, #tpu.memory_space<vmem>>, vector<1x32xbf16>
    %c672 = arith.constant 672 : index
    %c0_49 = arith.constant 0 : index
    %97 = vector.load %arg4[%c672, %c0_49] : memref<2192x512xbf16, #tpu.memory_space<vmem>>, vector<3x32xbf16>
    %c675 = arith.constant 675 : index
    %c0_50 = arith.constant 0 : index
    %98 = vector.load %arg4[%c675, %c0_50] : memref<2192x512xbf16, #tpu.memory_space<vmem>>, vector<1x32xbf16>
    %c688 = arith.constant 688 : index
    %c0_51 = arith.constant 0 : index
    %99 = vector.load %arg4[%c688, %c0_51] : memref<2192x512xbf16, #tpu.memory_space<vmem>>, vector<512x512xbf16>
    %c1200 = arith.constant 1200 : index
    %c0_52 = arith.constant 0 : index
    %100 = vector.load %arg4[%c1200, %c0_52] : memref<2192x512xbf16, #tpu.memory_space<vmem>>, vector<1x512xbf16>
    %c1216 = arith.constant 1216 : index
    %c0_53 = arith.constant 0 : index
    %101 = vector.load %arg4[%c1216, %c0_53] : memref<2192x512xbf16, #tpu.memory_space<vmem>>, vector<32x512xbf16>
    %c1264 = arith.constant 1264 : index
    %c0_54 = arith.constant 0 : index
    %102 = vector.load %arg4[%c1264, %c0_54] : memref<2192x512xbf16, #tpu.memory_space<vmem>>, vector<32x512xbf16>
    %c1312 = arith.constant 1312 : index
    %c0_55 = arith.constant 0 : index
    %103 = vector.load %arg4[%c1312, %c0_55] : memref<2192x512xbf16, #tpu.memory_space<vmem>>, vector<512x256xbf16>
    %c1824 = arith.constant 1824 : index
    %c0_56 = arith.constant 0 : index
    %104 = vector.load %arg4[%c1824, %c0_56] : memref<2192x512xbf16, #tpu.memory_space<vmem>>, vector<1x256xbf16>
    %c1840 = arith.constant 1840 : index
    %c0_57 = arith.constant 0 : index
    %105 = vector.load %arg4[%c1840, %c0_57] : memref<2192x512xbf16, #tpu.memory_space<vmem>>, vector<256x64xbf16>
    %c2096 = arith.constant 2096 : index
    %c0_58 = arith.constant 0 : index
    %106 = vector.load %arg4[%c2096, %c0_58] : memref<2192x512xbf16, #tpu.memory_space<vmem>>, vector<1x64xbf16>
    %c2112 = arith.constant 2112 : index
    %c0_59 = arith.constant 0 : index
    %107 = vector.load %arg4[%c2112, %c0_59] : memref<2192x512xbf16, #tpu.memory_space<vmem>>, vector<64x30xbf16>
    %c2176 = arith.constant 2176 : index
    %c0_60 = arith.constant 0 : index
    %108 = vector.load %arg4[%c2176, %c0_60] : memref<2192x512xbf16, #tpu.memory_space<vmem>>, vector<1x30xbf16>
    %c0_61 = arith.constant 0 : index
    %c0_62 = arith.constant 0 : index
    %c0_63 = arith.constant 0 : index
    %109 = vector.load %arg1[%c0_61, %c0_62, %c0_63] : memref<2x128x3xf32, #tpu.memory_space<vmem>>, vector<2x128x3xf32>
    %110 = vector.shape_cast %84 : vector<2x3xf32> to vector<2x1x3xf32>
    %111 = vector.broadcast %110 : vector<2x1x3xf32> to vector<2x128x3xf32>
    %112 = arith.subf %109, %111 : vector<2x128x3xf32>
    %113 = vector.shape_cast %112 : vector<2x128x3xf32> to vector<256x3xf32>
    %114 = arith.extf %85 : vector<3x64xbf16> to vector<3x64xf32>
    %115 = vector.extract_strided_slice %113 {offsets = [0, 0], sizes = [256, 1], strides = [1, 1]} : vector<256x3xf32> to vector<256x1xf32>
    %116 = vector.extract_strided_slice %114 {offsets = [0, 0], sizes = [1, 64], strides = [1, 1]} : vector<3x64xf32> to vector<1x64xf32>
    %117 = vector.broadcast %115 : vector<256x1xf32> to vector<256x64xf32>
    %118 = vector.broadcast %116 : vector<1x64xf32> to vector<256x64xf32>
    %119 = arith.mulf %117, %118 : vector<256x64xf32>
    %120 = vector.extract_strided_slice %113 {offsets = [0, 1], sizes = [256, 1], strides = [1, 1]} : vector<256x3xf32> to vector<256x1xf32>
    %121 = vector.extract_strided_slice %114 {offsets = [1, 0], sizes = [1, 64], strides = [1, 1]} : vector<3x64xf32> to vector<1x64xf32>
    %122 = vector.broadcast %120 : vector<256x1xf32> to vector<256x64xf32>
    %123 = vector.broadcast %121 : vector<1x64xf32> to vector<256x64xf32>
    %124 = arith.mulf %122, %123 : vector<256x64xf32>
    %125 = arith.addf %119, %124 : vector<256x64xf32>
    %126 = vector.extract_strided_slice %113 {offsets = [0, 2], sizes = [256, 1], strides = [1, 1]} : vector<256x3xf32> to vector<256x1xf32>
    %127 = vector.extract_strided_slice %114 {offsets = [2, 0], sizes = [1, 64], strides = [1, 1]} : vector<3x64xf32> to vector<1x64xf32>
    %128 = vector.broadcast %126 : vector<256x1xf32> to vector<256x64xf32>
    %129 = vector.broadcast %127 : vector<1x64xf32> to vector<256x64xf32>
    %130 = arith.mulf %128, %129 : vector<256x64xf32>
    %131 = arith.addf %125, %130 : vector<256x64xf32>
    %132 = arith.extf %86 : vector<1x64xbf16> to vector<1x64xf32>
    %133 = vector.broadcast %132 : vector<1x64xf32> to vector<256x64xf32>
    %134 = arith.addf %131, %133 : vector<256x64xf32>
    %cst_64 = arith.constant 0.000000e+00 : f32
    %135 = vector.broadcast %cst_64 : f32 to vector<256x64xf32>
    %136 = arith.maximumf %134, %135 : vector<256x64xf32>
    %137 = arith.truncf %136 : vector<256x64xf32> to vector<256x64xbf16>
    %cst_65 = arith.constant dense<0.000000e+00> : vector<256x128xf32>
    %138 = tpu.matmul %137, %87, %cst_65 {dimension_numbers = #tpu.dot_dimension_numbers<[1], [0], [0], [1], [0, 0, 1, 1], [], []>} : vector<256x64xbf16>, vector<64x128xbf16>, vector<256x128xf32> -> vector<256x128xf32>
    %139 = arith.extf %88 : vector<1x128xbf16> to vector<1x128xf32>
    %140 = vector.broadcast %139 : vector<1x128xf32> to vector<256x128xf32>
    %141 = arith.addf %138, %140 : vector<256x128xf32>
    %cst_66 = arith.constant 0.000000e+00 : f32
    %142 = vector.broadcast %cst_66 : f32 to vector<256x128xf32>
    %143 = arith.maximumf %141, %142 : vector<256x128xf32>
    %144 = arith.truncf %143 : vector<256x128xf32> to vector<256x128xbf16>
    %cst_67 = arith.constant dense<0.000000e+00> : vector<256x128xf32>
    %145 = tpu.matmul %144, %89, %cst_67 {dimension_numbers = #tpu.dot_dimension_numbers<[1], [0], [0], [1], [0, 0, 1, 1], [], []>} : vector<256x128xbf16>, vector<128x128xbf16>, vector<256x128xf32> -> vector<256x128xf32>
    %146 = arith.extf %90 : vector<1x128xbf16> to vector<1x128xf32>
    %147 = vector.broadcast %146 : vector<1x128xf32> to vector<256x128xf32>
    %148 = arith.addf %145, %147 : vector<256x128xf32>
    %cst_68 = arith.constant 0.000000e+00 : f32
    %149 = vector.broadcast %cst_68 : f32 to vector<256x128xf32>
    %150 = arith.maximumf %148, %149 : vector<256x128xf32>
    %151 = arith.truncf %150 : vector<256x128xf32> to vector<256x128xbf16>
    %cst_69 = arith.constant dense<0.000000e+00> : vector<256x256xf32>
    %152 = tpu.matmul %151, %91, %cst_69 {dimension_numbers = #tpu.dot_dimension_numbers<[1], [0], [0], [1], [0, 0, 1, 1], [], []>} : vector<256x128xbf16>, vector<128x256xbf16>, vector<256x256xf32> -> vector<256x256xf32>
    %153 = arith.extf %92 : vector<1x256xbf16> to vector<1x256xf32>
    %154 = vector.broadcast %153 : vector<1x256xf32> to vector<256x256xf32>
    %155 = arith.addf %152, %154 : vector<256x256xf32>
    %cst_70 = arith.constant 0.000000e+00 : f32
    %156 = vector.broadcast %cst_70 : f32 to vector<256x256xf32>
    %157 = arith.maximumf %155, %156 : vector<256x256xf32>
    %158 = arith.truncf %157 : vector<256x256xf32> to vector<256x256xbf16>
    %cst_71 = arith.constant dense<0.000000e+00> : vector<256x512xf32>
    %159 = tpu.matmul %158, %93, %cst_71 {dimension_numbers = #tpu.dot_dimension_numbers<[1], [0], [0], [1], [0, 0, 1, 1], [], []>} : vector<256x256xbf16>, vector<256x512xbf16>, vector<256x512xf32> -> vector<256x512xf32>
    %160 = arith.extf %94 : vector<1x512xbf16> to vector<1x512xf32>
    %161 = vector.broadcast %160 : vector<1x512xf32> to vector<256x512xf32>
    %162 = arith.addf %159, %161 : vector<256x512xf32>
    %cst_72 = arith.constant 0.000000e+00 : f32
    %163 = vector.broadcast %cst_72 : f32 to vector<256x512xf32>
    %164 = arith.maximumf %162, %163 : vector<256x512xf32>
    %165 = vector.shape_cast %164 : vector<256x512xf32> to vector<2x128x512xf32>
    %cst_73 = arith.constant dense<0xFF800000> : vector<2x512xf32>
    %166 = vector.multi_reduction <maximumf>, %165, %cst_73 [1] : vector<2x128x512xf32> to vector<2x512xf32>
    %167 = arith.truncf %0 : vector<2x3xf32> to vector<2x3xbf16>
    %cst_74 = arith.constant dense<0.000000e+00> : vector<2x32xf32>
    %168 = tpu.matmul %167, %95, %cst_74 {dimension_numbers = #tpu.dot_dimension_numbers<[1], [0], [0], [1], [0, 0, 1, 1], [], []>} : vector<2x3xbf16>, vector<3x32xbf16>, vector<2x32xf32> -> vector<2x32xf32>
    %169 = arith.extf %96 : vector<1x32xbf16> to vector<1x32xf32>
    %170 = vector.broadcast %169 : vector<1x32xf32> to vector<2x32xf32>
    %171 = arith.addf %168, %170 : vector<2x32xf32>
    %cst_75 = arith.constant 0.000000e+00 : f32
    %172 = vector.broadcast %cst_75 : f32 to vector<2x32xf32>
    %173 = arith.maximumf %171, %172 : vector<2x32xf32>
    %174 = arith.truncf %84 : vector<2x3xf32> to vector<2x3xbf16>
    %cst_76 = arith.constant dense<0.000000e+00> : vector<2x32xf32>
    %175 = tpu.matmul %174, %97, %cst_76 {dimension_numbers = #tpu.dot_dimension_numbers<[1], [0], [0], [1], [0, 0, 1, 1], [], []>} : vector<2x3xbf16>, vector<3x32xbf16>, vector<2x32xf32> -> vector<2x32xf32>
    %176 = arith.extf %98 : vector<1x32xbf16> to vector<1x32xf32>
    %177 = vector.broadcast %176 : vector<1x32xf32> to vector<2x32xf32>
    %178 = arith.addf %175, %177 : vector<2x32xf32>
    %cst_77 = arith.constant 0.000000e+00 : f32
    %179 = vector.broadcast %cst_77 : f32 to vector<2x32xf32>
    %180 = arith.maximumf %178, %179 : vector<2x32xf32>
    %181 = arith.truncf %166 : vector<2x512xf32> to vector<2x512xbf16>
    %cst_78 = arith.constant dense<0.000000e+00> : vector<2x512xf32>
    %182 = tpu.matmul %181, %99, %cst_78 {dimension_numbers = #tpu.dot_dimension_numbers<[1], [0], [0], [1], [0, 0, 1, 1], [], []>} : vector<2x512xbf16>, vector<512x512xbf16>, vector<2x512xf32> -> vector<2x512xf32>
    %183 = arith.truncf %173 : vector<2x32xf32> to vector<2x32xbf16>
    %cst_79 = arith.constant dense<0.000000e+00> : vector<2x512xf32>
    %184 = tpu.matmul %183, %101, %cst_79 {dimension_numbers = #tpu.dot_dimension_numbers<[1], [0], [0], [1], [0, 0, 1, 1], [], []>} : vector<2x32xbf16>, vector<32x512xbf16>, vector<2x512xf32> -> vector<2x512xf32>
    %185 = arith.addf %182, %184 : vector<2x512xf32>
    %186 = arith.truncf %180 : vector<2x32xf32> to vector<2x32xbf16>
    %cst_80 = arith.constant dense<0.000000e+00> : vector<2x512xf32>
    %187 = tpu.matmul %186, %102, %cst_80 {dimension_numbers = #tpu.dot_dimension_numbers<[1], [0], [0], [1], [0, 0, 1, 1], [], []>} : vector<2x32xbf16>, vector<32x512xbf16>, vector<2x512xf32> -> vector<2x512xf32>
    %188 = arith.addf %185, %187 : vector<2x512xf32>
    %189 = arith.extf %100 : vector<1x512xbf16> to vector<1x512xf32>
    %190 = vector.broadcast %189 : vector<1x512xf32> to vector<2x512xf32>
    %191 = arith.addf %188, %190 : vector<2x512xf32>
    %cst_81 = arith.constant 0.000000e+00 : f32
    %192 = vector.broadcast %cst_81 : f32 to vector<2x512xf32>
    %193 = arith.maximumf %191, %192 : vector<2x512xf32>
    %194 = arith.truncf %193 : vector<2x512xf32> to vector<2x512xbf16>
    %cst_82 = arith.constant dense<0.000000e+00> : vector<2x256xf32>
    %195 = tpu.matmul %194, %103, %cst_82 {dimension_numbers = #tpu.dot_dimension_numbers<[1], [0], [0], [1], [0, 0, 1, 1], [], []>} : vector<2x512xbf16>, vector<512x256xbf16>, vector<2x256xf32> -> vector<2x256xf32>
    %196 = arith.extf %104 : vector<1x256xbf16> to vector<1x256xf32>
    %197 = vector.broadcast %196 : vector<1x256xf32> to vector<2x256xf32>
    %198 = arith.addf %195, %197 : vector<2x256xf32>
    %cst_83 = arith.constant 0.000000e+00 : f32
    %199 = vector.broadcast %cst_83 : f32 to vector<2x256xf32>
    %200 = arith.maximumf %198, %199 : vector<2x256xf32>
    %201 = arith.truncf %200 : vector<2x256xf32> to vector<2x256xbf16>
    %cst_84 = arith.constant dense<0.000000e+00> : vector<2x64xf32>
    %202 = tpu.matmul %201, %105, %cst_84 {dimension_numbers = #tpu.dot_dimension_numbers<[1], [0], [0], [1], [0, 0, 1, 1], [], []>} : vector<2x256xbf16>, vector<256x64xbf16>, vector<2x64xf32> -> vector<2x64xf32>
    %203 = arith.extf %106 : vector<1x64xbf16> to vector<1x64xf32>
    %204 = vector.broadcast %203 : vector<1x64xf32> to vector<2x64xf32>
    %205 = arith.addf %202, %204 : vector<2x64xf32>
    %cst_85 = arith.constant 0.000000e+00 : f32
    %206 = vector.broadcast %cst_85 : f32 to vector<2x64xf32>
    %207 = arith.maximumf %205, %206 : vector<2x64xf32>
    %208 = arith.truncf %207 : vector<2x64xf32> to vector<2x64xbf16>
    %cst_86 = arith.constant dense<0.000000e+00> : vector<2x30xf32>
    %209 = tpu.matmul %208, %107, %cst_86 {dimension_numbers = #tpu.dot_dimension_numbers<[1], [0], [0], [1], [0, 0, 1, 1], [], []>} : vector<2x64xbf16>, vector<64x30xbf16>, vector<2x30xf32> -> vector<2x30xf32>
    %210 = arith.extf %108 : vector<1x30xbf16> to vector<1x30xf32>
    %211 = vector.broadcast %210 : vector<1x30xf32> to vector<2x30xf32>
    %212 = arith.addf %209, %211 : vector<2x30xf32>
    %cst_87 = arith.constant 0.000000e+00 : f32
    %213 = vector.broadcast %cst_87 : f32 to vector<2x128xf32>
    %c0_88 = arith.constant 0 : index
    %c0_89 = arith.constant 0 : index
    %214 = vector.load %arg5[%c0_88, %c0_89] : memref<2x128xf32, #tpu.memory_space<vmem>>, vector<2x128xf32>
    tpu.vector_store %arg5[%c0_88, %c0_89], %213 {strides = array<i32>} : memref<2x128xf32, #tpu.memory_space<vmem>>, vector<2x128xf32>,
    %c0_90 = arith.constant 0 : index
    %c0_91 = arith.constant 0 : index
    %215 = vector.load %arg5[%c0_90, %c0_91] : memref<2x128xf32, #tpu.memory_space<vmem>>, vector<2x30xf32>
    tpu.vector_store %arg5[%c0_90, %c0_91], %212 {strides = array<i32>} : memref<2x128xf32, #tpu.memory_space<vmem>>, vector<2x30xf32>,
    %c0_92 = arith.constant 0 : index
    %c30 = arith.constant 30 : index
    %216 = vector.load %arg5[%c0_92, %c30] : memref<2x128xf32, #tpu.memory_space<vmem>>, vector<2x3xf32>
    tpu.vector_store %arg5[%c0_92, %c30], %84 {strides = array<i32>} : memref<2x128xf32, #tpu.memory_space<vmem>>, vector<2x3xf32>,
    return
  }
  func.func @transform_0(%arg0: i32) -> (i32, i32, i32) {
    %c0_i32 = arith.constant 0 : i32
    %c0_i32_0 = arith.constant 0 : i32
    %c0_i32_1 = arith.constant 0 : i32
    return %arg0, %c0_i32, %c0_i32_0 : i32, i32, i32
  }
  func.func @transform_1(%arg0: i32) -> (i32, i32) {
    %c0_i32 = arith.constant 0 : i32
    %c0_i32_0 = arith.constant 0 : i32
    return %arg0, %c0_i32 : i32, i32
  }
  func.func @transform_2(%arg0: i32) -> (i32, i32) {
    %c0_i32 = arith.constant 0 : i32
    %c0_i32_0 = arith.constant 0 : i32
    %c0_i32_1 = arith.constant 0 : i32
    return %c0_i32, %c0_i32_0 : i32, i32
  }
  func.func @transform_3(%arg0: i32) -> (i32, i32) {
    %c0_i32 = arith.constant 0 : i32
    %c0_i32_0 = arith.constant 0 : i32
    %c0_i32_1 = arith.constant 0 : i32
    return %c0_i32, %c0_i32_0 : i32, i32
  }
  func.func @transform_4(%arg0: i32) -> (i32, i32) {
    %c0_i32 = arith.constant 0 : i32
    %c0_i32_0 = arith.constant 0 : i32
    return %arg0, %c0_i32 : i32, i32
  }
}

</mosaic_0001>

<llo_original>
// kernel: tpu_custom_call.1
$region0: #{tpu_custom_call.1}
  #allocation0 [shape = 'u32[]', space=smem, size = 0x4, offset = 0x4, fixed_abs, tag = 'smem constant byte address 0x4 - core index']
  #allocation1 [shape = 'u32[144,128]{1,0:T(1,128)}', space=vmem, size = 0x12000, scoped, tag = 'internal scratch']
  %s0 = inlined_call_operand.vmem [shape: f32[2,128,3], index: 0, kind: input, shape index: {}]
  %s1 = inlined_call_operand.hbm [shape: f32[2,3], index: 1, kind: input, shape index: {}]
  %s2 = inlined_call_operand.hbm [shape: bf16[1008,256], index: 2, kind: input, shape index: {}]
  %s3 = inlined_call_operand.hbm [shape: bf16[2192,512], index: 3, kind: input, shape index: {}]
  %s4 = inlined_call_operand.hbm [shape: f32[2,128], index: 4, kind: output, shape index: {}]
  %s5 = sld [smem:[#allocation0]]
  $region38: #{tpu_custom_call.1} parent=0
    _
  %s7 = ssub.s32 1, %s5
  %s8 = scalar_select 0, %s7, %s5
  $region1: #{tpu_custom_call.1} parent=0
    #allocation2 [shape = 'u8[1024]{0}', space=vmem, size = 0x400, scoped, tag = 'input window, operand 1, single buffered']
    #allocation3 [shape = 's32[1]{0}', space=sflag, size = 0x4, scoped, tag = 'scoped memory for tpu_custom_call.1']
    #allocation4 [shape = 's32[1]{0}', space=sflag, size = 0x4, scoped, tag = 'scoped memory for tpu_custom_call.1']
    #allocation5 [shape = 'u8[516096]{0}', space=vmem, size = 0x7e000, scoped, tag = 'input window, operand 2, single buffered']
    #allocation6 [shape = 's32[1]{0}', space=sflag, size = 0x4, scoped, tag = 'scoped memory for tpu_custom_call.1']
    #allocation7 [shape = 'u8[2244608]{0}', space=vmem, size = 0x224000, scoped, tag = 'input window, operand 3, single buffered']
    #allocation8 [shape = 'u8[1024]{0}', space=vmem, size = 0x400, scoped, tag = 'output window, operand 0, single buffered']
    %9 = vsyncpa [#allocation3], 0
    %10 = vsyncpa [#allocation6], 0
    %11 = vsyncpa [#allocation4], 0
    // Predicated region
    $region2: #{tpu_custom_call.1} parent=1 // pred_check
      _
    $region3: #{tpu_custom_call.1} parent=1 // pred_check_branch
      %13 = sbr.rel (0) target = $region5
    $region4: #{tpu_custom_call.1} parent=1 // pred_region
      _
    $region5: #{tpu_custom_call.1} parent=1 // pred_fallthru
      _
    // Predicated region
    $region6: #{tpu_custom_call.1} parent=1 // pred_check
      _
    $region7: #{tpu_custom_call.1} parent=1 // pred_check_branch
      %15 = sbr.rel (0) target = $region9
    $region8: #{tpu_custom_call.1} parent=1 // pred_region
      %s17 = ssub.s32 32, 32
      %18 = vsyncadd [#allocation3], %s17
      %s20 = sshll.u32 [#allocation2], 4
      %s21 = int_to_ptr.vmem [resolvable:$true] %s20
      %23 = dma.hbm_to_vmem [thread:$0]  %s1, 32, %s21, [#allocation3]
    $region9: #{tpu_custom_call.1} parent=1 // pred_fallthru
      _
    // Predicated region
    $region10: #{tpu_custom_call.1} parent=1 // pred_check
      _
    $region11: #{tpu_custom_call.1} parent=1 // pred_check_branch
      %25 = sbr.rel (0) target = $region13
    $region12: #{tpu_custom_call.1} parent=1 // pred_region
      %s27 = ssub.s32 16128, 16128
      %28 = vsyncadd [#allocation6], %s27
      %s29 = sshll.u32 [#allocation5], 4
      %s30 = int_to_ptr.vmem [resolvable:$true] %s29
      %35 = dma.hbm_to_vmem [thread:$0]  %s2, 16128, %s30, [#allocation6], 128, 128, 8
    $region13: #{tpu_custom_call.1} parent=1 // pred_fallthru
      _
    // Predicated region
    $region14: #{tpu_custom_call.1} parent=1 // pred_check
      _
    $region15: #{tpu_custom_call.1} parent=1 // pred_check_branch
      %37 = sbr.rel (0) target = $region17
    $region16: #{tpu_custom_call.1} parent=1 // pred_region
      %s39 = ssub.s32 70144, 70144
      %40 = vsyncadd [#allocation6], %s39
      %s41 = sshll.u32 [#allocation7], 4
      %s42 = int_to_ptr.vmem [resolvable:$true] %s41
      %47 = dma.hbm_to_vmem [thread:$0]  %s3, 70144, %s42, [#allocation6], 256, 256, 16
    $region17: #{tpu_custom_call.1} parent=1 // pred_fallthru
      _
    // Predicated region
    $region18: #{tpu_custom_call.1} parent=1 // pred_check
      _
    $region19: #{tpu_custom_call.1} parent=1 // pred_check_branch
      %49 = sbr.rel (0) target = $region21
    $region20: #{tpu_custom_call.1} parent=1 // pred_region
      %50 = dma.done [#allocation3], 32
    $region21: #{tpu_custom_call.1} parent=1 // pred_fallthru
      _
    // Predicated region
    $region22: #{tpu_custom_call.1} parent=1 // pred_check
      _
    $region23: #{tpu_custom_call.1} parent=1 // pred_check_branch
      %52 = sbr.rel (0) target = $region25
    $region24: #{tpu_custom_call.1} parent=1 // pred_region
      %53 = dma.done [#allocation6], 16128
    $region25: #{tpu_custom_call.1} parent=1 // pred_fallthru
      _
    // Predicated region
    $region26: #{tpu_custom_call.1} parent=1 // pred_check
      _
    $region27: #{tpu_custom_call.1} parent=1 // pred_check_branch
      %55 = sbr.rel (0) target = $region29
    $region28: #{tpu_custom_call.1} parent=1 // pred_region
      %56 = dma.done [#allocation6], 70144
    $region29: #{tpu_custom_call.1} parent=1 // pred_fallthru
      _
    %v58 = vld [vmem:[#allocation2] sm:$0x3]
    %v59 = vld [vmem:[%s0] sm:$0xff]
    %v60 = vld [vmem:[%s0 + $0x8] sm:$0xff]
    %v61 = vld [vmem:[%s0 + $0x10] sm:$0xff]
    %v62 = vld [vmem:[%s0 + $0x18] sm:$0xff]
    %v63 = vld [vmem:[%s0 + $0x20] sm:$0xff]
    %v64 = vld [vmem:[%s0 + $0x28] sm:$0xff]
    %v65 = vld [vmem:[%s0 + $0x30] sm:$0xff]
    %v66 = vld [vmem:[%s0 + $0x38] sm:$0xff]
    %v67 = vld [vmem:[%s0 + $0x40] sm:$0xff]
    %v68 = vld [vmem:[%s0 + $0x48] sm:$0xff]
    %v69 = vld [vmem:[%s0 + $0x50] sm:$0xff]
    %v70 = vld [vmem:[%s0 + $0x58] sm:$0xff]
    %v71 = vld [vmem:[%s0 + $0x60] sm:$0xff]
    %v72 = vld [vmem:[%s0 + $0x68] sm:$0xff]
    %v73 = vld [vmem:[%s0 + $0x70] sm:$0xff]
    %v74 = vld [vmem:[%s0 + $0x78] sm:$0xff]
    %v75 = vld [vmem:[%s0 + $0x80] sm:$0xff]
    %v76 = vld [vmem:[%s0 + $0x88] sm:$0xff]
    %v77 = vld [vmem:[%s0 + $0x90] sm:$0xff]
    %v78 = vld [vmem:[%s0 + $0x98] sm:$0xff]
    %v79 = vld [vmem:[%s0 + $0xa0] sm:$0xff]
    %v80 = vld [vmem:[%s0 + $0xa8] sm:$0xff]
    %v81 = vld [vmem:[%s0 + $0xb0] sm:$0xff]
    %v82 = vld [vmem:[%s0 + $0xb8] sm:$0xff]
    %v83 = vld [vmem:[%s0 + $0xc0] sm:$0xff]
    %v84 = vld [vmem:[%s0 + $0xc8] sm:$0xff]
    %v85 = vld [vmem:[%s0 + $0xd0] sm:$0xff]
    %v86 = vld [vmem:[%s0 + $0xd8] sm:$0xff]
    %v87 = vld [vmem:[%s0 + $0xe0] sm:$0xff]
    %v88 = vld [vmem:[%s0 + $0xe8] sm:$0xff]
    %v89 = vld [vmem:[%s0 + $0xf0] sm:$0xff]
    %v90 = vld [vmem:[%s0 + $0xf8] sm:$0xff]
    %vm91 = vcmask 23552
    %v92 = vsel %vm91, %v59, 0.0
    %v93 = vsel %vm91, %v60, 0.0
    %v94 = vadd.f32 %v92, %v93
    %v95 = vsel %vm91, %v61, 0.0
    %v96 = vadd.f32 %v94, %v95
    %v97 = vsel %vm91, %v62, 0.0
    %v98 = vadd.f32 %v96, %v97
    %v99 = vsel %vm91, %v63, 0.0
    %v100 = vadd.f32 %v98, %v99
    %v101 = vsel %vm91, %v64, 0.0
    %v102 = vadd.f32 %v100, %v101
    %v103 = vsel %vm91, %v65, 0.0
    %v104 = vadd.f32 %v102, %v103
    %v105 = vsel %vm91, %v66, 0.0
    %v106 = vadd.f32 %v104, %v105
    %v107 = vsel %vm91, %v67, 0.0
    %v108 = vadd.f32 %v106, %v107
    %v109 = vsel %vm91, %v68, 0.0
    %v110 = vadd.f32 %v108, %v109
    %v111 = vsel %vm91, %v69, 0.0
    %v112 = vadd.f32 %v110, %v111
    %v113 = vsel %vm91, %v70, 0.0
    %v114 = vadd.f32 %v112, %v113
    %v115 = vsel %vm91, %v71, 0.0
    %v116 = vadd.f32 %v114, %v115
    %v117 = vsel %vm91, %v72, 0.0
    %v118 = vadd.f32 %v116, %v117
    %v119 = vsel %vm91, %v73, 0.0
    %v120 = vadd.f32 %v118, %v119
    %v121 = vsel %vm91, %v74, 0.0
    %v122 = vadd.f32 %v120, %v121
    %v123 = vrot.slane %v122, 4
    %v124 = vadd.f32 %v122, %v123
    %v125 = vrot.slane %v124, 2
    %v126 = vadd.f32 %v124, %v125
    %v127 = vrot.slane %v126, 1
    %v128 = vadd.f32 %v126, %v127
    %v129 = vsel %vm91, %v75, 0.0
    %v130 = vsel %vm91, %v76, 0.0
    %v131 = vadd.f32 %v129, %v130
    %v132 = vsel %vm91, %v77, 0.0
    %v133 = vadd.f32 %v131, %v132
    %v134 = vsel %vm91, %v78, 0.0
    %v135 = vadd.f32 %v133, %v134
    %v136 = vsel %vm91, %v79, 0.0
    %v137 = vadd.f32 %v135, %v136
    %v138 = vsel %vm91, %v80, 0.0
    %v139 = vadd.f32 %v137, %v138
    %v140 = vsel %vm91, %v81, 0.0
    %v141 = vadd.f32 %v139, %v140
    %v142 = vsel %vm91, %v82, 0.0
    %v143 = vadd.f32 %v141, %v142
    %v144 = vsel %vm91, %v83, 0.0
    %v145 = vadd.f32 %v143, %v144
    %v146 = vsel %vm91, %v84, 0.0
    %v147 = vadd.f32 %v145, %v146
    %v148 = vsel %vm91, %v85, 0.0
    %v149 = vadd.f32 %v147, %v148
    %v150 = vsel %vm91, %v86, 0.0
    %v151 = vadd.f32 %v149, %v150
    %v152 = vsel %vm91, %v87, 0.0
    %v153 = vadd.f32 %v151, %v152
    %v154 = vsel %vm91, %v88, 0.0
    %v155 = vadd.f32 %v153, %v154
    %v156 = vsel %vm91, %v89, 0.0
    %v157 = vadd.f32 %v155, %v156
    %v158 = vsel %vm91, %v90, 0.0
    %v159 = vadd.f32 %v157, %v158
    %v160 = vrot.slane %v159, 4
    %v161 = vadd.f32 %v159, %v160
    %v162 = vrot.slane %v161, 2
    %v163 = vadd.f32 %v161, %v162
    %v164 = vrot.slane %v163, 1
    %v165 = vadd.f32 %v163, %v164
    %v166 = vrcp.pop 128.0
    %v167 = vmul.f32 %v128, %v166
    %v168 = vmul.f32 %v165, %v166
    %v169 = vld [vmem:[#allocation5] sm:$0x3]
    %v170 = vld [vmem:[#allocation5] sm:$0x2]
    %v171 = vld [vmem:[#allocation5 + $0x10] sm:$0xf]
    %v172 = vld [vmem:[#allocation5 + $0x18] sm:$0xf]
    %v173 = vld [vmem:[#allocation5 + $0x20] sm:$0xf]
    %v174 = vld [vmem:[#allocation5 + $0x28] sm:$0xf]
    %v175 = vld [vmem:[#allocation5 + $0x30] sm:$0xf]
    %v176 = vld [vmem:[#allocation5 + $0x38] sm:$0xf]
    %v177 = vld [vmem:[#allocation5 + $0x40] sm:$0xf]
    %v178 = vld [vmem:[#allocation5 + $0x48] sm:$0xf]
    %v179 = vld [vmem:[#allocation5 + $0x50] sm:$0xf]
    %v180 = vld [vmem:[#allocation5 + $0x58] sm:$0xf]
    %v181 = vld [vmem:[#allocation5 + $0x60] sm:$0xf]
    %v182 = vld [vmem:[#allocation5 + $0x68] sm:$0xf]
    %v183 = vld [vmem:[#allocation5 + $0x70] sm:$0xf]
    %v184 = vld [vmem:[#allocation5 + $0x78] sm:$0xf]
    %v185 = vld [vmem:[#allocation5 + $0x80] sm:$0xf]
    %v186 = vld [vmem:[#allocation5 + $0x88] sm:$0xf]
    %v187 = vld [vmem:[#allocation5 + $0x90] sm:$0x1]
    %v188 = vld [vmem:[#allocation5 + $0xa0] sm:$0xff]
    %v189 = vld [vmem:[#allocation5 + $0xa8] sm:$0xff]
    %v190 = vld [vmem:[#allocation5 + $0xb0] sm:$0xff]
    %v191 = vld [vmem:[#allocation5 + $0xb8] sm:$0xff]
    %v192 = vld [vmem:[#allocation5 + $0xc0] sm:$0xff]
    %v193 = vld [vmem:[#allocation5 + $0xc8] sm:$0xff]
    %v194 = vld [vmem:[#allocation5 + $0xd0] sm:$0xff]
    %v195 = vld [vmem:[#allocation5 + $0xd8] sm:$0xff]
    %v196 = vld [vmem:[#allocation5 + $0xe0] sm:$0xff]
    %v197 = vld [vmem:[#allocation5 + $0xe8] sm:$0xff]
    %v198 = vld [vmem:[#allocation5 + $0xf0] sm:$0xff]
    %v199 = vld [vmem:[#allocation5 + $0xf8] sm:$0xff]
    %v200 = vld [vmem:[#allocation5 + $0x100] sm:$0xff]
    %v201 = vld [vmem:[#allocation5 + $0x108] sm:$0xff]
    %v202 = vld [vmem:[#allocation5 + $0x110] sm:$0xff]
    %v203 = vld [vmem:[#allocation5 + $0x118] sm:$0xff]
    %v204 = vld [vmem:[#allocation5 + $0x120] sm:$0x11]
    %v205 = vld [vmem:[#allocation5 + $0x130] sm:$0xff]
    %v206 = vld [vmem:[#allocation5 + $0x138] sm:$0xff]
    %v207 = vld [vmem:[#allocation5 + $0x140] sm:$0xff]
    %v208 = vld [vmem:[#allocation5 + $0x148] sm:$0xff]
    %v209 = vld [vmem:[#allocation5 + $0x150] sm:$0xff]
    %v210 = vld [vmem:[#allocation5 + $0x158] sm:$0xff]
    %v211 = vld [vmem:[#allocation5 + $0x160] sm:$0xff]
    %v212 = vld [vmem:[#allocation5 + $0x168] sm:$0xff]
    %v213 = vld [vmem:[#allocation5 + $0x170] sm:$0xff]
    %v214 = vld [vmem:[#allocation5 + $0x178] sm:$0xff]
    %v215 = vld [vmem:[#allocation5 + $0x180] sm:$0xff]
    %v216 = vld [vmem:[#allocation5 + $0x188] sm:$0xff]
    %v217 = vld [vmem:[#allocation5 + $0x190] sm:$0xff]
    %v218 = vld [vmem:[#allocation5 + $0x198] sm:$0xff]
    %v219 = vld [vmem:[#allocation5 + $0x1a0] sm:$0xff]
    %v220 = vld [vmem:[#allocation5 + $0x1a8] sm:$0xff]
    %v221 = vld [vmem:[#allocation5 + $0x1b0] sm:$0xff]
    %v222 = vld [vmem:[#allocation5 + $0x1b8] sm:$0xff]
    %v223 = vld [vmem:[#allocation5 + $0x1c0] sm:$0xff]
    %v224 = vld [vmem:[#allocation5 + $0x1c8] sm:$0xff]
    %v225 = vld [vmem:[#allocation5 + $0x1d0] sm:$0xff]
    %v226 = vld [vmem:[#allocation5 + $0x1d8] sm:$0xff]
    %v227 = vld [vmem:[#allocation5 + $0x1e0] sm:$0xff]
    %v228 = vld [vmem:[#allocation5 + $0x1e8] sm:$0xff]
    %v229 = vld [vmem:[#allocation5 + $0x1f0] sm:$0xff]
    %v230 = vld [vmem:[#allocation5 + $0x1f8] sm:$0xff]
    %v231 = vld [vmem:[#allocation5 + $0x200] sm:$0xff]
    %v232 = vld [vmem:[#allocation5 + $0x208] sm:$0xff]
    %v233 = vld [vmem:[#allocation5 + $0x210] sm:$0xff]
    %v234 = vld [vmem:[#allocation5 + $0x218] sm:$0xff]
    %v235 = vld [vmem:[#allocation5 + $0x220] sm:$0xff]
    %v236 = vld [vmem:[#allocation5 + $0x228] sm:$0xff]
    %v237 = vld [vmem:[#allocation5 + $0x230] sm:$0x11]
    %v238 = vld [vmem:[#allocation5 + $0x240] sm:$0x33]
    %v239 = vld [vmem:[#allocation5 + $0x250] sm:$0xf]
    %v240 = vld [vmem:[#allocation5 + $0x258] sm:$0xf]
    %v241 = vld [vmem:[#allocation5 + $0x260] sm:$0xf]
    %v242 = vld [vmem:[#allocation5 + $0x268] sm:$0xf]
    %v243 = vld [vmem:[#allocation5 + $0x270] sm:$0xf]
    %v244 = vld [vmem:[#allocation5 + $0x278] sm:$0xf]
    %v245 = vld [vmem:[#allocation5 + $0x280] sm:$0xf]
    %v246 = vld [vmem:[#allocation5 + $0x288] sm:$0xf]
    %v247 = vld [vmem:[#allocation5 + $0x290] sm:$0xf]
    %v248 = vld [vmem:[#allocation5 + $0x298] sm:$0xf]
    %v249 = vld [vmem:[#allocation5 + $0x2a0] sm:$0xf]
    %v250 = vld [vmem:[#allocation5 + $0x2a8] sm:$0xf]
    %v251 = vld [vmem:[#allocation5 + $0x2b0] sm:$0xf]
    %v252 = vld [vmem:[#allocation5 + $0x2b8] sm:$0xf]
    %v253 = vld [vmem:[#allocation5 + $0x2c0] sm:$0xf]
    %v254 = vld [vmem:[#allocation5 + $0x2c8] sm:$0xf]
    %v255 = vld [vmem:[#allocation5 + $0x2d0] sm:$0xf]
    %v256 = vld [vmem:[#allocation5 + $0x2d8] sm:$0xf]
    %v257 = vld [vmem:[#allocation5 + $0x2e0] sm:$0xf]
    %v258 = vld [vmem:[#allocation5 + $0x2e8] sm:$0xf]
    %v259 = vld [vmem:[#allocation5 + $0x2f0] sm:$0xf]
    %v260 = vld [vmem:[#allocation5 + $0x2f8] sm:$0xf]
    %v261 = vld [vmem:[#allocation5 + $0x300] sm:$0xf]
    %v262 = vld [vmem:[#allocation5 + $0x308] sm:$0xf]
    %v263 = vld [vmem:[#allocation5 + $0x310] sm:$0xf]
    %v264 = vld [vmem:[#allocation5 + $0x318] sm:$0xf]
    %v265 = vld [vmem:[#allocation5 + $0x320] sm:$0xf]
    %v266 = vld [vmem:[#allocation5 + $0x328] sm:$0xf]
    %v267 = vld [vmem:[#allocation5 + $0x330] sm:$0xf]
    %v268 = vld [vmem:[#allocation5 + $0x338] sm:$0xf]
    %v269 = vld [vmem:[#allocation5 + $0x340] sm:$0xf]
    %v270 = vld [vmem:[#allocation5 + $0x348] sm:$0xf]
    %v271 = vld [vmem:[#allocation5 + $0x350] sm:$0x1]
    %v272 = vld [vmem:[#allocation5 + $0x360] sm:$0xf]
    %v273 = vld [vmem:[#allocation5 + $0x368] sm:$0xf]
    %v274 = vld [vmem:[#allocation5 + $0x370] sm:$0xf]
    %v275 = vld [vmem:[#allocation5 + $0x378] sm:$0xf]
    %v276 = vld [vmem:[#allocation5 + $0x380] sm:$0xf]
    %v277 = vld [vmem:[#allocation5 + $0x388] sm:$0xf]
    %v278 = vld [vmem:[#allocation5 + $0x390] sm:$0xf]
    %v279 = vld [vmem:[#allocation5 + $0x398] sm:$0xf]
    %v280 = vld [vmem:[#allocation5 + $0x3a0] sm:$0xf]
    %v281 = vld [vmem:[#allocation5 + $0x3a8] sm:$0xf]
    %v282 = vld [vmem:[#allocation5 + $0x3b0] sm:$0xf]
    %v283 = vld [vmem:[#allocation5 + $0x3b8] sm:$0xf]
    %v284 = vld [vmem:[#allocation5 + $0x3c0] sm:$0xf]
    %v285 = vld [vmem:[#allocation5 + $0x3c8] sm:$0xf]
    %v286 = vld [vmem:[#allocation5 + $0x3d0] sm:$0xf]
    %v287 = vld [vmem:[#allocation5 + $0x3d8] sm:$0xf]
    %v288 = vld [vmem:[#allocation5 + $0x3e0] sm:$0x1]
    %v289 = vsub.f32 %v59, %v167
    %v290 = vsub.f32 %v60, %v167
    %v291 = vsub.f32 %v61, %v167
    %v292 = vsub.f32 %v62, %v167
    %v293 = vsub.f32 %v63, %v167
    %v294 = vsub.f32 %v64, %v167
    %v295 = vsub.f32 %v65, %v167
    %v296 = vsub.f32 %v66, %v167
    %v297 = vsub.f32 %v67, %v167
    %v298 = vsub.f32 %v68, %v167
    %v299 = vsub.f32 %v69, %v167
    %v300 = vsub.f32 %v70, %v167
    %v301 = vsub.f32 %v71, %v167
    %v302 = vsub.f32 %v72, %v167
    %v303 = vsub.f32 %v73, %v167
    %v304 = vsub.f32 %v74, %v167
    %v305 = vsub.f32 %v75, %v168
    %v306 = vsub.f32 %v76, %v168
    %v307 = vsub.f32 %v77, %v168
    %v308 = vsub.f32 %v78, %v168
    %v309 = vsub.f32 %v79, %v168
    %v310 = vsub.f32 %v80, %v168
    %v311 = vsub.f32 %v81, %v168
    %v312 = vsub.f32 %v82, %v168
    %v313 = vsub.f32 %v83, %v168
    %v314 = vsub.f32 %v84, %v168
    %v315 = vsub.f32 %v85, %v168
    %v316 = vsub.f32 %v86, %v168
    %v317 = vsub.f32 %v87, %v168
    %v318 = vsub.f32 %v88, %v168
    %v319 = vsub.f32 %v89, %v168
    %v320 = vsub.f32 %v90, %v168
    %v321 = vunpack.c.l.bf16 %v169
    %323 = vset.pattern.permute.xlu0 0
    %324 = vperm.xlu0 %323, %v289
    %v325 = vpop.permute.xlu0 %324
    %328 = vset.pattern.permute.xlu0 0
    %329 = vperm.xlu0 %328, %v290
    %v330 = vpop.permute.xlu0 %329
    %333 = vset.pattern.permute.xlu0 0
    %334 = vperm.xlu0 %333, %v291
    %v335 = vpop.permute.xlu0 %334
    %338 = vset.pattern.permute.xlu0 0
    %339 = vperm.xlu0 %338, %v292
    %v340 = vpop.permute.xlu0 %339
    %343 = vset.pattern.permute.xlu0 0
    %344 = vperm.xlu0 %343, %v293
    %v345 = vpop.permute.xlu0 %344
    %348 = vset.pattern.permute.xlu0 0
    %349 = vperm.xlu0 %348, %v294
    %v350 = vpop.permute.xlu0 %349
    %353 = vset.pattern.permute.xlu0 0
    %354 = vperm.xlu0 %353, %v295
    %v355 = vpop.permute.xlu0 %354
    %358 = vset.pattern.permute.xlu0 0
    %359 = vperm.xlu0 %358, %v296
    %v360 = vpop.permute.xlu0 %359
    %363 = vset.pattern.permute.xlu0 0
    %364 = vperm.xlu0 %363, %v297
    %v365 = vpop.permute.xlu0 %364
    %368 = vset.pattern.permute.xlu0 0
    %369 = vperm.xlu0 %368, %v298
    %v370 = vpop.permute.xlu0 %369
    %373 = vset.pattern.permute.xlu0 0
    %374 = vperm.xlu0 %373, %v299
    %v375 = vpop.permute.xlu0 %374
    %378 = vset.pattern.permute.xlu0 0
    %379 = vperm.xlu0 %378, %v300
    %v380 = vpop.permute.xlu0 %379
    %383 = vset.pattern.permute.xlu0 0
    %384 = vperm.xlu0 %383, %v301
    %v385 = vpop.permute.xlu0 %384
    %388 = vset.pattern.permute.xlu0 0
    %389 = vperm.xlu0 %388, %v302
    %v390 = vpop.permute.xlu0 %389
    %393 = vset.pattern.permute.xlu0 0
    %394 = vperm.xlu0 %393, %v303
    %v395 = vpop.permute.xlu0 %394
    %398 = vset.pattern.permute.xlu0 0
    %399 = vperm.xlu0 %398, %v304
    %v400 = vpop.permute.xlu0 %399
    %403 = vset.pattern.permute.xlu0 0
    %404 = vperm.xlu0 %403, %v305
    %v405 = vpop.permute.xlu0 %404
    %408 = vset.pattern.permute.xlu0 0
    %409 = vperm.xlu0 %408, %v306
    %v410 = vpop.permute.xlu0 %409
    %413 = vset.pattern.permute.xlu0 0
    %414 = vperm.xlu0 %413, %v307
    %v415 = vpop.permute.xlu0 %414
    %418 = vset.pattern.permute.xlu0 0
    %419 = vperm.xlu0 %418, %v308
    %v420 = vpop.permute.xlu0 %419
    %423 = vset.pattern.permute.xlu0 0
    %424 = vperm.xlu0 %423, %v309
    %v425 = vpop.permute.xlu0 %424
    %428 = vset.pattern.permute.xlu0 0
    %429 = vperm.xlu0 %428, %v310
    %v430 = vpop.permute.xlu0 %429
    %433 = vset.pattern.permute.xlu0 0
    %434 = vperm.xlu0 %433, %v311
    %v435 = vpop.permute.xlu0 %434
    %438 = vset.pattern.permute.xlu0 0
    %439 = vperm.xlu0 %438, %v312
    %v440 = vpop.permute.xlu0 %439
    %443 = vset.pattern.permute.xlu0 0
    %444 = vperm.xlu0 %443, %v313
    %v445 = vpop.permute.xlu0 %444
    %448 = vset.pattern.permute.xlu0 0
    %449 = vperm.xlu0 %448, %v314
    %v450 = vpop.permute.xlu0 %449
    %453 = vset.pattern.permute.xlu0 0
    %454 = vperm.xlu0 %453, %v315
    %v455 = vpop.permute.xlu0 %454
    %458 = vset.pattern.permute.xlu0 0
    %459 = vperm.xlu0 %458, %v316
    %v460 = vpop.permute.xlu0 %459
    %463 = vset.pattern.permute.xlu0 0
    %464 = vperm.xlu0 %463, %v317
    %v465 = vpop.permute.xlu0 %464
    %468 = vset.pattern.permute.xlu0 0
    %469 = vperm.xlu0 %468, %v318
    %v470 = vpop.permute.xlu0 %469
    %473 = vset.pattern.permute.xlu0 0
    %474 = vperm.xlu0 %473, %v319
    %v475 = vpop.permute.xlu0 %474
    %478 = vset.pattern.permute.xlu0 0
    %479 = vperm.xlu0 %478, %v320
    %v480 = vpop.permute.xlu0 %479
    %v482 = vlaneseq
    %v483 = vshrl.u32 %v482, 7
    %v484 = vsub.s32 0, %v483
    %v485 = vrot.slane %v321, %v484
    %v486 = vmul.f32 %v325, %v485
    %v487 = vmul.f32 %v330, %v485
    %v488 = vmul.f32 %v335, %v485
    %v489 = vmul.f32 %v340, %v485
    %v490 = vmul.f32 %v345, %v485
    %v491 = vmul.f32 %v350, %v485
    %v492 = vmul.f32 %v355, %v485
    %v493 = vmul.f32 %v360, %v485
    %v494 = vmul.f32 %v365, %v485
    %v495 = vmul.f32 %v370, %v485
    %v496 = vmul.f32 %v375, %v485
    %v497 = vmul.f32 %v380, %v485
    %v498 = vmul.f32 %v385, %v485
    %v499 = vmul.f32 %v390, %v485
    %v500 = vmul.f32 %v395, %v485
    %v501 = vmul.f32 %v400, %v485
    %v502 = vmul.f32 %v405, %v485
    %v503 = vmul.f32 %v410, %v485
    %v504 = vmul.f32 %v415, %v485
    %v505 = vmul.f32 %v420, %v485
    %v506 = vmul.f32 %v425, %v485
    %v507 = vmul.f32 %v430, %v485
    %v508 = vmul.f32 %v435, %v485
    %v509 = vmul.f32 %v440, %v485
    %v510 = vmul.f32 %v445, %v485
    %v511 = vmul.f32 %v450, %v485
    %v512 = vmul.f32 %v455, %v485
    %v513 = vmul.f32 %v460, %v485
    %v514 = vmul.f32 %v465, %v485
    %v515 = vmul.f32 %v470, %v485
    %v516 = vmul.f32 %v475, %v485
    %v517 = vmul.f32 %v480, %v485
    %518 = vset.pattern.permute.xlu0 1
    %519 = vperm.xlu0 %518, %v289
    %v520 = vpop.permute.xlu0 %519
    %522 = vset.pattern.permute.xlu0 1
    %523 = vperm.xlu0 %522, %v290
    %v524 = vpop.permute.xlu0 %523
    %526 = vset.pattern.permute.xlu0 1
    %527 = vperm.xlu0 %526, %v291
    %v528 = vpop.permute.xlu0 %527
    %530 = vset.pattern.permute.xlu0 1
    %531 = vperm.xlu0 %530, %v292
    %v532 = vpop.permute.xlu0 %531
    %534 = vset.pattern.permute.xlu0 1
    %535 = vperm.xlu0 %534, %v293
    %v536 = vpop.permute.xlu0 %535
    %538 = vset.pattern.permute.xlu0 1
    %539 = vperm.xlu0 %538, %v294
    %v540 = vpop.permute.xlu0 %539
    %542 = vset.pattern.permute.xlu0 1
    %543 = vperm.xlu0 %542, %v295
    %v544 = vpop.permute.xlu0 %543
    %546 = vset.pattern.permute.xlu0 1
    %547 = vperm.xlu0 %546, %v296
    %v548 = vpop.permute.xlu0 %547
    %550 = vset.pattern.permute.xlu0 1
    %551 = vperm.xlu0 %550, %v297
    %v552 = vpop.permute.xlu0 %551
    %554 = vset.pattern.permute.xlu0 1
    %555 = vperm.xlu0 %554, %v298
    %v556 = vpop.permute.xlu0 %555
    %558 = vset.pattern.permute.xlu0 1
    %559 = vperm.xlu0 %558, %v299
    %v560 = vpop.permute.xlu0 %559
    %562 = vset.pattern.permute.xlu0 1
    %563 = vperm.xlu0 %562, %v300
    %v564 = vpop.permute.xlu0 %563
    %566 = vset.pattern.permute.xlu0 1
    %567 = vperm.xlu0 %566, %v301
    %v568 = vpop.permute.xlu0 %567
    %570 = vset.pattern.permute.xlu0 1
    %571 = vperm.xlu0 %570, %v302
    %v572 = vpop.permute.xlu0 %571
    %574 = vset.pattern.permute.xlu0 1
    %575 = vperm.xlu0 %574, %v303
    %v576 = vpop.permute.xlu0 %575
    %578 = vset.pattern.permute.xlu0 1
    %579 = vperm.xlu0 %578, %v304
    %v580 = vpop.permute.xlu0 %579
    %582 = vset.pattern.permute.xlu0 1
    %583 = vperm.xlu0 %582, %v305
    %v584 = vpop.permute.xlu0 %583
    %586 = vset.pattern.permute.xlu0 1
    %587 = vperm.xlu0 %586, %v306
    %v588 = vpop.permute.xlu0 %587
    %590 = vset.pattern.permute.xlu0 1
    %591 = vperm.xlu0 %590, %v307
    %v592 = vpop.permute.xlu0 %591
    %594 = vset.pattern.permute.xlu0 1
    %595 = vperm.xlu0 %594, %v308
    %v596 = vpop.permute.xlu0 %595
    %598 = vset.pattern.permute.xlu0 1
    %599 = vperm.xlu0 %598, %v309
    %v600 = vpop.permute.xlu0 %599
    %602 = vset.pattern.permute.xlu0 1
    %603 = vperm.xlu0 %602, %v310
    %v604 = vpop.permute.xlu0 %603
    %606 = vset.pattern.permute.xlu0 1
    %607 = vperm.xlu0 %606, %v311
    %v608 = vpop.permute.xlu0 %607
    %610 = vset.pattern.permute.xlu0 1
    %611 = vperm.xlu0 %610, %v312
    %v612 = vpop.permute.xlu0 %611
    %614 = vset.pattern.permute.xlu0 1
    %615 = vperm.xlu0 %614, %v313
    %v616 = vpop.permute.xlu0 %615
    %618 = vset.pattern.permute.xlu0 1
    %619 = vperm.xlu0 %618, %v314
    %v620 = vpop.permute.xlu0 %619
    %622 = vset.pattern.permute.xlu0 1
    %623 = vperm.xlu0 %622, %v315
    %v624 = vpop.permute.xlu0 %623
    %626 = vset.pattern.permute.xlu0 1
    %627 = vperm.xlu0 %626, %v316
    %v628 = vpop.permute.xlu0 %627
    %630 = vset.pattern.permute.xlu0 1
    %631 = vperm.xlu0 %630, %v317
    %v632 = vpop.permute.xlu0 %631
    %634 = vset.pattern.permute.xlu0 1
    %635 = vperm.xlu0 %634, %v318
    %v636 = vpop.permute.xlu0 %635
    %638 = vset.pattern.permute.xlu0 1
    %639 = vperm.xlu0 %638, %v319
    %v640 = vpop.permute.xlu0 %639
    %642 = vset.pattern.permute.xlu0 1
    %643 = vperm.xlu0 %642, %v320
    %v644 = vpop.permute.xlu0 %643
    %v646 = vlaneseq
    %v647 = vshrl.u32 %v646, 7
    %v648 = vsub.s32 1, %v647
    %v649 = vrot.slane %v321, %v648
    %v650 = vmul.f32 %v520, %v649
    %v651 = vmul.f32 %v524, %v649
    %v652 = vmul.f32 %v528, %v649
    %v653 = vmul.f32 %v532, %v649
    %v654 = vmul.f32 %v536, %v649
    %v655 = vmul.f32 %v540, %v649
    %v656 = vmul.f32 %v544, %v649
    %v657 = vmul.f32 %v548, %v649
    %v658 = vmul.f32 %v552, %v649
    %v659 = vmul.f32 %v556, %v649
    %v660 = vmul.f32 %v560, %v649
    %v661 = vmul.f32 %v564, %v649
    %v662 = vmul.f32 %v568, %v649
    %v663 = vmul.f32 %v572, %v649
    %v664 = vmul.f32 %v576, %v649
    %v665 = vmul.f32 %v580, %v649
    %v666 = vmul.f32 %v584, %v649
    %v667 = vmul.f32 %v588, %v649
    %v668 = vmul.f32 %v592, %v649
    %v669 = vmul.f32 %v596, %v649
    %v670 = vmul.f32 %v600, %v649
    %v671 = vmul.f32 %v604, %v649
    %v672 = vmul.f32 %v608, %v649
    %v673 = vmul.f32 %v612, %v649
    %v674 = vmul.f32 %v616, %v649
    %v675 = vmul.f32 %v620, %v649
    %v676 = vmul.f32 %v624, %v649
    %v677 = vmul.f32 %v628, %v649
    %v678 = vmul.f32 %v632, %v649
    %v679 = vmul.f32 %v636, %v649
    %v680 = vmul.f32 %v640, %v649
    %v681 = vmul.f32 %v644, %v649
    %v682 = vadd.f32 %v486, %v650
    %v683 = vadd.f32 %v487, %v651
    %v684 = vadd.f32 %v488, %v652
    %v685 = vadd.f32 %v489, %v653
    %v686 = vadd.f32 %v490, %v654
    %v687 = vadd.f32 %v491, %v655
    %v688 = vadd.f32 %v492, %v656
    %v689 = vadd.f32 %v493, %v657
    %v690 = vadd.f32 %v494, %v658
    %v691 = vadd.f32 %v495, %v659
    %v692 = vadd.f32 %v496, %v660
    %v693 = vadd.f32 %v497, %v661
    %v694 = vadd.f32 %v498, %v662
    %v695 = vadd.f32 %v499, %v663
    %v696 = vadd.f32 %v500, %v664
    %v697 = vadd.f32 %v501, %v665
    %v698 = vadd.f32 %v502, %v666
    %v699 = vadd.f32 %v503, %v667
    %v700 = vadd.f32 %v504, %v668
    %v701 = vadd.f32 %v505, %v669
    %v702 = vadd.f32 %v506, %v670
    %v703 = vadd.f32 %v507, %v671
    %v704 = vadd.f32 %v508, %v672
    %v705 = vadd.f32 %v509, %v673
    %v706 = vadd.f32 %v510, %v674
    %v707 = vadd.f32 %v511, %v675
    %v708 = vadd.f32 %v512, %v676
    %v709 = vadd.f32 %v513, %v677
    %v710 = vadd.f32 %v514, %v678
    %v711 = vadd.f32 %v515, %v679
    %v712 = vadd.f32 %v516, %v680
    %v713 = vadd.f32 %v517, %v681
    %714 = vset.pattern.permute.xlu0 2
    %715 = vperm.xlu0 %714, %v289
    %v716 = vpop.permute.xlu0 %715
    %718 = vset.pattern.permute.xlu0 2
    %719 = vperm.xlu0 %718, %v290
    %v720 = vpop.permute.xlu0 %719
    %722 = vset.pattern.permute.xlu0 2
    %723 = vperm.xlu0 %722, %v291
    %v724 = vpop.permute.xlu0 %723
    %726 = vset.pattern.permute.xlu0 2
    %727 = vperm.xlu0 %726, %v292
    %v728 = vpop.permute.xlu0 %727
    %730 = vset.pattern.permute.xlu0 2
    %731 = vperm.xlu0 %730, %v293
    %v732 = vpop.permute.xlu0 %731
    %734 = vset.pattern.permute.xlu0 2
    %735 = vperm.xlu0 %734, %v294
    %v736 = vpop.permute.xlu0 %735
    %738 = vset.pattern.permute.xlu0 2
    %739 = vperm.xlu0 %738, %v295
    %v740 = vpop.permute.xlu0 %739
    %742 = vset.pattern.permute.xlu0 2
    %743 = vperm.xlu0 %742, %v296
    %v744 = vpop.permute.xlu0 %743
    %746 = vset.pattern.permute.xlu0 2
    %747 = vperm.xlu0 %746, %v297
    %v748 = vpop.permute.xlu0 %747
    %750 = vset.pattern.permute.xlu0 2
    %751 = vperm.xlu0 %750, %v298
    %v752 = vpop.permute.xlu0 %751
    %754 = vset.pattern.permute.xlu0 2
    %755 = vperm.xlu0 %754, %v299
    %v756 = vpop.permute.xlu0 %755
    %758 = vset.pattern.permute.xlu0 2
    %759 = vperm.xlu0 %758, %v300
    %v760 = vpop.permute.xlu0 %759
    %762 = vset.pattern.permute.xlu0 2
    %763 = vperm.xlu0 %762, %v301
    %v764 = vpop.permute.xlu0 %763
    %766 = vset.pattern.permute.xlu0 2
    %767 = vperm.xlu0 %766, %v302
    %v768 = vpop.permute.xlu0 %767
    %770 = vset.pattern.permute.xlu0 2
    %771 = vperm.xlu0 %770, %v303
    %v772 = vpop.permute.xlu0 %771
    %774 = vset.pattern.permute.xlu0 2
    %775 = vperm.xlu0 %774, %v304
    %v776 = vpop.permute.xlu0 %775
    %778 = vset.pattern.permute.xlu0 2
    %779 = vperm.xlu0 %778, %v305
    %v780 = vpop.permute.xlu0 %779
    %782 = vset.pattern.permute.xlu0 2
    %783 = vperm.xlu0 %782, %v306
    %v784 = vpop.permute.xlu0 %783
    %786 = vset.pattern.permute.xlu0 2
    %787 = vperm.xlu0 %786, %v307
    %v788 = vpop.permute.xlu0 %787
    %790 = vset.pattern.permute.xlu0 2
    %791 = vperm.xlu0 %790, %v308
    %v792 = vpop.permute.xlu0 %791
    %794 = vset.pattern.permute.xlu0 2
    %795 = vperm.xlu0 %794, %v309
    %v796 = vpop.permute.xlu0 %795
    %798 = vset.pattern.permute.xlu0 2
    %799 = vperm.xlu0 %798, %v310
    %v800 = vpop.permute.xlu0 %799
    %802 = vset.pattern.permute.xlu0 2
    %803 = vperm.xlu0 %802, %v311
    %v804 = vpop.permute.xlu0 %803
    %806 = vset.pattern.permute.xlu0 2
    %807 = vperm.xlu0 %806, %v312
    %v808 = vpop.permute.xlu0 %807
    %810 = vset.pattern.permute.xlu0 2
    %811 = vperm.xlu0 %810, %v313
    %v812 = vpop.permute.xlu0 %811
    %814 = vset.pattern.permute.xlu0 2
    %815 = vperm.xlu0 %814, %v314
    %v816 = vpop.permute.xlu0 %815
    %818 = vset.pattern.permute.xlu0 2
    %819 = vperm.xlu0 %818, %v315
    %v820 = vpop.permute.xlu0 %819
    %822 = vset.pattern.permute.xlu0 2
    %823 = vperm.xlu0 %822, %v316
    %v824 = vpop.permute.xlu0 %823
    %826 = vset.pattern.permute.xlu0 2
    %827 = vperm.xlu0 %826, %v317
    %v828 = vpop.permute.xlu0 %827
    %830 = vset.pattern.permute.xlu0 2
    %831 = vperm.xlu0 %830, %v318
    %v832 = vpop.permute.xlu0 %831
    %834 = vset.pattern.permute.xlu0 2
    %835 = vperm.xlu0 %834, %v319
    %v836 = vpop.permute.xlu0 %835
    %838 = vset.pattern.permute.xlu0 2
    %839 = vperm.xlu0 %838, %v320
    %v840 = vpop.permute.xlu0 %839
    %v842 = vlaneseq
    %v843 = vshrl.u32 %v842, 7
    %v844 = vsub.s32 2, %v843
    %v845 = vrot.slane %v321, %v844
    %v846 = vmul.f32 %v716, %v845
    %v847 = vmul.f32 %v720, %v845
    %v848 = vmul.f32 %v724, %v845
    %v849 = vmul.f32 %v728, %v845
    %v850 = vmul.f32 %v732, %v845
    %v851 = vmul.f32 %v736, %v845
    %v852 = vmul.f32 %v740, %v845
    %v853 = vmul.f32 %v744, %v845
    %v854 = vmul.f32 %v748, %v845
    %v855 = vmul.f32 %v752, %v845
    %v856 = vmul.f32 %v756, %v845
    %v857 = vmul.f32 %v760, %v845
    %v858 = vmul.f32 %v764, %v845
    %v859 = vmul.f32 %v768, %v845
    %v860 = vmul.f32 %v772, %v845
    %v861 = vmul.f32 %v776, %v845
    %v862 = vmul.f32 %v780, %v845
    %v863 = vmul.f32 %v784, %v845
    %v864 = vmul.f32 %v788, %v845
    %v865 = vmul.f32 %v792, %v845
    %v866 = vmul.f32 %v796, %v845
    %v867 = vmul.f32 %v800, %v845
    %v868 = vmul.f32 %v804, %v845
    %v869 = vmul.f32 %v808, %v845
    %v870 = vmul.f32 %v812, %v845
    %v871 = vmul.f32 %v816, %v845
    %v872 = vmul.f32 %v820, %v845
    %v873 = vmul.f32 %v824, %v845
    %v874 = vmul.f32 %v828, %v845
    %v875 = vmul.f32 %v832, %v845
    %v876 = vmul.f32 %v836, %v845
    %v877 = vmul.f32 %v840, %v845
    %v878 = vadd.f32 %v682, %v846
    %v879 = vadd.f32 %v683, %v847
    %v880 = vadd.f32 %v684, %v848
    %v881 = vadd.f32 %v685, %v849
    %v882 = vadd.f32 %v686, %v850
    %v883 = vadd.f32 %v687, %v851
    %v884 = vadd.f32 %v688, %v852
    %v885 = vadd.f32 %v689, %v853
    %v886 = vadd.f32 %v690, %v854
    %v887 = vadd.f32 %v691, %v855
    %v888 = vadd.f32 %v692, %v856
    %v889 = vadd.f32 %v693, %v857
    %v890 = vadd.f32 %v694, %v858
    %v891 = vadd.f32 %v695, %v859
    %v892 = vadd.f32 %v696, %v860
    %v893 = vadd.f32 %v697, %v861
    %v894 = vadd.f32 %v698, %v862
    %v895 = vadd.f32 %v699, %v863
    %v896 = vadd.f32 %v700, %v864
    %v897 = vadd.f32 %v701, %v865
    %v898 = vadd.f32 %v702, %v866
    %v899 = vadd.f32 %v703, %v867
    %v900 = vadd.f32 %v704, %v868
    %v901 = vadd.f32 %v705, %v869
    %v902 = vadd.f32 %v706, %v870
    %v903 = vadd.f32 %v707, %v871
    %v904 = vadd.f32 %v708, %v872
    %v905 = vadd.f32 %v709, %v873
    %v906 = vadd.f32 %v710, %v874
    %v907 = vadd.f32 %v711, %v875
    %v908 = vadd.f32 %v712, %v876
    %v909 = vadd.f32 %v713, %v877
    %v910 = vunpack.c.l.bf16 %v170
    %v911 = vlaneseq
    %v912 = vshrl.u32 %v911, 7
    %v913 = vsub.s32 3, %v912
    %v914 = vrot.slane %v910, %v913
    %v915 = vadd.f32 %v878, %v914
    %v916 = vadd.f32 %v879, %v914
    %v917 = vadd.f32 %v880, %v914
    %v918 = vadd.f32 %v881, %v914
    %v919 = vadd.f32 %v882, %v914
    %v920 = vadd.f32 %v883, %v914
    %v921 = vadd.f32 %v884, %v914
    %v922 = vadd.f32 %v885, %v914
    %v923 = vadd.f32 %v886, %v914
    %v924 = vadd.f32 %v887, %v914
    %v925 = vadd.f32 %v888, %v914
    %v926 = vadd.f32 %v889, %v914
    %v927 = vadd.f32 %v890, %v914
    %v928 = vadd.f32 %v891, %v914
    %v929 = vadd.f32 %v892, %v914
    %v930 = vadd.f32 %v893, %v914
    %v931 = vadd.f32 %v894, %v914
    %v932 = vadd.f32 %v895, %v914
    %v933 = vadd.f32 %v896, %v914
    %v934 = vadd.f32 %v897, %v914
    %v935 = vadd.f32 %v898, %v914
    %v936 = vadd.f32 %v899, %v914
    %v937 = vadd.f32 %v900, %v914
    %v938 = vadd.f32 %v901, %v914
    %v939 = vadd.f32 %v902, %v914
    %v940 = vadd.f32 %v903, %v914
    %v941 = vadd.f32 %v904, %v914
    %v942 = vadd.f32 %v905, %v914
    %v943 = vadd.f32 %v906, %v914
    %v944 = vadd.f32 %v907, %v914
    %v945 = vadd.f32 %v908, %v914
    %v946 = vadd.f32 %v909, %v914
    %v947 = vmax.f32 %v915, 0.0
    %v948 = vmax.f32 %v916, 0.0
    %v949 = vmax.f32 %v917, 0.0
    %v950 = vmax.f32 %v918, 0.0
    %v951 = vmax.f32 %v919, 0.0
    %v952 = vmax.f32 %v920, 0.0
    %v953 = vmax.f32 %v921, 0.0
    %v954 = vmax.f32 %v922, 0.0
    %v955 = vmax.f32 %v923, 0.0
    %v956 = vmax.f32 %v924, 0.0
    %v957 = vmax.f32 %v925, 0.0
    %v958 = vmax.f32 %v926, 0.0
    %v959 = vmax.f32 %v927, 0.0
    %v960 = vmax.f32 %v928, 0.0
    %v961 = vmax.f32 %v929, 0.0
    %v962 = vmax.f32 %v930, 0.0
    %v963 = vmax.f32 %v931, 0.0
    %v964 = vmax.f32 %v932, 0.0
    %v965 = vmax.f32 %v933, 0.0
    %v966 = vmax.f32 %v934, 0.0
    %v967 = vmax.f32 %v935, 0.0
    %v968 = vmax.f32 %v936, 0.0
    %v969 = vmax.f32 %v937, 0.0
    %v970 = vmax.f32 %v938, 0.0
    %v971 = vmax.f32 %v939, 0.0
    %v972 = vmax.f32 %v940, 0.0
    %v973 = vmax.f32 %v941, 0.0
    %v974 = vmax.f32 %v942, 0.0
    %v975 = vmax.f32 %v943, 0.0
    %v976 = vmax.f32 %v944, 0.0
    %v977 = vmax.f32 %v945, 0.0
    %v978 = vmax.f32 %v946, 0.0
    %v979 = vpack.c.bf16 %v948, %v947
    %v980 = vpack.c.bf16 %v950, %v949
    %v981 = vpack.c.bf16 %v952, %v951
    %v982 = vpack.c.bf16 %v954, %v953
    %v983 = vpack.c.bf16 %v956, %v955
    %v984 = vpack.c.bf16 %v958, %v957
    %v985 = vpack.c.bf16 %v960, %v959
    %v986 = vpack.c.bf16 %v962, %v961
    %v987 = vpack.c.bf16 %v964, %v963
    %v988 = vpack.c.bf16 %v966, %v965
    %v989 = vpack.c.bf16 %v968, %v967
    %v990 = vpack.c.bf16 %v970, %v969
    %v991 = vpack.c.bf16 %v972, %v971
    %v992 = vpack.c.bf16 %v974, %v973
    %v993 = vpack.c.bf16 %v976, %v975
    %v994 = vpack.c.bf16 %v978, %v977
    %v995 = vunpack.c.l.bf16 %v187
    %v996 = vlaneseq
    %v997 = vshrl.u32 %v996, 7
    %v998 = vsub.s32 0, %v997
    %v999 = vrot.slane %v995, %v998
    %v1016 = vunpack.c.l.b16 %v171
    %v1017 = vunpack.c.l.b16 %v172
    %v1018 = vunpack.c.l.b16 %v173
    %v1019 = vunpack.c.l.b16 %v174
    %v1020 = vunpack.c.l.b16 %v175
    %v1021 = vunpack.c.l.b16 %v176
    %v1022 = vunpack.c.l.b16 %v177
    %v1023 = vunpack.c.l.b16 %v178
    %v1024 = vunpack.c.l.b16 %v179
    %v1025 = vunpack.c.l.b16 %v180
    %v1026 = vunpack.c.l.b16 %v181
    %v1027 = vunpack.c.l.b16 %v182
    %v1028 = vunpack.c.l.b16 %v183
    %v1029 = vunpack.c.l.b16 %v184
    %v1030 = vunpack.c.l.b16 %v185
    %v1031 = vunpack.c.l.b16 %v186
    %v1032 = vpack.c.b16 %v1017, %v1016
    %v1033 = vpack.c.b16 %v1019, %v1018
    %v1034 = vpack.c.b16 %v1021, %v1020
    %v1035 = vpack.c.b16 %v1023, %v1022
    %v1036 = vpack.c.b16 %v1025, %v1024
    %v1037 = vpack.c.b16 %v1027, %v1026
    %v1038 = vpack.c.b16 %v1029, %v1028
    %v1039 = vpack.c.b16 %v1031, %v1030
    %1048 = vmatprep.subr.bf16.mxu0 0
    %1049 = vmatpush1.bf16.msra.mxu0 %v1039
    %1050 = vmatprep.subr.bf16.mxu0 0
    %1051 = vmatpush1.bf16.msra.mxu0 %v1038
    %1052 = vmatprep.subr.bf16.mxu0 0
    %1053 = vmatpush1.bf16.msra.mxu0 %v1037
    %1054 = vmatprep.subr.bf16.mxu0 0
    %1055 = vmatpush1.bf16.msra.mxu0 %v1036
    %1056 = vmatprep.subr.bf16.mxu0 0
    %1057 = vmatpush1.bf16.msra.mxu0 %v1035
    %1058 = vmatprep.subr.bf16.mxu0 0
    %1059 = vmatpush1.bf16.msra.mxu0 %v1034
    %1060 = vmatprep.subr.bf16.mxu0 0
    %1061 = vmatpush1.bf16.msra.mxu0 %v1033
    %1062 = vmatprep.subr.bf16.mxu0 0
    %1063 = vmatpush1.bf16.msra.mxu0 %v1032
    %1064 = vmatprep.subr.bf16.mxu0 0
    %1065 = vmatpush2.bf16.msra.mxu0 0
    %1066 = vmatprep.subr.bf16.mxu0 0
    %1067 = vmatpush2.bf16.msra.mxu0 0
    %1068 = vmatprep.subr.bf16.mxu0 0
    %1069 = vmatpush2.bf16.msra.mxu0 0
    %1070 = vmatprep.subr.bf16.mxu0 0
    %1071 = vmatpush2.bf16.msra.mxu0 0
    %1072 = vmatprep.subr.bf16.mxu0 0
    %1073 = vmatpush2.bf16.msra.mxu0 0
    %1074 = vmatprep.subr.bf16.mxu0 0
    %1075 = vmatpush2.bf16.msra.mxu0 0
    %1076 = vmatprep.subr.bf16.mxu0 0
    %1077 = vmatpush2.bf16.msra.mxu0 0
    %1078 = vmatprep.subr.bf16.mxu0 0
    %1079 = vmatpush2.bf16.msra.mxu0 0
    %1080 = vmatprep.mubr.bf16.mxu0 0
    %1081 = vmatmul.mubr.bf16.gmra.mxu0 %v979
    %v1082 = vpop.f32.mrf.mxu0
    %v1083 = vadd.f32 %v999, %v1082
    %v1084 = vpop.f32.mrf.mxu0
    %v1085 = vpop.f32.mrf.mxu0
    %v1086 = vadd.f32 %v999, %v1085
    %v1087 = vpop.f32.mrf.mxu0
    %1088 = vmatprep.mubr.bf16.mxu0 0
    %1089 = vmatmul.mubr.bf16.gmra.mxu0 %v980
    %v1090 = vpop.f32.mrf.mxu0
    %v1091 = vadd.f32 %v999, %v1090
    %v1092 = vpop.f32.mrf.mxu0
    %v1093 = vpop.f32.mrf.mxu0
    %v1094 = vadd.f32 %v999, %v1093
    %v1095 = vpop.f32.mrf.mxu0
    %1096 = vmatprep.mubr.bf16.mxu0 0
    %1097 = vmatmul.mubr.bf16.gmra.mxu0 %v981
    %v1098 = vpop.f32.mrf.mxu0
    %v1099 = vadd.f32 %v999, %v1098
    %v1100 = vpop.f32.mrf.mxu0
    %v1101 = vpop.f32.mrf.mxu0
    %v1102 = vadd.f32 %v999, %v1101
    %v1103 = vpop.f32.mrf.mxu0
    %1104 = vmatprep.mubr.bf16.mxu0 0
    %1105 = vmatmul.mubr.bf16.gmra.mxu0 %v982
    %v1106 = vpop.f32.mrf.mxu0
    %v1107 = vadd.f32 %v999, %v1106
    %v1108 = vpop.f32.mrf.mxu0
    %v1109 = vpop.f32.mrf.mxu0
    %v1110 = vadd.f32 %v999, %v1109
    %v1111 = vpop.f32.mrf.mxu0
    %1112 = vmatprep.mubr.bf16.mxu0 0
    %1113 = vmatmul.mubr.bf16.gmra.mxu0 %v983
    %v1114 = vpop.f32.mrf.mxu0
    %v1115 = vadd.f32 %v999, %v1114
    %v1116 = vpop.f32.mrf.mxu0
    %v1117 = vpop.f32.mrf.mxu0
    %v1118 = vadd.f32 %v999, %v1117
    %v1119 = vpop.f32.mrf.mxu0
    %1120 = vmatprep.mubr.bf16.mxu0 0
    %1121 = vmatmul.mubr.bf16.gmra.mxu0 %v984
    %v1122 = vpop.f32.mrf.mxu0
    %v1123 = vadd.f32 %v999, %v1122
    %v1124 = vpop.f32.mrf.mxu0
    %v1125 = vpop.f32.mrf.mxu0
    %v1126 = vadd.f32 %v999, %v1125
    %v1127 = vpop.f32.mrf.mxu0
    %1128 = vmatprep.mubr.bf16.mxu0 0
    %1129 = vmatmul.mubr.bf16.gmra.mxu0 %v985
    %v1130 = vpop.f32.mrf.mxu0
    %v1131 = vadd.f32 %v999, %v1130
    %v1132 = vpop.f32.mrf.mxu0
    %v1133 = vpop.f32.mrf.mxu0
    %v1134 = vadd.f32 %v999, %v1133
    %v1135 = vpop.f32.mrf.mxu0
    %1136 = vmatprep.mubr.bf16.mxu0 0
    %1137 = vmatmul.mubr.bf16.gmra.mxu0 %v986
    %v1138 = vpop.f32.mrf.mxu0
    %v1139 = vadd.f32 %v999, %v1138
    %v1140 = vpop.f32.mrf.mxu0
    %v1141 = vpop.f32.mrf.mxu0
    %v1142 = vadd.f32 %v999, %v1141
    %v1143 = vpop.f32.mrf.mxu0
    %1144 = vmatprep.mubr.bf16.mxu0 0
    %1145 = vmatmul.mubr.bf16.gmra.mxu0 %v987
    %v1146 = vpop.f32.mrf.mxu0
    %v1147 = vadd.f32 %v999, %v1146
    %v1148 = vpop.f32.mrf.mxu0
    %v1149 = vpop.f32.mrf.mxu0
    %v1150 = vadd.f32 %v999, %v1149
    %v1151 = vpop.f32.mrf.mxu0
    %1152 = vmatprep.mubr.bf16.mxu0 0
    %1153 = vmatmul.mubr.bf16.gmra.mxu0 %v988
    %v1154 = vpop.f32.mrf.mxu0
    %v1155 = vadd.f32 %v999, %v1154
    %v1156 = vpop.f32.mrf.mxu0
    %v1157 = vpop.f32.mrf.mxu0
    %v1158 = vadd.f32 %v999, %v1157
    %v1159 = vpop.f32.mrf.mxu0
    %1160 = vmatprep.mubr.bf16.mxu0 0
    %1161 = vmatmul.mubr.bf16.gmra.mxu0 %v989
    %v1162 = vpop.f32.mrf.mxu0
    %v1163 = vadd.f32 %v999, %v1162
    %v1164 = vpop.f32.mrf.mxu0
    %v1165 = vpop.f32.mrf.mxu0
    %v1166 = vadd.f32 %v999, %v1165
    %v1167 = vpop.f32.mrf.mxu0
    %1168 = vmatprep.mubr.bf16.mxu0 0
    %1169 = vmatmul.mubr.bf16.gmra.mxu0 %v990
    %v1170 = vpop.f32.mrf.mxu0
    %v1171 = vadd.f32 %v999, %v1170
    %v1172 = vpop.f32.mrf.mxu0
    %v1173 = vpop.f32.mrf.mxu0
    %v1174 = vadd.f32 %v999, %v1173
    %v1175 = vpop.f32.mrf.mxu0
    %1176 = vmatprep.mubr.bf16.mxu0 0
    %1177 = vmatmul.mubr.bf16.gmra.mxu0 %v991
    %v1178 = vpop.f32.mrf.mxu0
    %v1179 = vadd.f32 %v999, %v1178
    %v1180 = vpop.f32.mrf.mxu0
    %v1181 = vpop.f32.mrf.mxu0
    %v1182 = vadd.f32 %v999, %v1181
    %v1183 = vpop.f32.mrf.mxu0
    %1184 = vmatprep.mubr.bf16.mxu0 0
    %1185 = vmatmul.mubr.bf16.gmra.mxu0 %v992
    %v1186 = vpop.f32.mrf.mxu0
    %v1187 = vadd.f32 %v999, %v1186
    %v1188 = vpop.f32.mrf.mxu0
    %v1189 = vpop.f32.mrf.mxu0
    %v1190 = vadd.f32 %v999, %v1189
    %v1191 = vpop.f32.mrf.mxu0
    %1192 = vmatprep.mubr.bf16.mxu0 0
    %1193 = vmatmul.mubr.bf16.gmra.mxu0 %v993
    %v1194 = vpop.f32.mrf.mxu0
    %v1195 = vadd.f32 %v999, %v1194
    %v1196 = vpop.f32.mrf.mxu0
    %v1197 = vpop.f32.mrf.mxu0
    %v1198 = vadd.f32 %v999, %v1197
    %v1199 = vpop.f32.mrf.mxu0
    %1200 = vmatprep.mubr.bf16.mxu0 0
    %1201 = vmatmul.mubr.bf16.gmra.mxu0 %v994
    %v1202 = vpop.f32.mrf.mxu0
    %v1203 = vadd.f32 %v999, %v1202
    %v1204 = vpop.f32.mrf.mxu0
    %v1205 = vpop.f32.mrf.mxu0
    %v1206 = vadd.f32 %v999, %v1205
    %v1207 = vpop.f32.mrf.mxu0
    %1208 = vdwg.mxu0
    %v1209 = vmax.f32 %v1083, 0.0
    %v1210 = vmax.f32 %v1086, 0.0
    %v1211 = vmax.f32 %v1091, 0.0
    %v1212 = vmax.f32 %v1094, 0.0
    %v1213 = vmax.f32 %v1099, 0.0
    %v1214 = vmax.f32 %v1102, 0.0
    %v1215 = vmax.f32 %v1107, 0.0
    %v1216 = vmax.f32 %v1110, 0.0
    %v1217 = vmax.f32 %v1115, 0.0
    %v1218 = vmax.f32 %v1118, 0.0
    %v1219 = vmax.f32 %v1123, 0.0
    %v1220 = vmax.f32 %v1126, 0.0
    %v1221 = vmax.f32 %v1131, 0.0
    %v1222 = vmax.f32 %v1134, 0.0
    %v1223 = vmax.f32 %v1139, 0.0
    %v1224 = vmax.f32 %v1142, 0.0
    %v1225 = vmax.f32 %v1147, 0.0
    %v1226 = vmax.f32 %v1150, 0.0
    %v1227 = vmax.f32 %v1155, 0.0
    %v1228 = vmax.f32 %v1158, 0.0
    %v1229 = vmax.f32 %v1163, 0.0
    %v1230 = vmax.f32 %v1166, 0.0
    %v1231 = vmax.f32 %v1171, 0.0
    %v1232 = vmax.f32 %v1174, 0.0
    %v1233 = vmax.f32 %v1179, 0.0
    %v1234 = vmax.f32 %v1182, 0.0
    %v1235 = vmax.f32 %v1187, 0.0
    %v1236 = vmax.f32 %v1190, 0.0
    %v1237 = vmax.f32 %v1195, 0.0
    %v1238 = vmax.f32 %v1198, 0.0
    %v1239 = vmax.f32 %v1203, 0.0
    %v1240 = vmax.f32 %v1206, 0.0
    %v1241 = vpack.c.bf16 %v1210, %v1209
    %v1242 = vpack.c.bf16 %v1212, %v1211
    %v1243 = vpack.c.bf16 %v1214, %v1213
    %v1244 = vpack.c.bf16 %v1216, %v1215
    %v1245 = vpack.c.bf16 %v1218, %v1217
    %v1246 = vpack.c.bf16 %v1220, %v1219
    %v1247 = vpack.c.bf16 %v1222, %v1221
    %v1248 = vpack.c.bf16 %v1224, %v1223
    %v1249 = vpack.c.bf16 %v1226, %v1225
    %v1250 = vpack.c.bf16 %v1228, %v1227
    %v1251 = vpack.c.bf16 %v1230, %v1229
    %v1252 = vpack.c.bf16 %v1232, %v1231
    %v1253 = vpack.c.bf16 %v1234, %v1233
    %v1254 = vpack.c.bf16 %v1236, %v1235
    %v1255 = vpack.c.bf16 %v1238, %v1237
    %v1256 = vpack.c.bf16 %v1240, %v1239
    %v1257 = vunpack.c.l.bf16 %v204
    %v1258 = vunpack.c.h.bf16 %v204
    %v1259 = vlaneseq
    %v1260 = vshrl.u32 %v1259, 7
    %v1261 = vsub.s32 0, %v1260
    %v1262 = vrot.slane %v1257, %v1261
    %v1263 = vlaneseq
    %v1264 = vshrl.u32 %v1263, 7
    %v1265 = vsub.s32 0, %v1264
    %v1266 = vrot.slane %v1258, %v1265
    %v1283 = vunpack.c.l.b16 %v188
    %v1284 = vunpack.c.h.b16 %v188
    %v1285 = vunpack.c.l.b16 %v189
    %v1286 = vunpack.c.h.b16 %v189
    %v1287 = vunpack.c.l.b16 %v190
    %v1288 = vunpack.c.h.b16 %v190
    %v1289 = vunpack.c.l.b16 %v191
    %v1290 = vunpack.c.h.b16 %v191
    %v1291 = vunpack.c.l.b16 %v192
    %v1292 = vunpack.c.h.b16 %v192
    %v1293 = vunpack.c.l.b16 %v193
    %v1294 = vunpack.c.h.b16 %v193
    %v1295 = vunpack.c.l.b16 %v194
    %v1296 = vunpack.c.h.b16 %v194
    %v1297 = vunpack.c.l.b16 %v195
    %v1298 = vunpack.c.h.b16 %v195
    %v1299 = vunpack.c.l.b16 %v196
    %v1300 = vunpack.c.h.b16 %v196
    %v1301 = vunpack.c.l.b16 %v197
    %v1302 = vunpack.c.h.b16 %v197
    %v1303 = vunpack.c.l.b16 %v198
    %v1304 = vunpack.c.h.b16 %v198
    %v1305 = vunpack.c.l.b16 %v199
    %v1306 = vunpack.c.h.b16 %v199
    %v1307 = vunpack.c.l.b16 %v200
    %v1308 = vunpack.c.h.b16 %v200
    %v1309 = vunpack.c.l.b16 %v201
    %v1310 = vunpack.c.h.b16 %v201
    %v1311 = vunpack.c.l.b16 %v202
    %v1312 = vunpack.c.h.b16 %v202
    %v1313 = vunpack.c.l.b16 %v203
    %v1314 = vunpack.c.h.b16 %v203
    %v1315 = vpack.c.b16 %v1285, %v1283
    %v1316 = vpack.c.b16 %v1286, %v1284
    %v1317 = vpack.c.b16 %v1289, %v1287
    %v1318 = vpack.c.b16 %v1290, %v1288
    %v1319 = vpack.c.b16 %v1293, %v1291
    %v1320 = vpack.c.b16 %v1294, %v1292
    %v1321 = vpack.c.b16 %v1297, %v1295
    %v1322 = vpack.c.b16 %v1298, %v1296
    %v1323 = vpack.c.b16 %v1301, %v1299
    %v1324 = vpack.c.b16 %v1302, %v1300
    %v1325 = vpack.c.b16 %v1305, %v1303
    %v1326 = vpack.c.b16 %v1306, %v1304
    %v1327 = vpack.c.b16 %v1309, %v1307
    %v1328 = vpack.c.b16 %v1310, %v1308
    %v1329 = vpack.c.b16 %v1313, %v1311
    %v1330 = vpack.c.b16 %v1314, %v1312
    %1347 = vmatprep.subr.bf16.mxu0 %v1330
    %1348 = vmatpush1.bf16.msra.mxu0 %v1329
    %1349 = vmatprep.subr.bf16.mxu0 %v1328
    %1350 = vmatpush1.bf16.msra.mxu0 %v1327
    %1351 = vmatprep.subr.bf16.mxu0 %v1326
    %1352 = vmatpush1.bf16.msra.mxu0 %v1325
    %1353 = vmatprep.subr.bf16.mxu0 %v1324
    %1354 = vmatpush1.bf16.msra.mxu0 %v1323
    %1355 = vmatprep.subr.bf16.mxu0 %v1322
    %1356 = vmatpush1.bf16.msra.mxu0 %v1321
    %1357 = vmatprep.subr.bf16.mxu0 %v1320
    %1358 = vmatpush1.bf16.msra.mxu0 %v1319
    %1359 = vmatprep.subr.bf16.mxu0 %v1318
    %1360 = vmatpush1.bf16.msra.mxu0 %v1317
    %1361 = vmatprep.subr.bf16.mxu0 %v1316
    %1362 = vmatpush1.bf16.msra.mxu0 %v1315
    %1363 = vmatprep.subr.bf16.mxu0 0
    %1364 = vmatpush2.bf16.msra.mxu0 0
    %1365 = vmatprep.subr.bf16.mxu0 0
    %1366 = vmatpush2.bf16.msra.mxu0 0
    %1367 = vmatprep.subr.bf16.mxu0 0
    %1368 = vmatpush2.bf16.msra.mxu0 0
    %1369 = vmatprep.subr.bf16.mxu0 0
    %1370 = vmatpush2.bf16.msra.mxu0 0
    %1371 = vmatprep.subr.bf16.mxu0 0
    %1372 = vmatpush2.bf16.msra.mxu0 0
    %1373 = vmatprep.subr.bf16.mxu0 0
    %1374 = vmatpush2.bf16.msra.mxu0 0
    %1375 = vmatprep.subr.bf16.mxu0 0
    %1376 = vmatpush2.bf16.msra.mxu0 0
    %1377 = vmatprep.subr.bf16.mxu0 0
    %1378 = vmatpush2.bf16.msra.mxu0 0
    %1379 = vmatprep.mubr.bf16.mxu0 0
    %1380 = vmatmul.mubr.bf16.gmra.mxu0 %v1241
    %v1381 = vpop.f32.mrf.mxu0
    %v1382 = vadd.f32 %v1262, %v1381
    %v1383 = vpop.f32.mrf.mxu0
    %v1384 = vadd.f32 %v1266, %v1383
    %v1385 = vpop.f32.mrf.mxu0
    %v1386 = vadd.f32 %v1262, %v1385
    %v1387 = vpop.f32.mrf.mxu0
    %v1388 = vadd.f32 %v1266, %v1387
    %1389 = vmatprep.mubr.bf16.mxu0 0
    %1390 = vmatmul.mubr.bf16.gmra.mxu0 %v1242
    %v1391 = vpop.f32.mrf.mxu0
    %v1392 = vadd.f32 %v1262, %v1391
    %v1393 = vpop.f32.mrf.mxu0
    %v1394 = vadd.f32 %v1266, %v1393
    %v1395 = vpop.f32.mrf.mxu0
    %v1396 = vadd.f32 %v1262, %v1395
    %v1397 = vpop.f32.mrf.mxu0
    %v1398 = vadd.f32 %v1266, %v1397
    %1399 = vmatprep.mubr.bf16.mxu0 0
    %1400 = vmatmul.mubr.bf16.gmra.mxu0 %v1243
    %v1401 = vpop.f32.mrf.mxu0
    %v1402 = vadd.f32 %v1262, %v1401
    %v1403 = vpop.f32.mrf.mxu0
    %v1404 = vadd.f32 %v1266, %v1403
    %v1405 = vpop.f32.mrf.mxu0
    %v1406 = vadd.f32 %v1262, %v1405
    %v1407 = vpop.f32.mrf.mxu0
    %v1408 = vadd.f32 %v1266, %v1407
    %1409 = vmatprep.mubr.bf16.mxu0 0
    %1410 = vmatmul.mubr.bf16.gmra.mxu0 %v1244
    %v1411 = vpop.f32.mrf.mxu0
    %v1412 = vadd.f32 %v1262, %v1411
    %v1413 = vpop.f32.mrf.mxu0
    %v1414 = vadd.f32 %v1266, %v1413
    %v1415 = vpop.f32.mrf.mxu0
    %v1416 = vadd.f32 %v1262, %v1415
    %v1417 = vpop.f32.mrf.mxu0
    %v1418 = vadd.f32 %v1266, %v1417
    %1419 = vmatprep.mubr.bf16.mxu0 0
    %1420 = vmatmul.mubr.bf16.gmra.mxu0 %v1245
    %v1421 = vpop.f32.mrf.mxu0
    %v1422 = vadd.f32 %v1262, %v1421
    %v1423 = vpop.f32.mrf.mxu0
    %v1424 = vadd.f32 %v1266, %v1423
    %v1425 = vpop.f32.mrf.mxu0
    %v1426 = vadd.f32 %v1262, %v1425
    %v1427 = vpop.f32.mrf.mxu0
    %v1428 = vadd.f32 %v1266, %v1427
    %1429 = vmatprep.mubr.bf16.mxu0 0
    %1430 = vmatmul.mubr.bf16.gmra.mxu0 %v1246
    %v1431 = vpop.f32.mrf.mxu0
    %v1432 = vadd.f32 %v1262, %v1431
    %v1433 = vpop.f32.mrf.mxu0
    %v1434 = vadd.f32 %v1266, %v1433
    %v1435 = vpop.f32.mrf.mxu0
    %v1436 = vadd.f32 %v1262, %v1435
    %v1437 = vpop.f32.mrf.mxu0
    %v1438 = vadd.f32 %v1266, %v1437
    %1439 = vmatprep.mubr.bf16.mxu0 0
    %1440 = vmatmul.mubr.bf16.gmra.mxu0 %v1247
    %v1441 = vpop.f32.mrf.mxu0
    %v1442 = vadd.f32 %v1262, %v1441
    %v1443 = vpop.f32.mrf.mxu0
    %v1444 = vadd.f32 %v1266, %v1443
    %v1445 = vpop.f32.mrf.mxu0
    %v1446 = vadd.f32 %v1262, %v1445
    %v1447 = vpop.f32.mrf.mxu0
    %v1448 = vadd.f32 %v1266, %v1447
    %1449 = vmatprep.mubr.bf16.mxu0 0
    %1450 = vmatmul.mubr.bf16.gmra.mxu0 %v1248
    %v1451 = vpop.f32.mrf.mxu0
    %v1452 = vadd.f32 %v1262, %v1451
    %v1453 = vpop.f32.mrf.mxu0
    %v1454 = vadd.f32 %v1266, %v1453
    %v1455 = vpop.f32.mrf.mxu0
    %v1456 = vadd.f32 %v1262, %v1455
    %v1457 = vpop.f32.mrf.mxu0
    %v1458 = vadd.f32 %v1266, %v1457
    %1459 = vmatprep.mubr.bf16.mxu0 0
    %1460 = vmatmul.mubr.bf16.gmra.mxu0 %v1249
    %v1461 = vpop.f32.mrf.mxu0
    %v1462 = vadd.f32 %v1262, %v1461
    %v1463 = vpop.f32.mrf.mxu0
    %v1464 = vadd.f32 %v1266, %v1463
    %v1465 = vpop.f32.mrf.mxu0
    %v1466 = vadd.f32 %v1262, %v1465
    %v1467 = vpop.f32.mrf.mxu0
    %v1468 = vadd.f32 %v1266, %v1467
    %1469 = vmatprep.mubr.bf16.mxu0 0
    %1470 = vmatmul.mubr.bf16.gmra.mxu0 %v1250
    %v1471 = vpop.f32.mrf.mxu0
    %v1472 = vadd.f32 %v1262, %v1471
    %v1473 = vpop.f32.mrf.mxu0
    %v1474 = vadd.f32 %v1266, %v1473
    %v1475 = vpop.f32.mrf.mxu0
    %v1476 = vadd.f32 %v1262, %v1475
    %v1477 = vpop.f32.mrf.mxu0
    %v1478 = vadd.f32 %v1266, %v1477
    %1479 = vmatprep.mubr.bf16.mxu0 0
    %1480 = vmatmul.mubr.bf16.gmra.mxu0 %v1251
    %v1481 = vpop.f32.mrf.mxu0
    %v1482 = vadd.f32 %v1262, %v1481
    %v1483 = vpop.f32.mrf.mxu0
    %v1484 = vadd.f32 %v1266, %v1483
    %v1485 = vpop.f32.mrf.mxu0
    %v1486 = vadd.f32 %v1262, %v1485
    %v1487 = vpop.f32.mrf.mxu0
    %v1488 = vadd.f32 %v1266, %v1487
    %1489 = vmatprep.mubr.bf16.mxu0 0
    %1490 = vmatmul.mubr.bf16.gmra.mxu0 %v1252
    %v1491 = vpop.f32.mrf.mxu0
    %v1492 = vadd.f32 %v1262, %v1491
    %v1493 = vpop.f32.mrf.mxu0
    %v1494 = vadd.f32 %v1266, %v1493
    %v1495 = vpop.f32.mrf.mxu0
    %v1496 = vadd.f32 %v1262, %v1495
    %v1497 = vpop.f32.mrf.mxu0
    %v1498 = vadd.f32 %v1266, %v1497
    %1499 = vmatprep.mubr.bf16.mxu0 0
    %1500 = vmatmul.mubr.bf16.gmra.mxu0 %v1253
    %v1501 = vpop.f32.mrf.mxu0
    %v1502 = vadd.f32 %v1262, %v1501
    %v1503 = vpop.f32.mrf.mxu0
    %v1504 = vadd.f32 %v1266, %v1503
    %v1505 = vpop.f32.mrf.mxu0
    %v1506 = vadd.f32 %v1262, %v1505
    %v1507 = vpop.f32.mrf.mxu0
    %v1508 = vadd.f32 %v1266, %v1507
    %1509 = vmatprep.mubr.bf16.mxu0 0
    %1510 = vmatmul.mubr.bf16.gmra.mxu0 %v1254
    %v1511 = vpop.f32.mrf.mxu0
    %v1512 = vadd.f32 %v1262, %v1511
    %v1513 = vpop.f32.mrf.mxu0
    %v1514 = vadd.f32 %v1266, %v1513
    %v1515 = vpop.f32.mrf.mxu0
    %v1516 = vadd.f32 %v1262, %v1515
    %v1517 = vpop.f32.mrf.mxu0
    %v1518 = vadd.f32 %v1266, %v1517
    %1519 = vmatprep.mubr.bf16.mxu0 0
    %1520 = vmatmul.mubr.bf16.gmra.mxu0 %v1255
    %v1521 = vpop.f32.mrf.mxu0
    %v1522 = vadd.f32 %v1262, %v1521
    %v1523 = vpop.f32.mrf.mxu0
    %v1524 = vadd.f32 %v1266, %v1523
    %v1525 = vpop.f32.mrf.mxu0
    %v1526 = vadd.f32 %v1262, %v1525
    %v1527 = vpop.f32.mrf.mxu0
    %v1528 = vadd.f32 %v1266, %v1527
    %1529 = vmatprep.mubr.bf16.mxu0 0
    %1530 = vmatmul.mubr.bf16.gmra.mxu0 %v1256
    %v1531 = vpop.f32.mrf.mxu0
    %v1532 = vadd.f32 %v1262, %v1531
    %v1533 = vpop.f32.mrf.mxu0
    %v1534 = vadd.f32 %v1266, %v1533
    %v1535 = vpop.f32.mrf.mxu0
    %v1536 = vadd.f32 %v1262, %v1535
    %v1537 = vpop.f32.mrf.mxu0
    %v1538 = vadd.f32 %v1266, %v1537
    %1539 = vdwg.mxu0
    %v1540 = vmax.f32 %v1382, 0.0
    %v1541 = vmax.f32 %v1384, 0.0
    %v1542 = vmax.f32 %v1386, 0.0
    %v1543 = vmax.f32 %v1388, 0.0
    %v1544 = vmax.f32 %v1392, 0.0
    %v1545 = vmax.f32 %v1394, 0.0
    %v1546 = vmax.f32 %v1396, 0.0
    %v1547 = vmax.f32 %v1398, 0.0
    %v1548 = vmax.f32 %v1402, 0.0
    %v1549 = vmax.f32 %v1404, 0.0
    %v1550 = vmax.f32 %v1406, 0.0
    %v1551 = vmax.f32 %v1408, 0.0
    %v1552 = vmax.f32 %v1412, 0.0
    %v1553 = vmax.f32 %v1414, 0.0
    %v1554 = vmax.f32 %v1416, 0.0
    %v1555 = vmax.f32 %v1418, 0.0
    %v1556 = vmax.f32 %v1422, 0.0
    %v1557 = vmax.f32 %v1424, 0.0
    %v1558 = vmax.f32 %v1426, 0.0
    %v1559 = vmax.f32 %v1428, 0.0
    %v1560 = vmax.f32 %v1432, 0.0
    %v1561 = vmax.f32 %v1434, 0.0
    %v1562 = vmax.f32 %v1436, 0.0
    %v1563 = vmax.f32 %v1438, 0.0
    %v1564 = vmax.f32 %v1442, 0.0
    %v1565 = vmax.f32 %v1444, 0.0
    %v1566 = vmax.f32 %v1446, 0.0
    %v1567 = vmax.f32 %v1448, 0.0
    %v1568 = vmax.f32 %v1452, 0.0
    %v1569 = vmax.f32 %v1454, 0.0
    %v1570 = vmax.f32 %v1456, 0.0
    %v1571 = vmax.f32 %v1458, 0.0
    %v1572 = vmax.f32 %v1462, 0.0
    %v1573 = vmax.f32 %v1464, 0.0
    %v1574 = vmax.f32 %v1466, 0.0
    %v1575 = vmax.f32 %v1468, 0.0
    %v1576 = vmax.f32 %v1472, 0.0
    %v1577 = vmax.f32 %v1474, 0.0
    %v1578 = vmax.f32 %v1476, 0.0
    %v1579 = vmax.f32 %v1478, 0.0
    %v1580 = vmax.f32 %v1482, 0.0
    %v1581 = vmax.f32 %v1484, 0.0
    %v1582 = vmax.f32 %v1486, 0.0
    %v1583 = vmax.f32 %v1488, 0.0
    %v1584 = vmax.f32 %v1492, 0.0
    %v1585 = vmax.f32 %v1494, 0.0
    %v1586 = vmax.f32 %v1496, 0.0
    %v1587 = vmax.f32 %v1498, 0.0
    %v1588 = vmax.f32 %v1502, 0.0
    %v1589 = vmax.f32 %v1504, 0.0
    %v1590 = vmax.f32 %v1506, 0.0
    %v1591 = vmax.f32 %v1508, 0.0
    %v1592 = vmax.f32 %v1512, 0.0
    %v1593 = vmax.f32 %v1514, 0.0
    %v1594 = vmax.f32 %v1516, 0.0
    %v1595 = vmax.f32 %v1518, 0.0
    %v1596 = vmax.f32 %v1522, 0.0
    %v1597 = vmax.f32 %v1524, 0.0
    %v1598 = vmax.f32 %v1526, 0.0
    %v1599 = vmax.f32 %v1528, 0.0
    %v1600 = vmax.f32 %v1532, 0.0
    %v1601 = vmax.f32 %v1534, 0.0
    %v1602 = vmax.f32 %v1536, 0.0
    %v1603 = vmax.f32 %v1538, 0.0
    %v1604 = vmax.f32 %v1540, %v1542
    %v1605 = vmax.f32 %v1604, %v1544
    %v1606 = vmax.f32 %v1605, %v1546
    %v1607 = vmax.f32 %v1606, %v1548
    %v1608 = vmax.f32 %v1607, %v1550
    %v1609 = vmax.f32 %v1608, %v1552
    %v1610 = vmax.f32 %v1609, %v1554
    %v1611 = vmax.f32 %v1610, %v1556
    %v1612 = vmax.f32 %v1611, %v1558
    %v1613 = vmax.f32 %v1612, %v1560
    %v1614 = vmax.f32 %v1613, %v1562
    %v1615 = vmax.f32 %v1614, %v1564
    %v1616 = vmax.f32 %v1615, %v1566
    %v1617 = vmax.f32 %v1616, %v1568
    %v1618 = vmax.f32 %v1617, %v1570
    %v1619 = vrot.slane %v1618, 4
    %v1620 = vmax.f32 %v1618, %v1619
    %v1621 = vrot.slane %v1620, 2
    %v1622 = vmax.f32 %v1620, %v1621
    %v1623 = vrot.slane %v1622, 1
    %v1624 = vmax.f32 %v1622, %v1623
    %v1625 = vmax.f32 %v1541, %v1543
    %v1626 = vmax.f32 %v1625, %v1545
    %v1627 = vmax.f32 %v1626, %v1547
    %v1628 = vmax.f32 %v1627, %v1549
    %v1629 = vmax.f32 %v1628, %v1551
    %v1630 = vmax.f32 %v1629, %v1553
    %v1631 = vmax.f32 %v1630, %v1555
    %v1632 = vmax.f32 %v1631, %v1557
    %v1633 = vmax.f32 %v1632, %v1559
    %v1634 = vmax.f32 %v1633, %v1561
    %v1635 = vmax.f32 %v1634, %v1563
    %v1636 = vmax.f32 %v1635, %v1565
    %v1637 = vmax.f32 %v1636, %v1567
    %v1638 = vmax.f32 %v1637, %v1569
    %v1639 = vmax.f32 %v1638, %v1571
    %v1640 = vrot.slane %v1639, 4
    %v1641 = vmax.f32 %v1639, %v1640
    %v1642 = vrot.slane %v1641, 2
    %v1643 = vmax.f32 %v1641, %v1642
    %v1644 = vrot.slane %v1643, 1
    %v1645 = vmax.f32 %v1643, %v1644
    %v1646 = vmax.f32 %v1572, %v1574
    %v1647 = vmax.f32 %v1646, %v1576
    %v1648 = vmax.f32 %v1647, %v1578
    %v1649 = vmax.f32 %v1648, %v1580
    %v1650 = vmax.f32 %v1649, %v1582
    %v1651 = vmax.f32 %v1650, %v1584
    %v1652 = vmax.f32 %v1651, %v1586
    %v1653 = vmax.f32 %v1652, %v1588
    %v1654 = vmax.f32 %v1653, %v1590
    %v1655 = vmax.f32 %v1654, %v1592
    %v1656 = vmax.f32 %v1655, %v1594
    %v1657 = vmax.f32 %v1656, %v1596
    %v1658 = vmax.f32 %v1657, %v1598
    %v1659 = vmax.f32 %v1658, %v1600
    %v1660 = vmax.f32 %v1659, %v1602
    %v1661 = vrot.slane %v1660, 4
    %v1662 = vmax.f32 %v1660, %v1661
    %v1663 = vrot.slane %v1662, 2
    %v1664 = vmax.f32 %v1662, %v1663
    %v1665 = vrot.slane %v1664, 1
    %v1666 = vmax.f32 %v1664, %v1665
    %v1667 = vmax.f32 %v1573, %v1575
    %v1668 = vmax.f32 %v1667, %v1577
    %v1669 = vmax.f32 %v1668, %v1579
    %v1670 = vmax.f32 %v1669, %v1581
    %v1671 = vmax.f32 %v1670, %v1583
    %v1672 = vmax.f32 %v1671, %v1585
    %v1673 = vmax.f32 %v1672, %v1587
    %v1674 = vmax.f32 %v1673, %v1589
    %v1675 = vmax.f32 %v1674, %v1591
    %v1676 = vmax.f32 %v1675, %v1593
    %v1677 = vmax.f32 %v1676, %v1595
    %v1678 = vmax.f32 %v1677, %v1597
    %v1679 = vmax.f32 %v1678, %v1599
    %v1680 = vmax.f32 %v1679, %v1601
    %v1681 = vmax.f32 %v1680, %v1603
    %v1682 = vrot.slane %v1681, 4
    %v1683 = vmax.f32 %v1681, %v1682
    %v1684 = vrot.slane %v1683, 2
    %v1685 = vmax.f32 %v1683, %v1684
    %v1686 = vrot.slane %v1685, 1
    %v1687 = vmax.f32 %v1685, %v1686
    %v1688 = vpack.c.bf16 %v1624, %v1624
    %v1689 = vpack.c.bf16 %v1645, %v1645
    %v1690 = vpack.c.bf16 %v1666, %v1666
    %v1691 = vpack.c.bf16 %v1687, %v1687
    %v1692 = vpack.c.bf16 %v58, %v58
    %v1694 = vunpack.c.l.b16 %v238
    %v1695 = vunpack.c.h.b16 %v238
    %v1696 = vpack.c.b16 %v1694, %v1694
    %v1697 = vpack.c.b16 %v1695, %v1695
    %v1699 = vsel %vm91, %v1692, 0
    %vm1701 = vcmask 1040384
    %vm1702 = vcmask 1041408
    %v1703 = vsel %vm1701, 4294967295, 65535
    %v1704 = vsel %vm1702, %v1703, 0
    %v1706 = vand.u32 %v1696, %v1704
    %v1709 = vand.u32 %v1697, %v1704
    %1711 = vmatprep.subr.bf16.mxu0 0
    %1712 = vmatpush1.bf16.msra.mxu0 0
    %1713 = vmatprep.subr.bf16.mxu0 0
    %1714 = vmatpush1.bf16.msra.mxu0 0
    %1715 = vmatprep.subr.bf16.mxu0 0
    %1716 = vmatpush1.bf16.msra.mxu0 0
    %1717 = vmatprep.subr.bf16.mxu0 0
    %1718 = vmatpush1.bf16.msra.mxu0 0
    %1719 = vmatprep.subr.bf16.mxu0 0
    %1720 = vmatpush1.bf16.msra.mxu0 0
    %1721 = vmatprep.subr.bf16.mxu0 0
    %1722 = vmatpush1.bf16.msra.mxu0 0
    %1723 = vmatprep.subr.bf16.mxu0 0
    %1724 = vmatpush1.bf16.msra.mxu0 0
    %1725 = vmatprep.subr.bf16.mxu0 %v1709
    %1726 = vmatpush1.bf16.msra.mxu0 %v1706
    %1727 = vmatprep.subr.bf16.mxu0 0
    %1728 = vmatpush2.bf16.msra.mxu0 0
    %1729 = vmatprep.subr.bf16.mxu0 0
    %1730 = vmatpush2.bf16.msra.mxu0 0
    %1731 = vmatprep.subr.bf16.mxu0 0
    %1732 = vmatpush2.bf16.msra.mxu0 0
    %1733 = vmatprep.subr.bf16.mxu0 0
    %1734 = vmatpush2.bf16.msra.mxu0 0
    %1735 = vmatprep.subr.bf16.mxu0 0
    %1736 = vmatpush2.bf16.msra.mxu0 0
    %1737 = vmatprep.subr.bf16.mxu0 0
    %1738 = vmatpush2.bf16.msra.mxu0 0
    %1739 = vmatprep.subr.bf16.mxu0 0
    %1740 = vmatpush2.bf16.msra.mxu0 0
    %1741 = vmatprep.subr.bf16.mxu0 0
    %1742 = vmatpush2.bf16.msra.mxu0 0
    %1743 = vmatprep.mubr.bf16.mxu0 0
    %1744 = vmatmul.mubr.bf16.gmra.mxu0 %v1699
    %v1745 = vpop.f32.mrf.mxu0
    %v1746 = vadd.f32 0.0, %v1745
    %v1747 = vpop.f32.mrf.mxu0
    %v1748 = vadd.f32 0.0, %v1747
    %v1749 = vpop.f32.mrf.mxu0
    %v1750 = vpop.f32.mrf.mxu0
    %1751 = vdwg.mxu0
    %v1756 = vunpack.c.l.b16 %v1688
    %v1757 = vunpack.c.l.b16 %v1689
    %v1758 = vunpack.c.l.b16 %v1690
    %v1759 = vunpack.c.l.b16 %v1691
    %vm1760 = vcmask 1041409
    %v1761 = vsel %vm1760, %v1758, %v1756
    %v1762 = vsel %vm1760, %v1759, %v1757
    %v1763 = vpack.c.b16 %v1761, %v1761
    %v1764 = vpack.c.b16 %v1762, %v1762
    %v1799 = vunpack.c.l.b16 %v205
    %v1800 = vunpack.c.h.b16 %v205
    %v1801 = vunpack.c.l.b16 %v206
    %v1802 = vunpack.c.h.b16 %v206
    %v1803 = vunpack.c.l.b16 %v207
    %v1804 = vunpack.c.h.b16 %v207
    %v1805 = vunpack.c.l.b16 %v208
    %v1806 = vunpack.c.h.b16 %v208
    %v1807 = vunpack.c.l.b16 %v209
    %v1808 = vunpack.c.h.b16 %v209
    %v1809 = vunpack.c.l.b16 %v210
    %v1810 = vunpack.c.h.b16 %v210
    %v1811 = vunpack.c.l.b16 %v211
    %v1812 = vunpack.c.h.b16 %v211
    %v1813 = vunpack.c.l.b16 %v212
    %v1814 = vunpack.c.h.b16 %v212
    %v1815 = vunpack.c.l.b16 %v213
    %v1816 = vunpack.c.h.b16 %v213
    %v1817 = vunpack.c.l.b16 %v214
    %v1818 = vunpack.c.h.b16 %v214
    %v1819 = vunpack.c.l.b16 %v215
    %v1820 = vunpack.c.h.b16 %v215
    %v1821 = vunpack.c.l.b16 %v216
    %v1822 = vunpack.c.h.b16 %v216
    %v1823 = vunpack.c.l.b16 %v217
    %v1824 = vunpack.c.h.b16 %v217
    %v1825 = vunpack.c.l.b16 %v218
    %v1826 = vunpack.c.h.b16 %v218
    %v1827 = vunpack.c.l.b16 %v219
    %v1828 = vunpack.c.h.b16 %v219
    %v1829 = vunpack.c.l.b16 %v220
    %v1830 = vunpack.c.h.b16 %v220
    %v1831 = vunpack.c.l.b16 %v221
    %v1832 = vunpack.c.h.b16 %v221
    %v1833 = vunpack.c.l.b16 %v222
    %v1834 = vunpack.c.h.b16 %v222
    %v1835 = vunpack.c.l.b16 %v223
    %v1836 = vunpack.c.h.b16 %v223
    %v1837 = vunpack.c.l.b16 %v224
    %v1838 = vunpack.c.h.b16 %v224
    %v1839 = vunpack.c.l.b16 %v225
    %v1840 = vunpack.c.h.b16 %v225
    %v1841 = vunpack.c.l.b16 %v226
    %v1842 = vunpack.c.h.b16 %v226
    %v1843 = vunpack.c.l.b16 %v227
    %v1844 = vunpack.c.h.b16 %v227
    %v1845 = vunpack.c.l.b16 %v228
    %v1846 = vunpack.c.h.b16 %v228
    %v1847 = vunpack.c.l.b16 %v229
    %v1848 = vunpack.c.h.b16 %v229
    %v1849 = vunpack.c.l.b16 %v230
    %v1850 = vunpack.c.h.b16 %v230
    %v1851 = vunpack.c.l.b16 %v231
    %v1852 = vunpack.c.h.b16 %v231
    %v1853 = vunpack.c.l.b16 %v232
    %v1854 = vunpack.c.h.b16 %v232
    %v1855 = vunpack.c.l.b16 %v233
    %v1856 = vunpack.c.h.b16 %v233
    %v1857 = vunpack.c.l.b16 %v234
    %v1858 = vunpack.c.h.b16 %v234
    %v1859 = vunpack.c.l.b16 %v235
    %v1860 = vunpack.c.h.b16 %v235
    %v1861 = vunpack.c.l.b16 %v236
    %v1862 = vunpack.c.h.b16 %v236
    %v1863 = vpack.c.b16 %v1801, %v1799
    %v1864 = vpack.c.b16 %v1802, %v1800
    %v1865 = vpack.c.b16 %v1805, %v1803
    %v1866 = vpack.c.b16 %v1806, %v1804
    %v1867 = vpack.c.b16 %v1809, %v1807
    %v1868 = vpack.c.b16 %v1810, %v1808
    %v1869 = vpack.c.b16 %v1813, %v1811
    %v1870 = vpack.c.b16 %v1814, %v1812
    %v1871 = vpack.c.b16 %v1817, %v1815
    %v1872 = vpack.c.b16 %v1818, %v1816
    %v1873 = vpack.c.b16 %v1821, %v1819
    %v1874 = vpack.c.b16 %v1822, %v1820
    %v1875 = vpack.c.b16 %v1825, %v1823
    %v1876 = vpack.c.b16 %v1826, %v1824
    %v1877 = vpack.c.b16 %v1829, %v1827
    %v1878 = vpack.c.b16 %v1830, %v1828
    %v1879 = vpack.c.b16 %v1833, %v1831
    %v1880 = vpack.c.b16 %v1834, %v1832
    %v1881 = vpack.c.b16 %v1837, %v1835
    %v1882 = vpack.c.b16 %v1838, %v1836
    %v1883 = vpack.c.b16 %v1841, %v1839
    %v1884 = vpack.c.b16 %v1842, %v1840
    %v1885 = vpack.c.b16 %v1845, %v1843
    %v1886 = vpack.c.b16 %v1846, %v1844
    %v1887 = vpack.c.b16 %v1849, %v1847
    %v1888 = vpack.c.b16 %v1850, %v1848
    %v1889 = vpack.c.b16 %v1853, %v1851
    %v1890 = vpack.c.b16 %v1854, %v1852
    %v1891 = vpack.c.b16 %v1857, %v1855
    %v1892 = vpack.c.b16 %v1858, %v1856
    %v1893 = vpack.c.b16 %v1861, %v1859
    %v1894 = vpack.c.b16 %v1862, %v1860
    %1927 = vmatprep.subr.bf16.mxu0 %v1878
    %1928 = vmatpush1.bf16.msra.mxu0 %v1877
    %1929 = vmatprep.subr.bf16.mxu0 %v1876
    %1930 = vmatpush1.bf16.msra.mxu0 %v1875
    %1931 = vmatprep.subr.bf16.mxu0 %v1874
    %1932 = vmatpush1.bf16.msra.mxu0 %v1873
    %1933 = vmatprep.subr.bf16.mxu0 %v1872
    %1934 = vmatpush1.bf16.msra.mxu0 %v1871
    %1935 = vmatprep.subr.bf16.mxu0 %v1870
    %1936 = vmatpush1.bf16.msra.mxu0 %v1869
    %1937 = vmatprep.subr.bf16.mxu0 %v1868
    %1938 = vmatpush1.bf16.msra.mxu0 %v1867
    %1939 = vmatprep.subr.bf16.mxu0 %v1866
    %1940 = vmatpush1.bf16.msra.mxu0 %v1865
    %1941 = vmatprep.subr.bf16.mxu0 %v1864
    %1942 = vmatpush1.bf16.msra.mxu0 %v1863
    %1943 = vmatprep.subr.bf16.mxu0 %v1894
    %1944 = vmatpush2.bf16.msra.mxu0 %v1893
    %1945 = vmatprep.subr.bf16.mxu0 %v1892
    %1946 = vmatpush2.bf16.msra.mxu0 %v1891
    %1947 = vmatprep.subr.bf16.mxu0 %v1890
    %1948 = vmatpush2.bf16.msra.mxu0 %v1889
    %1949 = vmatprep.subr.bf16.mxu0 %v1888
    %1950 = vmatpush2.bf16.msra.mxu0 %v1887
    %1951 = vmatprep.subr.bf16.mxu0 %v1886
    %1952 = vmatpush2.bf16.msra.mxu0 %v1885
    %1953 = vmatprep.subr.bf16.mxu0 %v1884
    %1954 = vmatpush2.bf16.msra.mxu0 %v1883
    %1955 = vmatprep.subr.bf16.mxu0 %v1882
    %1956 = vmatpush2.bf16.msra.mxu0 %v1881
    %1957 = vmatprep.subr.bf16.mxu0 %v1880
    %1958 = vmatpush2.bf16.msra.mxu0 %v1879
    %1959 = vmatprep.mubr.bf16.mxu0 %v1764
    %1960 = vmatmul.mubr.bf16.gmra.mxu0 %v1763
    %v1961 = vpop.f32.mrf.mxu0
    %v1962 = vadd.f32 %v1746, %v1961
    %v1963 = vpop.f32.mrf.mxu0
    %v1964 = vadd.f32 %v1748, %v1963
    %v1965 = vpop.f32.mrf.mxu0
    %v1966 = vpop.f32.mrf.mxu0
    %1967 = vdwg.mxu0
    %v1968 = vunpack.c.l.bf16 %v237
    %v1969 = vunpack.c.h.bf16 %v237
    %v1970 = vlaneseq
    %v1971 = vshrl.u32 %v1970, 7
    %v1972 = vsub.s32 0, %v1971
    %v1973 = vrot.slane %v1968, %v1972
    %v1974 = vlaneseq
    %v1975 = vshrl.u32 %v1974, 7
    %v1976 = vsub.s32 0, %v1975
    %v1977 = vrot.slane %v1969, %v1976
    %v1978 = vadd.f32 %v1962, %v1973
    %v1979 = vadd.f32 %v1964, %v1977
    %v1980 = vmax.f32 %v1978, 0.0
    %v1981 = vmax.f32 %v1979, 0.0
    %v1982 = vpack.c.bf16 %v1980, %v1980
    %v1983 = vpack.c.bf16 %v1981, %v1981
    %v1984 = vunpack.c.l.bf16 %v271
    %v1985 = vlaneseq
    %v1986 = vshrl.u32 %v1985, 7
    %v1987 = vsub.s32 0, %v1986
    %v1988 = vrot.slane %v1984, %v1987
    %v2021 = vunpack.c.l.b16 %v239
    %v2022 = vunpack.c.l.b16 %v240
    %v2023 = vunpack.c.l.b16 %v241
    %v2024 = vunpack.c.l.b16 %v242
    %v2025 = vunpack.c.l.b16 %v243
    %v2026 = vunpack.c.l.b16 %v244
    %v2027 = vunpack.c.l.b16 %v245
    %v2028 = vunpack.c.l.b16 %v246
    %v2029 = vunpack.c.l.b16 %v247
    %v2030 = vunpack.c.l.b16 %v248
    %v2031 = vunpack.c.l.b16 %v249
    %v2032 = vunpack.c.l.b16 %v250
    %v2033 = vunpack.c.l.b16 %v251
    %v2034 = vunpack.c.l.b16 %v252
    %v2035 = vunpack.c.l.b16 %v253
    %v2036 = vunpack.c.l.b16 %v254
    %v2037 = vunpack.c.l.b16 %v255
    %v2038 = vunpack.c.l.b16 %v256
    %v2039 = vunpack.c.l.b16 %v257
    %v2040 = vunpack.c.l.b16 %v258
    %v2041 = vunpack.c.l.b16 %v259
    %v2042 = vunpack.c.l.b16 %v260
    %v2043 = vunpack.c.l.b16 %v261
    %v2044 = vunpack.c.l.b16 %v262
    %v2045 = vunpack.c.l.b16 %v263
    %v2046 = vunpack.c.l.b16 %v264
    %v2047 = vunpack.c.l.b16 %v265
    %v2048 = vunpack.c.l.b16 %v266
    %v2049 = vunpack.c.l.b16 %v267
    %v2050 = vunpack.c.l.b16 %v268
    %v2051 = vunpack.c.l.b16 %v269
    %v2052 = vunpack.c.l.b16 %v270
    %v2053 = vpack.c.b16 %v2022, %v2021
    %v2054 = vpack.c.b16 %v2024, %v2023
    %v2055 = vpack.c.b16 %v2026, %v2025
    %v2056 = vpack.c.b16 %v2028, %v2027
    %v2057 = vpack.c.b16 %v2030, %v2029
    %v2058 = vpack.c.b16 %v2032, %v2031
    %v2059 = vpack.c.b16 %v2034, %v2033
    %v2060 = vpack.c.b16 %v2036, %v2035
    %v2061 = vpack.c.b16 %v2038, %v2037
    %v2062 = vpack.c.b16 %v2040, %v2039
    %v2063 = vpack.c.b16 %v2042, %v2041
    %v2064 = vpack.c.b16 %v2044, %v2043
    %v2065 = vpack.c.b16 %v2046, %v2045
    %v2066 = vpack.c.b16 %v2048, %v2047
    %v2067 = vpack.c.b16 %v2050, %v2049
    %v2068 = vpack.c.b16 %v2052, %v2051
    %2085 = vmatprep.subr.bf16.mxu0 0
    %2086 = vmatpush1.bf16.msra.mxu0 %v2060
    %2087 = vmatprep.subr.bf16.mxu0 0
    %2088 = vmatpush1.bf16.msra.mxu0 %v2059
    %2089 = vmatprep.subr.bf16.mxu0 0
    %2090 = vmatpush1.bf16.msra.mxu0 %v2058
    %2091 = vmatprep.subr.bf16.mxu0 0
    %2092 = vmatpush1.bf16.msra.mxu0 %v2057
    %2093 = vmatprep.subr.bf16.mxu0 0
    %2094 = vmatpush1.bf16.msra.mxu0 %v2056
    %2095 = vmatprep.subr.bf16.mxu0 0
    %2096 = vmatpush1.bf16.msra.mxu0 %v2055
    %2097 = vmatprep.subr.bf16.mxu0 0
    %2098 = vmatpush1.bf16.msra.mxu0 %v2054
    %2099 = vmatprep.subr.bf16.mxu0 0
    %2100 = vmatpush1.bf16.msra.mxu0 %v2053
    %2101 = vmatprep.subr.bf16.mxu0 0
    %2102 = vmatpush2.bf16.msra.mxu0 %v2068
    %2103 = vmatprep.subr.bf16.mxu0 0
    %2104 = vmatpush2.bf16.msra.mxu0 %v2067
    %2105 = vmatprep.subr.bf16.mxu0 0
    %2106 = vmatpush2.bf16.msra.mxu0 %v2066
    %2107 = vmatprep.subr.bf16.mxu0 0
    %2108 = vmatpush2.bf16.msra.mxu0 %v2065
    %2109 = vmatprep.subr.bf16.mxu0 0
    %2110 = vmatpush2.bf16.msra.mxu0 %v2064
    %2111 = vmatprep.subr.bf16.mxu0 0
    %2112 = vmatpush2.bf16.msra.mxu0 %v2063
    %2113 = vmatprep.subr.bf16.mxu0 0
    %2114 = vmatpush2.bf16.msra.mxu0 %v2062
    %2115 = vmatprep.subr.bf16.mxu0 0
    %2116 = vmatpush2.bf16.msra.mxu0 %v2061
    %2117 = vmatprep.mubr.bf16.mxu0 %v1983
    %2118 = vmatmul.mubr.bf16.gmra.mxu0 %v1982
    %v2119 = vpop.f32.mrf.mxu0
    %v2120 = vadd.f32 %v1988, %v2119
    %v2121 = vpop.f32.mrf.mxu0
    %v2122 = vpop.f32.mrf.mxu0
    %v2123 = vpop.f32.mrf.mxu0
    %2124 = vdwg.mxu0
    %v2125 = vmax.f32 %v2120, 0.0
    %v2126 = vpack.c.bf16 %v2125, %v2125
    %v2127 = vunpack.c.l.bf16 %v288
    %v2128 = vlaneseq
    %v2129 = vshrl.u32 %v2128, 7
    %v2130 = vsub.s32 0, %v2129
    %v2131 = vrot.slane %v2127, %v2130
    %v2148 = vunpack.c.l.b16 %v272
    %v2149 = vunpack.c.l.b16 %v273
    %v2150 = vunpack.c.l.b16 %v274
    %v2151 = vunpack.c.l.b16 %v275
    %v2152 = vunpack.c.l.b16 %v276
    %v2153 = vunpack.c.l.b16 %v277
    %v2154 = vunpack.c.l.b16 %v278
    %v2155 = vunpack.c.l.b16 %v279
    %v2156 = vunpack.c.l.b16 %v280
    %v2157 = vunpack.c.l.b16 %v281
    %v2158 = vunpack.c.l.b16 %v282
    %v2159 = vunpack.c.l.b16 %v283
    %v2160 = vunpack.c.l.b16 %v284
    %v2161 = vunpack.c.l.b16 %v285
    %v2162 = vunpack.c.l.b16 %v286
    %v2163 = vunpack.c.l.b16 %v287
    %v2164 = vpack.c.b16 %v2149, %v2148
    %v2165 = vpack.c.b16 %v2151, %v2150
    %v2166 = vpack.c.b16 %v2153, %v2152
    %v2167 = vpack.c.b16 %v2155, %v2154
    %v2168 = vpack.c.b16 %v2157, %v2156
    %v2169 = vpack.c.b16 %v2159, %v2158
    %v2170 = vpack.c.b16 %v2161, %v2160
    %v2171 = vpack.c.b16 %v2163, %v2162
    %2180 = vmatprep.subr.bf16.mxu0 0
    %2181 = vmatpush1.bf16.msra.mxu0 %v2171
    %2182 = vmatprep.subr.bf16.mxu0 0
    %2183 = vmatpush1.bf16.msra.mxu0 %v2170
    %2184 = vmatprep.subr.bf16.mxu0 0
    %2185 = vmatpush1.bf16.msra.mxu0 %v2169
    %2186 = vmatprep.subr.bf16.mxu0 0
    %2187 = vmatpush1.bf16.msra.mxu0 %v2168
    %2188 = vmatprep.subr.bf16.mxu0 0
    %2189 = vmatpush1.bf16.msra.mxu0 %v2167
    %2190 = vmatprep.subr.bf16.mxu0 0
    %2191 = vmatpush1.bf16.msra.mxu0 %v2166
    %2192 = vmatprep.subr.bf16.mxu0 0
    %2193 = vmatpush1.bf16.msra.mxu0 %v2165
    %2194 = vmatprep.subr.bf16.mxu0 0
    %2195 = vmatpush1.bf16.msra.mxu0 %v2164
    %2196 = vmatprep.subr.bf16.mxu0 0
    %2197 = vmatpush2.bf16.msra.mxu0 0
    %2198 = vmatprep.subr.bf16.mxu0 0
    %2199 = vmatpush2.bf16.msra.mxu0 0
    %2200 = vmatprep.subr.bf16.mxu0 0
    %2201 = vmatpush2.bf16.msra.mxu0 0
    %2202 = vmatprep.subr.bf16.mxu0 0
    %2203 = vmatpush2.bf16.msra.mxu0 0
    %2204 = vmatprep.subr.bf16.mxu0 0
    %2205 = vmatpush2.bf16.msra.mxu0 0
    %2206 = vmatprep.subr.bf16.mxu0 0
    %2207 = vmatpush2.bf16.msra.mxu0 0
    %2208 = vmatprep.subr.bf16.mxu0 0
    %2209 = vmatpush2.bf16.msra.mxu0 0
    %2210 = vmatprep.subr.bf16.mxu0 0
    %2211 = vmatpush2.bf16.msra.mxu0 0
    %2212 = vmatprep.mubr.bf16.mxu0 0
    %2213 = vmatmul.mubr.bf16.gmra.mxu0 %v2126
    %v2214 = vpop.f32.mrf.mxu0
    %v2215 = vadd.f32 %v2131, %v2214
    %v2216 = vpop.f32.mrf.mxu0
    %v2217 = vpop.f32.mrf.mxu0
    %v2218 = vpop.f32.mrf.mxu0
    %2219 = vdwg.mxu0
    %v2222 = vsel %vm1760, %v168, %v167
    %v2224 = vadd.f32 %v2215, %v2222
    %v2225 = vld [vmem:[#allocation7] sm:$0x3]
    %v2226 = vld [vmem:[#allocation7] sm:$0x2]
    %v2227 = vld [vmem:[#allocation7 + $0x20] sm:$0xf]
    %v2228 = vld [vmem:[#allocation7 + $0x30] sm:$0xf]
    %v2229 = vld [vmem:[#allocation7 + $0x40] sm:$0xf]
    %v2230 = vld [vmem:[#allocation7 + $0x50] sm:$0xf]
    %v2231 = vld [vmem:[#allocation7 + $0x60] sm:$0xf]
    %v2232 = vld [vmem:[#allocation7 + $0x70] sm:$0xf]
    %v2233 = vld [vmem:[#allocation7 + $0x80] sm:$0xf]
    %v2234 = vld [vmem:[#allocation7 + $0x90] sm:$0xf]
    %v2235 = vld [vmem:[#allocation7 + $0xa0] sm:$0x1]
    %v2236 = vld [vmem:[#allocation7 + $0xc0] sm:$0xf]
    %v2237 = vld [vmem:[#allocation7 + $0xd0] sm:$0xf]
    %v2238 = vld [vmem:[#allocation7 + $0xe0] sm:$0xf]
    %v2239 = vld [vmem:[#allocation7 + $0xf0] sm:$0xf]
    %v2240 = vld [vmem:[#allocation7 + $0x100] sm:$0xf]
    %v2241 = vld [vmem:[#allocation7 + $0x110] sm:$0xf]
    %v2242 = vld [vmem:[#allocation7 + $0x120] sm:$0xf]
    %v2243 = vld [vmem:[#allocation7 + $0x130] sm:$0xf]
    %v2244 = vld [vmem:[#allocation7 + $0x140] sm:$0xf]
    %v2245 = vld [vmem:[#allocation7 + $0x150] sm:$0xf]
    %v2246 = vld [vmem:[#allocation7 + $0x160] sm:$0xf]
    %v2247 = vld [vmem:[#allocation7 + $0x170] sm:$0xf]
    %v2248 = vld [vmem:[#allocation7 + $0x180] sm:$0xf]
    %v2249 = vld [vmem:[#allocation7 + $0x190] sm:$0xf]
    %v2250 = vld [vmem:[#allocation7 + $0x1a0] sm:$0xf]
    %v2251 = vld [vmem:[#allocation7 + $0x1b0] sm:$0xf]
    %v2252 = vld [vmem:[#allocation7 + $0x1c0] sm:$0x1]
    %v2253 = vld [vmem:[#allocation7 + $0x1e0] sm:$0xff]
    %v2254 = vld [vmem:[#allocation7 + $0x1f0] sm:$0xff]
    %v2255 = vld [vmem:[#allocation7 + $0x200] sm:$0xff]
    %v2256 = vld [vmem:[#allocation7 + $0x210] sm:$0xff]
    %v2257 = vld [vmem:[#allocation7 + $0x220] sm:$0xff]
    %v2258 = vld [vmem:[#allocation7 + $0x230] sm:$0xff]
    %v2259 = vld [vmem:[#allocation7 + $0x240] sm:$0xff]
    %v2260 = vld [vmem:[#allocation7 + $0x250] sm:$0xff]
    %v2261 = vld [vmem:[#allocation7 + $0x260] sm:$0xff]
    %v2262 = vld [vmem:[#allocation7 + $0x270] sm:$0xff]
    %v2263 = vld [vmem:[#allocation7 + $0x280] sm:$0xff]
    %v2264 = vld [vmem:[#allocation7 + $0x290] sm:$0xff]
    %v2265 = vld [vmem:[#allocation7 + $0x2a0] sm:$0xff]
    %v2266 = vld [vmem:[#allocation7 + $0x2b0] sm:$0xff]
    %v2267 = vld [vmem:[#allocation7 + $0x2c0] sm:$0xff]
    %v2268 = vld [vmem:[#allocation7 + $0x2d0] sm:$0xff]
    %v2269 = vld [vmem:[#allocation7 + $0x2e0] sm:$0x11]
    %v2270 = vld [vmem:[#allocation7 + $0x300] sm:$0xff]
    %v2271 = vld [vmem:[#allocation7 + $0x308] sm:$0xff]
    %v2272 = vld [vmem:[#allocation7 + $0x310] sm:$0xff]
    %v2273 = vld [vmem:[#allocation7 + $0x318] sm:$0xff]
    %v2274 = vld [vmem:[#allocation7 + $0x320] sm:$0xff]
    %v2275 = vld [vmem:[#allocation7 + $0x328] sm:$0xff]
    %v2276 = vld [vmem:[#allocation7 + $0x330] sm:$0xff]
    %v2277 = vld [vmem:[#allocation7 + $0x338] sm:$0xff]
    %v2278 = vld [vmem:[#allocation7 + $0x340] sm:$0xff]
    %v2279 = vld [vmem:[#allocation7 + $0x348] sm:$0xff]
    %v2280 = vld [vmem:[#allocation7 + $0x350] sm:$0xff]
    %v2281 = vld [vmem:[#allocation7 + $0x358] sm:$0xff]
    %v2282 = vld [vmem:[#allocation7 + $0x360] sm:$0xff]
    %v2283 = vld [vmem:[#allocation7 + $0x368] sm:$0xff]
    %v2284 = vld [vmem:[#allocation7 + $0x370] sm:$0xff]
    %v2285 = vld [vmem:[#allocation7 + $0x378] sm:$0xff]
    %v2286 = vld [vmem:[#allocation7 + $0x380] sm:$0xff]
    %v2287 = vld [vmem:[#allocation7 + $0x388] sm:$0xff]
    %v2288 = vld [vmem:[#allocation7 + $0x390] sm:$0xff]
    %v2289 = vld [vmem:[#allocation7 + $0x398] sm:$0xff]
    %v2290 = vld [vmem:[#allocation7 + $0x3a0] sm:$0xff]
    %v2291 = vld [vmem:[#allocation7 + $0x3a8] sm:$0xff]
    %v2292 = vld [vmem:[#allocation7 + $0x3b0] sm:$0xff]
    %v2293 = vld [vmem:[#allocation7 + $0x3b8] sm:$0xff]
    %v2294 = vld [vmem:[#allocation7 + $0x3c0] sm:$0xff]
    %v2295 = vld [vmem:[#allocation7 + $0x3c8] sm:$0xff]
    %v2296 = vld [vmem:[#allocation7 + $0x3d0] sm:$0xff]
    %v2297 = vld [vmem:[#allocation7 + $0x3d8] sm:$0xff]
    %v2298 = vld [vmem:[#allocation7 + $0x3e0] sm:$0xff]
    %v2299 = vld [vmem:[#allocation7 + $0x3e8] sm:$0xff]
    %v2300 = vld [vmem:[#allocation7 + $0x3f0] sm:$0xff]
    %v2301 = vld [vmem:[#allocation7 + $0x3f8] sm:$0xff]
    %v2302 = vld [vmem:[#allocation7 + $0x400] sm:$0xff]
    %v2303 = vld [vmem:[#allocation7 + $0x408] sm:$0xff]
    %v2304 = vld [vmem:[#allocation7 + $0x410] sm:$0xff]
    %v2305 = vld [vmem:[#allocation7 + $0x418] sm:$0xff]
    %v2306 = vld [vmem:[#allocation7 + $0x420] sm:$0xff]
    %v2307 = vld [vmem:[#allocation7 + $0x428] sm:$0xff]
    %v2308 = vld [vmem:[#allocation7 + $0x430] sm:$0xff]
    %v2309 = vld [vmem:[#allocation7 + $0x438] sm:$0xff]
    %v2310 = vld [vmem:[#allocation7 + $0x440] sm:$0xff]
    %v2311 = vld [vmem:[#allocation7 + $0x448] sm:$0xff]
    %v2312 = vld [vmem:[#allocation7 + $0x450] sm:$0xff]
    %v2313 = vld [vmem:[#allocation7 + $0x458] sm:$0xff]
    %v2314 = vld [vmem:[#allocation7 + $0x460] sm:$0xff]
    %v2315 = vld [vmem:[#allocation7 + $0x468] sm:$0xff]
    %v2316 = vld [vmem:[#allocation7 + $0x470] sm:$0xff]
    %v2317 = vld [vmem:[#allocation7 + $0x478] sm:$0xff]
    %v2318 = vld [vmem:[#allocation7 + $0x480] sm:$0xff]
    %v2319 = vld [vmem:[#allocation7 + $0x488] sm:$0xff]
    %v2320 = vld [vmem:[#allocation7 + $0x490] sm:$0xff]
    %v2321 = vld [vmem:[#allocation7 + $0x498] sm:$0xff]
    %v2322 = vld [vmem:[#allocation7 + $0x4a0] sm:$0xff]
    %v2323 = vld [vmem:[#allocation7 + $0x4a8] sm:$0xff]
    %v2324 = vld [vmem:[#allocation7 + $0x4b0] sm:$0xff]
    %v2325 = vld [vmem:[#allocation7 + $0x4b8] sm:$0xff]
    %v2326 = vld [vmem:[#allocation7 + $0x4c0] sm:$0xff]
    %v2327 = vld [vmem:[#allocation7 + $0x4c8] sm:$0xff]
    %v2328 = vld [vmem:[#allocation7 + $0x4d0] sm:$0xff]
    %v2329 = vld [vmem:[#allocation7 + $0x4d8] sm:$0xff]
    %v2330 = vld [vmem:[#allocation7 + $0x4e0] sm:$0xff]
    %v2331 = vld [vmem:[#allocation7 + $0x4e8] sm:$0xff]
    %v2332 = vld [vmem:[#allocation7 + $0x4f0] sm:$0xff]
    %v2333 = vld [vmem:[#allocation7 + $0x4f8] sm:$0xff]
    %v2334 = vld [vmem:[#allocation7 + $0x500] sm:$0x11]
    %v2335 = vld [vmem:[#allocation7 + $0x508] sm:$0x11]
    %v2336 = vld [vmem:[#allocation7 + $0x520] sm:$0x3]
    %v2337 = vld [vmem:[#allocation7 + $0x520] sm:$0x2]
    %v2338 = vld [vmem:[#allocation7 + $0x540] sm:$0x3]
    %v2339 = vld [vmem:[#allocation7 + $0x540] sm:$0x2]
    %v2340 = vld [vmem:[#allocation7 + $0x560] sm:$0xff]
    %v2341 = vld [vmem:[#allocation7 + $0x568] sm:$0xff]
    %v2342 = vld [vmem:[#allocation7 + $0x570] sm:$0xff]
    %v2343 = vld [vmem:[#allocation7 + $0x578] sm:$0xff]
    %v2344 = vld [vmem:[#allocation7 + $0x580] sm:$0xff]
    %v2345 = vld [vmem:[#allocation7 + $0x588] sm:$0xff]
    %v2346 = vld [vmem:[#allocation7 + $0x590] sm:$0xff]
    %v2347 = vld [vmem:[#allocation7 + $0x598] sm:$0xff]
    %v2348 = vld [vmem:[#allocation7 + $0x5a0] sm:$0xff]
    %v2349 = vld [vmem:[#allocation7 + $0x5a8] sm:$0xff]
    %v2350 = vld [vmem:[#allocation7 + $0x5b0] sm:$0xff]
    %v2351 = vld [vmem:[#allocation7 + $0x5b8] sm:$0xff]
    %v2352 = vld [vmem:[#allocation7 + $0x5c0] sm:$0xff]
    %v2353 = vld [vmem:[#allocation7 + $0x5c8] sm:$0xff]
    %v2354 = vld [vmem:[#allocation7 + $0x5d0] sm:$0xff]
    %v2355 = vld [vmem:[#allocation7 + $0x5d8] sm:$0xff]
    %v2356 = vld [vmem:[#allocation7 + $0x5e0] sm:$0xff]
    %v2357 = vld [vmem:[#allocation7 + $0x5e8] sm:$0xff]
    %v2358 = vld [vmem:[#allocation7 + $0x5f0] sm:$0xff]
    %v2359 = vld [vmem:[#allocation7 + $0x5f8] sm:$0xff]
    %v2360 = vld [vmem:[#allocation7 + $0x600] sm:$0xff]
    %v2361 = vld [vmem:[#allocation7 + $0x608] sm:$0xff]
    %v2362 = vld [vmem:[#allocation7 + $0x610] sm:$0xff]
    %v2363 = vld [vmem:[#allocation7 + $0x618] sm:$0xff]
    %v2364 = vld [vmem:[#allocation7 + $0x620] sm:$0xff]
    %v2365 = vld [vmem:[#allocation7 + $0x628] sm:$0xff]
    %v2366 = vld [vmem:[#allocation7 + $0x630] sm:$0xff]
    %v2367 = vld [vmem:[#allocation7 + $0x638] sm:$0xff]
    %v2368 = vld [vmem:[#allocation7 + $0x640] sm:$0xff]
    %v2369 = vld [vmem:[#allocation7 + $0x648] sm:$0xff]
    %v2370 = vld [vmem:[#allocation7 + $0x650] sm:$0xff]
    %v2371 = vld [vmem:[#allocation7 + $0x658] sm:$0xff]
    %v2372 = vld [vmem:[#allocation7 + $0x660] sm:$0xff]
    %v2373 = vld [vmem:[#allocation7 + $0x668] sm:$0xff]
    %v2374 = vld [vmem:[#allocation7 + $0x670] sm:$0xff]
    %v2375 = vld [vmem:[#allocation7 + $0x678] sm:$0xff]
    %v2376 = vld [vmem:[#allocation7 + $0x680] sm:$0xff]
    %v2377 = vld [vmem:[#allocation7 + $0x688] sm:$0xff]
    %v2378 = vld [vmem:[#allocation7 + $0x690] sm:$0xff]
    %v2379 = vld [vmem:[#allocation7 + $0x698] sm:$0xff]
    %v2380 = vld [vmem:[#allocation7 + $0x6a0] sm:$0xff]
    %v2381 = vld [vmem:[#allocation7 + $0x6a8] sm:$0xff]
    %v2382 = vld [vmem:[#allocation7 + $0x6b0] sm:$0xff]
    %v2383 = vld [vmem:[#allocation7 + $0x6b8] sm:$0xff]
    %v2384 = vld [vmem:[#allocation7 + $0x6c0] sm:$0xff]
    %v2385 = vld [vmem:[#allocation7 + $0x6c8] sm:$0xff]
    %v2386 = vld [vmem:[#allocation7 + $0x6d0] sm:$0xff]
    %v2387 = vld [vmem:[#allocation7 + $0x6d8] sm:$0xff]
    %v2388 = vld [vmem:[#allocation7 + $0x6e0] sm:$0xff]
    %v2389 = vld [vmem:[#allocation7 + $0x6e8] sm:$0xff]
    %v2390 = vld [vmem:[#allocation7 + $0x6f0] sm:$0xff]
    %v2391 = vld [vmem:[#allocation7 + $0x6f8] sm:$0xff]
    %v2392 = vld [vmem:[#allocation7 + $0x700] sm:$0xff]
    %v2393 = vld [vmem:[#allocation7 + $0x708] sm:$0xff]
    %v2394 = vld [vmem:[#allocation7 + $0x710] sm:$0xff]
    %v2395 = vld [vmem:[#allocation7 + $0x718] sm:$0xff]
    %v2396 = vld [vmem:[#allocation7 + $0x720] sm:$0xff]
    %v2397 = vld [vmem:[#allocation7 + $0x728] sm:$0xff]
    %v2398 = vld [vmem:[#allocation7 + $0x730] sm:$0xff]
    %v2399 = vld [vmem:[#allocation7 + $0x738] sm:$0xff]
    %v2400 = vld [vmem:[#allocation7 + $0x740] sm:$0xff]
    %v2401 = vld [vmem:[#allocation7 + $0x748] sm:$0xff]
    %v2402 = vld [vmem:[#allocation7 + $0x750] sm:$0xff]
    %v2403 = vld [vmem:[#allocation7 + $0x758] sm:$0xff]
    %v2404 = vld [vmem:[#allocation7 + $0x760] sm:$0xff]
    %v2405 = vld [vmem:[#allocation7 + $0x768] sm:$0xff]
    %v2406 = vld [vmem:[#allocation7 + $0x770] sm:$0xff]
    %v2407 = vld [vmem:[#allocation7 + $0x778] sm:$0xff]
    %v2408 = vld [vmem:[#allocation7 + $0x780] sm:$0xff]
    %v2409 = vld [vmem:[#allocation7 + $0x788] sm:$0xff]
    %v2410 = vld [vmem:[#allocation7 + $0x790] sm:$0xff]
    %v2411 = vld [vmem:[#allocation7 + $0x798] sm:$0xff]
    %v2412 = vld [vmem:[#allocation7 + $0x7a0] sm:$0xff]
    %v2413 = vld [vmem:[#allocation7 + $0x7a8] sm:$0xff]
    %v2414 = vld [vmem:[#allocation7 + $0x7b0] sm:$0xff]
    %v2415 = vld [vmem:[#allocation7 + $0x7b8] sm:$0xff]
    %v2416 = vld [vmem:[#allocation7 + $0x7c0] sm:$0xff]
    %v2417 = vld [vmem:[#allocation7 + $0x7c8] sm:$0xff]
    %v2418 = vld [vmem:[#allocation7 + $0x7d0] sm:$0xff]
    %v2419 = vld [vmem:[#allocation7 + $0x7d8] sm:$0xff]
    %v2420 = vld [vmem:[#allocation7 + $0x7e0] sm:$0xff]
    %v2421 = vld [vmem:[#allocation7 + $0x7e8] sm:$0xff]
    %v2422 = vld [vmem:[#allocation7 + $0x7f0] sm:$0xff]
    %v2423 = vld [vmem:[#allocation7 + $0x7f8] sm:$0xff]
    %v2424 = vld [vmem:[#allocation7 + $0x800] sm:$0xff]
    %v2425 = vld [vmem:[#allocation7 + $0x808] sm:$0xff]
    %v2426 = vld [vmem:[#allocation7 + $0x810] sm:$0xff]
    %v2427 = vld [vmem:[#allocation7 + $0x818] sm:$0xff]
    %v2428 = vld [vmem:[#allocation7 + $0x820] sm:$0xff]
    %v2429 = vld [vmem:[#allocation7 + $0x828] sm:$0xff]
    %v2430 = vld [vmem:[#allocation7 + $0x830] sm:$0xff]
    %v2431 = vld [vmem:[#allocation7 + $0x838] sm:$0xff]
    %v2432 = vld [vmem:[#allocation7 + $0x840] sm:$0xff]
    %v2433 = vld [vmem:[#allocation7 + $0x848] sm:$0xff]
    %v2434 = vld [vmem:[#allocation7 + $0x850] sm:$0xff]
    %v2435 = vld [vmem:[#allocation7 + $0x858] sm:$0xff]
    %v2436 = vld [vmem:[#allocation7 + $0x860] sm:$0xff]
    %v2437 = vld [vmem:[#allocation7 + $0x868] sm:$0xff]
    %v2438 = vld [vmem:[#allocation7 + $0x870] sm:$0xff]
    %v2439 = vld [vmem:[#allocation7 + $0x878] sm:$0xff]
    %v2440 = vld [vmem:[#allocation7 + $0x880] sm:$0xff]
    %v2441 = vld [vmem:[#allocation7 + $0x888] sm:$0xff]
    %v2442 = vld [vmem:[#allocation7 + $0x890] sm:$0xff]
    %v2443 = vld [vmem:[#allocation7 + $0x898] sm:$0xff]
    %v2444 = vld [vmem:[#allocation7 + $0x8a0] sm:$0xff]
    %v2445 = vld [vmem:[#allocation7 + $0x8a8] sm:$0xff]
    %v2446 = vld [vmem:[#allocation7 + $0x8b0] sm:$0xff]
    %v2447 = vld [vmem:[#allocation7 + $0x8b8] sm:$0xff]
    %v2448 = vld [vmem:[#allocation7 + $0x8c0] sm:$0xff]
    %v2449 = vld [vmem:[#allocation7 + $0x8c8] sm:$0xff]
    %v2450 = vld [vmem:[#allocation7 + $0x8d0] sm:$0xff]
    %v2451 = vld [vmem:[#allocation7 + $0x8d8] sm:$0xff]
    %v2452 = vld [vmem:[#allocation7 + $0x8e0] sm:$0xff]
    %v2453 = vld [vmem:[#allocation7 + $0x8e8] sm:$0xff]
    %v2454 = vld [vmem:[#allocation7 + $0x8f0] sm:$0xff]
    %v2455 = vld [vmem:[#allocation7 + $0x8f8] sm:$0xff]
    %v2456 = vld [vmem:[#allocation7 + $0x900] sm:$0xff]
    %v2457 = vld [vmem:[#allocation7 + $0x908] sm:$0xff]
    %v2458 = vld [vmem:[#allocation7 + $0x910] sm:$0xff]
    %v2459 = vld [vmem:[#allocation7 + $0x918] sm:$0xff]
    %v2460 = vld [vmem:[#allocation7 + $0x920] sm:$0xff]
    %v2461 = vld [vmem:[#allocation7 + $0x928] sm:$0xff]
    %v2462 = vld [vmem:[#allocation7 + $0x930] sm:$0xff]
    %v2463 = vld [vmem:[#allocation7 + $0x938] sm:$0xff]
    %v2464 = vld [vmem:[#allocation7 + $0x940] sm:$0xff]
    %v2465 = vld [vmem:[#allocation7 + $0x948] sm:$0xff]
    %v2466 = vld [vmem:[#allocation7 + $0x950] sm:$0xff]
    %v2467 = vld [vmem:[#allocation7 + $0x958] sm:$0xff]
    %v2468 = vld [vmem:[#allocation7 + $0x960] sm:$0x11]
    %v2469 = vld [vmem:[#allocation7 + $0x968] sm:$0x11]
    %v2470 = vld [vmem:[#allocation7 + $0x980] sm:$0xff]
    %v2471 = vld [vmem:[#allocation7 + $0x988] sm:$0xff]
    %v2472 = vld [vmem:[#allocation7 + $0x990] sm:$0xff]
    %v2473 = vld [vmem:[#allocation7 + $0x998] sm:$0xff]
    %v2474 = vld [vmem:[#allocation7 + $0x9a0] sm:$0xff]
    %v2475 = vld [vmem:[#allocation7 + $0x9a8] sm:$0xff]
    %v2476 = vld [vmem:[#allocation7 + $0x9b0] sm:$0xff]
    %v2477 = vld [vmem:[#allocation7 + $0x9b8] sm:$0xff]
    %v2478 = vld [vmem:[#allocation7 + $0x9e0] sm:$0xff]
    %v2479 = vld [vmem:[#allocation7 + $0x9e8] sm:$0xff]
    %v2480 = vld [vmem:[#allocation7 + $0x9f0] sm:$0xff]
    %v2481 = vld [vmem:[#allocation7 + $0x9f8] sm:$0xff]
    %v2482 = vld [vmem:[#allocation7 + $0xa00] sm:$0xff]
    %v2483 = vld [vmem:[#allocation7 + $0xa08] sm:$0xff]
    %v2484 = vld [vmem:[#allocation7 + $0xa10] sm:$0xff]
    %v2485 = vld [vmem:[#allocation7 + $0xa18] sm:$0xff]
    %v2486 = vld [vmem:[#allocation7 + $0xa40] sm:$0xff]
    %v2487 = vld [vmem:[#allocation7 + $0xa50] sm:$0xff]
    %v2488 = vld [vmem:[#allocation7 + $0xa60] sm:$0xff]
    %v2489 = vld [vmem:[#allocation7 + $0xa70] sm:$0xff]
    %v2490 = vld [vmem:[#allocation7 + $0xa80] sm:$0xff]
    %v2491 = vld [vmem:[#allocation7 + $0xa90] sm:$0xff]
    %v2492 = vld [vmem:[#allocation7 + $0xaa0] sm:$0xff]
    %v2493 = vld [vmem:[#allocation7 + $0xab0] sm:$0xff]
    %v2494 = vld [vmem:[#allocation7 + $0xac0] sm:$0xff]
    %v2495 = vld [vmem:[#allocation7 + $0xad0] sm:$0xff]
    %v2496 = vld [vmem:[#allocation7 + $0xae0] sm:$0xff]
    %v2497 = vld [vmem:[#allocation7 + $0xaf0] sm:$0xff]
    %v2498 = vld [vmem:[#allocation7 + $0xb00] sm:$0xff]
    %v2499 = vld [vmem:[#allocation7 + $0xb10] sm:$0xff]
    %v2500 = vld [vmem:[#allocation7 + $0xb20] sm:$0xff]
    %v2501 = vld [vmem:[#allocation7 + $0xb30] sm:$0xff]
    %v2502 = vld [vmem:[#allocation7 + $0xb40] sm:$0xff]
    %v2503 = vld [vmem:[#allocation7 + $0xb50] sm:$0xff]
    %v2504 = vld [vmem:[#allocation7 + $0xb60] sm:$0xff]
    %v2505 = vld [vmem:[#allocation7 + $0xb70] sm:$0xff]
    %v2506 = vld [vmem:[#allocation7 + $0xb80] sm:$0xff]
    %v2507 = vld [vmem:[#allocation7 + $0xb90] sm:$0xff]
    %v2508 = vld [vmem:[#allocation7 + $0xba0] sm:$0xff]
    %v2509 = vld [vmem:[#allocation7 + $0xbb0] sm:$0xff]
    %v2510 = vld [vmem:[#allocation7 + $0xbc0] sm:$0xff]
    %v2511 = vld [vmem:[#allocation7 + $0xbd0] sm:$0xff]
    %v2512 = vld [vmem:[#allocation7 + $0xbe0] sm:$0xff]
    %v2513 = vld [vmem:[#allocation7 + $0xbf0] sm:$0xff]
    %v2514 = vld [vmem:[#allocation7 + $0xc00] sm:$0xff]
    %v2515 = vld [vmem:[#allocation7 + $0xc10] sm:$0xff]
    %v2516 = vld [vmem:[#allocation7 + $0xc20] sm:$0xff]
    %v2517 = vld [vmem:[#allocation7 + $0xc30] sm:$0xff]
    %v2518 = vld [vmem:[#allocation7 + $0xc40] sm:$0xff]
    %v2519 = vld [vmem:[#allocation7 + $0xc50] sm:$0xff]
    %v2520 = vld [vmem:[#allocation7 + $0xc60] sm:$0xff]
    %v2521 = vld [vmem:[#allocation7 + $0xc70] sm:$0xff]
    %v2522 = vld [vmem:[#allocation7 + $0xc80] sm:$0xff]
    %v2523 = vld [vmem:[#allocation7 + $0xc90] sm:$0xff]
    %v2524 = vld [vmem:[#allocation7 + $0xca0] sm:$0xff]
    %v2525 = vld [vmem:[#allocation7 + $0xcb0] sm:$0xff]
    %v2526 = vld [vmem:[#allocation7 + $0xcc0] sm:$0xff]
    %v2527 = vld [vmem:[#allocation7 + $0xcd0] sm:$0xff]
    %v2528 = vld [vmem:[#allocation7 + $0xce0] sm:$0xff]
    %v2529 = vld [vmem:[#allocation7 + $0xcf0] sm:$0xff]
    %v2530 = vld [vmem:[#allocation7 + $0xd00] sm:$0xff]
    %v2531 = vld [vmem:[#allocation7 + $0xd10] sm:$0xff]
    %v2532 = vld [vmem:[#allocation7 + $0xd20] sm:$0xff]
    %v2533 = vld [vmem:[#allocation7 + $0xd30] sm:$0xff]
    %v2534 = vld [vmem:[#allocation7 + $0xd40] sm:$0xff]
    %v2535 = vld [vmem:[#allocation7 + $0xd50] sm:$0xff]
    %v2536 = vld [vmem:[#allocation7 + $0xd60] sm:$0xff]
    %v2537 = vld [vmem:[#allocation7 + $0xd70] sm:$0xff]
    %v2538 = vld [vmem:[#allocation7 + $0xd80] sm:$0xff]
    %v2539 = vld [vmem:[#allocation7 + $0xd90] sm:$0xff]
    %v2540 = vld [vmem:[#allocation7 + $0xda0] sm:$0xff]
    %v2541 = vld [vmem:[#allocation7 + $0xdb0] sm:$0xff]
    %v2542 = vld [vmem:[#allocation7 + $0xdc0] sm:$0xff]
    %v2543 = vld [vmem:[#allocation7 + $0xdd0] sm:$0xff]
    %v2544 = vld [vmem:[#allocation7 + $0xde0] sm:$0xff]
    %v2545 = vld [vmem:[#allocation7 + $0xdf0] sm:$0xff]
    %v2546 = vld [vmem:[#allocation7 + $0xe00] sm:$0xff]
    %v2547 = vld [vmem:[#allocation7 + $0xe10] sm:$0xff]
    %v2548 = vld [vmem:[#allocation7 + $0xe20] sm:$0xff]
    %v2549 = vld [vmem:[#allocation7 + $0xe30] sm:$0xff]
    %v2550 = vld [vmem:[#allocation7 + $0xe40] sm:$0x11]
    %v2551 = vld [vmem:[#allocation7 + $0xe60] sm:$0xf]
    %v2552 = vld [vmem:[#allocation7 + $0xe70] sm:$0xf]
    %v2553 = vld [vmem:[#allocation7 + $0xe80] sm:$0xf]
    %v2554 = vld [vmem:[#allocation7 + $0xe90] sm:$0xf]
    %v2555 = vld [vmem:[#allocation7 + $0xea0] sm:$0xf]
    %v2556 = vld [vmem:[#allocation7 + $0xeb0] sm:$0xf]
    %v2557 = vld [vmem:[#allocation7 + $0xec0] sm:$0xf]
    %v2558 = vld [vmem:[#allocation7 + $0xed0] sm:$0xf]
    %v2559 = vld [vmem:[#allocation7 + $0xee0] sm:$0xf]
    %v2560 = vld [vmem:[#allocation7 + $0xef0] sm:$0xf]
    %v2561 = vld [vmem:[#allocation7 + $0xf00] sm:$0xf]
    %v2562 = vld [vmem:[#allocation7 + $0xf10] sm:$0xf]
    %v2563 = vld [vmem:[#allocation7 + $0xf20] sm:$0xf]
    %v2564 = vld [vmem:[#allocation7 + $0xf30] sm:$0xf]
    %v2565 = vld [vmem:[#allocation7 + $0xf40] sm:$0xf]
    %v2566 = vld [vmem:[#allocation7 + $0xf50] sm:$0xf]
    %v2567 = vld [vmem:[#allocation7 + $0xf60] sm:$0xf]
    %v2568 = vld [vmem:[#allocation7 + $0xf70] sm:$0xf]
    %v2569 = vld [vmem:[#allocation7 + $0xf80] sm:$0xf]
    %v2570 = vld [vmem:[#allocation7 + $0xf90] sm:$0xf]
    %v2571 = vld [vmem:[#allocation7 + $0xfa0] sm:$0xf]
    %v2572 = vld [vmem:[#allocation7 + $0xfb0] sm:$0xf]
    %v2573 = vld [vmem:[#allocation7 + $0xfc0] sm:$0xf]
    %v2574 = vld [vmem:[#allocation7 + $0xfd0] sm:$0xf]
    %v2575 = vld [vmem:[#allocation7 + $0xfe0] sm:$0xf]
    %v2576 = vld [vmem:[#allocation7 + $0xff0] sm:$0xf]
    %v2577 = vld [vmem:[#allocation7 + $0x1000] sm:$0xf]
    %v2578 = vld [vmem:[#allocation7 + $0x1010] sm:$0xf]
    %v2579 = vld [vmem:[#allocation7 + $0x1020] sm:$0xf]
    %v2580 = vld [vmem:[#allocation7 + $0x1030] sm:$0xf]
    %v2581 = vld [vmem:[#allocation7 + $0x1040] sm:$0xf]
    %v2582 = vld [vmem:[#allocation7 + $0x1050] sm:$0xf]
    %v2583 = vld [vmem:[#allocation7 + $0x1060] sm:$0x1]
    %v2584 = vld [vmem:[#allocation7 + $0x1080] sm:$0xf]
    %v2585 = vld [vmem:[#allocation7 + $0x1090] sm:$0xf]
    %v2586 = vld [vmem:[#allocation7 + $0x10a0] sm:$0xf]
    %v2587 = vld [vmem:[#allocation7 + $0x10b0] sm:$0xf]
    %v2588 = vld [vmem:[#allocation7 + $0x10c0] sm:$0xf]
    %v2589 = vld [vmem:[#allocation7 + $0x10d0] sm:$0xf]
    %v2590 = vld [vmem:[#allocation7 + $0x10e0] sm:$0xf]
    %v2591 = vld [vmem:[#allocation7 + $0x10f0] sm:$0xf]
    %v2592 = vld [vmem:[#allocation7 + $0x1100] sm:$0x1]
    %v2595 = vunpack.c.l.s4 1966171168
    %v2596 = vunpack.c.0.s8 %v2595
    %v2597 = vlaneseq
    %v2598 = vshrl.u32 %v2597, 7
    %v2599 = vsub.s32 %v2596, %v2598
    %v2600 = vrot.slane %v2224, %v2599
    %v2601 = vcombine.high %v2600, %v2600
    %v2603 = vunpack.c.l.s4 1966171168
    %v2604 = vunpack.c.0.s8 %v2603
    %v2605 = vlaneseq
    %v2606 = vshrl.u32 %v2605, 7
    %v2607 = vsub.s32 %v2604, %v2606
    %v2608 = vrot.slane %v2600, %v2607
    %v2610 = vunpack.c.l.s4 1966171168
    %v2611 = vunpack.c.0.s8 %v2610
    %v2612 = vlaneseq
    %v2613 = vshrl.u32 %v2612, 7
    %v2614 = vsub.s32 %v2611, %v2613
    %v2615 = vrot.slane %v2601, %v2614
    %v2616 = vlaneseq
    %v2617 = vshrl.u32 %v2616, 7
    %v2618 = vsub.s32 0, %v2617
    %v2619 = vrot.slane %v2608, %v2618
    %v2620 = vlaneseq
    %v2621 = vshrl.u32 %v2620, 7
    %v2622 = vsub.s32 0, %v2621
    %v2623 = vrot.slane %v2615, %v2622
    %v2626 = vsub.f32 %v59, %v2619
    %v2627 = vsub.f32 %v60, %v2619
    %v2628 = vsub.f32 %v61, %v2619
    %v2629 = vsub.f32 %v62, %v2619
    %v2630 = vsub.f32 %v63, %v2619
    %v2631 = vsub.f32 %v64, %v2619
    %v2632 = vsub.f32 %v65, %v2619
    %v2633 = vsub.f32 %v66, %v2619
    %v2634 = vsub.f32 %v67, %v2619
    %v2635 = vsub.f32 %v68, %v2619
    %v2636 = vsub.f32 %v69, %v2619
    %v2637 = vsub.f32 %v70, %v2619
    %v2638 = vsub.f32 %v71, %v2619
    %v2639 = vsub.f32 %v72, %v2619
    %v2640 = vsub.f32 %v73, %v2619
    %v2641 = vsub.f32 %v74, %v2619
    %v2642 = vsub.f32 %v75, %v2623
    %v2643 = vsub.f32 %v76, %v2623
    %v2644 = vsub.f32 %v77, %v2623
    %v2645 = vsub.f32 %v78, %v2623
    %v2646 = vsub.f32 %v79, %v2623
    %v2647 = vsub.f32 %v80, %v2623
    %v2648 = vsub.f32 %v81, %v2623
    %v2649 = vsub.f32 %v82, %v2623
    %v2650 = vsub.f32 %v83, %v2623
    %v2651 = vsub.f32 %v84, %v2623
    %v2652 = vsub.f32 %v85, %v2623
    %v2653 = vsub.f32 %v86, %v2623
    %v2654 = vsub.f32 %v87, %v2623
    %v2655 = vsub.f32 %v88, %v2623
    %v2656 = vsub.f32 %v89, %v2623
    %v2657 = vsub.f32 %v90, %v2623
    %v2658 = vunpack.c.l.bf16 %v2225
    %2660 = vset.pattern.permute.xlu0 0
    %2661 = vperm.xlu0 %2660, %v2626
    %v2662 = vpop.permute.xlu0 %2661
    %2665 = vset.pattern.permute.xlu0 0
    %2666 = vperm.xlu0 %2665, %v2627
    %v2667 = vpop.permute.xlu0 %2666
    %2670 = vset.pattern.permute.xlu0 0
    %2671 = vperm.xlu0 %2670, %v2628
    %v2672 = vpop.permute.xlu0 %2671
    %2675 = vset.pattern.permute.xlu0 0
    %2676 = vperm.xlu0 %2675, %v2629
    %v2677 = vpop.permute.xlu0 %2676
    %2680 = vset.pattern.permute.xlu0 0
    %2681 = vperm.xlu0 %2680, %v2630
    %v2682 = vpop.permute.xlu0 %2681
    %2685 = vset.pattern.permute.xlu0 0
    %2686 = vperm.xlu0 %2685, %v2631
    %v2687 = vpop.permute.xlu0 %2686
    %2690 = vset.pattern.permute.xlu0 0
    %2691 = vperm.xlu0 %2690, %v2632
    %v2692 = vpop.permute.xlu0 %2691
    %2695 = vset.pattern.permute.xlu0 0
    %2696 = vperm.xlu0 %2695, %v2633
    %v2697 = vpop.permute.xlu0 %2696
    %2700 = vset.pattern.permute.xlu0 0
    %2701 = vperm.xlu0 %2700, %v2634
    %v2702 = vpop.permute.xlu0 %2701
    %2705 = vset.pattern.permute.xlu0 0
    %2706 = vperm.xlu0 %2705, %v2635
    %v2707 = vpop.permute.xlu0 %2706
    %2710 = vset.pattern.permute.xlu0 0
    %2711 = vperm.xlu0 %2710, %v2636
    %v2712 = vpop.permute.xlu0 %2711
    %2715 = vset.pattern.permute.xlu0 0
    %2716 = vperm.xlu0 %2715, %v2637
    %v2717 = vpop.permute.xlu0 %2716
    %2720 = vset.pattern.permute.xlu0 0
    %2721 = vperm.xlu0 %2720, %v2638
    %v2722 = vpop.permute.xlu0 %2721
    %2725 = vset.pattern.permute.xlu0 0
    %2726 = vperm.xlu0 %2725, %v2639
    %v2727 = vpop.permute.xlu0 %2726
    %2730 = vset.pattern.permute.xlu0 0
    %2731 = vperm.xlu0 %2730, %v2640
    %v2732 = vpop.permute.xlu0 %2731
    %2735 = vset.pattern.permute.xlu0 0
    %2736 = vperm.xlu0 %2735, %v2641
    %v2737 = vpop.permute.xlu0 %2736
    %2740 = vset.pattern.permute.xlu0 0
    %2741 = vperm.xlu0 %2740, %v2642
    %v2742 = vpop.permute.xlu0 %2741
    %2745 = vset.pattern.permute.xlu0 0
    %2746 = vperm.xlu0 %2745, %v2643
    %v2747 = vpop.permute.xlu0 %2746
    %2750 = vset.pattern.permute.xlu0 0
    %2751 = vperm.xlu0 %2750, %v2644
    %v2752 = vpop.permute.xlu0 %2751
    %2755 = vset.pattern.permute.xlu0 0
    %2756 = vperm.xlu0 %2755, %v2645
    %v2757 = vpop.permute.xlu0 %2756
    %2760 = vset.pattern.permute.xlu0 0
    %2761 = vperm.xlu0 %2760, %v2646
    %v2762 = vpop.permute.xlu0 %2761
    %2765 = vset.pattern.permute.xlu0 0
    %2766 = vperm.xlu0 %2765, %v2647
    %v2767 = vpop.permute.xlu0 %2766
    %2770 = vset.pattern.permute.xlu0 0
    %2771 = vperm.xlu0 %2770, %v2648
    %v2772 = vpop.permute.xlu0 %2771
    %2775 = vset.pattern.permute.xlu0 0
    %2776 = vperm.xlu0 %2775, %v2649
    %v2777 = vpop.permute.xlu0 %2776
    %2780 = vset.pattern.permute.xlu0 0
    %2781 = vperm.xlu0 %2780, %v2650
    %v2782 = vpop.permute.xlu0 %2781
    %2785 = vset.pattern.permute.xlu0 0
    %2786 = vperm.xlu0 %2785, %v2651
    %v2787 = vpop.permute.xlu0 %2786
    %2790 = vset.pattern.permute.xlu0 0
    %2791 = vperm.xlu0 %2790, %v2652
    %v2792 = vpop.permute.xlu0 %2791
    %2795 = vset.pattern.permute.xlu0 0
    %2796 = vperm.xlu0 %2795, %v2653
    %v2797 = vpop.permute.xlu0 %2796
    %2800 = vset.pattern.permute.xlu0 0
    %2801 = vperm.xlu0 %2800, %v2654
    %v2802 = vpop.permute.xlu0 %2801
    %2805 = vset.pattern.permute.xlu0 0
    %2806 = vperm.xlu0 %2805, %v2655
    %v2807 = vpop.permute.xlu0 %2806
    %2810 = vset.pattern.permute.xlu0 0
    %2811 = vperm.xlu0 %2810, %v2656
    %v2812 = vpop.permute.xlu0 %2811
    %2815 = vset.pattern.permute.xlu0 0
    %2816 = vperm.xlu0 %2815, %v2657
    %v2817 = vpop.permute.xlu0 %2816
    %v2819 = vlaneseq
    %v2820 = vshrl.u32 %v2819, 7
    %v2821 = vsub.s32 0, %v2820
    %v2822 = vrot.slane %v2658, %v2821
    %v2823 = vmul.f32 %v2662, %v2822
    %v2824 = vmul.f32 %v2667, %v2822
    %v2825 = vmul.f32 %v2672, %v2822
    %v2826 = vmul.f32 %v2677, %v2822
    %v2827 = vmul.f32 %v2682, %v2822
    %v2828 = vmul.f32 %v2687, %v2822
    %v2829 = vmul.f32 %v2692, %v2822
    %v2830 = vmul.f32 %v2697, %v2822
    %v2831 = vmul.f32 %v2702, %v2822
    %v2832 = vmul.f32 %v2707, %v2822
    %v2833 = vmul.f32 %v2712, %v2822
    %v2834 = vmul.f32 %v2717, %v2822
    %v2835 = vmul.f32 %v2722, %v2822
    %v2836 = vmul.f32 %v2727, %v2822
    %v2837 = vmul.f32 %v2732, %v2822
    %v2838 = vmul.f32 %v2737, %v2822
    %v2839 = vmul.f32 %v2742, %v2822
    %v2840 = vmul.f32 %v2747, %v2822
    %v2841 = vmul.f32 %v2752, %v2822
    %v2842 = vmul.f32 %v2757, %v2822
    %v2843 = vmul.f32 %v2762, %v2822
    %v2844 = vmul.f32 %v2767, %v2822
    %v2845 = vmul.f32 %v2772, %v2822
    %v2846 = vmul.f32 %v2777, %v2822
    %v2847 = vmul.f32 %v2782, %v2822
    %v2848 = vmul.f32 %v2787, %v2822
    %v2849 = vmul.f32 %v2792, %v2822
    %v2850 = vmul.f32 %v2797, %v2822
    %v2851 = vmul.f32 %v2802, %v2822
    %v2852 = vmul.f32 %v2807, %v2822
    %v2853 = vmul.f32 %v2812, %v2822
    %v2854 = vmul.f32 %v2817, %v2822
    %2855 = vset.pattern.permute.xlu0 1
    %2856 = vperm.xlu0 %2855, %v2626
    %v2857 = vpop.permute.xlu0 %2856
    %2859 = vset.pattern.permute.xlu0 1
    %2860 = vperm.xlu0 %2859, %v2627
    %v2861 = vpop.permute.xlu0 %2860
    %2863 = vset.pattern.permute.xlu0 1
    %2864 = vperm.xlu0 %2863, %v2628
    %v2865 = vpop.permute.xlu0 %2864
    %2867 = vset.pattern.permute.xlu0 1
    %2868 = vperm.xlu0 %2867, %v2629
    %v2869 = vpop.permute.xlu0 %2868
    %2871 = vset.pattern.permute.xlu0 1
    %2872 = vperm.xlu0 %2871, %v2630
    %v2873 = vpop.permute.xlu0 %2872
    %2875 = vset.pattern.permute.xlu0 1
    %2876 = vperm.xlu0 %2875, %v2631
    %v2877 = vpop.permute.xlu0 %2876
    %2879 = vset.pattern.permute.xlu0 1
    %2880 = vperm.xlu0 %2879, %v2632
    %v2881 = vpop.permute.xlu0 %2880
    %2883 = vset.pattern.permute.xlu0 1
    %2884 = vperm.xlu0 %2883, %v2633
    %v2885 = vpop.permute.xlu0 %2884
    %2887 = vset.pattern.permute.xlu0 1
    %2888 = vperm.xlu0 %2887, %v2634
    %v2889 = vpop.permute.xlu0 %2888
    %2891 = vset.pattern.permute.xlu0 1
    %2892 = vperm.xlu0 %2891, %v2635
    %v2893 = vpop.permute.xlu0 %2892
    %2895 = vset.pattern.permute.xlu0 1
    %2896 = vperm.xlu0 %2895, %v2636
    %v2897 = vpop.permute.xlu0 %2896
    %2899 = vset.pattern.permute.xlu0 1
    %2900 = vperm.xlu0 %2899, %v2637
    %v2901 = vpop.permute.xlu0 %2900
    %2903 = vset.pattern.permute.xlu0 1
    %2904 = vperm.xlu0 %2903, %v2638
    %v2905 = vpop.permute.xlu0 %2904
    %2907 = vset.pattern.permute.xlu0 1
    %2908 = vperm.xlu0 %2907, %v2639
    %v2909 = vpop.permute.xlu0 %2908
    %2911 = vset.pattern.permute.xlu0 1
    %2912 = vperm.xlu0 %2911, %v2640
    %v2913 = vpop.permute.xlu0 %2912
    %2915 = vset.pattern.permute.xlu0 1
    %2916 = vperm.xlu0 %2915, %v2641
    %v2917 = vpop.permute.xlu0 %2916
    %2919 = vset.pattern.permute.xlu0 1
    %2920 = vperm.xlu0 %2919, %v2642
    %v2921 = vpop.permute.xlu0 %2920
    %2923 = vset.pattern.permute.xlu0 1
    %2924 = vperm.xlu0 %2923, %v2643
    %v2925 = vpop.permute.xlu0 %2924
    %2927 = vset.pattern.permute.xlu0 1
    %2928 = vperm.xlu0 %2927, %v2644
    %v2929 = vpop.permute.xlu0 %2928
    %2931 = vset.pattern.permute.xlu0 1
    %2932 = vperm.xlu0 %2931, %v2645
    %v2933 = vpop.permute.xlu0 %2932
    %2935 = vset.pattern.permute.xlu0 1
    %2936 = vperm.xlu0 %2935, %v2646
    %v2937 = vpop.permute.xlu0 %2936
    %2939 = vset.pattern.permute.xlu0 1
    %2940 = vperm.xlu0 %2939, %v2647
    %v2941 = vpop.permute.xlu0 %2940
    %2943 = vset.pattern.permute.xlu0 1
    %2944 = vperm.xlu0 %2943, %v2648
    %v2945 = vpop.permute.xlu0 %2944
    %2947 = vset.pattern.permute.xlu0 1
    %2948 = vperm.xlu0 %2947, %v2649
    %v2949 = vpop.permute.xlu0 %2948
    %2951 = vset.pattern.permute.xlu0 1
    %2952 = vperm.xlu0 %2951, %v2650
    %v2953 = vpop.permute.xlu0 %2952
    %2955 = vset.pattern.permute.xlu0 1
    %2956 = vperm.xlu0 %2955, %v2651
    %v2957 = vpop.permute.xlu0 %2956
    %2959 = vset.pattern.permute.xlu0 1
    %2960 = vperm.xlu0 %2959, %v2652
    %v2961 = vpop.permute.xlu0 %2960
    %2963 = vset.pattern.permute.xlu0 1
    %2964 = vperm.xlu0 %2963, %v2653
    %v2965 = vpop.permute.xlu0 %2964
    %2967 = vset.pattern.permute.xlu0 1
    %2968 = vperm.xlu0 %2967, %v2654
    %v2969 = vpop.permute.xlu0 %2968
    %2971 = vset.pattern.permute.xlu0 1
    %2972 = vperm.xlu0 %2971, %v2655
    %v2973 = vpop.permute.xlu0 %2972
    %2975 = vset.pattern.permute.xlu0 1
    %2976 = vperm.xlu0 %2975, %v2656
    %v2977 = vpop.permute.xlu0 %2976
    %2979 = vset.pattern.permute.xlu0 1
    %2980 = vperm.xlu0 %2979, %v2657
    %v2981 = vpop.permute.xlu0 %2980
    %v2983 = vlaneseq
    %v2984 = vshrl.u32 %v2983, 7
    %v2985 = vsub.s32 1, %v2984
    %v2986 = vrot.slane %v2658, %v2985
    %v2987 = vmul.f32 %v2857, %v2986
    %v2988 = vmul.f32 %v2861, %v2986
    %v2989 = vmul.f32 %v2865, %v2986
    %v2990 = vmul.f32 %v2869, %v2986
    %v2991 = vmul.f32 %v2873, %v2986
    %v2992 = vmul.f32 %v2877, %v2986
    %v2993 = vmul.f32 %v2881, %v2986
    %v2994 = vmul.f32 %v2885, %v2986
    %v2995 = vmul.f32 %v2889, %v2986
    %v2996 = vmul.f32 %v2893, %v2986
    %v2997 = vmul.f32 %v2897, %v2986
    %v2998 = vmul.f32 %v2901, %v2986
    %v2999 = vmul.f32 %v2905, %v2986
    %v3000 = vmul.f32 %v2909, %v2986
    %v3001 = vmul.f32 %v2913, %v2986
    %v3002 = vmul.f32 %v2917, %v2986
    %v3003 = vmul.f32 %v2921, %v2986
    %v3004 = vmul.f32 %v2925, %v2986
    %v3005 = vmul.f32 %v2929, %v2986
    %v3006 = vmul.f32 %v2933, %v2986
    %v3007 = vmul.f32 %v2937, %v2986
    %v3008 = vmul.f32 %v2941, %v2986
    %v3009 = vmul.f32 %v2945, %v2986
    %v3010 = vmul.f32 %v2949, %v2986
    %v3011 = vmul.f32 %v2953, %v2986
    %v3012 = vmul.f32 %v2957, %v2986
    %v3013 = vmul.f32 %v2961, %v2986
    %v3014 = vmul.f32 %v2965, %v2986
    %v3015 = vmul.f32 %v2969, %v2986
    %v3016 = vmul.f32 %v2973, %v2986
    %v3017 = vmul.f32 %v2977, %v2986
    %v3018 = vmul.f32 %v2981, %v2986
    %v3019 = vadd.f32 %v2823, %v2987
    %v3020 = vadd.f32 %v2824, %v2988
    %v3021 = vadd.f32 %v2825, %v2989
    %v3022 = vadd.f32 %v2826, %v2990
    %v3023 = vadd.f32 %v2827, %v2991
    %v3024 = vadd.f32 %v2828, %v2992
    %v3025 = vadd.f32 %v2829, %v2993
    %v3026 = vadd.f32 %v2830, %v2994
    %v3027 = vadd.f32 %v2831, %v2995
    %v3028 = vadd.f32 %v2832, %v2996
    %v3029 = vadd.f32 %v2833, %v2997
    %v3030 = vadd.f32 %v2834, %v2998
    %v3031 = vadd.f32 %v2835, %v2999
    %v3032 = vadd.f32 %v2836, %v3000
    %v3033 = vadd.f32 %v2837, %v3001
    %v3034 = vadd.f32 %v2838, %v3002
    %v3035 = vadd.f32 %v2839, %v3003
    %v3036 = vadd.f32 %v2840, %v3004
    %v3037 = vadd.f32 %v2841, %v3005
    %v3038 = vadd.f32 %v2842, %v3006
    %v3039 = vadd.f32 %v2843, %v3007
    %v3040 = vadd.f32 %v2844, %v3008
    %v3041 = vadd.f32 %v2845, %v3009
    %v3042 = vadd.f32 %v2846, %v3010
    %v3043 = vadd.f32 %v2847, %v3011
    %v3044 = vadd.f32 %v2848, %v3012
    %v3045 = vadd.f32 %v2849, %v3013
    %v3046 = vadd.f32 %v2850, %v3014
    %v3047 = vadd.f32 %v2851, %v3015
    %v3048 = vadd.f32 %v2852, %v3016
    %v3049 = vadd.f32 %v2853, %v3017
    %v3050 = vadd.f32 %v2854, %v3018
    %3051 = vset.pattern.permute.xlu0 2
    %3052 = vperm.xlu0 %3051, %v2626
    %v3053 = vpop.permute.xlu0 %3052
    %3055 = vset.pattern.permute.xlu0 2
    %3056 = vperm.xlu0 %3055, %v2627
    %v3057 = vpop.permute.xlu0 %3056
    %3059 = vset.pattern.permute.xlu0 2
    %3060 = vperm.xlu0 %3059, %v2628
    %v3061 = vpop.permute.xlu0 %3060
    %3063 = vset.pattern.permute.xlu0 2
    %3064 = vperm.xlu0 %3063, %v2629
    %v3065 = vpop.permute.xlu0 %3064
    %3067 = vset.pattern.permute.xlu0 2
    %3068 = vperm.xlu0 %3067, %v2630
    %v3069 = vpop.permute.xlu0 %3068
    %3071 = vset.pattern.permute.xlu0 2
    %3072 = vperm.xlu0 %3071, %v2631
    %v3073 = vpop.permute.xlu0 %3072
    %3075 = vset.pattern.permute.xlu0 2
    %3076 = vperm.xlu0 %3075, %v2632
    %v3077 = vpop.permute.xlu0 %3076
    %3079 = vset.pattern.permute.xlu0 2
    %3080 = vperm.xlu0 %3079, %v2633
    %v3081 = vpop.permute.xlu0 %3080
    %3083 = vset.pattern.permute.xlu0 2
    %3084 = vperm.xlu0 %3083, %v2634
    %v3085 = vpop.permute.xlu0 %3084
    %3087 = vset.pattern.permute.xlu0 2
    %3088 = vperm.xlu0 %3087, %v2635
    %v3089 = vpop.permute.xlu0 %3088
    %3091 = vset.pattern.permute.xlu0 2
    %3092 = vperm.xlu0 %3091, %v2636
    %v3093 = vpop.permute.xlu0 %3092
    %3095 = vset.pattern.permute.xlu0 2
    %3096 = vperm.xlu0 %3095, %v2637
    %v3097 = vpop.permute.xlu0 %3096
    %3099 = vset.pattern.permute.xlu0 2
    %3100 = vperm.xlu0 %3099, %v2638
    %v3101 = vpop.permute.xlu0 %3100
    %3103 = vset.pattern.permute.xlu0 2
    %3104 = vperm.xlu0 %3103, %v2639
    %v3105 = vpop.permute.xlu0 %3104
    %3107 = vset.pattern.permute.xlu0 2
    %3108 = vperm.xlu0 %3107, %v2640
    %v3109 = vpop.permute.xlu0 %3108
    %3111 = vset.pattern.permute.xlu0 2
    %3112 = vperm.xlu0 %3111, %v2641
    %v3113 = vpop.permute.xlu0 %3112
    %3115 = vset.pattern.permute.xlu0 2
    %3116 = vperm.xlu0 %3115, %v2642
    %v3117 = vpop.permute.xlu0 %3116
    %3119 = vset.pattern.permute.xlu0 2
    %3120 = vperm.xlu0 %3119, %v2643
    %v3121 = vpop.permute.xlu0 %3120
    %3123 = vset.pattern.permute.xlu0 2
    %3124 = vperm.xlu0 %3123, %v2644
    %v3125 = vpop.permute.xlu0 %3124
    %3127 = vset.pattern.permute.xlu0 2
    %3128 = vperm.xlu0 %3127, %v2645
    %v3129 = vpop.permute.xlu0 %3128
    %3131 = vset.pattern.permute.xlu0 2
    %3132 = vperm.xlu0 %3131, %v2646
    %v3133 = vpop.permute.xlu0 %3132
    %3135 = vset.pattern.permute.xlu0 2
    %3136 = vperm.xlu0 %3135, %v2647
    %v3137 = vpop.permute.xlu0 %3136
    %3139 = vset.pattern.permute.xlu0 2
    %3140 = vperm.xlu0 %3139, %v2648
    %v3141 = vpop.permute.xlu0 %3140
    %3143 = vset.pattern.permute.xlu0 2
    %3144 = vperm.xlu0 %3143, %v2649
    %v3145 = vpop.permute.xlu0 %3144
    %3147 = vset.pattern.permute.xlu0 2
    %3148 = vperm.xlu0 %3147, %v2650
    %v3149 = vpop.permute.xlu0 %3148
    %3151 = vset.pattern.permute.xlu0 2
    %3152 = vperm.xlu0 %3151, %v2651
    %v3153 = vpop.permute.xlu0 %3152
    %3155 = vset.pattern.permute.xlu0 2
    %3156 = vperm.xlu0 %3155, %v2652
    %v3157 = vpop.permute.xlu0 %3156
    %3159 = vset.pattern.permute.xlu0 2
    %3160 = vperm.xlu0 %3159, %v2653
    %v3161 = vpop.permute.xlu0 %3160
    %3163 = vset.pattern.permute.xlu0 2
    %3164 = vperm.xlu0 %3163, %v2654
    %v3165 = vpop.permute.xlu0 %3164
    %3167 = vset.pattern.permute.xlu0 2
    %3168 = vperm.xlu0 %3167, %v2655
    %v3169 = vpop.permute.xlu0 %3168
    %3171 = vset.pattern.permute.xlu0 2
    %3172 = vperm.xlu0 %3171, %v2656
    %v3173 = vpop.permute.xlu0 %3172
    %3175 = vset.pattern.permute.xlu0 2
    %3176 = vperm.xlu0 %3175, %v2657
    %v3177 = vpop.permute.xlu0 %3176
    %v3179 = vlaneseq
    %v3180 = vshrl.u32 %v3179, 7
    %v3181 = vsub.s32 2, %v3180
    %v3182 = vrot.slane %v2658, %v3181
    %v3183 = vmul.f32 %v3053, %v3182
    %v3184 = vmul.f32 %v3057, %v3182
    %v3185 = vmul.f32 %v3061, %v3182
    %v3186 = vmul.f32 %v3065, %v3182
    %v3187 = vmul.f32 %v3069, %v3182
    %v3188 = vmul.f32 %v3073, %v3182
    %v3189 = vmul.f32 %v3077, %v3182
    %v3190 = vmul.f32 %v3081, %v3182
    %v3191 = vmul.f32 %v3085, %v3182
    %v3192 = vmul.f32 %v3089, %v3182
    %v3193 = vmul.f32 %v3093, %v3182
    %v3194 = vmul.f32 %v3097, %v3182
    %v3195 = vmul.f32 %v3101, %v3182
    %v3196 = vmul.f32 %v3105, %v3182
    %v3197 = vmul.f32 %v3109, %v3182
    %v3198 = vmul.f32 %v3113, %v3182
    %v3199 = vmul.f32 %v3117, %v3182
    %v3200 = vmul.f32 %v3121, %v3182
    %v3201 = vmul.f32 %v3125, %v3182
    %v3202 = vmul.f32 %v3129, %v3182
    %v3203 = vmul.f32 %v3133, %v3182
    %v3204 = vmul.f32 %v3137, %v3182
    %v3205 = vmul.f32 %v3141, %v3182
    %v3206 = vmul.f32 %v3145, %v3182
    %v3207 = vmul.f32 %v3149, %v3182
    %v3208 = vmul.f32 %v3153, %v3182
    %v3209 = vmul.f32 %v3157, %v3182
    %v3210 = vmul.f32 %v3161, %v3182
    %v3211 = vmul.f32 %v3165, %v3182
    %v3212 = vmul.f32 %v3169, %v3182
    %v3213 = vmul.f32 %v3173, %v3182
    %v3214 = vmul.f32 %v3177, %v3182
    %v3215 = vadd.f32 %v3019, %v3183
    %v3216 = vadd.f32 %v3020, %v3184
    %v3217 = vadd.f32 %v3021, %v3185
    %v3218 = vadd.f32 %v3022, %v3186
    %v3219 = vadd.f32 %v3023, %v3187
    %v3220 = vadd.f32 %v3024, %v3188
    %v3221 = vadd.f32 %v3025, %v3189
    %v3222 = vadd.f32 %v3026, %v3190
    %v3223 = vadd.f32 %v3027, %v3191
    %v3224 = vadd.f32 %v3028, %v3192
    %v3225 = vadd.f32 %v3029, %v3193
    %v3226 = vadd.f32 %v3030, %v3194
    %v3227 = vadd.f32 %v3031, %v3195
    %v3228 = vadd.f32 %v3032, %v3196
    %v3229 = vadd.f32 %v3033, %v3197
    %v3230 = vadd.f32 %v3034, %v3198
    %v3231 = vadd.f32 %v3035, %v3199
    %v3232 = vadd.f32 %v3036, %v3200
    %v3233 = vadd.f32 %v3037, %v3201
    %v3234 = vadd.f32 %v3038, %v3202
    %v3235 = vadd.f32 %v3039, %v3203
    %v3236 = vadd.f32 %v3040, %v3204
    %v3237 = vadd.f32 %v3041, %v3205
    %v3238 = vadd.f32 %v3042, %v3206
    %v3239 = vadd.f32 %v3043, %v3207
    %v3240 = vadd.f32 %v3044, %v3208
    %v3241 = vadd.f32 %v3045, %v3209
    %v3242 = vadd.f32 %v3046, %v3210
    %v3243 = vadd.f32 %v3047, %v3211
    %v3244 = vadd.f32 %v3048, %v3212
    %v3245 = vadd.f32 %v3049, %v3213
    %v3246 = vadd.f32 %v3050, %v3214
    %v3247 = vunpack.c.l.bf16 %v2226
    %v3248 = vlaneseq
    %v3249 = vshrl.u32 %v3248, 7
    %v3250 = vsub.s32 3, %v3249
    %v3251 = vrot.slane %v3247, %v3250
    %v3252 = vadd.f32 %v3215, %v3251
    %v3253 = vadd.f32 %v3216, %v3251
    %v3254 = vadd.f32 %v3217, %v3251
    %v3255 = vadd.f32 %v3218, %v3251
    %v3256 = vadd.f32 %v3219, %v3251
    %v3257 = vadd.f32 %v3220, %v3251
    %v3258 = vadd.f32 %v3221, %v3251
    %v3259 = vadd.f32 %v3222, %v3251
    %v3260 = vadd.f32 %v3223, %v3251
    %v3261 = vadd.f32 %v3224, %v3251
    %v3262 = vadd.f32 %v3225, %v3251
    %v3263 = vadd.f32 %v3226, %v3251
    %v3264 = vadd.f32 %v3227, %v3251
    %v3265 = vadd.f32 %v3228, %v3251
    %v3266 = vadd.f32 %v3229, %v3251
    %v3267 = vadd.f32 %v3230, %v3251
    %v3268 = vadd.f32 %v3231, %v3251
    %v3269 = vadd.f32 %v3232, %v3251
    %v3270 = vadd.f32 %v3233, %v3251
    %v3271 = vadd.f32 %v3234, %v3251
    %v3272 = vadd.f32 %v3235, %v3251
    %v3273 = vadd.f32 %v3236, %v3251
    %v3274 = vadd.f32 %v3237, %v3251
    %v3275 = vadd.f32 %v3238, %v3251
    %v3276 = vadd.f32 %v3239, %v3251
    %v3277 = vadd.f32 %v3240, %v3251
    %v3278 = vadd.f32 %v3241, %v3251
    %v3279 = vadd.f32 %v3242, %v3251
    %v3280 = vadd.f32 %v3243, %v3251
    %v3281 = vadd.f32 %v3244, %v3251
    %v3282 = vadd.f32 %v3245, %v3251
    %v3283 = vadd.f32 %v3246, %v3251
    %v3284 = vmax.f32 %v3252, 0.0
    %v3285 = vmax.f32 %v3253, 0.0
    %v3286 = vmax.f32 %v3254, 0.0
    %v3287 = vmax.f32 %v3255, 0.0
    %v3288 = vmax.f32 %v3256, 0.0
    %v3289 = vmax.f32 %v3257, 0.0
    %v3290 = vmax.f32 %v3258, 0.0
    %v3291 = vmax.f32 %v3259, 0.0
    %v3292 = vmax.f32 %v3260, 0.0
    %v3293 = vmax.f32 %v3261, 0.0
    %v3294 = vmax.f32 %v3262, 0.0
    %v3295 = vmax.f32 %v3263, 0.0
    %v3296 = vmax.f32 %v3264, 0.0
    %v3297 = vmax.f32 %v3265, 0.0
    %v3298 = vmax.f32 %v3266, 0.0
    %v3299 = vmax.f32 %v3267, 0.0
    %v3300 = vmax.f32 %v3268, 0.0
    %v3301 = vmax.f32 %v3269, 0.0
    %v3302 = vmax.f32 %v3270, 0.0
    %v3303 = vmax.f32 %v3271, 0.0
    %v3304 = vmax.f32 %v3272, 0.0
    %v3305 = vmax.f32 %v3273, 0.0
    %v3306 = vmax.f32 %v3274, 0.0
    %v3307 = vmax.f32 %v3275, 0.0
    %v3308 = vmax.f32 %v3276, 0.0
    %v3309 = vmax.f32 %v3277, 0.0
    %v3310 = vmax.f32 %v3278, 0.0
    %v3311 = vmax.f32 %v3279, 0.0
    %v3312 = vmax.f32 %v3280, 0.0
    %v3313 = vmax.f32 %v3281, 0.0
    %v3314 = vmax.f32 %v3282, 0.0
    %v3315 = vmax.f32 %v3283, 0.0
    %v3316 = vpack.c.bf16 %v3285, %v3284
    %v3317 = vpack.c.bf16 %v3287, %v3286
    %v3318 = vpack.c.bf16 %v3289, %v3288
    %v3319 = vpack.c.bf16 %v3291, %v3290
    %v3320 = vpack.c.bf16 %v3293, %v3292
    %v3321 = vpack.c.bf16 %v3295, %v3294
    %v3322 = vpack.c.bf16 %v3297, %v3296
    %v3323 = vpack.c.bf16 %v3299, %v3298
    %v3324 = vpack.c.bf16 %v3301, %v3300
    %v3325 = vpack.c.bf16 %v3303, %v3302
    %v3326 = vpack.c.bf16 %v3305, %v3304
    %v3327 = vpack.c.bf16 %v3307, %v3306
    %v3328 = vpack.c.bf16 %v3309, %v3308
    %v3329 = vpack.c.bf16 %v3311, %v3310
    %v3330 = vpack.c.bf16 %v3313, %v3312
    %v3331 = vpack.c.bf16 %v3315, %v3314
    %v3332 = vunpack.c.l.bf16 %v2235
    %v3333 = vlaneseq
    %v3334 = vshrl.u32 %v3333, 7
    %v3335 = vsub.s32 0, %v3334
    %v3336 = vrot.slane %v3332, %v3335
    %v3345 = vunpack.c.l.b16 %v2227
    %v3346 = vunpack.c.l.b16 %v2228
    %v3347 = vunpack.c.l.b16 %v2229
    %v3348 = vunpack.c.l.b16 %v2230
    %v3349 = vunpack.c.l.b16 %v2231
    %v3350 = vunpack.c.l.b16 %v2232
    %v3351 = vunpack.c.l.b16 %v2233
    %v3352 = vunpack.c.l.b16 %v2234
    %v3353 = vpack.c.b16 %v3346, %v3345
    %v3354 = vpack.c.b16 %v3348, %v3347
    %v3355 = vpack.c.b16 %v3350, %v3349
    %v3356 = vpack.c.b16 %v3352, %v3351
    %vm3361 = vcmask 523264
    %v3363 = vsel %vm3361, %v3316, 0
    %v3366 = vsel %vm3361, %v3317, 0
    %v3369 = vsel %vm3361, %v3318, 0
    %v3372 = vsel %vm3361, %v3319, 0
    %v3375 = vsel %vm3361, %v3320, 0
    %v3378 = vsel %vm3361, %v3321, 0
    %v3381 = vsel %vm3361, %v3322, 0
    %v3384 = vsel %vm3361, %v3323, 0
    %v3387 = vsel %vm3361, %v3324, 0
    %v3390 = vsel %vm3361, %v3325, 0
    %v3393 = vsel %vm3361, %v3326, 0
    %v3396 = vsel %vm3361, %v3327, 0
    %v3399 = vsel %vm3361, %v3328, 0
    %v3402 = vsel %vm3361, %v3329, 0
    %v3405 = vsel %vm3361, %v3330, 0
    %v3408 = vsel %vm3361, %v3331, 0
    %3410 = vmatprep.subr.bf16.mxu0 0
    %3411 = vmatpush1.bf16.msra.mxu0 0
    %3412 = vmatprep.subr.bf16.mxu0 0
    %3413 = vmatpush1.bf16.msra.mxu0 0
    %3414 = vmatprep.subr.bf16.mxu0 0
    %3415 = vmatpush1.bf16.msra.mxu0 0
    %3416 = vmatprep.subr.bf16.mxu0 0
    %3417 = vmatpush1.bf16.msra.mxu0 0
    %3418 = vmatprep.subr.bf16.mxu0 0
    %3419 = vmatpush1.bf16.msra.mxu0 %v3356
    %3420 = vmatprep.subr.bf16.mxu0 0
    %3421 = vmatpush1.bf16.msra.mxu0 %v3355
    %3422 = vmatprep.subr.bf16.mxu0 0
    %3423 = vmatpush1.bf16.msra.mxu0 %v3354
    %3424 = vmatprep.subr.bf16.mxu0 0
    %3425 = vmatpush1.bf16.msra.mxu0 %v3353
    %3426 = vmatprep.subr.bf16.mxu0 0
    %3427 = vmatpush2.bf16.msra.mxu0 0
    %3428 = vmatprep.subr.bf16.mxu0 0
    %3429 = vmatpush2.bf16.msra.mxu0 0
    %3430 = vmatprep.subr.bf16.mxu0 0
    %3431 = vmatpush2.bf16.msra.mxu0 0
    %3432 = vmatprep.subr.bf16.mxu0 0
    %3433 = vmatpush2.bf16.msra.mxu0 0
    %3434 = vmatprep.subr.bf16.mxu0 0
    %3435 = vmatpush2.bf16.msra.mxu0 0
    %3436 = vmatprep.subr.bf16.mxu0 0
    %3437 = vmatpush2.bf16.msra.mxu0 0
    %3438 = vmatprep.subr.bf16.mxu0 0
    %3439 = vmatpush2.bf16.msra.mxu0 0
    %3440 = vmatprep.subr.bf16.mxu0 0
    %3441 = vmatpush2.bf16.msra.mxu0 0
    %3442 = vmatprep.mubr.bf16.mxu0 0
    %3443 = vmatmul.mubr.bf16.gmra.mxu0 %v3363
    %v3444 = vpop.f32.mrf.mxu0
    %v3445 = vadd.f32 %v3336, %v3444
    %v3446 = vpop.f32.mrf.mxu0
    %v3447 = vpop.f32.mrf.mxu0
    %v3448 = vadd.f32 %v3336, %v3447
    %v3449 = vpop.f32.mrf.mxu0
    %3450 = vmatprep.mubr.bf16.mxu0 0
    %3451 = vmatmul.mubr.bf16.gmra.mxu0 %v3366
    %v3452 = vpop.f32.mrf.mxu0
    %v3453 = vadd.f32 %v3336, %v3452
    %v3454 = vpop.f32.mrf.mxu0
    %v3455 = vpop.f32.mrf.mxu0
    %v3456 = vadd.f32 %v3336, %v3455
    %v3457 = vpop.f32.mrf.mxu0
    %3458 = vmatprep.mubr.bf16.mxu0 0
    %3459 = vmatmul.mubr.bf16.gmra.mxu0 %v3369
    %v3460 = vpop.f32.mrf.mxu0
    %v3461 = vadd.f32 %v3336, %v3460
    %v3462 = vpop.f32.mrf.mxu0
    %v3463 = vpop.f32.mrf.mxu0
    %v3464 = vadd.f32 %v3336, %v3463
    %v3465 = vpop.f32.mrf.mxu0
    %3466 = vmatprep.mubr.bf16.mxu0 0
    %3467 = vmatmul.mubr.bf16.gmra.mxu0 %v3372
    %v3468 = vpop.f32.mrf.mxu0
    %v3469 = vadd.f32 %v3336, %v3468
    %v3470 = vpop.f32.mrf.mxu0
    %v3471 = vpop.f32.mrf.mxu0
    %v3472 = vadd.f32 %v3336, %v3471
    %v3473 = vpop.f32.mrf.mxu0
    %3474 = vmatprep.mubr.bf16.mxu0 0
    %3475 = vmatmul.mubr.bf16.gmra.mxu0 %v3375
    %v3476 = vpop.f32.mrf.mxu0
    %v3477 = vadd.f32 %v3336, %v3476
    %v3478 = vpop.f32.mrf.mxu0
    %v3479 = vpop.f32.mrf.mxu0
    %v3480 = vadd.f32 %v3336, %v3479
    %v3481 = vpop.f32.mrf.mxu0
    %3482 = vmatprep.mubr.bf16.mxu0 0
    %3483 = vmatmul.mubr.bf16.gmra.mxu0 %v3378
    %v3484 = vpop.f32.mrf.mxu0
    %v3485 = vadd.f32 %v3336, %v3484
    %v3486 = vpop.f32.mrf.mxu0
    %v3487 = vpop.f32.mrf.mxu0
    %v3488 = vadd.f32 %v3336, %v3487
    %v3489 = vpop.f32.mrf.mxu0
    %3490 = vmatprep.mubr.bf16.mxu0 0
    %3491 = vmatmul.mubr.bf16.gmra.mxu0 %v3381
    %v3492 = vpop.f32.mrf.mxu0
    %v3493 = vadd.f32 %v3336, %v3492
    %v3494 = vpop.f32.mrf.mxu0
    %v3495 = vpop.f32.mrf.mxu0
    %v3496 = vadd.f32 %v3336, %v3495
    %v3497 = vpop.f32.mrf.mxu0
    %3498 = vmatprep.mubr.bf16.mxu0 0
    %3499 = vmatmul.mubr.bf16.gmra.mxu0 %v3384
    %v3500 = vpop.f32.mrf.mxu0
    %v3501 = vadd.f32 %v3336, %v3500
    %v3502 = vpop.f32.mrf.mxu0
    %v3503 = vpop.f32.mrf.mxu0
    %v3504 = vadd.f32 %v3336, %v3503
    %v3505 = vpop.f32.mrf.mxu0
    %3506 = vmatprep.mubr.bf16.mxu0 0
    %3507 = vmatmul.mubr.bf16.gmra.mxu0 %v3387
    %v3508 = vpop.f32.mrf.mxu0
    %v3509 = vadd.f32 %v3336, %v3508
    %v3510 = vpop.f32.mrf.mxu0
    %v3511 = vpop.f32.mrf.mxu0
    %v3512 = vadd.f32 %v3336, %v3511
    %v3513 = vpop.f32.mrf.mxu0
    %3514 = vmatprep.mubr.bf16.mxu0 0
    %3515 = vmatmul.mubr.bf16.gmra.mxu0 %v3390
    %v3516 = vpop.f32.mrf.mxu0
    %v3517 = vadd.f32 %v3336, %v3516
    %v3518 = vpop.f32.mrf.mxu0
    %v3519 = vpop.f32.mrf.mxu0
    %v3520 = vadd.f32 %v3336, %v3519
    %v3521 = vpop.f32.mrf.mxu0
    %3522 = vmatprep.mubr.bf16.mxu0 0
    %3523 = vmatmul.mubr.bf16.gmra.mxu0 %v3393
    %v3524 = vpop.f32.mrf.mxu0
    %v3525 = vadd.f32 %v3336, %v3524
    %v3526 = vpop.f32.mrf.mxu0
    %v3527 = vpop.f32.mrf.mxu0
    %v3528 = vadd.f32 %v3336, %v3527
    %v3529 = vpop.f32.mrf.mxu0
    %3530 = vmatprep.mubr.bf16.mxu0 0
    %3531 = vmatmul.mubr.bf16.gmra.mxu0 %v3396
    %v3532 = vpop.f32.mrf.mxu0
    %v3533 = vadd.f32 %v3336, %v3532
    %v3534 = vpop.f32.mrf.mxu0
    %v3535 = vpop.f32.mrf.mxu0
    %v3536 = vadd.f32 %v3336, %v3535
    %v3537 = vpop.f32.mrf.mxu0
    %3538 = vmatprep.mubr.bf16.mxu0 0
    %3539 = vmatmul.mubr.bf16.gmra.mxu0 %v3399
    %v3540 = vpop.f32.mrf.mxu0
    %v3541 = vadd.f32 %v3336, %v3540
    %v3542 = vpop.f32.mrf.mxu0
    %v3543 = vpop.f32.mrf.mxu0
    %v3544 = vadd.f32 %v3336, %v3543
    %v3545 = vpop.f32.mrf.mxu0
    %3546 = vmatprep.mubr.bf16.mxu0 0
    %3547 = vmatmul.mubr.bf16.gmra.mxu0 %v3402
    %v3548 = vpop.f32.mrf.mxu0
    %v3549 = vadd.f32 %v3336, %v3548
    %v3550 = vpop.f32.mrf.mxu0
    %v3551 = vpop.f32.mrf.mxu0
    %v3552 = vadd.f32 %v3336, %v3551
    %v3553 = vpop.f32.mrf.mxu0
    %3554 = vmatprep.mubr.bf16.mxu0 0
    %3555 = vmatmul.mubr.bf16.gmra.mxu0 %v3405
    %v3556 = vpop.f32.mrf.mxu0
    %v3557 = vadd.f32 %v3336, %v3556
    %v3558 = vpop.f32.mrf.mxu0
    %v3559 = vpop.f32.mrf.mxu0
    %v3560 = vadd.f32 %v3336, %v3559
    %v3561 = vpop.f32.mrf.mxu0
    %3562 = vmatprep.mubr.bf16.mxu0 0
    %3563 = vmatmul.mubr.bf16.gmra.mxu0 %v3408
    %v3564 = vpop.f32.mrf.mxu0
    %v3565 = vadd.f32 %v3336, %v3564
    %v3566 = vpop.f32.mrf.mxu0
    %v3567 = vpop.f32.mrf.mxu0
    %v3568 = vadd.f32 %v3336, %v3567
    %v3569 = vpop.f32.mrf.mxu0
    %3570 = vdwg.mxu0
    %v3571 = vmax.f32 %v3445, 0.0
    %v3572 = vmax.f32 %v3448, 0.0
    %v3573 = vmax.f32 %v3453, 0.0
    %v3574 = vmax.f32 %v3456, 0.0
    %v3575 = vmax.f32 %v3461, 0.0
    %v3576 = vmax.f32 %v3464, 0.0
    %v3577 = vmax.f32 %v3469, 0.0
    %v3578 = vmax.f32 %v3472, 0.0
    %v3579 = vmax.f32 %v3477, 0.0
    %v3580 = vmax.f32 %v3480, 0.0
    %v3581 = vmax.f32 %v3485, 0.0
    %v3582 = vmax.f32 %v3488, 0.0
    %v3583 = vmax.f32 %v3493, 0.0
    %v3584 = vmax.f32 %v3496, 0.0
    %v3585 = vmax.f32 %v3501, 0.0
    %v3586 = vmax.f32 %v3504, 0.0
    %v3587 = vmax.f32 %v3509, 0.0
    %v3588 = vmax.f32 %v3512, 0.0
    %v3589 = vmax.f32 %v3517, 0.0
    %v3590 = vmax.f32 %v3520, 0.0
    %v3591 = vmax.f32 %v3525, 0.0
    %v3592 = vmax.f32 %v3528, 0.0
    %v3593 = vmax.f32 %v3533, 0.0
    %v3594 = vmax.f32 %v3536, 0.0
    %v3595 = vmax.f32 %v3541, 0.0
    %v3596 = vmax.f32 %v3544, 0.0
    %v3597 = vmax.f32 %v3549, 0.0
    %v3598 = vmax.f32 %v3552, 0.0
    %v3599 = vmax.f32 %v3557, 0.0
    %v3600 = vmax.f32 %v3560, 0.0
    %v3601 = vmax.f32 %v3565, 0.0
    %v3602 = vmax.f32 %v3568, 0.0
    %v3603 = vpack.c.bf16 %v3572, %v3571
    %v3604 = vpack.c.bf16 %v3574, %v3573
    %v3605 = vpack.c.bf16 %v3576, %v3575
    %v3606 = vpack.c.bf16 %v3578, %v3577
    %v3607 = vpack.c.bf16 %v3580, %v3579
    %v3608 = vpack.c.bf16 %v3582, %v3581
    %v3609 = vpack.c.bf16 %v3584, %v3583
    %v3610 = vpack.c.bf16 %v3586, %v3585
    %v3611 = vpack.c.bf16 %v3588, %v3587
    %v3612 = vpack.c.bf16 %v3590, %v3589
    %v3613 = vpack.c.bf16 %v3592, %v3591
    %v3614 = vpack.c.bf16 %v3594, %v3593
    %v3615 = vpack.c.bf16 %v3596, %v3595
    %v3616 = vpack.c.bf16 %v3598, %v3597
    %v3617 = vpack.c.bf16 %v3600, %v3599
    %v3618 = vpack.c.bf16 %v3602, %v3601
    %v3619 = vunpack.c.l.bf16 %v2252
    %v3620 = vlaneseq
    %v3621 = vshrl.u32 %v3620, 7
    %v3622 = vsub.s32 0, %v3621
    %v3623 = vrot.slane %v3619, %v3622
    %v3640 = vunpack.c.l.b16 %v2236
    %v3641 = vunpack.c.l.b16 %v2237
    %v3642 = vunpack.c.l.b16 %v2238
    %v3643 = vunpack.c.l.b16 %v2239
    %v3644 = vunpack.c.l.b16 %v2240
    %v3645 = vunpack.c.l.b16 %v2241
    %v3646 = vunpack.c.l.b16 %v2242
    %v3647 = vunpack.c.l.b16 %v2243
    %v3648 = vunpack.c.l.b16 %v2244
    %v3649 = vunpack.c.l.b16 %v2245
    %v3650 = vunpack.c.l.b16 %v2246
    %v3651 = vunpack.c.l.b16 %v2247
    %v3652 = vunpack.c.l.b16 %v2248
    %v3653 = vunpack.c.l.b16 %v2249
    %v3654 = vunpack.c.l.b16 %v2250
    %v3655 = vunpack.c.l.b16 %v2251
    %v3656 = vpack.c.b16 %v3641, %v3640
    %v3657 = vpack.c.b16 %v3643, %v3642
    %v3658 = vpack.c.b16 %v3645, %v3644
    %v3659 = vpack.c.b16 %v3647, %v3646
    %v3660 = vpack.c.b16 %v3649, %v3648
    %v3661 = vpack.c.b16 %v3651, %v3650
    %v3662 = vpack.c.b16 %v3653, %v3652
    %v3663 = vpack.c.b16 %v3655, %v3654
    %3672 = vmatprep.subr.bf16.mxu0 0
    %3673 = vmatpush1.bf16.msra.mxu0 %v3663
    %3674 = vmatprep.subr.bf16.mxu0 0
    %3675 = vmatpush1.bf16.msra.mxu0 %v3662
    %3676 = vmatprep.subr.bf16.mxu0 0
    %3677 = vmatpush1.bf16.msra.mxu0 %v3661
    %3678 = vmatprep.subr.bf16.mxu0 0
    %3679 = vmatpush1.bf16.msra.mxu0 %v3660
    %3680 = vmatprep.subr.bf16.mxu0 0
    %3681 = vmatpush1.bf16.msra.mxu0 %v3659
    %3682 = vmatprep.subr.bf16.mxu0 0
    %3683 = vmatpush1.bf16.msra.mxu0 %v3658
    %3684 = vmatprep.subr.bf16.mxu0 0
    %3685 = vmatpush1.bf16.msra.mxu0 %v3657
    %3686 = vmatprep.subr.bf16.mxu0 0
    %3687 = vmatpush1.bf16.msra.mxu0 %v3656
    %3688 = vmatprep.subr.bf16.mxu0 0
    %3689 = vmatpush2.bf16.msra.mxu0 0
    %3690 = vmatprep.subr.bf16.mxu0 0
    %3691 = vmatpush2.bf16.msra.mxu0 0
    %3692 = vmatprep.subr.bf16.mxu0 0
    %3693 = vmatpush2.bf16.msra.mxu0 0
    %3694 = vmatprep.subr.bf16.mxu0 0
    %3695 = vmatpush2.bf16.msra.mxu0 0
    %3696 = vmatprep.subr.bf16.mxu0 0
    %3697 = vmatpush2.bf16.msra.mxu0 0
    %3698 = vmatprep.subr.bf16.mxu0 0
    %3699 = vmatpush2.bf16.msra.mxu0 0
    %3700 = vmatprep.subr.bf16.mxu0 0
    %3701 = vmatpush2.bf16.msra.mxu0 0
    %3702 = vmatprep.subr.bf16.mxu0 0
    %3703 = vmatpush2.bf16.msra.mxu0 0
    %3704 = vmatprep.mubr.bf16.mxu0 0
    %3705 = vmatmul.mubr.bf16.gmra.mxu0 %v3603
    %v3706 = vpop.f32.mrf.mxu0
    %v3707 = vadd.f32 %v3623, %v3706
    %v3708 = vpop.f32.mrf.mxu0
    %v3709 = vpop.f32.mrf.mxu0
    %v3710 = vadd.f32 %v3623, %v3709
    %v3711 = vpop.f32.mrf.mxu0
    %3712 = vmatprep.mubr.bf16.mxu0 0
    %3713 = vmatmul.mubr.bf16.gmra.mxu0 %v3604
    %v3714 = vpop.f32.mrf.mxu0
    %v3715 = vadd.f32 %v3623, %v3714
    %v3716 = vpop.f32.mrf.mxu0
    %v3717 = vpop.f32.mrf.mxu0
    %v3718 = vadd.f32 %v3623, %v3717
    %v3719 = vpop.f32.mrf.mxu0
    %3720 = vmatprep.mubr.bf16.mxu0 0
    %3721 = vmatmul.mubr.bf16.gmra.mxu0 %v3605
    %v3722 = vpop.f32.mrf.mxu0
    %v3723 = vadd.f32 %v3623, %v3722
    %v3724 = vpop.f32.mrf.mxu0
    %v3725 = vpop.f32.mrf.mxu0
    %v3726 = vadd.f32 %v3623, %v3725
    %v3727 = vpop.f32.mrf.mxu0
    %3728 = vmatprep.mubr.bf16.mxu0 0
    %3729 = vmatmul.mubr.bf16.gmra.mxu0 %v3606
    %v3730 = vpop.f32.mrf.mxu0
    %v3731 = vadd.f32 %v3623, %v3730
    %v3732 = vpop.f32.mrf.mxu0
    %v3733 = vpop.f32.mrf.mxu0
    %v3734 = vadd.f32 %v3623, %v3733
    %v3735 = vpop.f32.mrf.mxu0
    %3736 = vmatprep.mubr.bf16.mxu0 0
    %3737 = vmatmul.mubr.bf16.gmra.mxu0 %v3607
    %v3738 = vpop.f32.mrf.mxu0
    %v3739 = vadd.f32 %v3623, %v3738
    %v3740 = vpop.f32.mrf.mxu0
    %v3741 = vpop.f32.mrf.mxu0
    %v3742 = vadd.f32 %v3623, %v3741
    %v3743 = vpop.f32.mrf.mxu0
    %3744 = vmatprep.mubr.bf16.mxu0 0
    %3745 = vmatmul.mubr.bf16.gmra.mxu0 %v3608
    %v3746 = vpop.f32.mrf.mxu0
    %v3747 = vadd.f32 %v3623, %v3746
    %v3748 = vpop.f32.mrf.mxu0
    %v3749 = vpop.f32.mrf.mxu0
    %v3750 = vadd.f32 %v3623, %v3749
    %v3751 = vpop.f32.mrf.mxu0
    %3752 = vmatprep.mubr.bf16.mxu0 0
    %3753 = vmatmul.mubr.bf16.gmra.mxu0 %v3609
    %v3754 = vpop.f32.mrf.mxu0
    %v3755 = vadd.f32 %v3623, %v3754
    %v3756 = vpop.f32.mrf.mxu0
    %v3757 = vpop.f32.mrf.mxu0
    %v3758 = vadd.f32 %v3623, %v3757
    %v3759 = vpop.f32.mrf.mxu0
    %3760 = vmatprep.mubr.bf16.mxu0 0
    %3761 = vmatmul.mubr.bf16.gmra.mxu0 %v3610
    %v3762 = vpop.f32.mrf.mxu0
    %v3763 = vadd.f32 %v3623, %v3762
    %v3764 = vpop.f32.mrf.mxu0
    %v3765 = vpop.f32.mrf.mxu0
    %v3766 = vadd.f32 %v3623, %v3765
    %v3767 = vpop.f32.mrf.mxu0
    %3768 = vmatprep.mubr.bf16.mxu0 0
    %3769 = vmatmul.mubr.bf16.gmra.mxu0 %v3611
    %v3770 = vpop.f32.mrf.mxu0
    %v3771 = vadd.f32 %v3623, %v3770
    %v3772 = vpop.f32.mrf.mxu0
    %v3773 = vpop.f32.mrf.mxu0
    %v3774 = vadd.f32 %v3623, %v3773
    %v3775 = vpop.f32.mrf.mxu0
    %3776 = vmatprep.mubr.bf16.mxu0 0
    %3777 = vmatmul.mubr.bf16.gmra.mxu0 %v3612
    %v3778 = vpop.f32.mrf.mxu0
    %v3779 = vadd.f32 %v3623, %v3778
    %v3780 = vpop.f32.mrf.mxu0
    %v3781 = vpop.f32.mrf.mxu0
    %v3782 = vadd.f32 %v3623, %v3781
    %v3783 = vpop.f32.mrf.mxu0
    %3784 = vmatprep.mubr.bf16.mxu0 0
    %3785 = vmatmul.mubr.bf16.gmra.mxu0 %v3613
    %v3786 = vpop.f32.mrf.mxu0
    %v3787 = vadd.f32 %v3623, %v3786
    %v3788 = vpop.f32.mrf.mxu0
    %v3789 = vpop.f32.mrf.mxu0
    %v3790 = vadd.f32 %v3623, %v3789
    %v3791 = vpop.f32.mrf.mxu0
    %3792 = vmatprep.mubr.bf16.mxu0 0
    %3793 = vmatmul.mubr.bf16.gmra.mxu0 %v3614
    %v3794 = vpop.f32.mrf.mxu0
    %v3795 = vadd.f32 %v3623, %v3794
    %v3796 = vpop.f32.mrf.mxu0
    %v3797 = vpop.f32.mrf.mxu0
    %v3798 = vadd.f32 %v3623, %v3797
    %v3799 = vpop.f32.mrf.mxu0
    %3800 = vmatprep.mubr.bf16.mxu0 0
    %3801 = vmatmul.mubr.bf16.gmra.mxu0 %v3615
    %v3802 = vpop.f32.mrf.mxu0
    %v3803 = vadd.f32 %v3623, %v3802
    %v3804 = vpop.f32.mrf.mxu0
    %v3805 = vpop.f32.mrf.mxu0
    %v3806 = vadd.f32 %v3623, %v3805
    %v3807 = vpop.f32.mrf.mxu0
    %3808 = vmatprep.mubr.bf16.mxu0 0
    %3809 = vmatmul.mubr.bf16.gmra.mxu0 %v3616
    %v3810 = vpop.f32.mrf.mxu0
    %v3811 = vadd.f32 %v3623, %v3810
    %v3812 = vpop.f32.mrf.mxu0
    %v3813 = vpop.f32.mrf.mxu0
    %v3814 = vadd.f32 %v3623, %v3813
    %v3815 = vpop.f32.mrf.mxu0
    %3816 = vmatprep.mubr.bf16.mxu0 0
    %3817 = vmatmul.mubr.bf16.gmra.mxu0 %v3617
    %v3818 = vpop.f32.mrf.mxu0
    %v3819 = vadd.f32 %v3623, %v3818
    %v3820 = vpop.f32.mrf.mxu0
    %v3821 = vpop.f32.mrf.mxu0
    %v3822 = vadd.f32 %v3623, %v3821
    %v3823 = vpop.f32.mrf.mxu0
    %3824 = vmatprep.mubr.bf16.mxu0 0
    %3825 = vmatmul.mubr.bf16.gmra.mxu0 %v3618
    %v3826 = vpop.f32.mrf.mxu0
    %v3827 = vadd.f32 %v3623, %v3826
    %v3828 = vpop.f32.mrf.mxu0
    %v3829 = vpop.f32.mrf.mxu0
    %v3830 = vadd.f32 %v3623, %v3829
    %v3831 = vpop.f32.mrf.mxu0
    %3832 = vdwg.mxu0
    %v3833 = vmax.f32 %v3707, 0.0
    %v3834 = vmax.f32 %v3710, 0.0
    %v3835 = vmax.f32 %v3715, 0.0
    %v3836 = vmax.f32 %v3718, 0.0
    %v3837 = vmax.f32 %v3723, 0.0
    %v3838 = vmax.f32 %v3726, 0.0
    %v3839 = vmax.f32 %v3731, 0.0
    %v3840 = vmax.f32 %v3734, 0.0
    %v3841 = vmax.f32 %v3739, 0.0
    %v3842 = vmax.f32 %v3742, 0.0
    %v3843 = vmax.f32 %v3747, 0.0
    %v3844 = vmax.f32 %v3750, 0.0
    %v3845 = vmax.f32 %v3755, 0.0
    %v3846 = vmax.f32 %v3758, 0.0
    %v3847 = vmax.f32 %v3763, 0.0
    %v3848 = vmax.f32 %v3766, 0.0
    %v3849 = vmax.f32 %v3771, 0.0
    %v3850 = vmax.f32 %v3774, 0.0
    %v3851 = vmax.f32 %v3779, 0.0
    %v3852 = vmax.f32 %v3782, 0.0
    %v3853 = vmax.f32 %v3787, 0.0
    %v3854 = vmax.f32 %v3790, 0.0
    %v3855 = vmax.f32 %v3795, 0.0
    %v3856 = vmax.f32 %v3798, 0.0
    %v3857 = vmax.f32 %v3803, 0.0
    %v3858 = vmax.f32 %v3806, 0.0
    %v3859 = vmax.f32 %v3811, 0.0
    %v3860 = vmax.f32 %v3814, 0.0
    %v3861 = vmax.f32 %v3819, 0.0
    %v3862 = vmax.f32 %v3822, 0.0
    %v3863 = vmax.f32 %v3827, 0.0
    %v3864 = vmax.f32 %v3830, 0.0
    %v3865 = vpack.c.bf16 %v3834, %v3833
    %v3866 = vpack.c.bf16 %v3836, %v3835
    %v3867 = vpack.c.bf16 %v3838, %v3837
    %v3868 = vpack.c.bf16 %v3840, %v3839
    %v3869 = vpack.c.bf16 %v3842, %v3841
    %v3870 = vpack.c.bf16 %v3844, %v3843
    %v3871 = vpack.c.bf16 %v3846, %v3845
    %v3872 = vpack.c.bf16 %v3848, %v3847
    %v3873 = vpack.c.bf16 %v3850, %v3849
    %v3874 = vpack.c.bf16 %v3852, %v3851
    %v3875 = vpack.c.bf16 %v3854, %v3853
    %v3876 = vpack.c.bf16 %v3856, %v3855
    %v3877 = vpack.c.bf16 %v3858, %v3857
    %v3878 = vpack.c.bf16 %v3860, %v3859
    %v3879 = vpack.c.bf16 %v3862, %v3861
    %v3880 = vpack.c.bf16 %v3864, %v3863
    %v3881 = vunpack.c.l.bf16 %v2269
    %v3882 = vunpack.c.h.bf16 %v2269
    %v3883 = vlaneseq
    %v3884 = vshrl.u32 %v3883, 7
    %v3885 = vsub.s32 0, %v3884
    %v3886 = vrot.slane %v3881, %v3885
    %v3887 = vlaneseq
    %v3888 = vshrl.u32 %v3887, 7
    %v3889 = vsub.s32 0, %v3888
    %v3890 = vrot.slane %v3882, %v3889
    %v3907 = vunpack.c.l.b16 %v2253
    %v3908 = vunpack.c.h.b16 %v2253
    %v3909 = vunpack.c.l.b16 %v2254
    %v3910 = vunpack.c.h.b16 %v2254
    %v3911 = vunpack.c.l.b16 %v2255
    %v3912 = vunpack.c.h.b16 %v2255
    %v3913 = vunpack.c.l.b16 %v2256
    %v3914 = vunpack.c.h.b16 %v2256
    %v3915 = vunpack.c.l.b16 %v2257
    %v3916 = vunpack.c.h.b16 %v2257
    %v3917 = vunpack.c.l.b16 %v2258
    %v3918 = vunpack.c.h.b16 %v2258
    %v3919 = vunpack.c.l.b16 %v2259
    %v3920 = vunpack.c.h.b16 %v2259
    %v3921 = vunpack.c.l.b16 %v2260
    %v3922 = vunpack.c.h.b16 %v2260
    %v3923 = vunpack.c.l.b16 %v2261
    %v3924 = vunpack.c.h.b16 %v2261
    %v3925 = vunpack.c.l.b16 %v2262
    %v3926 = vunpack.c.h.b16 %v2262
    %v3927 = vunpack.c.l.b16 %v2263
    %v3928 = vunpack.c.h.b16 %v2263
    %v3929 = vunpack.c.l.b16 %v2264
    %v3930 = vunpack.c.h.b16 %v2264
    %v3931 = vunpack.c.l.b16 %v2265
    %v3932 = vunpack.c.h.b16 %v2265
    %v3933 = vunpack.c.l.b16 %v2266
    %v3934 = vunpack.c.h.b16 %v2266
    %v3935 = vunpack.c.l.b16 %v2267
    %v3936 = vunpack.c.h.b16 %v2267
    %v3937 = vunpack.c.l.b16 %v2268
    %v3938 = vunpack.c.h.b16 %v2268
    %v3939 = vpack.c.b16 %v3909, %v3907
    %v3940 = vpack.c.b16 %v3910, %v3908
    %v3941 = vpack.c.b16 %v3913, %v3911
    %v3942 = vpack.c.b16 %v3914, %v3912
    %v3943 = vpack.c.b16 %v3917, %v3915
    %v3944 = vpack.c.b16 %v3918, %v3916
    %v3945 = vpack.c.b16 %v3921, %v3919
    %v3946 = vpack.c.b16 %v3922, %v3920
    %v3947 = vpack.c.b16 %v3925, %v3923
    %v3948 = vpack.c.b16 %v3926, %v3924
    %v3949 = vpack.c.b16 %v3929, %v3927
    %v3950 = vpack.c.b16 %v3930, %v3928
    %v3951 = vpack.c.b16 %v3933, %v3931
    %v3952 = vpack.c.b16 %v3934, %v3932
    %v3953 = vpack.c.b16 %v3937, %v3935
    %v3954 = vpack.c.b16 %v3938, %v3936
    %3971 = vmatprep.subr.bf16.mxu0 %v3954
    %3972 = vmatpush1.bf16.msra.mxu0 %v3953
    %3973 = vmatprep.subr.bf16.mxu0 %v3952
    %3974 = vmatpush1.bf16.msra.mxu0 %v3951
    %3975 = vmatprep.subr.bf16.mxu0 %v3950
    %3976 = vmatpush1.bf16.msra.mxu0 %v3949
    %3977 = vmatprep.subr.bf16.mxu0 %v3948
    %3978 = vmatpush1.bf16.msra.mxu0 %v3947
    %3979 = vmatprep.subr.bf16.mxu0 %v3946
    %3980 = vmatpush1.bf16.msra.mxu0 %v3945
    %3981 = vmatprep.subr.bf16.mxu0 %v3944
    %3982 = vmatpush1.bf16.msra.mxu0 %v3943
    %3983 = vmatprep.subr.bf16.mxu0 %v3942
    %3984 = vmatpush1.bf16.msra.mxu0 %v3941
    %3985 = vmatprep.subr.bf16.mxu0 %v3940
    %3986 = vmatpush1.bf16.msra.mxu0 %v3939
    %3987 = vmatprep.subr.bf16.mxu0 0
    %3988 = vmatpush2.bf16.msra.mxu0 0
    %3989 = vmatprep.subr.bf16.mxu0 0
    %3990 = vmatpush2.bf16.msra.mxu0 0
    %3991 = vmatprep.subr.bf16.mxu0 0
    %3992 = vmatpush2.bf16.msra.mxu0 0
    %3993 = vmatprep.subr.bf16.mxu0 0
    %3994 = vmatpush2.bf16.msra.mxu0 0
    %3995 = vmatprep.subr.bf16.mxu0 0
    %3996 = vmatpush2.bf16.msra.mxu0 0
    %3997 = vmatprep.subr.bf16.mxu0 0
    %3998 = vmatpush2.bf16.msra.mxu0 0
    %3999 = vmatprep.subr.bf16.mxu0 0
    %4000 = vmatpush2.bf16.msra.mxu0 0
    %4001 = vmatprep.subr.bf16.mxu0 0
    %4002 = vmatpush2.bf16.msra.mxu0 0
    %4003 = vmatprep.mubr.bf16.mxu0 0
    %4004 = vmatmul.mubr.bf16.gmra.mxu0 %v3865
    %v4005 = vpop.f32.mrf.mxu0
    %v4006 = vadd.f32 %v3886, %v4005
    %v4007 = vpop.f32.mrf.mxu0
    %v4008 = vadd.f32 %v3890, %v4007
    %v4009 = vpop.f32.mrf.mxu0
    %v4010 = vadd.f32 %v3886, %v4009
    %v4011 = vpop.f32.mrf.mxu0
    %v4012 = vadd.f32 %v3890, %v4011
    %4013 = vmatprep.mubr.bf16.mxu0 0
    %4014 = vmatmul.mubr.bf16.gmra.mxu0 %v3866
    %v4015 = vpop.f32.mrf.mxu0
    %v4016 = vadd.f32 %v3886, %v4015
    %v4017 = vpop.f32.mrf.mxu0
    %v4018 = vadd.f32 %v3890, %v4017
    %v4019 = vpop.f32.mrf.mxu0
    %v4020 = vadd.f32 %v3886, %v4019
    %v4021 = vpop.f32.mrf.mxu0
    %v4022 = vadd.f32 %v3890, %v4021
    %4023 = vmatprep.mubr.bf16.mxu0 0
    %4024 = vmatmul.mubr.bf16.gmra.mxu0 %v3867
    %v4025 = vpop.f32.mrf.mxu0
    %v4026 = vadd.f32 %v3886, %v4025
    %v4027 = vpop.f32.mrf.mxu0
    %v4028 = vadd.f32 %v3890, %v4027
    %v4029 = vpop.f32.mrf.mxu0
    %v4030 = vadd.f32 %v3886, %v4029
    %v4031 = vpop.f32.mrf.mxu0
    %v4032 = vadd.f32 %v3890, %v4031
    %4033 = vmatprep.mubr.bf16.mxu0 0
    %4034 = vmatmul.mubr.bf16.gmra.mxu0 %v3868
    %v4035 = vpop.f32.mrf.mxu0
    %v4036 = vadd.f32 %v3886, %v4035
    %v4037 = vpop.f32.mrf.mxu0
    %v4038 = vadd.f32 %v3890, %v4037
    %v4039 = vpop.f32.mrf.mxu0
    %v4040 = vadd.f32 %v3886, %v4039
    %v4041 = vpop.f32.mrf.mxu0
    %v4042 = vadd.f32 %v3890, %v4041
    %4043 = vmatprep.mubr.bf16.mxu0 0
    %4044 = vmatmul.mubr.bf16.gmra.mxu0 %v3869
    %v4045 = vpop.f32.mrf.mxu0
    %v4046 = vadd.f32 %v3886, %v4045
    %v4047 = vpop.f32.mrf.mxu0
    %v4048 = vadd.f32 %v3890, %v4047
    %v4049 = vpop.f32.mrf.mxu0
    %v4050 = vadd.f32 %v3886, %v4049
    %v4051 = vpop.f32.mrf.mxu0
    %v4052 = vadd.f32 %v3890, %v4051
    %4053 = vmatprep.mubr.bf16.mxu0 0
    %4054 = vmatmul.mubr.bf16.gmra.mxu0 %v3870
    %v4055 = vpop.f32.mrf.mxu0
    %v4056 = vadd.f32 %v3886, %v4055
    %v4057 = vpop.f32.mrf.mxu0
    %v4058 = vadd.f32 %v3890, %v4057
    %v4059 = vpop.f32.mrf.mxu0
    %v4060 = vadd.f32 %v3886, %v4059
    %v4061 = vpop.f32.mrf.mxu0
    %v4062 = vadd.f32 %v3890, %v4061
    %4063 = vmatprep.mubr.bf16.mxu0 0
    %4064 = vmatmul.mubr.bf16.gmra.mxu0 %v3871
    %v4065 = vpop.f32.mrf.mxu0
    %v4066 = vadd.f32 %v3886, %v4065
    %v4067 = vpop.f32.mrf.mxu0
    %v4068 = vadd.f32 %v3890, %v4067
    %v4069 = vpop.f32.mrf.mxu0
    %v4070 = vadd.f32 %v3886, %v4069
    %v4071 = vpop.f32.mrf.mxu0
    %v4072 = vadd.f32 %v3890, %v4071
    %4073 = vmatprep.mubr.bf16.mxu0 0
    %4074 = vmatmul.mubr.bf16.gmra.mxu0 %v3872
    %v4075 = vpop.f32.mrf.mxu0
    %v4076 = vadd.f32 %v3886, %v4075
    %v4077 = vpop.f32.mrf.mxu0
    %v4078 = vadd.f32 %v3890, %v4077
    %v4079 = vpop.f32.mrf.mxu0
    %v4080 = vadd.f32 %v3886, %v4079
    %v4081 = vpop.f32.mrf.mxu0
    %v4082 = vadd.f32 %v3890, %v4081
    %4083 = vmatprep.mubr.bf16.mxu0 0
    %4084 = vmatmul.mubr.bf16.gmra.mxu0 %v3873
    %v4085 = vpop.f32.mrf.mxu0
    %v4086 = vadd.f32 %v3886, %v4085
    %v4087 = vpop.f32.mrf.mxu0
    %v4088 = vadd.f32 %v3890, %v4087
    %v4089 = vpop.f32.mrf.mxu0
    %v4090 = vadd.f32 %v3886, %v4089
    %v4091 = vpop.f32.mrf.mxu0
    %v4092 = vadd.f32 %v3890, %v4091
    %4093 = vmatprep.mubr.bf16.mxu0 0
    %4094 = vmatmul.mubr.bf16.gmra.mxu0 %v3874
    %v4095 = vpop.f32.mrf.mxu0
    %v4096 = vadd.f32 %v3886, %v4095
    %v4097 = vpop.f32.mrf.mxu0
    %v4098 = vadd.f32 %v3890, %v4097
    %v4099 = vpop.f32.mrf.mxu0
    %v4100 = vadd.f32 %v3886, %v4099
    %v4101 = vpop.f32.mrf.mxu0
    %v4102 = vadd.f32 %v3890, %v4101
    %4103 = vmatprep.mubr.bf16.mxu0 0
    %4104 = vmatmul.mubr.bf16.gmra.mxu0 %v3875
    %v4105 = vpop.f32.mrf.mxu0
    %v4106 = vadd.f32 %v3886, %v4105
    %v4107 = vpop.f32.mrf.mxu0
    %v4108 = vadd.f32 %v3890, %v4107
    %v4109 = vpop.f32.mrf.mxu0
    %v4110 = vadd.f32 %v3886, %v4109
    %v4111 = vpop.f32.mrf.mxu0
    %v4112 = vadd.f32 %v3890, %v4111
    %4113 = vmatprep.mubr.bf16.mxu0 0
    %4114 = vmatmul.mubr.bf16.gmra.mxu0 %v3876
    %v4115 = vpop.f32.mrf.mxu0
    %v4116 = vadd.f32 %v3886, %v4115
    %v4117 = vpop.f32.mrf.mxu0
    %v4118 = vadd.f32 %v3890, %v4117
    %v4119 = vpop.f32.mrf.mxu0
    %v4120 = vadd.f32 %v3886, %v4119
    %v4121 = vpop.f32.mrf.mxu0
    %v4122 = vadd.f32 %v3890, %v4121
    %4123 = vmatprep.mubr.bf16.mxu0 0
    %4124 = vmatmul.mubr.bf16.gmra.mxu0 %v3877
    %v4125 = vpop.f32.mrf.mxu0
    %v4126 = vadd.f32 %v3886, %v4125
    %v4127 = vpop.f32.mrf.mxu0
    %v4128 = vadd.f32 %v3890, %v4127
    %v4129 = vpop.f32.mrf.mxu0
    %v4130 = vadd.f32 %v3886, %v4129
    %v4131 = vpop.f32.mrf.mxu0
    %v4132 = vadd.f32 %v3890, %v4131
    %4133 = vmatprep.mubr.bf16.mxu0 0
    %4134 = vmatmul.mubr.bf16.gmra.mxu0 %v3878
    %v4135 = vpop.f32.mrf.mxu0
    %v4136 = vadd.f32 %v3886, %v4135
    %v4137 = vpop.f32.mrf.mxu0
    %v4138 = vadd.f32 %v3890, %v4137
    %v4139 = vpop.f32.mrf.mxu0
    %v4140 = vadd.f32 %v3886, %v4139
    %v4141 = vpop.f32.mrf.mxu0
    %v4142 = vadd.f32 %v3890, %v4141
    %4143 = vmatprep.mubr.bf16.mxu0 0
    %4144 = vmatmul.mubr.bf16.gmra.mxu0 %v3879
    %v4145 = vpop.f32.mrf.mxu0
    %v4146 = vadd.f32 %v3886, %v4145
    %v4147 = vpop.f32.mrf.mxu0
    %v4148 = vadd.f32 %v3890, %v4147
    %v4149 = vpop.f32.mrf.mxu0
    %v4150 = vadd.f32 %v3886, %v4149
    %v4151 = vpop.f32.mrf.mxu0
    %v4152 = vadd.f32 %v3890, %v4151
    %4153 = vmatprep.mubr.bf16.mxu0 0
    %4154 = vmatmul.mubr.bf16.gmra.mxu0 %v3880
    %v4155 = vpop.f32.mrf.mxu0
    %v4156 = vadd.f32 %v3886, %v4155
    %v4157 = vpop.f32.mrf.mxu0
    %v4158 = vadd.f32 %v3890, %v4157
    %v4159 = vpop.f32.mrf.mxu0
    %v4160 = vadd.f32 %v3886, %v4159
    %v4161 = vpop.f32.mrf.mxu0
    %v4162 = vadd.f32 %v3890, %v4161
    %4163 = vdwg.mxu0
    %v4164 = vmax.f32 %v4006, 0.0
    %v4165 = vmax.f32 %v4008, 0.0
    %v4166 = vmax.f32 %v4010, 0.0
    %v4167 = vmax.f32 %v4012, 0.0
    %v4168 = vmax.f32 %v4016, 0.0
    %v4169 = vmax.f32 %v4018, 0.0
    %v4170 = vmax.f32 %v4020, 0.0
    %v4171 = vmax.f32 %v4022, 0.0
    %v4172 = vmax.f32 %v4026, 0.0
    %v4173 = vmax.f32 %v4028, 0.0
    %v4174 = vmax.f32 %v4030, 0.0
    %v4175 = vmax.f32 %v4032, 0.0
    %v4176 = vmax.f32 %v4036, 0.0
    %v4177 = vmax.f32 %v4038, 0.0
    %v4178 = vmax.f32 %v4040, 0.0
    %v4179 = vmax.f32 %v4042, 0.0
    %v4180 = vmax.f32 %v4046, 0.0
    %v4181 = vmax.f32 %v4048, 0.0
    %v4182 = vmax.f32 %v4050, 0.0
    %v4183 = vmax.f32 %v4052, 0.0
    %v4184 = vmax.f32 %v4056, 0.0
    %v4185 = vmax.f32 %v4058, 0.0
    %v4186 = vmax.f32 %v4060, 0.0
    %v4187 = vmax.f32 %v4062, 0.0
    %v4188 = vmax.f32 %v4066, 0.0
    %v4189 = vmax.f32 %v4068, 0.0
    %v4190 = vmax.f32 %v4070, 0.0
    %v4191 = vmax.f32 %v4072, 0.0
    %v4192 = vmax.f32 %v4076, 0.0
    %v4193 = vmax.f32 %v4078, 0.0
    %v4194 = vmax.f32 %v4080, 0.0
    %v4195 = vmax.f32 %v4082, 0.0
    %v4196 = vmax.f32 %v4086, 0.0
    %v4197 = vmax.f32 %v4088, 0.0
    %v4198 = vmax.f32 %v4090, 0.0
    %v4199 = vmax.f32 %v4092, 0.0
    %v4200 = vmax.f32 %v4096, 0.0
    %v4201 = vmax.f32 %v4098, 0.0
    %v4202 = vmax.f32 %v4100, 0.0
    %v4203 = vmax.f32 %v4102, 0.0
    %v4204 = vmax.f32 %v4106, 0.0
    %v4205 = vmax.f32 %v4108, 0.0
    %v4206 = vmax.f32 %v4110, 0.0
    %v4207 = vmax.f32 %v4112, 0.0
    %v4208 = vmax.f32 %v4116, 0.0
    %v4209 = vmax.f32 %v4118, 0.0
    %v4210 = vmax.f32 %v4120, 0.0
    %v4211 = vmax.f32 %v4122, 0.0
    %v4212 = vmax.f32 %v4126, 0.0
    %v4213 = vmax.f32 %v4128, 0.0
    %v4214 = vmax.f32 %v4130, 0.0
    %v4215 = vmax.f32 %v4132, 0.0
    %v4216 = vmax.f32 %v4136, 0.0
    %v4217 = vmax.f32 %v4138, 0.0
    %v4218 = vmax.f32 %v4140, 0.0
    %v4219 = vmax.f32 %v4142, 0.0
    %v4220 = vmax.f32 %v4146, 0.0
    %v4221 = vmax.f32 %v4148, 0.0
    %v4222 = vmax.f32 %v4150, 0.0
    %v4223 = vmax.f32 %v4152, 0.0
    %v4224 = vmax.f32 %v4156, 0.0
    %v4225 = vmax.f32 %v4158, 0.0
    %v4226 = vmax.f32 %v4160, 0.0
    %v4227 = vmax.f32 %v4162, 0.0
    %v4228 = vpack.c.bf16 %v4166, %v4164
    %v4229 = vpack.c.bf16 %v4167, %v4165
    %v4230 = vpack.c.bf16 %v4170, %v4168
    %v4231 = vpack.c.bf16 %v4171, %v4169
    %v4232 = vpack.c.bf16 %v4174, %v4172
    %v4233 = vpack.c.bf16 %v4175, %v4173
    %v4234 = vpack.c.bf16 %v4178, %v4176
    %v4235 = vpack.c.bf16 %v4179, %v4177
    %v4236 = vpack.c.bf16 %v4182, %v4180
    %v4237 = vpack.c.bf16 %v4183, %v4181
    %v4238 = vpack.c.bf16 %v4186, %v4184
    %v4239 = vpack.c.bf16 %v4187, %v4185
    %v4240 = vpack.c.bf16 %v4190, %v4188
    %v4241 = vpack.c.bf16 %v4191, %v4189
    %v4242 = vpack.c.bf16 %v4194, %v4192
    %v4243 = vpack.c.bf16 %v4195, %v4193
    %v4244 = vpack.c.bf16 %v4198, %v4196
    %v4245 = vpack.c.bf16 %v4199, %v4197
    %v4246 = vpack.c.bf16 %v4202, %v4200
    %v4247 = vpack.c.bf16 %v4203, %v4201
    %v4248 = vpack.c.bf16 %v4206, %v4204
    %v4249 = vpack.c.bf16 %v4207, %v4205
    %v4250 = vpack.c.bf16 %v4210, %v4208
    %v4251 = vpack.c.bf16 %v4211, %v4209
    %v4252 = vpack.c.bf16 %v4214, %v4212
    %v4253 = vpack.c.bf16 %v4215, %v4213
    %v4254 = vpack.c.bf16 %v4218, %v4216
    %v4255 = vpack.c.bf16 %v4219, %v4217
    %v4256 = vpack.c.bf16 %v4222, %v4220
    %v4257 = vpack.c.bf16 %v4223, %v4221
    %v4258 = vpack.c.bf16 %v4226, %v4224
    %v4259 = vpack.c.bf16 %v4227, %v4225
    %v4260 = vunpack.c.l.bf16 %v2334
    %v4261 = vunpack.c.h.bf16 %v2334
    %v4262 = vunpack.c.l.bf16 %v2335
    %v4263 = vunpack.c.h.bf16 %v2335
    %v4264 = vlaneseq
    %v4265 = vshrl.u32 %v4264, 7
    %v4266 = vsub.s32 0, %v4265
    %v4267 = vrot.slane %v4260, %v4266
    %v4268 = vlaneseq
    %v4269 = vshrl.u32 %v4268, 7
    %v4270 = vsub.s32 0, %v4269
    %v4271 = vrot.slane %v4261, %v4270
    %v4272 = vlaneseq
    %v4273 = vshrl.u32 %v4272, 7
    %v4274 = vsub.s32 0, %v4273
    %v4275 = vrot.slane %v4262, %v4274
    %v4276 = vlaneseq
    %v4277 = vshrl.u32 %v4276, 7
    %v4278 = vsub.s32 0, %v4277
    %v4279 = vrot.slane %v4263, %v4278
    %v4344 = vunpack.c.l.b16 %v2270
    %v4345 = vunpack.c.h.b16 %v2270
    %v4346 = vunpack.c.l.b16 %v2271
    %v4347 = vunpack.c.h.b16 %v2271
    %v4348 = vunpack.c.l.b16 %v2272
    %v4349 = vunpack.c.h.b16 %v2272
    %v4350 = vunpack.c.l.b16 %v2273
    %v4351 = vunpack.c.h.b16 %v2273
    %v4352 = vunpack.c.l.b16 %v2274
    %v4353 = vunpack.c.h.b16 %v2274
    %v4354 = vunpack.c.l.b16 %v2275
    %v4355 = vunpack.c.h.b16 %v2275
    %v4356 = vunpack.c.l.b16 %v2276
    %v4357 = vunpack.c.h.b16 %v2276
    %v4358 = vunpack.c.l.b16 %v2277
    %v4359 = vunpack.c.h.b16 %v2277
    %v4360 = vunpack.c.l.b16 %v2278
    %v4361 = vunpack.c.h.b16 %v2278
    %v4362 = vunpack.c.l.b16 %v2279
    %v4363 = vunpack.c.h.b16 %v2279
    %v4364 = vunpack.c.l.b16 %v2280
    %v4365 = vunpack.c.h.b16 %v2280
    %v4366 = vunpack.c.l.b16 %v2281
    %v4367 = vunpack.c.h.b16 %v2281
    %v4368 = vunpack.c.l.b16 %v2282
    %v4369 = vunpack.c.h.b16 %v2282
    %v4370 = vunpack.c.l.b16 %v2283
    %v4371 = vunpack.c.h.b16 %v2283
    %v4372 = vunpack.c.l.b16 %v2284
    %v4373 = vunpack.c.h.b16 %v2284
    %v4374 = vunpack.c.l.b16 %v2285
    %v4375 = vunpack.c.h.b16 %v2285
    %v4376 = vunpack.c.l.b16 %v2286
    %v4377 = vunpack.c.h.b16 %v2286
    %v4378 = vunpack.c.l.b16 %v2287
    %v4379 = vunpack.c.h.b16 %v2287
    %v4380 = vunpack.c.l.b16 %v2288
    %v4381 = vunpack.c.h.b16 %v2288
    %v4382 = vunpack.c.l.b16 %v2289
    %v4383 = vunpack.c.h.b16 %v2289
    %v4384 = vunpack.c.l.b16 %v2290
    %v4385 = vunpack.c.h.b16 %v2290
    %v4386 = vunpack.c.l.b16 %v2291
    %v4387 = vunpack.c.h.b16 %v2291
    %v4388 = vunpack.c.l.b16 %v2292
    %v4389 = vunpack.c.h.b16 %v2292
    %v4390 = vunpack.c.l.b16 %v2293
    %v4391 = vunpack.c.h.b16 %v2293
    %v4392 = vunpack.c.l.b16 %v2294
    %v4393 = vunpack.c.h.b16 %v2294
    %v4394 = vunpack.c.l.b16 %v2295
    %v4395 = vunpack.c.h.b16 %v2295
    %v4396 = vunpack.c.l.b16 %v2296
    %v4397 = vunpack.c.h.b16 %v2296
    %v4398 = vunpack.c.l.b16 %v2297
    %v4399 = vunpack.c.h.b16 %v2297
    %v4400 = vunpack.c.l.b16 %v2298
    %v4401 = vunpack.c.h.b16 %v2298
    %v4402 = vunpack.c.l.b16 %v2299
    %v4403 = vunpack.c.h.b16 %v2299
    %v4404 = vunpack.c.l.b16 %v2300
    %v4405 = vunpack.c.h.b16 %v2300
    %v4406 = vunpack.c.l.b16 %v2301
    %v4407 = vunpack.c.h.b16 %v2301
    %v4408 = vunpack.c.l.b16 %v2302
    %v4409 = vunpack.c.h.b16 %v2302
    %v4410 = vunpack.c.l.b16 %v2303
    %v4411 = vunpack.c.h.b16 %v2303
    %v4412 = vunpack.c.l.b16 %v2304
    %v4413 = vunpack.c.h.b16 %v2304
    %v4414 = vunpack.c.l.b16 %v2305
    %v4415 = vunpack.c.h.b16 %v2305
    %v4416 = vunpack.c.l.b16 %v2306
    %v4417 = vunpack.c.h.b16 %v2306
    %v4418 = vunpack.c.l.b16 %v2307
    %v4419 = vunpack.c.h.b16 %v2307
    %v4420 = vunpack.c.l.b16 %v2308
    %v4421 = vunpack.c.h.b16 %v2308
    %v4422 = vunpack.c.l.b16 %v2309
    %v4423 = vunpack.c.h.b16 %v2309
    %v4424 = vunpack.c.l.b16 %v2310
    %v4425 = vunpack.c.h.b16 %v2310
    %v4426 = vunpack.c.l.b16 %v2311
    %v4427 = vunpack.c.h.b16 %v2311
    %v4428 = vunpack.c.l.b16 %v2312
    %v4429 = vunpack.c.h.b16 %v2312
    %v4430 = vunpack.c.l.b16 %v2313
    %v4431 = vunpack.c.h.b16 %v2313
    %v4432 = vunpack.c.l.b16 %v2314
    %v4433 = vunpack.c.h.b16 %v2314
    %v4434 = vunpack.c.l.b16 %v2315
    %v4435 = vunpack.c.h.b16 %v2315
    %v4436 = vunpack.c.l.b16 %v2316
    %v4437 = vunpack.c.h.b16 %v2316
    %v4438 = vunpack.c.l.b16 %v2317
    %v4439 = vunpack.c.h.b16 %v2317
    %v4440 = vunpack.c.l.b16 %v2318
    %v4441 = vunpack.c.h.b16 %v2318
    %v4442 = vunpack.c.l.b16 %v2319
    %v4443 = vunpack.c.h.b16 %v2319
    %v4444 = vunpack.c.l.b16 %v2320
    %v4445 = vunpack.c.h.b16 %v2320
    %v4446 = vunpack.c.l.b16 %v2321
    %v4447 = vunpack.c.h.b16 %v2321
    %v4448 = vunpack.c.l.b16 %v2322
    %v4449 = vunpack.c.h.b16 %v2322
    %v4450 = vunpack.c.l.b16 %v2323
    %v4451 = vunpack.c.h.b16 %v2323
    %v4452 = vunpack.c.l.b16 %v2324
    %v4453 = vunpack.c.h.b16 %v2324
    %v4454 = vunpack.c.l.b16 %v2325
    %v4455 = vunpack.c.h.b16 %v2325
    %v4456 = vunpack.c.l.b16 %v2326
    %v4457 = vunpack.c.h.b16 %v2326
    %v4458 = vunpack.c.l.b16 %v2327
    %v4459 = vunpack.c.h.b16 %v2327
    %v4460 = vunpack.c.l.b16 %v2328
    %v4461 = vunpack.c.h.b16 %v2328
    %v4462 = vunpack.c.l.b16 %v2329
    %v4463 = vunpack.c.h.b16 %v2329
    %v4464 = vunpack.c.l.b16 %v2330
    %v4465 = vunpack.c.h.b16 %v2330
    %v4466 = vunpack.c.l.b16 %v2331
    %v4467 = vunpack.c.h.b16 %v2331
    %v4468 = vunpack.c.l.b16 %v2332
    %v4469 = vunpack.c.h.b16 %v2332
    %v4470 = vunpack.c.l.b16 %v2333
    %v4471 = vunpack.c.h.b16 %v2333
    %v4472 = vpack.c.b16 %v4348, %v4344
    %v4473 = vpack.c.b16 %v4349, %v4345
    %v4474 = vpack.c.b16 %v4350, %v4346
    %v4475 = vpack.c.b16 %v4351, %v4347
    %v4476 = vpack.c.b16 %v4356, %v4352
    %v4477 = vpack.c.b16 %v4357, %v4353
    %v4478 = vpack.c.b16 %v4358, %v4354
    %v4479 = vpack.c.b16 %v4359, %v4355
    %v4480 = vpack.c.b16 %v4364, %v4360
    %v4481 = vpack.c.b16 %v4365, %v4361
    %v4482 = vpack.c.b16 %v4366, %v4362
    %v4483 = vpack.c.b16 %v4367, %v4363
    %v4484 = vpack.c.b16 %v4372, %v4368
    %v4485 = vpack.c.b16 %v4373, %v4369
    %v4486 = vpack.c.b16 %v4374, %v4370
    %v4487 = vpack.c.b16 %v4375, %v4371
    %v4488 = vpack.c.b16 %v4380, %v4376
    %v4489 = vpack.c.b16 %v4381, %v4377
    %v4490 = vpack.c.b16 %v4382, %v4378
    %v4491 = vpack.c.b16 %v4383, %v4379
    %v4492 = vpack.c.b16 %v4388, %v4384
    %v4493 = vpack.c.b16 %v4389, %v4385
    %v4494 = vpack.c.b16 %v4390, %v4386
    %v4495 = vpack.c.b16 %v4391, %v4387
    %v4496 = vpack.c.b16 %v4396, %v4392
    %v4497 = vpack.c.b16 %v4397, %v4393
    %v4498 = vpack.c.b16 %v4398, %v4394
    %v4499 = vpack.c.b16 %v4399, %v4395
    %v4500 = vpack.c.b16 %v4404, %v4400
    %v4501 = vpack.c.b16 %v4405, %v4401
    %v4502 = vpack.c.b16 %v4406, %v4402
    %v4503 = vpack.c.b16 %v4407, %v4403
    %v4504 = vpack.c.b16 %v4412, %v4408
    %v4505 = vpack.c.b16 %v4413, %v4409
    %v4506 = vpack.c.b16 %v4414, %v4410
    %v4507 = vpack.c.b16 %v4415, %v4411
    %v4508 = vpack.c.b16 %v4420, %v4416
    %v4509 = vpack.c.b16 %v4421, %v4417
    %v4510 = vpack.c.b16 %v4422, %v4418
    %v4511 = vpack.c.b16 %v4423, %v4419
    %v4512 = vpack.c.b16 %v4428, %v4424
    %v4513 = vpack.c.b16 %v4429, %v4425
    %v4514 = vpack.c.b16 %v4430, %v4426
    %v4515 = vpack.c.b16 %v4431, %v4427
    %v4516 = vpack.c.b16 %v4436, %v4432
    %v4517 = vpack.c.b16 %v4437, %v4433
    %v4518 = vpack.c.b16 %v4438, %v4434
    %v4519 = vpack.c.b16 %v4439, %v4435
    %v4520 = vpack.c.b16 %v4444, %v4440
    %v4521 = vpack.c.b16 %v4445, %v4441
    %v4522 = vpack.c.b16 %v4446, %v4442
    %v4523 = vpack.c.b16 %v4447, %v4443
    %v4524 = vpack.c.b16 %v4452, %v4448
    %v4525 = vpack.c.b16 %v4453, %v4449
    %v4526 = vpack.c.b16 %v4454, %v4450
    %v4527 = vpack.c.b16 %v4455, %v4451
    %v4528 = vpack.c.b16 %v4460, %v4456
    %v4529 = vpack.c.b16 %v4461, %v4457
    %v4530 = vpack.c.b16 %v4462, %v4458
    %v4531 = vpack.c.b16 %v4463, %v4459
    %v4532 = vpack.c.b16 %v4468, %v4464
    %v4533 = vpack.c.b16 %v4469, %v4465
    %v4534 = vpack.c.b16 %v4470, %v4466
    %v4535 = vpack.c.b16 %v4471, %v4467
    %4600 = vmatprep.subr.bf16.mxu0 %v4501
    %4601 = vmatpush1.bf16.msra.mxu0 %v4500
    %4602 = vmatprep.subr.bf16.mxu0 %v4497
    %4603 = vmatpush1.bf16.msra.mxu0 %v4496
    %4604 = vmatprep.subr.bf16.mxu0 %v4493
    %4605 = vmatpush1.bf16.msra.mxu0 %v4492
    %4606 = vmatprep.subr.bf16.mxu0 %v4489
    %4607 = vmatpush1.bf16.msra.mxu0 %v4488
    %4608 = vmatprep.subr.bf16.mxu0 %v4485
    %4609 = vmatpush1.bf16.msra.mxu0 %v4484
    %4610 = vmatprep.subr.bf16.mxu0 %v4481
    %4611 = vmatpush1.bf16.msra.mxu0 %v4480
    %4612 = vmatprep.subr.bf16.mxu0 %v4477
    %4613 = vmatpush1.bf16.msra.mxu0 %v4476
    %4614 = vmatprep.subr.bf16.mxu0 %v4473
    %4615 = vmatpush1.bf16.msra.mxu0 %v4472
    %4616 = vmatprep.subr.bf16.mxu0 %v4533
    %4617 = vmatpush2.bf16.msra.mxu0 %v4532
    %4618 = vmatprep.subr.bf16.mxu0 %v4529
    %4619 = vmatpush2.bf16.msra.mxu0 %v4528
    %4620 = vmatprep.subr.bf16.mxu0 %v4525
    %4621 = vmatpush2.bf16.msra.mxu0 %v4524
    %4622 = vmatprep.subr.bf16.mxu0 %v4521
    %4623 = vmatpush2.bf16.msra.mxu0 %v4520
    %4624 = vmatprep.subr.bf16.mxu0 %v4517
    %4625 = vmatpush2.bf16.msra.mxu0 %v4516
    %4626 = vmatprep.subr.bf16.mxu0 %v4513
    %4627 = vmatpush2.bf16.msra.mxu0 %v4512
    %4628 = vmatprep.subr.bf16.mxu0 %v4509
    %4629 = vmatpush2.bf16.msra.mxu0 %v4508
    %4630 = vmatprep.subr.bf16.mxu0 %v4505
    %4631 = vmatpush2.bf16.msra.mxu0 %v4504
    %4632 = vmatprep.mubr.bf16.mxu0 %v4229
    %4633 = vmatmul.mubr.bf16.gmra.mxu0 %v4228
    %v4634 = vpop.f32.mrf.mxu0
    %v4635 = vadd.f32 %v4267, %v4634
    %v4636 = vpop.f32.mrf.mxu0
    %v4637 = vadd.f32 %v4271, %v4636
    %v4638 = vpop.f32.mrf.mxu0
    %v4639 = vadd.f32 %v4267, %v4638
    %v4640 = vpop.f32.mrf.mxu0
    %v4641 = vadd.f32 %v4271, %v4640
    %4642 = vmatprep.mubr.bf16.mxu0 %v4231
    %4643 = vmatmul.mubr.bf16.gmra.mxu0 %v4230
    %v4644 = vpop.f32.mrf.mxu0
    %v4645 = vadd.f32 %v4267, %v4644
    %v4646 = vpop.f32.mrf.mxu0
    %v4647 = vadd.f32 %v4271, %v4646
    %v4648 = vpop.f32.mrf.mxu0
    %v4649 = vadd.f32 %v4267, %v4648
    %v4650 = vpop.f32.mrf.mxu0
    %v4651 = vadd.f32 %v4271, %v4650
    %4652 = vmatprep.mubr.bf16.mxu0 %v4233
    %4653 = vmatmul.mubr.bf16.gmra.mxu0 %v4232
    %v4654 = vpop.f32.mrf.mxu0
    %v4655 = vadd.f32 %v4267, %v4654
    %v4656 = vpop.f32.mrf.mxu0
    %v4657 = vadd.f32 %v4271, %v4656
    %v4658 = vpop.f32.mrf.mxu0
    %v4659 = vadd.f32 %v4267, %v4658
    %v4660 = vpop.f32.mrf.mxu0
    %v4661 = vadd.f32 %v4271, %v4660
    %4662 = vmatprep.mubr.bf16.mxu0 %v4235
    %4663 = vmatmul.mubr.bf16.gmra.mxu0 %v4234
    %v4664 = vpop.f32.mrf.mxu0
    %v4665 = vadd.f32 %v4267, %v4664
    %v4666 = vpop.f32.mrf.mxu0
    %v4667 = vadd.f32 %v4271, %v4666
    %v4668 = vpop.f32.mrf.mxu0
    %v4669 = vadd.f32 %v4267, %v4668
    %v4670 = vpop.f32.mrf.mxu0
    %v4671 = vadd.f32 %v4271, %v4670
    %4672 = vmatprep.mubr.bf16.mxu0 %v4237
    %4673 = vmatmul.mubr.bf16.gmra.mxu0 %v4236
    %v4674 = vpop.f32.mrf.mxu0
    %v4675 = vadd.f32 %v4267, %v4674
    %v4676 = vpop.f32.mrf.mxu0
    %v4677 = vadd.f32 %v4271, %v4676
    %v4678 = vpop.f32.mrf.mxu0
    %v4679 = vadd.f32 %v4267, %v4678
    %v4680 = vpop.f32.mrf.mxu0
    %v4681 = vadd.f32 %v4271, %v4680
    %4682 = vmatprep.mubr.bf16.mxu0 %v4239
    %4683 = vmatmul.mubr.bf16.gmra.mxu0 %v4238
    %v4684 = vpop.f32.mrf.mxu0
    %v4685 = vadd.f32 %v4267, %v4684
    %v4686 = vpop.f32.mrf.mxu0
    %v4687 = vadd.f32 %v4271, %v4686
    %v4688 = vpop.f32.mrf.mxu0
    %v4689 = vadd.f32 %v4267, %v4688
    %v4690 = vpop.f32.mrf.mxu0
    %v4691 = vadd.f32 %v4271, %v4690
    %4692 = vmatprep.mubr.bf16.mxu0 %v4241
    %4693 = vmatmul.mubr.bf16.gmra.mxu0 %v4240
    %v4694 = vpop.f32.mrf.mxu0
    %v4695 = vadd.f32 %v4267, %v4694
    %v4696 = vpop.f32.mrf.mxu0
    %v4697 = vadd.f32 %v4271, %v4696
    %v4698 = vpop.f32.mrf.mxu0
    %v4699 = vadd.f32 %v4267, %v4698
    %v4700 = vpop.f32.mrf.mxu0
    %v4701 = vadd.f32 %v4271, %v4700
    %4702 = vmatprep.mubr.bf16.mxu0 %v4243
    %4703 = vmatmul.mubr.bf16.gmra.mxu0 %v4242
    %v4704 = vpop.f32.mrf.mxu0
    %v4705 = vadd.f32 %v4267, %v4704
    %v4706 = vpop.f32.mrf.mxu0
    %v4707 = vadd.f32 %v4271, %v4706
    %v4708 = vpop.f32.mrf.mxu0
    %v4709 = vadd.f32 %v4267, %v4708
    %v4710 = vpop.f32.mrf.mxu0
    %v4711 = vadd.f32 %v4271, %v4710
    %4712 = vmatprep.mubr.bf16.mxu0 %v4245
    %4713 = vmatmul.mubr.bf16.gmra.mxu0 %v4244
    %v4714 = vpop.f32.mrf.mxu0
    %v4715 = vadd.f32 %v4267, %v4714
    %v4716 = vpop.f32.mrf.mxu0
    %v4717 = vadd.f32 %v4271, %v4716
    %v4718 = vpop.f32.mrf.mxu0
    %v4719 = vadd.f32 %v4267, %v4718
    %v4720 = vpop.f32.mrf.mxu0
    %v4721 = vadd.f32 %v4271, %v4720
    %4722 = vmatprep.mubr.bf16.mxu0 %v4247
    %4723 = vmatmul.mubr.bf16.gmra.mxu0 %v4246
    %v4724 = vpop.f32.mrf.mxu0
    %v4725 = vadd.f32 %v4267, %v4724
    %v4726 = vpop.f32.mrf.mxu0
    %v4727 = vadd.f32 %v4271, %v4726
    %v4728 = vpop.f32.mrf.mxu0
    %v4729 = vadd.f32 %v4267, %v4728
    %v4730 = vpop.f32.mrf.mxu0
    %v4731 = vadd.f32 %v4271, %v4730
    %4732 = vmatprep.mubr.bf16.mxu0 %v4249
    %4733 = vmatmul.mubr.bf16.gmra.mxu0 %v4248
    %v4734 = vpop.f32.mrf.mxu0
    %v4735 = vadd.f32 %v4267, %v4734
    %v4736 = vpop.f32.mrf.mxu0
    %v4737 = vadd.f32 %v4271, %v4736
    %v4738 = vpop.f32.mrf.mxu0
    %v4739 = vadd.f32 %v4267, %v4738
    %v4740 = vpop.f32.mrf.mxu0
    %v4741 = vadd.f32 %v4271, %v4740
    %4742 = vmatprep.mubr.bf16.mxu0 %v4251
    %4743 = vmatmul.mubr.bf16.gmra.mxu0 %v4250
    %v4744 = vpop.f32.mrf.mxu0
    %v4745 = vadd.f32 %v4267, %v4744
    %v4746 = vpop.f32.mrf.mxu0
    %v4747 = vadd.f32 %v4271, %v4746
    %v4748 = vpop.f32.mrf.mxu0
    %v4749 = vadd.f32 %v4267, %v4748
    %v4750 = vpop.f32.mrf.mxu0
    %v4751 = vadd.f32 %v4271, %v4750
    %4752 = vmatprep.mubr.bf16.mxu0 %v4253
    %4753 = vmatmul.mubr.bf16.gmra.mxu0 %v4252
    %v4754 = vpop.f32.mrf.mxu0
    %v4755 = vadd.f32 %v4267, %v4754
    %v4756 = vpop.f32.mrf.mxu0
    %v4757 = vadd.f32 %v4271, %v4756
    %v4758 = vpop.f32.mrf.mxu0
    %v4759 = vadd.f32 %v4267, %v4758
    %v4760 = vpop.f32.mrf.mxu0
    %v4761 = vadd.f32 %v4271, %v4760
    %4762 = vmatprep.mubr.bf16.mxu0 %v4255
    %4763 = vmatmul.mubr.bf16.gmra.mxu0 %v4254
    %v4764 = vpop.f32.mrf.mxu0
    %v4765 = vadd.f32 %v4267, %v4764
    %v4766 = vpop.f32.mrf.mxu0
    %v4767 = vadd.f32 %v4271, %v4766
    %v4768 = vpop.f32.mrf.mxu0
    %v4769 = vadd.f32 %v4267, %v4768
    %v4770 = vpop.f32.mrf.mxu0
    %v4771 = vadd.f32 %v4271, %v4770
    %4772 = vmatprep.mubr.bf16.mxu0 %v4257
    %4773 = vmatmul.mubr.bf16.gmra.mxu0 %v4256
    %v4774 = vpop.f32.mrf.mxu0
    %v4775 = vadd.f32 %v4267, %v4774
    %v4776 = vpop.f32.mrf.mxu0
    %v4777 = vadd.f32 %v4271, %v4776
    %v4778 = vpop.f32.mrf.mxu0
    %v4779 = vadd.f32 %v4267, %v4778
    %v4780 = vpop.f32.mrf.mxu0
    %v4781 = vadd.f32 %v4271, %v4780
    %4782 = vmatprep.mubr.bf16.mxu0 %v4259
    %4783 = vmatmul.mubr.bf16.gmra.mxu0 %v4258
    %v4784 = vpop.f32.mrf.mxu0
    %v4785 = vadd.f32 %v4267, %v4784
    %v4786 = vpop.f32.mrf.mxu0
    %v4787 = vadd.f32 %v4271, %v4786
    %v4788 = vpop.f32.mrf.mxu0
    %v4789 = vadd.f32 %v4267, %v4788
    %v4790 = vpop.f32.mrf.mxu0
    %v4791 = vadd.f32 %v4271, %v4790
    %4792 = vdwg.mxu0
    %4793 = vmatprep.subr.bf16.mxu0 %v4503
    %4794 = vmatpush1.bf16.msra.mxu0 %v4502
    %4795 = vmatprep.subr.bf16.mxu0 %v4499
    %4796 = vmatpush1.bf16.msra.mxu0 %v4498
    %4797 = vmatprep.subr.bf16.mxu0 %v4495
    %4798 = vmatpush1.bf16.msra.mxu0 %v4494
    %4799 = vmatprep.subr.bf16.mxu0 %v4491
    %4800 = vmatpush1.bf16.msra.mxu0 %v4490
    %4801 = vmatprep.subr.bf16.mxu0 %v4487
    %4802 = vmatpush1.bf16.msra.mxu0 %v4486
    %4803 = vmatprep.subr.bf16.mxu0 %v4483
    %4804 = vmatpush1.bf16.msra.mxu0 %v4482
    %4805 = vmatprep.subr.bf16.mxu0 %v4479
    %4806 = vmatpush1.bf16.msra.mxu0 %v4478
    %4807 = vmatprep.subr.bf16.mxu0 %v4475
    %4808 = vmatpush1.bf16.msra.mxu0 %v4474
    %4809 = vmatprep.subr.bf16.mxu0 %v4535
    %4810 = vmatpush2.bf16.msra.mxu0 %v4534
    %4811 = vmatprep.subr.bf16.mxu0 %v4531
    %4812 = vmatpush2.bf16.msra.mxu0 %v4530
    %4813 = vmatprep.subr.bf16.mxu0 %v4527
    %4814 = vmatpush2.bf16.msra.mxu0 %v4526
    %4815 = vmatprep.subr.bf16.mxu0 %v4523
    %4816 = vmatpush2.bf16.msra.mxu0 %v4522
    %4817 = vmatprep.subr.bf16.mxu0 %v4519
    %4818 = vmatpush2.bf16.msra.mxu0 %v4518
    %4819 = vmatprep.subr.bf16.mxu0 %v4515
    %4820 = vmatpush2.bf16.msra.mxu0 %v4514
    %4821 = vmatprep.subr.bf16.mxu0 %v4511
    %4822 = vmatpush2.bf16.msra.mxu0 %v4510
    %4823 = vmatprep.subr.bf16.mxu0 %v4507
    %4824 = vmatpush2.bf16.msra.mxu0 %v4506
    %4825 = vmatprep.mubr.bf16.mxu0 %v4229
    %4826 = vmatmul.mubr.bf16.gmra.mxu0 %v4228
    %v4827 = vpop.f32.mrf.mxu0
    %v4828 = vadd.f32 %v4275, %v4827
    %v4829 = vpop.f32.mrf.mxu0
    %v4830 = vadd.f32 %v4279, %v4829
    %v4831 = vpop.f32.mrf.mxu0
    %v4832 = vadd.f32 %v4275, %v4831
    %v4833 = vpop.f32.mrf.mxu0
    %v4834 = vadd.f32 %v4279, %v4833
    %4835 = vmatprep.mubr.bf16.mxu0 %v4231
    %4836 = vmatmul.mubr.bf16.gmra.mxu0 %v4230
    %v4837 = vpop.f32.mrf.mxu0
    %v4838 = vadd.f32 %v4275, %v4837
    %v4839 = vpop.f32.mrf.mxu0
    %v4840 = vadd.f32 %v4279, %v4839
    %v4841 = vpop.f32.mrf.mxu0
    %v4842 = vadd.f32 %v4275, %v4841
    %v4843 = vpop.f32.mrf.mxu0
    %v4844 = vadd.f32 %v4279, %v4843
    %4845 = vmatprep.mubr.bf16.mxu0 %v4233
    %4846 = vmatmul.mubr.bf16.gmra.mxu0 %v4232
    %v4847 = vpop.f32.mrf.mxu0
    %v4848 = vadd.f32 %v4275, %v4847
    %v4849 = vpop.f32.mrf.mxu0
    %v4850 = vadd.f32 %v4279, %v4849
    %v4851 = vpop.f32.mrf.mxu0
    %v4852 = vadd.f32 %v4275, %v4851
    %v4853 = vpop.f32.mrf.mxu0
    %v4854 = vadd.f32 %v4279, %v4853
    %4855 = vmatprep.mubr.bf16.mxu0 %v4235
    %4856 = vmatmul.mubr.bf16.gmra.mxu0 %v4234
    %v4857 = vpop.f32.mrf.mxu0
    %v4858 = vadd.f32 %v4275, %v4857
    %v4859 = vpop.f32.mrf.mxu0
    %v4860 = vadd.f32 %v4279, %v4859
    %v4861 = vpop.f32.mrf.mxu0
    %v4862 = vadd.f32 %v4275, %v4861
    %v4863 = vpop.f32.mrf.mxu0
    %v4864 = vadd.f32 %v4279, %v4863
    %4865 = vmatprep.mubr.bf16.mxu0 %v4237
    %4866 = vmatmul.mubr.bf16.gmra.mxu0 %v4236
    %v4867 = vpop.f32.mrf.mxu0
    %v4868 = vadd.f32 %v4275, %v4867
    %v4869 = vpop.f32.mrf.mxu0
    %v4870 = vadd.f32 %v4279, %v4869
    %v4871 = vpop.f32.mrf.mxu0
    %v4872 = vadd.f32 %v4275, %v4871
    %v4873 = vpop.f32.mrf.mxu0
    %v4874 = vadd.f32 %v4279, %v4873
    %4875 = vmatprep.mubr.bf16.mxu0 %v4239
    %4876 = vmatmul.mubr.bf16.gmra.mxu0 %v4238
    %v4877 = vpop.f32.mrf.mxu0
    %v4878 = vadd.f32 %v4275, %v4877
    %v4879 = vpop.f32.mrf.mxu0
    %v4880 = vadd.f32 %v4279, %v4879
    %v4881 = vpop.f32.mrf.mxu0
    %v4882 = vadd.f32 %v4275, %v4881
    %v4883 = vpop.f32.mrf.mxu0
    %v4884 = vadd.f32 %v4279, %v4883
    %4885 = vmatprep.mubr.bf16.mxu0 %v4241
    %4886 = vmatmul.mubr.bf16.gmra.mxu0 %v4240
    %v4887 = vpop.f32.mrf.mxu0
    %v4888 = vadd.f32 %v4275, %v4887
    %v4889 = vpop.f32.mrf.mxu0
    %v4890 = vadd.f32 %v4279, %v4889
    %v4891 = vpop.f32.mrf.mxu0
    %v4892 = vadd.f32 %v4275, %v4891
    %v4893 = vpop.f32.mrf.mxu0
    %v4894 = vadd.f32 %v4279, %v4893
    %4895 = vmatprep.mubr.bf16.mxu0 %v4243
    %4896 = vmatmul.mubr.bf16.gmra.mxu0 %v4242
    %v4897 = vpop.f32.mrf.mxu0
    %v4898 = vadd.f32 %v4275, %v4897
    %v4899 = vpop.f32.mrf.mxu0
    %v4900 = vadd.f32 %v4279, %v4899
    %v4901 = vpop.f32.mrf.mxu0
    %v4902 = vadd.f32 %v4275, %v4901
    %v4903 = vpop.f32.mrf.mxu0
    %v4904 = vadd.f32 %v4279, %v4903
    %4905 = vmatprep.mubr.bf16.mxu0 %v4245
    %4906 = vmatmul.mubr.bf16.gmra.mxu0 %v4244
    %v4907 = vpop.f32.mrf.mxu0
    %v4908 = vadd.f32 %v4275, %v4907
    %v4909 = vpop.f32.mrf.mxu0
    %v4910 = vadd.f32 %v4279, %v4909
    %v4911 = vpop.f32.mrf.mxu0
    %v4912 = vadd.f32 %v4275, %v4911
    %v4913 = vpop.f32.mrf.mxu0
    %v4914 = vadd.f32 %v4279, %v4913
    %4915 = vmatprep.mubr.bf16.mxu0 %v4247
    %4916 = vmatmul.mubr.bf16.gmra.mxu0 %v4246
    %v4917 = vpop.f32.mrf.mxu0
    %v4918 = vadd.f32 %v4275, %v4917
    %v4919 = vpop.f32.mrf.mxu0
    %v4920 = vadd.f32 %v4279, %v4919
    %v4921 = vpop.f32.mrf.mxu0
    %v4922 = vadd.f32 %v4275, %v4921
    %v4923 = vpop.f32.mrf.mxu0
    %v4924 = vadd.f32 %v4279, %v4923
    %4925 = vmatprep.mubr.bf16.mxu0 %v4249
    %4926 = vmatmul.mubr.bf16.gmra.mxu0 %v4248
    %v4927 = vpop.f32.mrf.mxu0
    %v4928 = vadd.f32 %v4275, %v4927
    %v4929 = vpop.f32.mrf.mxu0
    %v4930 = vadd.f32 %v4279, %v4929
    %v4931 = vpop.f32.mrf.mxu0
    %v4932 = vadd.f32 %v4275, %v4931
    %v4933 = vpop.f32.mrf.mxu0
    %v4934 = vadd.f32 %v4279, %v4933
    %4935 = vmatprep.mubr.bf16.mxu0 %v4251
    %4936 = vmatmul.mubr.bf16.gmra.mxu0 %v4250
    %v4937 = vpop.f32.mrf.mxu0
    %v4938 = vadd.f32 %v4275, %v4937
    %v4939 = vpop.f32.mrf.mxu0
    %v4940 = vadd.f32 %v4279, %v4939
    %v4941 = vpop.f32.mrf.mxu0
    %v4942 = vadd.f32 %v4275, %v4941
    %v4943 = vpop.f32.mrf.mxu0
    %v4944 = vadd.f32 %v4279, %v4943
    %4945 = vmatprep.mubr.bf16.mxu0 %v4253
    %4946 = vmatmul.mubr.bf16.gmra.mxu0 %v4252
    %v4947 = vpop.f32.mrf.mxu0
    %v4948 = vadd.f32 %v4275, %v4947
    %v4949 = vpop.f32.mrf.mxu0
    %v4950 = vadd.f32 %v4279, %v4949
    %v4951 = vpop.f32.mrf.mxu0
    %v4952 = vadd.f32 %v4275, %v4951
    %v4953 = vpop.f32.mrf.mxu0
    %v4954 = vadd.f32 %v4279, %v4953
    %4955 = vmatprep.mubr.bf16.mxu0 %v4255
    %4956 = vmatmul.mubr.bf16.gmra.mxu0 %v4254
    %v4957 = vpop.f32.mrf.mxu0
    %v4958 = vadd.f32 %v4275, %v4957
    %v4959 = vpop.f32.mrf.mxu0
    %v4960 = vadd.f32 %v4279, %v4959
    %v4961 = vpop.f32.mrf.mxu0
    %v4962 = vadd.f32 %v4275, %v4961
    %v4963 = vpop.f32.mrf.mxu0
    %v4964 = vadd.f32 %v4279, %v4963
    %4965 = vmatprep.mubr.bf16.mxu0 %v4257
    %4966 = vmatmul.mubr.bf16.gmra.mxu0 %v4256
    %v4967 = vpop.f32.mrf.mxu0
    %v4968 = vadd.f32 %v4275, %v4967
    %v4969 = vpop.f32.mrf.mxu0
    %v4970 = vadd.f32 %v4279, %v4969
    %v4971 = vpop.f32.mrf.mxu0
    %v4972 = vadd.f32 %v4275, %v4971
    %v4973 = vpop.f32.mrf.mxu0
    %v4974 = vadd.f32 %v4279, %v4973
    %4975 = vmatprep.mubr.bf16.mxu0 %v4259
    %4976 = vmatmul.mubr.bf16.gmra.mxu0 %v4258
    %v4977 = vpop.f32.mrf.mxu0
    %v4978 = vadd.f32 %v4275, %v4977
    %v4979 = vpop.f32.mrf.mxu0
    %v4980 = vadd.f32 %v4279, %v4979
    %v4981 = vpop.f32.mrf.mxu0
    %v4982 = vadd.f32 %v4275, %v4981
    %v4983 = vpop.f32.mrf.mxu0
    %v4984 = vadd.f32 %v4279, %v4983
    %4985 = vdwg.mxu0
    %v4986 = vmax.f32 %v4635, 0.0
    %v4987 = vmax.f32 %v4637, 0.0
    %v4988 = vmax.f32 %v4828, 0.0
    %v4989 = vmax.f32 %v4830, 0.0
    %v4990 = vmax.f32 %v4639, 0.0
    %v4991 = vmax.f32 %v4641, 0.0
    %v4992 = vmax.f32 %v4832, 0.0
    %v4993 = vmax.f32 %v4834, 0.0
    %v4994 = vmax.f32 %v4645, 0.0
    %v4995 = vmax.f32 %v4647, 0.0
    %v4996 = vmax.f32 %v4838, 0.0
    %v4997 = vmax.f32 %v4840, 0.0
    %v4998 = vmax.f32 %v4649, 0.0
    %v4999 = vmax.f32 %v4651, 0.0
    %v5000 = vmax.f32 %v4842, 0.0
    %v5001 = vmax.f32 %v4844, 0.0
    %v5002 = vmax.f32 %v4655, 0.0
    %v5003 = vmax.f32 %v4657, 0.0
    %v5004 = vmax.f32 %v4848, 0.0
    %v5005 = vmax.f32 %v4850, 0.0
    %v5006 = vmax.f32 %v4659, 0.0
    %v5007 = vmax.f32 %v4661, 0.0
    %v5008 = vmax.f32 %v4852, 0.0
    %v5009 = vmax.f32 %v4854, 0.0
    %v5010 = vmax.f32 %v4665, 0.0
    %v5011 = vmax.f32 %v4667, 0.0
    %v5012 = vmax.f32 %v4858, 0.0
    %v5013 = vmax.f32 %v4860, 0.0
    %v5014 = vmax.f32 %v4669, 0.0
    %v5015 = vmax.f32 %v4671, 0.0
    %v5016 = vmax.f32 %v4862, 0.0
    %v5017 = vmax.f32 %v4864, 0.0
    %v5018 = vmax.f32 %v4675, 0.0
    %v5019 = vmax.f32 %v4677, 0.0
    %v5020 = vmax.f32 %v4868, 0.0
    %v5021 = vmax.f32 %v4870, 0.0
    %v5022 = vmax.f32 %v4679, 0.0
    %v5023 = vmax.f32 %v4681, 0.0
    %v5024 = vmax.f32 %v4872, 0.0
    %v5025 = vmax.f32 %v4874, 0.0
    %v5026 = vmax.f32 %v4685, 0.0
    %v5027 = vmax.f32 %v4687, 0.0
    %v5028 = vmax.f32 %v4878, 0.0
    %v5029 = vmax.f32 %v4880, 0.0
    %v5030 = vmax.f32 %v4689, 0.0
    %v5031 = vmax.f32 %v4691, 0.0
    %v5032 = vmax.f32 %v4882, 0.0
    %v5033 = vmax.f32 %v4884, 0.0
    %v5034 = vmax.f32 %v4695, 0.0
    %v5035 = vmax.f32 %v4697, 0.0
    %v5036 = vmax.f32 %v4888, 0.0
    %v5037 = vmax.f32 %v4890, 0.0
    %v5038 = vmax.f32 %v4699, 0.0
    %v5039 = vmax.f32 %v4701, 0.0
    %v5040 = vmax.f32 %v4892, 0.0
    %v5041 = vmax.f32 %v4894, 0.0
    %v5042 = vmax.f32 %v4705, 0.0
    %v5043 = vmax.f32 %v4707, 0.0
    %v5044 = vmax.f32 %v4898, 0.0
    %v5045 = vmax.f32 %v4900, 0.0
    %v5046 = vmax.f32 %v4709, 0.0
    %v5047 = vmax.f32 %v4711, 0.0
    %v5048 = vmax.f32 %v4902, 0.0
    %v5049 = vmax.f32 %v4904, 0.0
    %v5050 = vmax.f32 %v4715, 0.0
    %v5051 = vmax.f32 %v4717, 0.0
    %v5052 = vmax.f32 %v4908, 0.0
    %v5053 = vmax.f32 %v4910, 0.0
    %v5054 = vmax.f32 %v4719, 0.0
    %v5055 = vmax.f32 %v4721, 0.0
    %v5056 = vmax.f32 %v4912, 0.0
    %v5057 = vmax.f32 %v4914, 0.0
    %v5058 = vmax.f32 %v4725, 0.0
    %v5059 = vmax.f32 %v4727, 0.0
    %v5060 = vmax.f32 %v4918, 0.0
    %v5061 = vmax.f32 %v4920, 0.0
    %v5062 = vmax.f32 %v4729, 0.0
    %v5063 = vmax.f32 %v4731, 0.0
    %v5064 = vmax.f32 %v4922, 0.0
    %v5065 = vmax.f32 %v4924, 0.0
    %v5066 = vmax.f32 %v4735, 0.0
    %v5067 = vmax.f32 %v4737, 0.0
    %v5068 = vmax.f32 %v4928, 0.0
    %v5069 = vmax.f32 %v4930, 0.0
    %v5070 = vmax.f32 %v4739, 0.0
    %v5071 = vmax.f32 %v4741, 0.0
    %v5072 = vmax.f32 %v4932, 0.0
    %v5073 = vmax.f32 %v4934, 0.0
    %v5074 = vmax.f32 %v4745, 0.0
    %v5075 = vmax.f32 %v4747, 0.0
    %v5076 = vmax.f32 %v4938, 0.0
    %v5077 = vmax.f32 %v4940, 0.0
    %v5078 = vmax.f32 %v4749, 0.0
    %v5079 = vmax.f32 %v4751, 0.0
    %v5080 = vmax.f32 %v4942, 0.0
    %v5081 = vmax.f32 %v4944, 0.0
    %v5082 = vmax.f32 %v4755, 0.0
    %v5083 = vmax.f32 %v4757, 0.0
    %v5084 = vmax.f32 %v4948, 0.0
    %v5085 = vmax.f32 %v4950, 0.0
    %v5086 = vmax.f32 %v4759, 0.0
    %v5087 = vmax.f32 %v4761, 0.0
    %v5088 = vmax.f32 %v4952, 0.0
    %v5089 = vmax.f32 %v4954, 0.0
    %v5090 = vmax.f32 %v4765, 0.0
    %v5091 = vmax.f32 %v4767, 0.0
    %v5092 = vmax.f32 %v4958, 0.0
    %v5093 = vmax.f32 %v4960, 0.0
    %v5094 = vmax.f32 %v4769, 0.0
    %v5095 = vmax.f32 %v4771, 0.0
    %v5096 = vmax.f32 %v4962, 0.0
    %v5097 = vmax.f32 %v4964, 0.0
    %v5098 = vmax.f32 %v4775, 0.0
    %v5099 = vmax.f32 %v4777, 0.0
    %v5100 = vmax.f32 %v4968, 0.0
    %v5101 = vmax.f32 %v4970, 0.0
    %v5102 = vmax.f32 %v4779, 0.0
    %v5103 = vmax.f32 %v4781, 0.0
    %v5104 = vmax.f32 %v4972, 0.0
    %v5105 = vmax.f32 %v4974, 0.0
    %v5106 = vmax.f32 %v4785, 0.0
    %v5107 = vmax.f32 %v4787, 0.0
    %v5108 = vmax.f32 %v4978, 0.0
    %v5109 = vmax.f32 %v4980, 0.0
    %v5110 = vmax.f32 %v4789, 0.0
    %v5111 = vmax.f32 %v4791, 0.0
    %v5112 = vmax.f32 %v4982, 0.0
    %v5113 = vmax.f32 %v4984, 0.0
    %v5114 = vmax.f32 %v4986, %v4990
    %v5115 = vmax.f32 %v5114, %v4994
    %v5116 = vmax.f32 %v5115, %v4998
    %v5117 = vmax.f32 %v5116, %v5002
    %v5118 = vmax.f32 %v5117, %v5006
    %v5119 = vmax.f32 %v5118, %v5010
    %v5120 = vmax.f32 %v5119, %v5014
    %v5121 = vmax.f32 %v5120, %v5018
    %v5122 = vmax.f32 %v5121, %v5022
    %v5123 = vmax.f32 %v5122, %v5026
    %v5124 = vmax.f32 %v5123, %v5030
    %v5125 = vmax.f32 %v5124, %v5034
    %v5126 = vmax.f32 %v5125, %v5038
    %v5127 = vmax.f32 %v5126, %v5042
    %v5128 = vmax.f32 %v5127, %v5046
    %v5129 = vrot.slane %v5128, 4
    %v5130 = vmax.f32 %v5128, %v5129
    %v5131 = vrot.slane %v5130, 2
    %v5132 = vmax.f32 %v5130, %v5131
    %v5133 = vrot.slane %v5132, 1
    %v5134 = vmax.f32 %v5132, %v5133
    %v5135 = vmax.f32 %v4987, %v4991
    %v5136 = vmax.f32 %v5135, %v4995
    %v5137 = vmax.f32 %v5136, %v4999
    %v5138 = vmax.f32 %v5137, %v5003
    %v5139 = vmax.f32 %v5138, %v5007
    %v5140 = vmax.f32 %v5139, %v5011
    %v5141 = vmax.f32 %v5140, %v5015
    %v5142 = vmax.f32 %v5141, %v5019
    %v5143 = vmax.f32 %v5142, %v5023
    %v5144 = vmax.f32 %v5143, %v5027
    %v5145 = vmax.f32 %v5144, %v5031
    %v5146 = vmax.f32 %v5145, %v5035
    %v5147 = vmax.f32 %v5146, %v5039
    %v5148 = vmax.f32 %v5147, %v5043
    %v5149 = vmax.f32 %v5148, %v5047
    %v5150 = vrot.slane %v5149, 4
    %v5151 = vmax.f32 %v5149, %v5150
    %v5152 = vrot.slane %v5151, 2
    %v5153 = vmax.f32 %v5151, %v5152
    %v5154 = vrot.slane %v5153, 1
    %v5155 = vmax.f32 %v5153, %v5154
    %v5156 = vmax.f32 %v4988, %v4992
    %v5157 = vmax.f32 %v5156, %v4996
    %v5158 = vmax.f32 %v5157, %v5000
    %v5159 = vmax.f32 %v5158, %v5004
    %v5160 = vmax.f32 %v5159, %v5008
    %v5161 = vmax.f32 %v5160, %v5012
    %v5162 = vmax.f32 %v5161, %v5016
    %v5163 = vmax.f32 %v5162, %v5020
    %v5164 = vmax.f32 %v5163, %v5024
    %v5165 = vmax.f32 %v5164, %v5028
    %v5166 = vmax.f32 %v5165, %v5032
    %v5167 = vmax.f32 %v5166, %v5036
    %v5168 = vmax.f32 %v5167, %v5040
    %v5169 = vmax.f32 %v5168, %v5044
    %v5170 = vmax.f32 %v5169, %v5048
    %v5171 = vrot.slane %v5170, 4
    %v5172 = vmax.f32 %v5170, %v5171
    %v5173 = vrot.slane %v5172, 2
    %v5174 = vmax.f32 %v5172, %v5173
    %v5175 = vrot.slane %v5174, 1
    %v5176 = vmax.f32 %v5174, %v5175
    %v5177 = vmax.f32 %v4989, %v4993
    %v5178 = vmax.f32 %v5177, %v4997
    %v5179 = vmax.f32 %v5178, %v5001
    %v5180 = vmax.f32 %v5179, %v5005
    %v5181 = vmax.f32 %v5180, %v5009
    %v5182 = vmax.f32 %v5181, %v5013
    %v5183 = vmax.f32 %v5182, %v5017
    %v5184 = vmax.f32 %v5183, %v5021
    %v5185 = vmax.f32 %v5184, %v5025
    %v5186 = vmax.f32 %v5185, %v5029
    %v5187 = vmax.f32 %v5186, %v5033
    %v5188 = vmax.f32 %v5187, %v5037
    %v5189 = vmax.f32 %v5188, %v5041
    %v5190 = vmax.f32 %v5189, %v5045
    %v5191 = vmax.f32 %v5190, %v5049
    %v5192 = vrot.slane %v5191, 4
    %v5193 = vmax.f32 %v5191, %v5192
    %v5194 = vrot.slane %v5193, 2
    %v5195 = vmax.f32 %v5193, %v5194
    %v5196 = vrot.slane %v5195, 1
    %v5197 = vmax.f32 %v5195, %v5196
    %v5198 = vmax.f32 %v5050, %v5054
    %v5199 = vmax.f32 %v5198, %v5058
    %v5200 = vmax.f32 %v5199, %v5062
    %v5201 = vmax.f32 %v5200, %v5066
    %v5202 = vmax.f32 %v5201, %v5070
    %v5203 = vmax.f32 %v5202, %v5074
    %v5204 = vmax.f32 %v5203, %v5078
    %v5205 = vmax.f32 %v5204, %v5082
    %v5206 = vmax.f32 %v5205, %v5086
    %v5207 = vmax.f32 %v5206, %v5090
    %v5208 = vmax.f32 %v5207, %v5094
    %v5209 = vmax.f32 %v5208, %v5098
    %v5210 = vmax.f32 %v5209, %v5102
    %v5211 = vmax.f32 %v5210, %v5106
    %v5212 = vmax.f32 %v5211, %v5110
    %v5213 = vrot.slane %v5212, 4
    %v5214 = vmax.f32 %v5212, %v5213
    %v5215 = vrot.slane %v5214, 2
    %v5216 = vmax.f32 %v5214, %v5215
    %v5217 = vrot.slane %v5216, 1
    %v5218 = vmax.f32 %v5216, %v5217
    %v5219 = vmax.f32 %v5051, %v5055
    %v5220 = vmax.f32 %v5219, %v5059
    %v5221 = vmax.f32 %v5220, %v5063
    %v5222 = vmax.f32 %v5221, %v5067
    %v5223 = vmax.f32 %v5222, %v5071
    %v5224 = vmax.f32 %v5223, %v5075
    %v5225 = vmax.f32 %v5224, %v5079
    %v5226 = vmax.f32 %v5225, %v5083
    %v5227 = vmax.f32 %v5226, %v5087
    %v5228 = vmax.f32 %v5227, %v5091
    %v5229 = vmax.f32 %v5228, %v5095
    %v5230 = vmax.f32 %v5229, %v5099
    %v5231 = vmax.f32 %v5230, %v5103
    %v5232 = vmax.f32 %v5231, %v5107
    %v5233 = vmax.f32 %v5232, %v5111
    %v5234 = vrot.slane %v5233, 4
    %v5235 = vmax.f32 %v5233, %v5234
    %v5236 = vrot.slane %v5235, 2
    %v5237 = vmax.f32 %v5235, %v5236
    %v5238 = vrot.slane %v5237, 1
    %v5239 = vmax.f32 %v5237, %v5238
    %v5240 = vmax.f32 %v5052, %v5056
    %v5241 = vmax.f32 %v5240, %v5060
    %v5242 = vmax.f32 %v5241, %v5064
    %v5243 = vmax.f32 %v5242, %v5068
    %v5244 = vmax.f32 %v5243, %v5072
    %v5245 = vmax.f32 %v5244, %v5076
    %v5246 = vmax.f32 %v5245, %v5080
    %v5247 = vmax.f32 %v5246, %v5084
    %v5248 = vmax.f32 %v5247, %v5088
    %v5249 = vmax.f32 %v5248, %v5092
    %v5250 = vmax.f32 %v5249, %v5096
    %v5251 = vmax.f32 %v5250, %v5100
    %v5252 = vmax.f32 %v5251, %v5104
    %v5253 = vmax.f32 %v5252, %v5108
    %v5254 = vmax.f32 %v5253, %v5112
    %v5255 = vrot.slane %v5254, 4
    %v5256 = vmax.f32 %v5254, %v5255
    %v5257 = vrot.slane %v5256, 2
    %v5258 = vmax.f32 %v5256, %v5257
    %v5259 = vrot.slane %v5258, 1
    %v5260 = vmax.f32 %v5258, %v5259
    %v5261 = vmax.f32 %v5053, %v5057
    %v5262 = vmax.f32 %v5261, %v5061
    %v5263 = vmax.f32 %v5262, %v5065
    %v5264 = vmax.f32 %v5263, %v5069
    %v5265 = vmax.f32 %v5264, %v5073
    %v5266 = vmax.f32 %v5265, %v5077
    %v5267 = vmax.f32 %v5266, %v5081
    %v5268 = vmax.f32 %v5267, %v5085
    %v5269 = vmax.f32 %v5268, %v5089
    %v5270 = vmax.f32 %v5269, %v5093
    %v5271 = vmax.f32 %v5270, %v5097
    %v5272 = vmax.f32 %v5271, %v5101
    %v5273 = vmax.f32 %v5272, %v5105
    %v5274 = vmax.f32 %v5273, %v5109
    %v5275 = vmax.f32 %v5274, %v5113
    %v5276 = vrot.slane %v5275, 4
    %v5277 = vmax.f32 %v5275, %v5276
    %v5278 = vrot.slane %v5277, 2
    %v5279 = vmax.f32 %v5277, %v5278
    %v5280 = vrot.slane %v5279, 1
    %v5281 = vmax.f32 %v5279, %v5280
    %v5282 = vunpack.c.l.bf16 %v2337
    %v5283 = vlaneseq
    %v5284 = vshrl.u32 %v5283, 7
    %v5285 = vsub.s32 3, %v5284
    %v5286 = vrot.slane %v5282, %v5285
    %v5288 = vand.u32 %v2336, %v1704
    %5290 = vmatprep.subr.bf16.mxu0 0
    %5291 = vmatpush1.bf16.msra.mxu0 0
    %5292 = vmatprep.subr.bf16.mxu0 0
    %5293 = vmatpush1.bf16.msra.mxu0 0
    %5294 = vmatprep.subr.bf16.mxu0 0
    %5295 = vmatpush1.bf16.msra.mxu0 0
    %5296 = vmatprep.subr.bf16.mxu0 0
    %5297 = vmatpush1.bf16.msra.mxu0 0
    %5298 = vmatprep.subr.bf16.mxu0 0
    %5299 = vmatpush1.bf16.msra.mxu0 0
    %5300 = vmatprep.subr.bf16.mxu0 0
    %5301 = vmatpush1.bf16.msra.mxu0 0
    %5302 = vmatprep.subr.bf16.mxu0 0
    %5303 = vmatpush1.bf16.msra.mxu0 0
    %5304 = vmatprep.subr.bf16.mxu0 0
    %5305 = vmatpush1.bf16.msra.mxu0 %v5288
    %5306 = vmatprep.subr.bf16.mxu0 0
    %5307 = vmatpush2.bf16.msra.mxu0 0
    %5308 = vmatprep.subr.bf16.mxu0 0
    %5309 = vmatpush2.bf16.msra.mxu0 0
    %5310 = vmatprep.subr.bf16.mxu0 0
    %5311 = vmatpush2.bf16.msra.mxu0 0
    %5312 = vmatprep.subr.bf16.mxu0 0
    %5313 = vmatpush2.bf16.msra.mxu0 0
    %5314 = vmatprep.subr.bf16.mxu0 0
    %5315 = vmatpush2.bf16.msra.mxu0 0
    %5316 = vmatprep.subr.bf16.mxu0 0
    %5317 = vmatpush2.bf16.msra.mxu0 0
    %5318 = vmatprep.subr.bf16.mxu0 0
    %5319 = vmatpush2.bf16.msra.mxu0 0
    %5320 = vmatprep.subr.bf16.mxu0 0
    %5321 = vmatpush2.bf16.msra.mxu0 0
    %5322 = vmatprep.mubr.bf16.mxu0 0
    %5323 = vmatmul.mubr.bf16.gmra.mxu0 %v1699
    %v5324 = vpop.f32.mrf.mxu0
    %v5325 = vadd.f32 %v5286, %v5324
    %v5326 = vpop.f32.mrf.mxu0
    %v5327 = vpop.f32.mrf.mxu0
    %v5328 = vpop.f32.mrf.mxu0
    %5329 = vdwg.mxu0
    %v5330 = vmax.f32 %v5325, 0.0
    %v5331 = vpack.c.bf16 %v2224, %v2224
    %v5332 = vunpack.c.l.bf16 %v2339
    %v5333 = vlaneseq
    %v5334 = vshrl.u32 %v5333, 7
    %v5335 = vsub.s32 3, %v5334
    %v5336 = vrot.slane %v5332, %v5335
    %v5338 = vsel %vm91, %v5331, 0
    %v5341 = vand.u32 %v2338, %v1704
    %5343 = vmatprep.subr.bf16.mxu0 0
    %5344 = vmatpush1.bf16.msra.mxu0 0
    %5345 = vmatprep.subr.bf16.mxu0 0
    %5346 = vmatpush1.bf16.msra.mxu0 0
    %5347 = vmatprep.subr.bf16.mxu0 0
    %5348 = vmatpush1.bf16.msra.mxu0 0
    %5349 = vmatprep.subr.bf16.mxu0 0
    %5350 = vmatpush1.bf16.msra.mxu0 0
    %5351 = vmatprep.subr.bf16.mxu0 0
    %5352 = vmatpush1.bf16.msra.mxu0 0
    %5353 = vmatprep.subr.bf16.mxu0 0
    %5354 = vmatpush1.bf16.msra.mxu0 0
    %5355 = vmatprep.subr.bf16.mxu0 0
    %5356 = vmatpush1.bf16.msra.mxu0 0
    %5357 = vmatprep.subr.bf16.mxu0 0
    %5358 = vmatpush1.bf16.msra.mxu0 %v5341
    %5359 = vmatprep.subr.bf16.mxu0 0
    %5360 = vmatpush2.bf16.msra.mxu0 0
    %5361 = vmatprep.subr.bf16.mxu0 0
    %5362 = vmatpush2.bf16.msra.mxu0 0
    %5363 = vmatprep.subr.bf16.mxu0 0
    %5364 = vmatpush2.bf16.msra.mxu0 0
    %5365 = vmatprep.subr.bf16.mxu0 0
    %5366 = vmatpush2.bf16.msra.mxu0 0
    %5367 = vmatprep.subr.bf16.mxu0 0
    %5368 = vmatpush2.bf16.msra.mxu0 0
    %5369 = vmatprep.subr.bf16.mxu0 0
    %5370 = vmatpush2.bf16.msra.mxu0 0
    %5371 = vmatprep.subr.bf16.mxu0 0
    %5372 = vmatpush2.bf16.msra.mxu0 0
    %5373 = vmatprep.subr.bf16.mxu0 0
    %5374 = vmatpush2.bf16.msra.mxu0 0
    %5375 = vmatprep.mubr.bf16.mxu0 0
    %5376 = vmatmul.mubr.bf16.gmra.mxu0 %v5338
    %v5377 = vpop.f32.mrf.mxu0
    %v5378 = vadd.f32 %v5336, %v5377
    %v5379 = vpop.f32.mrf.mxu0
    %v5380 = vpop.f32.mrf.mxu0
    %v5381 = vpop.f32.mrf.mxu0
    %5382 = vdwg.mxu0
    %v5383 = vmax.f32 %v5378, 0.0
    %v5384 = vpack.c.bf16 %v5134, %v5134
    %v5385 = vpack.c.bf16 %v5155, %v5155
    %v5386 = vpack.c.bf16 %v5176, %v5176
    %v5387 = vpack.c.bf16 %v5197, %v5197
    %v5388 = vpack.c.bf16 %v5218, %v5218
    %v5389 = vpack.c.bf16 %v5239, %v5239
    %v5390 = vpack.c.bf16 %v5260, %v5260
    %v5391 = vpack.c.bf16 %v5281, %v5281
    %v5392 = vpack.c.bf16 %v5330, %v5330
    %v5401 = vunpack.c.l.b16 %v2470
    %v5402 = vunpack.c.h.b16 %v2470
    %v5403 = vunpack.c.l.b16 %v2471
    %v5404 = vunpack.c.h.b16 %v2471
    %v5405 = vunpack.c.l.b16 %v2472
    %v5406 = vunpack.c.h.b16 %v2472
    %v5407 = vunpack.c.l.b16 %v2473
    %v5408 = vunpack.c.h.b16 %v2473
    %v5409 = vunpack.c.l.b16 %v2474
    %v5410 = vunpack.c.h.b16 %v2474
    %v5411 = vunpack.c.l.b16 %v2475
    %v5412 = vunpack.c.h.b16 %v2475
    %v5413 = vunpack.c.l.b16 %v2476
    %v5414 = vunpack.c.h.b16 %v2476
    %v5415 = vunpack.c.l.b16 %v2477
    %v5416 = vunpack.c.h.b16 %v2477
    %v5417 = vpack.c.b16 %v5405, %v5401
    %v5418 = vpack.c.b16 %v5406, %v5402
    %v5419 = vpack.c.b16 %v5407, %v5403
    %v5420 = vpack.c.b16 %v5408, %v5404
    %v5421 = vpack.c.b16 %v5413, %v5409
    %v5422 = vpack.c.b16 %v5414, %v5410
    %v5423 = vpack.c.b16 %v5415, %v5411
    %v5424 = vpack.c.b16 %v5416, %v5412
    %vm5433 = vcmask 261120
    %v5435 = vsel %vm5433, %v5392, 0
    %5437 = vmatprep.subr.bf16.mxu0 0
    %5438 = vmatpush1.bf16.msra.mxu0 0
    %5439 = vmatprep.subr.bf16.mxu0 0
    %5440 = vmatpush1.bf16.msra.mxu0 0
    %5441 = vmatprep.subr.bf16.mxu0 0
    %5442 = vmatpush1.bf16.msra.mxu0 0
    %5443 = vmatprep.subr.bf16.mxu0 0
    %5444 = vmatpush1.bf16.msra.mxu0 0
    %5445 = vmatprep.subr.bf16.mxu0 0
    %5446 = vmatpush1.bf16.msra.mxu0 0
    %5447 = vmatprep.subr.bf16.mxu0 0
    %5448 = vmatpush1.bf16.msra.mxu0 0
    %5449 = vmatprep.subr.bf16.mxu0 %v5422
    %5450 = vmatpush1.bf16.msra.mxu0 %v5421
    %5451 = vmatprep.subr.bf16.mxu0 %v5418
    %5452 = vmatpush1.bf16.msra.mxu0 %v5417
    %5453 = vmatprep.subr.bf16.mxu0 0
    %5454 = vmatpush2.bf16.msra.mxu0 0
    %5455 = vmatprep.subr.bf16.mxu0 0
    %5456 = vmatpush2.bf16.msra.mxu0 0
    %5457 = vmatprep.subr.bf16.mxu0 0
    %5458 = vmatpush2.bf16.msra.mxu0 0
    %5459 = vmatprep.subr.bf16.mxu0 0
    %5460 = vmatpush2.bf16.msra.mxu0 0
    %5461 = vmatprep.subr.bf16.mxu0 0
    %5462 = vmatpush2.bf16.msra.mxu0 0
    %5463 = vmatprep.subr.bf16.mxu0 0
    %5464 = vmatpush2.bf16.msra.mxu0 0
    %5465 = vmatprep.subr.bf16.mxu0 0
    %5466 = vmatpush2.bf16.msra.mxu0 0
    %5467 = vmatprep.subr.bf16.mxu0 0
    %5468 = vmatpush2.bf16.msra.mxu0 0
    %5469 = vmatprep.mubr.bf16.mxu0 0
    %5470 = vmatmul.mubr.bf16.gmra.mxu0 %v5435
    %v5471 = vpop.f32.mrf.mxu0
    %v5472 = vadd.f32 0.0, %v5471
    %v5473 = vpop.f32.mrf.mxu0
    %v5474 = vadd.f32 0.0, %v5473
    %v5475 = vpop.f32.mrf.mxu0
    %v5476 = vpop.f32.mrf.mxu0
    %5477 = vdwg.mxu0
    %5478 = vmatprep.subr.bf16.mxu0 0
    %5479 = vmatpush1.bf16.msra.mxu0 0
    %5480 = vmatprep.subr.bf16.mxu0 0
    %5481 = vmatpush1.bf16.msra.mxu0 0
    %5482 = vmatprep.subr.bf16.mxu0 0
    %5483 = vmatpush1.bf16.msra.mxu0 0
    %5484 = vmatprep.subr.bf16.mxu0 0
    %5485 = vmatpush1.bf16.msra.mxu0 0
    %5486 = vmatprep.subr.bf16.mxu0 0
    %5487 = vmatpush1.bf16.msra.mxu0 0
    %5488 = vmatprep.subr.bf16.mxu0 0
    %5489 = vmatpush1.bf16.msra.mxu0 0
    %5490 = vmatprep.subr.bf16.mxu0 %v5424
    %5491 = vmatpush1.bf16.msra.mxu0 %v5423
    %5492 = vmatprep.subr.bf16.mxu0 %v5420
    %5493 = vmatpush1.bf16.msra.mxu0 %v5419
    %5494 = vmatprep.subr.bf16.mxu0 0
    %5495 = vmatpush2.bf16.msra.mxu0 0
    %5496 = vmatprep.subr.bf16.mxu0 0
    %5497 = vmatpush2.bf16.msra.mxu0 0
    %5498 = vmatprep.subr.bf16.mxu0 0
    %5499 = vmatpush2.bf16.msra.mxu0 0
    %5500 = vmatprep.subr.bf16.mxu0 0
    %5501 = vmatpush2.bf16.msra.mxu0 0
    %5502 = vmatprep.subr.bf16.mxu0 0
    %5503 = vmatpush2.bf16.msra.mxu0 0
    %5504 = vmatprep.subr.bf16.mxu0 0
    %5505 = vmatpush2.bf16.msra.mxu0 0
    %5506 = vmatprep.subr.bf16.mxu0 0
    %5507 = vmatpush2.bf16.msra.mxu0 0
    %5508 = vmatprep.subr.bf16.mxu0 0
    %5509 = vmatpush2.bf16.msra.mxu0 0
    %5510 = vmatprep.mubr.bf16.mxu0 0
    %5511 = vmatmul.mubr.bf16.gmra.mxu0 %v5435
    %v5512 = vpop.f32.mrf.mxu0
    %v5513 = vadd.f32 0.0, %v5512
    %v5514 = vpop.f32.mrf.mxu0
    %v5515 = vadd.f32 0.0, %v5514
    %v5516 = vpop.f32.mrf.mxu0
    %v5517 = vpop.f32.mrf.mxu0
    %5518 = vdwg.mxu0
    %v5527 = vunpack.c.l.b16 %v5384
    %v5528 = vunpack.c.l.b16 %v5385
    %v5529 = vunpack.c.l.b16 %v5386
    %v5530 = vunpack.c.l.b16 %v5387
    %v5531 = vunpack.c.l.b16 %v5388
    %v5532 = vunpack.c.l.b16 %v5389
    %v5533 = vunpack.c.l.b16 %v5390
    %v5534 = vunpack.c.l.b16 %v5391
    %v5535 = vsel %vm1760, %v5531, %v5527
    %v5536 = vsel %vm1760, %v5532, %v5528
    %v5537 = vsel %vm1760, %v5533, %v5529
    %v5538 = vsel %vm1760, %v5534, %v5530
    %v5539 = vpack.c.b16 %v5535, %v5535
    %v5540 = vpack.c.b16 %v5536, %v5536
    %v5541 = vpack.c.b16 %v5537, %v5537
    %v5542 = vpack.c.b16 %v5538, %v5538
    %v5675 = vunpack.c.l.b16 %v2340
    %v5676 = vunpack.c.h.b16 %v2340
    %v5677 = vunpack.c.l.b16 %v2341
    %v5678 = vunpack.c.h.b16 %v2341
    %v5679 = vunpack.c.l.b16 %v2342
    %v5680 = vunpack.c.h.b16 %v2342
    %v5681 = vunpack.c.l.b16 %v2343
    %v5682 = vunpack.c.h.b16 %v2343
    %v5683 = vunpack.c.l.b16 %v2344
    %v5684 = vunpack.c.h.b16 %v2344
    %v5685 = vunpack.c.l.b16 %v2345
    %v5686 = vunpack.c.h.b16 %v2345
    %v5687 = vunpack.c.l.b16 %v2346
    %v5688 = vunpack.c.h.b16 %v2346
    %v5689 = vunpack.c.l.b16 %v2347
    %v5690 = vunpack.c.h.b16 %v2347
    %v5691 = vunpack.c.l.b16 %v2348
    %v5692 = vunpack.c.h.b16 %v2348
    %v5693 = vunpack.c.l.b16 %v2349
    %v5694 = vunpack.c.h.b16 %v2349
    %v5695 = vunpack.c.l.b16 %v2350
    %v5696 = vunpack.c.h.b16 %v2350
    %v5697 = vunpack.c.l.b16 %v2351
    %v5698 = vunpack.c.h.b16 %v2351
    %v5699 = vunpack.c.l.b16 %v2352
    %v5700 = vunpack.c.h.b16 %v2352
    %v5701 = vunpack.c.l.b16 %v2353
    %v5702 = vunpack.c.h.b16 %v2353
    %v5703 = vunpack.c.l.b16 %v2354
    %v5704 = vunpack.c.h.b16 %v2354
    %v5705 = vunpack.c.l.b16 %v2355
    %v5706 = vunpack.c.h.b16 %v2355
    %v5707 = vunpack.c.l.b16 %v2356
    %v5708 = vunpack.c.h.b16 %v2356
    %v5709 = vunpack.c.l.b16 %v2357
    %v5710 = vunpack.c.h.b16 %v2357
    %v5711 = vunpack.c.l.b16 %v2358
    %v5712 = vunpack.c.h.b16 %v2358
    %v5713 = vunpack.c.l.b16 %v2359
    %v5714 = vunpack.c.h.b16 %v2359
    %v5715 = vunpack.c.l.b16 %v2360
    %v5716 = vunpack.c.h.b16 %v2360
    %v5717 = vunpack.c.l.b16 %v2361
    %v5718 = vunpack.c.h.b16 %v2361
    %v5719 = vunpack.c.l.b16 %v2362
    %v5720 = vunpack.c.h.b16 %v2362
    %v5721 = vunpack.c.l.b16 %v2363
    %v5722 = vunpack.c.h.b16 %v2363
    %v5723 = vunpack.c.l.b16 %v2364
    %v5724 = vunpack.c.h.b16 %v2364
    %v5725 = vunpack.c.l.b16 %v2365
    %v5726 = vunpack.c.h.b16 %v2365
    %v5727 = vunpack.c.l.b16 %v2366
    %v5728 = vunpack.c.h.b16 %v2366
    %v5729 = vunpack.c.l.b16 %v2367
    %v5730 = vunpack.c.h.b16 %v2367
    %v5731 = vunpack.c.l.b16 %v2368
    %v5732 = vunpack.c.h.b16 %v2368
    %v5733 = vunpack.c.l.b16 %v2369
    %v5734 = vunpack.c.h.b16 %v2369
    %v5735 = vunpack.c.l.b16 %v2370
    %v5736 = vunpack.c.h.b16 %v2370
    %v5737 = vunpack.c.l.b16 %v2371
    %v5738 = vunpack.c.h.b16 %v2371
    %v5739 = vunpack.c.l.b16 %v2372
    %v5740 = vunpack.c.h.b16 %v2372
    %v5741 = vunpack.c.l.b16 %v2373
    %v5742 = vunpack.c.h.b16 %v2373
    %v5743 = vunpack.c.l.b16 %v2374
    %v5744 = vunpack.c.h.b16 %v2374
    %v5745 = vunpack.c.l.b16 %v2375
    %v5746 = vunpack.c.h.b16 %v2375
    %v5747 = vunpack.c.l.b16 %v2376
    %v5748 = vunpack.c.h.b16 %v2376
    %v5749 = vunpack.c.l.b16 %v2377
    %v5750 = vunpack.c.h.b16 %v2377
    %v5751 = vunpack.c.l.b16 %v2378
    %v5752 = vunpack.c.h.b16 %v2378
    %v5753 = vunpack.c.l.b16 %v2379
    %v5754 = vunpack.c.h.b16 %v2379
    %v5755 = vunpack.c.l.b16 %v2380
    %v5756 = vunpack.c.h.b16 %v2380
    %v5757 = vunpack.c.l.b16 %v2381
    %v5758 = vunpack.c.h.b16 %v2381
    %v5759 = vunpack.c.l.b16 %v2382
    %v5760 = vunpack.c.h.b16 %v2382
    %v5761 = vunpack.c.l.b16 %v2383
    %v5762 = vunpack.c.h.b16 %v2383
    %v5763 = vunpack.c.l.b16 %v2384
    %v5764 = vunpack.c.h.b16 %v2384
    %v5765 = vunpack.c.l.b16 %v2385
    %v5766 = vunpack.c.h.b16 %v2385
    %v5767 = vunpack.c.l.b16 %v2386
    %v5768 = vunpack.c.h.b16 %v2386
    %v5769 = vunpack.c.l.b16 %v2387
    %v5770 = vunpack.c.h.b16 %v2387
    %v5771 = vunpack.c.l.b16 %v2388
    %v5772 = vunpack.c.h.b16 %v2388
    %v5773 = vunpack.c.l.b16 %v2389
    %v5774 = vunpack.c.h.b16 %v2389
    %v5775 = vunpack.c.l.b16 %v2390
    %v5776 = vunpack.c.h.b16 %v2390
    %v5777 = vunpack.c.l.b16 %v2391
    %v5778 = vunpack.c.h.b16 %v2391
    %v5779 = vunpack.c.l.b16 %v2392
    %v5780 = vunpack.c.h.b16 %v2392
    %v5781 = vunpack.c.l.b16 %v2393
    %v5782 = vunpack.c.h.b16 %v2393
    %v5783 = vunpack.c.l.b16 %v2394
    %v5784 = vunpack.c.h.b16 %v2394
    %v5785 = vunpack.c.l.b16 %v2395
    %v5786 = vunpack.c.h.b16 %v2395
    %v5787 = vunpack.c.l.b16 %v2396
    %v5788 = vunpack.c.h.b16 %v2396
    %v5789 = vunpack.c.l.b16 %v2397
    %v5790 = vunpack.c.h.b16 %v2397
    %v5791 = vunpack.c.l.b16 %v2398
    %v5792 = vunpack.c.h.b16 %v2398
    %v5793 = vunpack.c.l.b16 %v2399
    %v5794 = vunpack.c.h.b16 %v2399
    %v5795 = vunpack.c.l.b16 %v2400
    %v5796 = vunpack.c.h.b16 %v2400
    %v5797 = vunpack.c.l.b16 %v2401
    %v5798 = vunpack.c.h.b16 %v2401
    %v5799 = vunpack.c.l.b16 %v2402
    %v5800 = vunpack.c.h.b16 %v2402
    %v5801 = vunpack.c.l.b16 %v2403
    %v5802 = vunpack.c.h.b16 %v2403
    %v5803 = vunpack.c.l.b16 %v2404
    %v5804 = vunpack.c.h.b16 %v2404
    %v5805 = vunpack.c.l.b16 %v2405
    %v5806 = vunpack.c.h.b16 %v2405
    %v5807 = vunpack.c.l.b16 %v2406
    %v5808 = vunpack.c.h.b16 %v2406
    %v5809 = vunpack.c.l.b16 %v2407
    %v5810 = vunpack.c.h.b16 %v2407
    %v5811 = vunpack.c.l.b16 %v2408
    %v5812 = vunpack.c.h.b16 %v2408
    %v5813 = vunpack.c.l.b16 %v2409
    %v5814 = vunpack.c.h.b16 %v2409
    %v5815 = vunpack.c.l.b16 %v2410
    %v5816 = vunpack.c.h.b16 %v2410
    %v5817 = vunpack.c.l.b16 %v2411
    %v5818 = vunpack.c.h.b16 %v2411
    %v5819 = vunpack.c.l.b16 %v2412
    %v5820 = vunpack.c.h.b16 %v2412
    %v5821 = vunpack.c.l.b16 %v2413
    %v5822 = vunpack.c.h.b16 %v2413
    %v5823 = vunpack.c.l.b16 %v2414
    %v5824 = vunpack.c.h.b16 %v2414
    %v5825 = vunpack.c.l.b16 %v2415
    %v5826 = vunpack.c.h.b16 %v2415
    %v5827 = vunpack.c.l.b16 %v2416
    %v5828 = vunpack.c.h.b16 %v2416
    %v5829 = vunpack.c.l.b16 %v2417
    %v5830 = vunpack.c.h.b16 %v2417
    %v5831 = vunpack.c.l.b16 %v2418
    %v5832 = vunpack.c.h.b16 %v2418
    %v5833 = vunpack.c.l.b16 %v2419
    %v5834 = vunpack.c.h.b16 %v2419
    %v5835 = vunpack.c.l.b16 %v2420
    %v5836 = vunpack.c.h.b16 %v2420
    %v5837 = vunpack.c.l.b16 %v2421
    %v5838 = vunpack.c.h.b16 %v2421
    %v5839 = vunpack.c.l.b16 %v2422
    %v5840 = vunpack.c.h.b16 %v2422
    %v5841 = vunpack.c.l.b16 %v2423
    %v5842 = vunpack.c.h.b16 %v2423
    %v5843 = vunpack.c.l.b16 %v2424
    %v5844 = vunpack.c.h.b16 %v2424
    %v5845 = vunpack.c.l.b16 %v2425
    %v5846 = vunpack.c.h.b16 %v2425
    %v5847 = vunpack.c.l.b16 %v2426
    %v5848 = vunpack.c.h.b16 %v2426
    %v5849 = vunpack.c.l.b16 %v2427
    %v5850 = vunpack.c.h.b16 %v2427
    %v5851 = vunpack.c.l.b16 %v2428
    %v5852 = vunpack.c.h.b16 %v2428
    %v5853 = vunpack.c.l.b16 %v2429
    %v5854 = vunpack.c.h.b16 %v2429
    %v5855 = vunpack.c.l.b16 %v2430
    %v5856 = vunpack.c.h.b16 %v2430
    %v5857 = vunpack.c.l.b16 %v2431
    %v5858 = vunpack.c.h.b16 %v2431
    %v5859 = vunpack.c.l.b16 %v2432
    %v5860 = vunpack.c.h.b16 %v2432
    %v5861 = vunpack.c.l.b16 %v2433
    %v5862 = vunpack.c.h.b16 %v2433
    %v5863 = vunpack.c.l.b16 %v2434
    %v5864 = vunpack.c.h.b16 %v2434
    %v5865 = vunpack.c.l.b16 %v2435
    %v5866 = vunpack.c.h.b16 %v2435
    %v5867 = vunpack.c.l.b16 %v2436
    %v5868 = vunpack.c.h.b16 %v2436
    %v5869 = vunpack.c.l.b16 %v2437
    %v5870 = vunpack.c.h.b16 %v2437
    %v5871 = vunpack.c.l.b16 %v2438
    %v5872 = vunpack.c.h.b16 %v2438
    %v5873 = vunpack.c.l.b16 %v2439
    %v5874 = vunpack.c.h.b16 %v2439
    %v5875 = vunpack.c.l.b16 %v2440
    %v5876 = vunpack.c.h.b16 %v2440
    %v5877 = vunpack.c.l.b16 %v2441
    %v5878 = vunpack.c.h.b16 %v2441
    %v5879 = vunpack.c.l.b16 %v2442
    %v5880 = vunpack.c.h.b16 %v2442
    %v5881 = vunpack.c.l.b16 %v2443
    %v5882 = vunpack.c.h.b16 %v2443
    %v5883 = vunpack.c.l.b16 %v2444
    %v5884 = vunpack.c.h.b16 %v2444
    %v5885 = vunpack.c.l.b16 %v2445
    %v5886 = vunpack.c.h.b16 %v2445
    %v5887 = vunpack.c.l.b16 %v2446
    %v5888 = vunpack.c.h.b16 %v2446
    %v5889 = vunpack.c.l.b16 %v2447
    %v5890 = vunpack.c.h.b16 %v2447
    %v5891 = vunpack.c.l.b16 %v2448
    %v5892 = vunpack.c.h.b16 %v2448
    %v5893 = vunpack.c.l.b16 %v2449
    %v5894 = vunpack.c.h.b16 %v2449
    %v5895 = vunpack.c.l.b16 %v2450
    %v5896 = vunpack.c.h.b16 %v2450
    %v5897 = vunpack.c.l.b16 %v2451
    %v5898 = vunpack.c.h.b16 %v2451
    %v5899 = vunpack.c.l.b16 %v2452
    %v5900 = vunpack.c.h.b16 %v2452
    %v5901 = vunpack.c.l.b16 %v2453
    %v5902 = vunpack.c.h.b16 %v2453
    %v5903 = vunpack.c.l.b16 %v2454
    %v5904 = vunpack.c.h.b16 %v2454
    %v5905 = vunpack.c.l.b16 %v2455
    %v5906 = vunpack.c.h.b16 %v2455
    %v5907 = vunpack.c.l.b16 %v2456
    %v5908 = vunpack.c.h.b16 %v2456
    %v5909 = vunpack.c.l.b16 %v2457
    %v5910 = vunpack.c.h.b16 %v2457
    %v5911 = vunpack.c.l.b16 %v2458
    %v5912 = vunpack.c.h.b16 %v2458
    %v5913 = vunpack.c.l.b16 %v2459
    %v5914 = vunpack.c.h.b16 %v2459
    %v5915 = vunpack.c.l.b16 %v2460
    %v5916 = vunpack.c.h.b16 %v2460
    %v5917 = vunpack.c.l.b16 %v2461
    %v5918 = vunpack.c.h.b16 %v2461
    %v5919 = vunpack.c.l.b16 %v2462
    %v5920 = vunpack.c.h.b16 %v2462
    %v5921 = vunpack.c.l.b16 %v2463
    %v5922 = vunpack.c.h.b16 %v2463
    %v5923 = vunpack.c.l.b16 %v2464
    %v5924 = vunpack.c.h.b16 %v2464
    %v5925 = vunpack.c.l.b16 %v2465
    %v5926 = vunpack.c.h.b16 %v2465
    %v5927 = vunpack.c.l.b16 %v2466
    %v5928 = vunpack.c.h.b16 %v2466
    %v5929 = vunpack.c.l.b16 %v2467
    %v5930 = vunpack.c.h.b16 %v2467
    %v5931 = vpack.c.b16 %v5679, %v5675
    %v5932 = vpack.c.b16 %v5680, %v5676
    %v5933 = vpack.c.b16 %v5681, %v5677
    %v5934 = vpack.c.b16 %v5682, %v5678
    %v5935 = vpack.c.b16 %v5687, %v5683
    %v5936 = vpack.c.b16 %v5688, %v5684
    %v5937 = vpack.c.b16 %v5689, %v5685
    %v5938 = vpack.c.b16 %v5690, %v5686
    %v5939 = vpack.c.b16 %v5695, %v5691
    %v5940 = vpack.c.b16 %v5696, %v5692
    %v5941 = vpack.c.b16 %v5697, %v5693
    %v5942 = vpack.c.b16 %v5698, %v5694
    %v5943 = vpack.c.b16 %v5703, %v5699
    %v5944 = vpack.c.b16 %v5704, %v5700
    %v5945 = vpack.c.b16 %v5705, %v5701
    %v5946 = vpack.c.b16 %v5706, %v5702
    %v5947 = vpack.c.b16 %v5711, %v5707
    %v5948 = vpack.c.b16 %v5712, %v5708
    %v5949 = vpack.c.b16 %v5713, %v5709
    %v5950 = vpack.c.b16 %v5714, %v5710
    %v5951 = vpack.c.b16 %v5719, %v5715
    %v5952 = vpack.c.b16 %v5720, %v5716
    %v5953 = vpack.c.b16 %v5721, %v5717
    %v5954 = vpack.c.b16 %v5722, %v5718
    %v5955 = vpack.c.b16 %v5727, %v5723
    %v5956 = vpack.c.b16 %v5728, %v5724
    %v5957 = vpack.c.b16 %v5729, %v5725
    %v5958 = vpack.c.b16 %v5730, %v5726
    %v5959 = vpack.c.b16 %v5735, %v5731
    %v5960 = vpack.c.b16 %v5736, %v5732
    %v5961 = vpack.c.b16 %v5737, %v5733
    %v5962 = vpack.c.b16 %v5738, %v5734
    %v5963 = vpack.c.b16 %v5743, %v5739
    %v5964 = vpack.c.b16 %v5744, %v5740
    %v5965 = vpack.c.b16 %v5745, %v5741
    %v5966 = vpack.c.b16 %v5746, %v5742
    %v5967 = vpack.c.b16 %v5751, %v5747
    %v5968 = vpack.c.b16 %v5752, %v5748
    %v5969 = vpack.c.b16 %v5753, %v5749
    %v5970 = vpack.c.b16 %v5754, %v5750
    %v5971 = vpack.c.b16 %v5759, %v5755
    %v5972 = vpack.c.b16 %v5760, %v5756
    %v5973 = vpack.c.b16 %v5761, %v5757
    %v5974 = vpack.c.b16 %v5762, %v5758
    %v5975 = vpack.c.b16 %v5767, %v5763
    %v5976 = vpack.c.b16 %v5768, %v5764
    %v5977 = vpack.c.b16 %v5769, %v5765
    %v5978 = vpack.c.b16 %v5770, %v5766
    %v5979 = vpack.c.b16 %v5775, %v5771
    %v5980 = vpack.c.b16 %v5776, %v5772
    %v5981 = vpack.c.b16 %v5777, %v5773
    %v5982 = vpack.c.b16 %v5778, %v5774
    %v5983 = vpack.c.b16 %v5783, %v5779
    %v5984 = vpack.c.b16 %v5784, %v5780
    %v5985 = vpack.c.b16 %v5785, %v5781
    %v5986 = vpack.c.b16 %v5786, %v5782
    %v5987 = vpack.c.b16 %v5791, %v5787
    %v5988 = vpack.c.b16 %v5792, %v5788
    %v5989 = vpack.c.b16 %v5793, %v5789
    %v5990 = vpack.c.b16 %v5794, %v5790
    %v5991 = vpack.c.b16 %v5799, %v5795
    %v5992 = vpack.c.b16 %v5800, %v5796
    %v5993 = vpack.c.b16 %v5801, %v5797
    %v5994 = vpack.c.b16 %v5802, %v5798
    %v5995 = vpack.c.b16 %v5807, %v5803
    %v5996 = vpack.c.b16 %v5808, %v5804
    %v5997 = vpack.c.b16 %v5809, %v5805
    %v5998 = vpack.c.b16 %v5810, %v5806
    %v5999 = vpack.c.b16 %v5815, %v5811
    %v6000 = vpack.c.b16 %v5816, %v5812
    %v6001 = vpack.c.b16 %v5817, %v5813
    %v6002 = vpack.c.b16 %v5818, %v5814
    %v6003 = vpack.c.b16 %v5823, %v5819
    %v6004 = vpack.c.b16 %v5824, %v5820
    %v6005 = vpack.c.b16 %v5825, %v5821
    %v6006 = vpack.c.b16 %v5826, %v5822
    %v6007 = vpack.c.b16 %v5831, %v5827
    %v6008 = vpack.c.b16 %v5832, %v5828
    %v6009 = vpack.c.b16 %v5833, %v5829
    %v6010 = vpack.c.b16 %v5834, %v5830
    %v6011 = vpack.c.b16 %v5839, %v5835
    %v6012 = vpack.c.b16 %v5840, %v5836
    %v6013 = vpack.c.b16 %v5841, %v5837
    %v6014 = vpack.c.b16 %v5842, %v5838
    %v6015 = vpack.c.b16 %v5847, %v5843
    %v6016 = vpack.c.b16 %v5848, %v5844
    %v6017 = vpack.c.b16 %v5849, %v5845
    %v6018 = vpack.c.b16 %v5850, %v5846
    %v6019 = vpack.c.b16 %v5855, %v5851
    %v6020 = vpack.c.b16 %v5856, %v5852
    %v6021 = vpack.c.b16 %v5857, %v5853
    %v6022 = vpack.c.b16 %v5858, %v5854
    %v6023 = vpack.c.b16 %v5863, %v5859
    %v6024 = vpack.c.b16 %v5864, %v5860
    %v6025 = vpack.c.b16 %v5865, %v5861
    %v6026 = vpack.c.b16 %v5866, %v5862
    %v6027 = vpack.c.b16 %v5871, %v5867
    %v6028 = vpack.c.b16 %v5872, %v5868
    %v6029 = vpack.c.b16 %v5873, %v5869
    %v6030 = vpack.c.b16 %v5874, %v5870
    %v6031 = vpack.c.b16 %v5879, %v5875
    %v6032 = vpack.c.b16 %v5880, %v5876
    %v6033 = vpack.c.b16 %v5881, %v5877
    %v6034 = vpack.c.b16 %v5882, %v5878
    %v6035 = vpack.c.b16 %v5887, %v5883
    %v6036 = vpack.c.b16 %v5888, %v5884
    %v6037 = vpack.c.b16 %v5889, %v5885
    %v6038 = vpack.c.b16 %v5890, %v5886
    %v6039 = vpack.c.b16 %v5895, %v5891
    %v6040 = vpack.c.b16 %v5896, %v5892
    %v6041 = vpack.c.b16 %v5897, %v5893
    %v6042 = vpack.c.b16 %v5898, %v5894
    %v6043 = vpack.c.b16 %v5903, %v5899
    %v6044 = vpack.c.b16 %v5904, %v5900
    %v6045 = vpack.c.b16 %v5905, %v5901
    %v6046 = vpack.c.b16 %v5906, %v5902
    %v6047 = vpack.c.b16 %v5911, %v5907
    %v6048 = vpack.c.b16 %v5912, %v5908
    %v6049 = vpack.c.b16 %v5913, %v5909
    %v6050 = vpack.c.b16 %v5914, %v5910
    %v6051 = vpack.c.b16 %v5919, %v5915
    %v6052 = vpack.c.b16 %v5920, %v5916
    %v6053 = vpack.c.b16 %v5921, %v5917
    %v6054 = vpack.c.b16 %v5922, %v5918
    %v6055 = vpack.c.b16 %v5927, %v5923
    %v6056 = vpack.c.b16 %v5928, %v5924
    %v6057 = vpack.c.b16 %v5929, %v5925
    %v6058 = vpack.c.b16 %v5930, %v5926
    %6187 = vmatprep.subr.bf16.mxu0 %v5960
    %6188 = vmatpush1.bf16.msra.mxu0 %v5959
    %6189 = vmatprep.subr.bf16.mxu0 %v5956
    %6190 = vmatpush1.bf16.msra.mxu0 %v5955
    %6191 = vmatprep.subr.bf16.mxu0 %v5952
    %6192 = vmatpush1.bf16.msra.mxu0 %v5951
    %6193 = vmatprep.subr.bf16.mxu0 %v5948
    %6194 = vmatpush1.bf16.msra.mxu0 %v5947
    %6195 = vmatprep.subr.bf16.mxu0 %v5944
    %6196 = vmatpush1.bf16.msra.mxu0 %v5943
    %6197 = vmatprep.subr.bf16.mxu0 %v5940
    %6198 = vmatpush1.bf16.msra.mxu0 %v5939
    %6199 = vmatprep.subr.bf16.mxu0 %v5936
    %6200 = vmatpush1.bf16.msra.mxu0 %v5935
    %6201 = vmatprep.subr.bf16.mxu0 %v5932
    %6202 = vmatpush1.bf16.msra.mxu0 %v5931
    %6203 = vmatprep.subr.bf16.mxu0 %v5992
    %6204 = vmatpush2.bf16.msra.mxu0 %v5991
    %6205 = vmatprep.subr.bf16.mxu0 %v5988
    %6206 = vmatpush2.bf16.msra.mxu0 %v5987
    %6207 = vmatprep.subr.bf16.mxu0 %v5984
    %6208 = vmatpush2.bf16.msra.mxu0 %v5983
    %6209 = vmatprep.subr.bf16.mxu0 %v5980
    %6210 = vmatpush2.bf16.msra.mxu0 %v5979
    %6211 = vmatprep.subr.bf16.mxu0 %v5976
    %6212 = vmatpush2.bf16.msra.mxu0 %v5975
    %6213 = vmatprep.subr.bf16.mxu0 %v5972
    %6214 = vmatpush2.bf16.msra.mxu0 %v5971
    %6215 = vmatprep.subr.bf16.mxu0 %v5968
    %6216 = vmatpush2.bf16.msra.mxu0 %v5967
    %6217 = vmatprep.subr.bf16.mxu0 %v5964
    %6218 = vmatpush2.bf16.msra.mxu0 %v5963
    %6219 = vmatprep.mubr.bf16.mxu0 %v5540
    %6220 = vmatmul.mubr.bf16.gmra.mxu0 %v5539
    %v6221 = vpop.f32.mrf.mxu0
    %v6222 = vadd.f32 %v5472, %v6221
    %v6223 = vpop.f32.mrf.mxu0
    %v6224 = vadd.f32 %v5474, %v6223
    %v6225 = vpop.f32.mrf.mxu0
    %v6226 = vpop.f32.mrf.mxu0
    %6227 = vdwg.mxu0
    %6228 = vmatprep.subr.bf16.mxu0 %v6024
    %6229 = vmatpush1.bf16.msra.mxu0 %v6023
    %6230 = vmatprep.subr.bf16.mxu0 %v6020
    %6231 = vmatpush1.bf16.msra.mxu0 %v6019
    %6232 = vmatprep.subr.bf16.mxu0 %v6016
    %6233 = vmatpush1.bf16.msra.mxu0 %v6015
    %6234 = vmatprep.subr.bf16.mxu0 %v6012
    %6235 = vmatpush1.bf16.msra.mxu0 %v6011
    %6236 = vmatprep.subr.bf16.mxu0 %v6008
    %6237 = vmatpush1.bf16.msra.mxu0 %v6007
    %6238 = vmatprep.subr.bf16.mxu0 %v6004
    %6239 = vmatpush1.bf16.msra.mxu0 %v6003
    %6240 = vmatprep.subr.bf16.mxu0 %v6000
    %6241 = vmatpush1.bf16.msra.mxu0 %v5999
    %6242 = vmatprep.subr.bf16.mxu0 %v5996
    %6243 = vmatpush1.bf16.msra.mxu0 %v5995
    %6244 = vmatprep.subr.bf16.mxu0 %v6056
    %6245 = vmatpush2.bf16.msra.mxu0 %v6055
    %6246 = vmatprep.subr.bf16.mxu0 %v6052
    %6247 = vmatpush2.bf16.msra.mxu0 %v6051
    %6248 = vmatprep.subr.bf16.mxu0 %v6048
    %6249 = vmatpush2.bf16.msra.mxu0 %v6047
    %6250 = vmatprep.subr.bf16.mxu0 %v6044
    %6251 = vmatpush2.bf16.msra.mxu0 %v6043
    %6252 = vmatprep.subr.bf16.mxu0 %v6040
    %6253 = vmatpush2.bf16.msra.mxu0 %v6039
    %6254 = vmatprep.subr.bf16.mxu0 %v6036
    %6255 = vmatpush2.bf16.msra.mxu0 %v6035
    %6256 = vmatprep.subr.bf16.mxu0 %v6032
    %6257 = vmatpush2.bf16.msra.mxu0 %v6031
    %6258 = vmatprep.subr.bf16.mxu0 %v6028
    %6259 = vmatpush2.bf16.msra.mxu0 %v6027
    %6260 = vmatprep.mubr.bf16.mxu0 %v5542
    %6261 = vmatmul.mubr.bf16.gmra.mxu0 %v5541
    %v6262 = vpop.f32.mrf.mxu0
    %v6263 = vadd.f32 %v6222, %v6262
    %v6264 = vpop.f32.mrf.mxu0
    %v6265 = vadd.f32 %v6224, %v6264
    %v6266 = vpop.f32.mrf.mxu0
    %v6267 = vpop.f32.mrf.mxu0
    %6268 = vdwg.mxu0
    %6269 = vmatprep.subr.bf16.mxu0 %v5962
    %6270 = vmatpush1.bf16.msra.mxu0 %v5961
    %6271 = vmatprep.subr.bf16.mxu0 %v5958
    %6272 = vmatpush1.bf16.msra.mxu0 %v5957
    %6273 = vmatprep.subr.bf16.mxu0 %v5954
    %6274 = vmatpush1.bf16.msra.mxu0 %v5953
    %6275 = vmatprep.subr.bf16.mxu0 %v5950
    %6276 = vmatpush1.bf16.msra.mxu0 %v5949
    %6277 = vmatprep.subr.bf16.mxu0 %v5946
    %6278 = vmatpush1.bf16.msra.mxu0 %v5945
    %6279 = vmatprep.subr.bf16.mxu0 %v5942
    %6280 = vmatpush1.bf16.msra.mxu0 %v5941
    %6281 = vmatprep.subr.bf16.mxu0 %v5938
    %6282 = vmatpush1.bf16.msra.mxu0 %v5937
    %6283 = vmatprep.subr.bf16.mxu0 %v5934
    %6284 = vmatpush1.bf16.msra.mxu0 %v5933
    %6285 = vmatprep.subr.bf16.mxu0 %v5994
    %6286 = vmatpush2.bf16.msra.mxu0 %v5993
    %6287 = vmatprep.subr.bf16.mxu0 %v5990
    %6288 = vmatpush2.bf16.msra.mxu0 %v5989
    %6289 = vmatprep.subr.bf16.mxu0 %v5986
    %6290 = vmatpush2.bf16.msra.mxu0 %v5985
    %6291 = vmatprep.subr.bf16.mxu0 %v5982
    %6292 = vmatpush2.bf16.msra.mxu0 %v5981
    %6293 = vmatprep.subr.bf16.mxu0 %v5978
    %6294 = vmatpush2.bf16.msra.mxu0 %v5977
    %6295 = vmatprep.subr.bf16.mxu0 %v5974
    %6296 = vmatpush2.bf16.msra.mxu0 %v5973
    %6297 = vmatprep.subr.bf16.mxu0 %v5970
    %6298 = vmatpush2.bf16.msra.mxu0 %v5969
    %6299 = vmatprep.subr.bf16.mxu0 %v5966
    %6300 = vmatpush2.bf16.msra.mxu0 %v5965
    %6301 = vmatprep.mubr.bf16.mxu0 %v5540
    %6302 = vmatmul.mubr.bf16.gmra.mxu0 %v5539
    %v6303 = vpop.f32.mrf.mxu0
    %v6304 = vadd.f32 %v5513, %v6303
    %v6305 = vpop.f32.mrf.mxu0
    %v6306 = vadd.f32 %v5515, %v6305
    %v6307 = vpop.f32.mrf.mxu0
    %v6308 = vpop.f32.mrf.mxu0
    %6309 = vdwg.mxu0
    %6310 = vmatprep.subr.bf16.mxu0 %v6026
    %6311 = vmatpush1.bf16.msra.mxu0 %v6025
    %6312 = vmatprep.subr.bf16.mxu0 %v6022
    %6313 = vmatpush1.bf16.msra.mxu0 %v6021
    %6314 = vmatprep.subr.bf16.mxu0 %v6018
    %6315 = vmatpush1.bf16.msra.mxu0 %v6017
    %6316 = vmatprep.subr.bf16.mxu0 %v6014
    %6317 = vmatpush1.bf16.msra.mxu0 %v6013
    %6318 = vmatprep.subr.bf16.mxu0 %v6010
    %6319 = vmatpush1.bf16.msra.mxu0 %v6009
    %6320 = vmatprep.subr.bf16.mxu0 %v6006
    %6321 = vmatpush1.bf16.msra.mxu0 %v6005
    %6322 = vmatprep.subr.bf16.mxu0 %v6002
    %6323 = vmatpush1.bf16.msra.mxu0 %v6001
    %6324 = vmatprep.subr.bf16.mxu0 %v5998
    %6325 = vmatpush1.bf16.msra.mxu0 %v5997
    %6326 = vmatprep.subr.bf16.mxu0 %v6058
    %6327 = vmatpush2.bf16.msra.mxu0 %v6057
    %6328 = vmatprep.subr.bf16.mxu0 %v6054
    %6329 = vmatpush2.bf16.msra.mxu0 %v6053
    %6330 = vmatprep.subr.bf16.mxu0 %v6050
    %6331 = vmatpush2.bf16.msra.mxu0 %v6049
    %6332 = vmatprep.subr.bf16.mxu0 %v6046
    %6333 = vmatpush2.bf16.msra.mxu0 %v6045
    %6334 = vmatprep.subr.bf16.mxu0 %v6042
    %6335 = vmatpush2.bf16.msra.mxu0 %v6041
    %6336 = vmatprep.subr.bf16.mxu0 %v6038
    %6337 = vmatpush2.bf16.msra.mxu0 %v6037
    %6338 = vmatprep.subr.bf16.mxu0 %v6034
    %6339 = vmatpush2.bf16.msra.mxu0 %v6033
    %6340 = vmatprep.subr.bf16.mxu0 %v6030
    %6341 = vmatpush2.bf16.msra.mxu0 %v6029
    %6342 = vmatprep.mubr.bf16.mxu0 %v5542
    %6343 = vmatmul.mubr.bf16.gmra.mxu0 %v5541
    %v6344 = vpop.f32.mrf.mxu0
    %v6345 = vadd.f32 %v6304, %v6344
    %v6346 = vpop.f32.mrf.mxu0
    %v6347 = vadd.f32 %v6306, %v6346
    %v6348 = vpop.f32.mrf.mxu0
    %v6349 = vpop.f32.mrf.mxu0
    %6350 = vdwg.mxu0
    %v6351 = vpack.c.bf16 %v5383, %v5383
    %v6360 = vunpack.c.l.b16 %v2478
    %v6361 = vunpack.c.h.b16 %v2478
    %v6362 = vunpack.c.l.b16 %v2479
    %v6363 = vunpack.c.h.b16 %v2479
    %v6364 = vunpack.c.l.b16 %v2480
    %v6365 = vunpack.c.h.b16 %v2480
    %v6366 = vunpack.c.l.b16 %v2481
    %v6367 = vunpack.c.h.b16 %v2481
    %v6368 = vunpack.c.l.b16 %v2482
    %v6369 = vunpack.c.h.b16 %v2482
    %v6370 = vunpack.c.l.b16 %v2483
    %v6371 = vunpack.c.h.b16 %v2483
    %v6372 = vunpack.c.l.b16 %v2484
    %v6373 = vunpack.c.h.b16 %v2484
    %v6374 = vunpack.c.l.b16 %v2485
    %v6375 = vunpack.c.h.b16 %v2485
    %v6376 = vpack.c.b16 %v6364, %v6360
    %v6377 = vpack.c.b16 %v6365, %v6361
    %v6378 = vpack.c.b16 %v6366, %v6362
    %v6379 = vpack.c.b16 %v6367, %v6363
    %v6380 = vpack.c.b16 %v6372, %v6368
    %v6381 = vpack.c.b16 %v6373, %v6369
    %v6382 = vpack.c.b16 %v6374, %v6370
    %v6383 = vpack.c.b16 %v6375, %v6371
    %v6393 = vsel %vm5433, %v6351, 0
    %6395 = vmatprep.subr.bf16.mxu0 0
    %6396 = vmatpush1.bf16.msra.mxu0 0
    %6397 = vmatprep.subr.bf16.mxu0 0
    %6398 = vmatpush1.bf16.msra.mxu0 0
    %6399 = vmatprep.subr.bf16.mxu0 0
    %6400 = vmatpush1.bf16.msra.mxu0 0
    %6401 = vmatprep.subr.bf16.mxu0 0
    %6402 = vmatpush1.bf16.msra.mxu0 0
    %6403 = vmatprep.subr.bf16.mxu0 0
    %6404 = vmatpush1.bf16.msra.mxu0 0
    %6405 = vmatprep.subr.bf16.mxu0 0
    %6406 = vmatpush1.bf16.msra.mxu0 0
    %6407 = vmatprep.subr.bf16.mxu0 %v6381
    %6408 = vmatpush1.bf16.msra.mxu0 %v6380
    %6409 = vmatprep.subr.bf16.mxu0 %v6377
    %6410 = vmatpush1.bf16.msra.mxu0 %v6376
    %6411 = vmatprep.subr.bf16.mxu0 0
    %6412 = vmatpush2.bf16.msra.mxu0 0
    %6413 = vmatprep.subr.bf16.mxu0 0
    %6414 = vmatpush2.bf16.msra.mxu0 0
    %6415 = vmatprep.subr.bf16.mxu0 0
    %6416 = vmatpush2.bf16.msra.mxu0 0
    %6417 = vmatprep.subr.bf16.mxu0 0
    %6418 = vmatpush2.bf16.msra.mxu0 0
    %6419 = vmatprep.subr.bf16.mxu0 0
    %6420 = vmatpush2.bf16.msra.mxu0 0
    %6421 = vmatprep.subr.bf16.mxu0 0
    %6422 = vmatpush2.bf16.msra.mxu0 0
    %6423 = vmatprep.subr.bf16.mxu0 0
    %6424 = vmatpush2.bf16.msra.mxu0 0
    %6425 = vmatprep.subr.bf16.mxu0 0
    %6426 = vmatpush2.bf16.msra.mxu0 0
    %6427 = vmatprep.mubr.bf16.mxu0 0
    %6428 = vmatmul.mubr.bf16.gmra.mxu0 %v6393
    %v6429 = vpop.f32.mrf.mxu0
    %v6430 = vadd.f32 0.0, %v6429
    %v6431 = vpop.f32.mrf.mxu0
    %v6432 = vadd.f32 0.0, %v6431
    %v6433 = vpop.f32.mrf.mxu0
    %v6434 = vpop.f32.mrf.mxu0
    %6435 = vdwg.mxu0
    %6436 = vmatprep.subr.bf16.mxu0 0
    %6437 = vmatpush1.bf16.msra.mxu0 0
    %6438 = vmatprep.subr.bf16.mxu0 0
    %6439 = vmatpush1.bf16.msra.mxu0 0
    %6440 = vmatprep.subr.bf16.mxu0 0
    %6441 = vmatpush1.bf16.msra.mxu0 0
    %6442 = vmatprep.subr.bf16.mxu0 0
    %6443 = vmatpush1.bf16.msra.mxu0 0
    %6444 = vmatprep.subr.bf16.mxu0 0
    %6445 = vmatpush1.bf16.msra.mxu0 0
    %6446 = vmatprep.subr.bf16.mxu0 0
    %6447 = vmatpush1.bf16.msra.mxu0 0
    %6448 = vmatprep.subr.bf16.mxu0 %v6383
    %6449 = vmatpush1.bf16.msra.mxu0 %v6382
    %6450 = vmatprep.subr.bf16.mxu0 %v6379
    %6451 = vmatpush1.bf16.msra.mxu0 %v6378
    %6452 = vmatprep.subr.bf16.mxu0 0
    %6453 = vmatpush2.bf16.msra.mxu0 0
    %6454 = vmatprep.subr.bf16.mxu0 0
    %6455 = vmatpush2.bf16.msra.mxu0 0
    %6456 = vmatprep.subr.bf16.mxu0 0
    %6457 = vmatpush2.bf16.msra.mxu0 0
    %6458 = vmatprep.subr.bf16.mxu0 0
    %6459 = vmatpush2.bf16.msra.mxu0 0
    %6460 = vmatprep.subr.bf16.mxu0 0
    %6461 = vmatpush2.bf16.msra.mxu0 0
    %6462 = vmatprep.subr.bf16.mxu0 0
    %6463 = vmatpush2.bf16.msra.mxu0 0
    %6464 = vmatprep.subr.bf16.mxu0 0
    %6465 = vmatpush2.bf16.msra.mxu0 0
    %6466 = vmatprep.subr.bf16.mxu0 0
    %6467 = vmatpush2.bf16.msra.mxu0 0
    %6468 = vmatprep.mubr.bf16.mxu0 0
    %6469 = vmatmul.mubr.bf16.gmra.mxu0 %v6393
    %v6470 = vpop.f32.mrf.mxu0
    %v6471 = vadd.f32 0.0, %v6470
    %v6472 = vpop.f32.mrf.mxu0
    %v6473 = vadd.f32 0.0, %v6472
    %v6474 = vpop.f32.mrf.mxu0
    %v6475 = vpop.f32.mrf.mxu0
    %6476 = vdwg.mxu0
    %v6477 = vadd.f32 %v6263, %v6430
    %v6478 = vadd.f32 %v6265, %v6432
    %v6479 = vadd.f32 %v6345, %v6471
    %v6480 = vadd.f32 %v6347, %v6473
    %v6481 = vunpack.c.l.bf16 %v2468
    %v6482 = vunpack.c.h.bf16 %v2468
    %v6483 = vunpack.c.l.bf16 %v2469
    %v6484 = vunpack.c.h.bf16 %v2469
    %v6485 = vlaneseq
    %v6486 = vshrl.u32 %v6485, 7
    %v6487 = vsub.s32 0, %v6486
    %v6488 = vrot.slane %v6481, %v6487
    %v6489 = vlaneseq
    %v6490 = vshrl.u32 %v6489, 7
    %v6491 = vsub.s32 0, %v6490
    %v6492 = vrot.slane %v6482, %v6491
    %v6493 = vlaneseq
    %v6494 = vshrl.u32 %v6493, 7
    %v6495 = vsub.s32 0, %v6494
    %v6496 = vrot.slane %v6483, %v6495
    %v6497 = vlaneseq
    %v6498 = vshrl.u32 %v6497, 7
    %v6499 = vsub.s32 0, %v6498
    %v6500 = vrot.slane %v6484, %v6499
    %v6501 = vadd.f32 %v6477, %v6488
    %v6502 = vadd.f32 %v6478, %v6492
    %v6503 = vadd.f32 %v6479, %v6496
    %v6504 = vadd.f32 %v6480, %v6500
    %v6505 = vmax.f32 %v6501, 0.0
    %v6506 = vmax.f32 %v6502, 0.0
    %v6507 = vmax.f32 %v6503, 0.0
    %v6508 = vmax.f32 %v6504, 0.0
    %v6509 = vpack.c.bf16 %v6505, %v6505
    %v6510 = vpack.c.bf16 %v6506, %v6506
    %v6511 = vpack.c.bf16 %v6507, %v6507
    %v6512 = vpack.c.bf16 %v6508, %v6508
    %v6513 = vunpack.c.l.bf16 %v2550
    %v6514 = vunpack.c.h.bf16 %v2550
    %v6515 = vlaneseq
    %v6516 = vshrl.u32 %v6515, 7
    %v6517 = vsub.s32 0, %v6516
    %v6518 = vrot.slane %v6513, %v6517
    %v6519 = vlaneseq
    %v6520 = vshrl.u32 %v6519, 7
    %v6521 = vsub.s32 0, %v6520
    %v6522 = vrot.slane %v6514, %v6521
    %v6587 = vunpack.c.l.b16 %v2486
    %v6588 = vunpack.c.h.b16 %v2486
    %v6589 = vunpack.c.l.b16 %v2487
    %v6590 = vunpack.c.h.b16 %v2487
    %v6591 = vunpack.c.l.b16 %v2488
    %v6592 = vunpack.c.h.b16 %v2488
    %v6593 = vunpack.c.l.b16 %v2489
    %v6594 = vunpack.c.h.b16 %v2489
    %v6595 = vunpack.c.l.b16 %v2490
    %v6596 = vunpack.c.h.b16 %v2490
    %v6597 = vunpack.c.l.b16 %v2491
    %v6598 = vunpack.c.h.b16 %v2491
    %v6599 = vunpack.c.l.b16 %v2492
    %v6600 = vunpack.c.h.b16 %v2492
    %v6601 = vunpack.c.l.b16 %v2493
    %v6602 = vunpack.c.h.b16 %v2493
    %v6603 = vunpack.c.l.b16 %v2494
    %v6604 = vunpack.c.h.b16 %v2494
    %v6605 = vunpack.c.l.b16 %v2495
    %v6606 = vunpack.c.h.b16 %v2495
    %v6607 = vunpack.c.l.b16 %v2496
    %v6608 = vunpack.c.h.b16 %v2496
    %v6609 = vunpack.c.l.b16 %v2497
    %v6610 = vunpack.c.h.b16 %v2497
    %v6611 = vunpack.c.l.b16 %v2498
    %v6612 = vunpack.c.h.b16 %v2498
    %v6613 = vunpack.c.l.b16 %v2499
    %v6614 = vunpack.c.h.b16 %v2499
    %v6615 = vunpack.c.l.b16 %v2500
    %v6616 = vunpack.c.h.b16 %v2500
    %v6617 = vunpack.c.l.b16 %v2501
    %v6618 = vunpack.c.h.b16 %v2501
    %v6619 = vunpack.c.l.b16 %v2502
    %v6620 = vunpack.c.h.b16 %v2502
    %v6621 = vunpack.c.l.b16 %v2503
    %v6622 = vunpack.c.h.b16 %v2503
    %v6623 = vunpack.c.l.b16 %v2504
    %v6624 = vunpack.c.h.b16 %v2504
    %v6625 = vunpack.c.l.b16 %v2505
    %v6626 = vunpack.c.h.b16 %v2505
    %v6627 = vunpack.c.l.b16 %v2506
    %v6628 = vunpack.c.h.b16 %v2506
    %v6629 = vunpack.c.l.b16 %v2507
    %v6630 = vunpack.c.h.b16 %v2507
    %v6631 = vunpack.c.l.b16 %v2508
    %v6632 = vunpack.c.h.b16 %v2508
    %v6633 = vunpack.c.l.b16 %v2509
    %v6634 = vunpack.c.h.b16 %v2509
    %v6635 = vunpack.c.l.b16 %v2510
    %v6636 = vunpack.c.h.b16 %v2510
    %v6637 = vunpack.c.l.b16 %v2511
    %v6638 = vunpack.c.h.b16 %v2511
    %v6639 = vunpack.c.l.b16 %v2512
    %v6640 = vunpack.c.h.b16 %v2512
    %v6641 = vunpack.c.l.b16 %v2513
    %v6642 = vunpack.c.h.b16 %v2513
    %v6643 = vunpack.c.l.b16 %v2514
    %v6644 = vunpack.c.h.b16 %v2514
    %v6645 = vunpack.c.l.b16 %v2515
    %v6646 = vunpack.c.h.b16 %v2515
    %v6647 = vunpack.c.l.b16 %v2516
    %v6648 = vunpack.c.h.b16 %v2516
    %v6649 = vunpack.c.l.b16 %v2517
    %v6650 = vunpack.c.h.b16 %v2517
    %v6651 = vunpack.c.l.b16 %v2518
    %v6652 = vunpack.c.h.b16 %v2518
    %v6653 = vunpack.c.l.b16 %v2519
    %v6654 = vunpack.c.h.b16 %v2519
    %v6655 = vunpack.c.l.b16 %v2520
    %v6656 = vunpack.c.h.b16 %v2520
    %v6657 = vunpack.c.l.b16 %v2521
    %v6658 = vunpack.c.h.b16 %v2521
    %v6659 = vunpack.c.l.b16 %v2522
    %v6660 = vunpack.c.h.b16 %v2522
    %v6661 = vunpack.c.l.b16 %v2523
    %v6662 = vunpack.c.h.b16 %v2523
    %v6663 = vunpack.c.l.b16 %v2524
    %v6664 = vunpack.c.h.b16 %v2524
    %v6665 = vunpack.c.l.b16 %v2525
    %v6666 = vunpack.c.h.b16 %v2525
    %v6667 = vunpack.c.l.b16 %v2526
    %v6668 = vunpack.c.h.b16 %v2526
    %v6669 = vunpack.c.l.b16 %v2527
    %v6670 = vunpack.c.h.b16 %v2527
    %v6671 = vunpack.c.l.b16 %v2528
    %v6672 = vunpack.c.h.b16 %v2528
    %v6673 = vunpack.c.l.b16 %v2529
    %v6674 = vunpack.c.h.b16 %v2529
    %v6675 = vunpack.c.l.b16 %v2530
    %v6676 = vunpack.c.h.b16 %v2530
    %v6677 = vunpack.c.l.b16 %v2531
    %v6678 = vunpack.c.h.b16 %v2531
    %v6679 = vunpack.c.l.b16 %v2532
    %v6680 = vunpack.c.h.b16 %v2532
    %v6681 = vunpack.c.l.b16 %v2533
    %v6682 = vunpack.c.h.b16 %v2533
    %v6683 = vunpack.c.l.b16 %v2534
    %v6684 = vunpack.c.h.b16 %v2534
    %v6685 = vunpack.c.l.b16 %v2535
    %v6686 = vunpack.c.h.b16 %v2535
    %v6687 = vunpack.c.l.b16 %v2536
    %v6688 = vunpack.c.h.b16 %v2536
    %v6689 = vunpack.c.l.b16 %v2537
    %v6690 = vunpack.c.h.b16 %v2537
    %v6691 = vunpack.c.l.b16 %v2538
    %v6692 = vunpack.c.h.b16 %v2538
    %v6693 = vunpack.c.l.b16 %v2539
    %v6694 = vunpack.c.h.b16 %v2539
    %v6695 = vunpack.c.l.b16 %v2540
    %v6696 = vunpack.c.h.b16 %v2540
    %v6697 = vunpack.c.l.b16 %v2541
    %v6698 = vunpack.c.h.b16 %v2541
    %v6699 = vunpack.c.l.b16 %v2542
    %v6700 = vunpack.c.h.b16 %v2542
    %v6701 = vunpack.c.l.b16 %v2543
    %v6702 = vunpack.c.h.b16 %v2543
    %v6703 = vunpack.c.l.b16 %v2544
    %v6704 = vunpack.c.h.b16 %v2544
    %v6705 = vunpack.c.l.b16 %v2545
    %v6706 = vunpack.c.h.b16 %v2545
    %v6707 = vunpack.c.l.b16 %v2546
    %v6708 = vunpack.c.h.b16 %v2546
    %v6709 = vunpack.c.l.b16 %v2547
    %v6710 = vunpack.c.h.b16 %v2547
    %v6711 = vunpack.c.l.b16 %v2548
    %v6712 = vunpack.c.h.b16 %v2548
    %v6713 = vunpack.c.l.b16 %v2549
    %v6714 = vunpack.c.h.b16 %v2549
    %v6715 = vpack.c.b16 %v6589, %v6587
    %v6716 = vpack.c.b16 %v6590, %v6588
    %v6717 = vpack.c.b16 %v6593, %v6591
    %v6718 = vpack.c.b16 %v6594, %v6592
    %v6719 = vpack.c.b16 %v6597, %v6595
    %v6720 = vpack.c.b16 %v6598, %v6596
    %v6721 = vpack.c.b16 %v6601, %v6599
    %v6722 = vpack.c.b16 %v6602, %v6600
    %v6723 = vpack.c.b16 %v6605, %v6603
    %v6724 = vpack.c.b16 %v6606, %v6604
    %v6725 = vpack.c.b16 %v6609, %v6607
    %v6726 = vpack.c.b16 %v6610, %v6608
    %v6727 = vpack.c.b16 %v6613, %v6611
    %v6728 = vpack.c.b16 %v6614, %v6612
    %v6729 = vpack.c.b16 %v6617, %v6615
    %v6730 = vpack.c.b16 %v6618, %v6616
    %v6731 = vpack.c.b16 %v6621, %v6619
    %v6732 = vpack.c.b16 %v6622, %v6620
    %v6733 = vpack.c.b16 %v6625, %v6623
    %v6734 = vpack.c.b16 %v6626, %v6624
    %v6735 = vpack.c.b16 %v6629, %v6627
    %v6736 = vpack.c.b16 %v6630, %v6628
    %v6737 = vpack.c.b16 %v6633, %v6631
    %v6738 = vpack.c.b16 %v6634, %v6632
    %v6739 = vpack.c.b16 %v6637, %v6635
    %v6740 = vpack.c.b16 %v6638, %v6636
    %v6741 = vpack.c.b16 %v6641, %v6639
    %v6742 = vpack.c.b16 %v6642, %v6640
    %v6743 = vpack.c.b16 %v6645, %v6643
    %v6744 = vpack.c.b16 %v6646, %v6644
    %v6745 = vpack.c.b16 %v6649, %v6647
    %v6746 = vpack.c.b16 %v6650, %v6648
    %v6747 = vpack.c.b16 %v6653, %v6651
    %v6748 = vpack.c.b16 %v6654, %v6652
    %v6749 = vpack.c.b16 %v6657, %v6655
    %v6750 = vpack.c.b16 %v6658, %v6656
    %v6751 = vpack.c.b16 %v6661, %v6659
    %v6752 = vpack.c.b16 %v6662, %v6660
    %v6753 = vpack.c.b16 %v6665, %v6663
    %v6754 = vpack.c.b16 %v6666, %v6664
    %v6755 = vpack.c.b16 %v6669, %v6667
    %v6756 = vpack.c.b16 %v6670, %v6668
    %v6757 = vpack.c.b16 %v6673, %v6671
    %v6758 = vpack.c.b16 %v6674, %v6672
    %v6759 = vpack.c.b16 %v6677, %v6675
    %v6760 = vpack.c.b16 %v6678, %v6676
    %v6761 = vpack.c.b16 %v6681, %v6679
    %v6762 = vpack.c.b16 %v6682, %v6680
    %v6763 = vpack.c.b16 %v6685, %v6683
    %v6764 = vpack.c.b16 %v6686, %v6684
    %v6765 = vpack.c.b16 %v6689, %v6687
    %v6766 = vpack.c.b16 %v6690, %v6688
    %v6767 = vpack.c.b16 %v6693, %v6691
    %v6768 = vpack.c.b16 %v6694, %v6692
    %v6769 = vpack.c.b16 %v6697, %v6695
    %v6770 = vpack.c.b16 %v6698, %v6696
    %v6771 = vpack.c.b16 %v6701, %v6699
    %v6772 = vpack.c.b16 %v6702, %v6700
    %v6773 = vpack.c.b16 %v6705, %v6703
    %v6774 = vpack.c.b16 %v6706, %v6704
    %v6775 = vpack.c.b16 %v6709, %v6707
    %v6776 = vpack.c.b16 %v6710, %v6708
    %v6777 = vpack.c.b16 %v6713, %v6711
    %v6778 = vpack.c.b16 %v6714, %v6712
    %6843 = vmatprep.subr.bf16.mxu0 %v6730
    %6844 = vmatpush1.bf16.msra.mxu0 %v6729
    %6845 = vmatprep.subr.bf16.mxu0 %v6728
    %6846 = vmatpush1.bf16.msra.mxu0 %v6727
    %6847 = vmatprep.subr.bf16.mxu0 %v6726
    %6848 = vmatpush1.bf16.msra.mxu0 %v6725
    %6849 = vmatprep.subr.bf16.mxu0 %v6724
    %6850 = vmatpush1.bf16.msra.mxu0 %v6723
    %6851 = vmatprep.subr.bf16.mxu0 %v6722
    %6852 = vmatpush1.bf16.msra.mxu0 %v6721
    %6853 = vmatprep.subr.bf16.mxu0 %v6720
    %6854 = vmatpush1.bf16.msra.mxu0 %v6719
    %6855 = vmatprep.subr.bf16.mxu0 %v6718
    %6856 = vmatpush1.bf16.msra.mxu0 %v6717
    %6857 = vmatprep.subr.bf16.mxu0 %v6716
    %6858 = vmatpush1.bf16.msra.mxu0 %v6715
    %6859 = vmatprep.subr.bf16.mxu0 %v6746
    %6860 = vmatpush2.bf16.msra.mxu0 %v6745
    %6861 = vmatprep.subr.bf16.mxu0 %v6744
    %6862 = vmatpush2.bf16.msra.mxu0 %v6743
    %6863 = vmatprep.subr.bf16.mxu0 %v6742
    %6864 = vmatpush2.bf16.msra.mxu0 %v6741
    %6865 = vmatprep.subr.bf16.mxu0 %v6740
    %6866 = vmatpush2.bf16.msra.mxu0 %v6739
    %6867 = vmatprep.subr.bf16.mxu0 %v6738
    %6868 = vmatpush2.bf16.msra.mxu0 %v6737
    %6869 = vmatprep.subr.bf16.mxu0 %v6736
    %6870 = vmatpush2.bf16.msra.mxu0 %v6735
    %6871 = vmatprep.subr.bf16.mxu0 %v6734
    %6872 = vmatpush2.bf16.msra.mxu0 %v6733
    %6873 = vmatprep.subr.bf16.mxu0 %v6732
    %6874 = vmatpush2.bf16.msra.mxu0 %v6731
    %6875 = vmatprep.mubr.bf16.mxu0 %v6510
    %6876 = vmatmul.mubr.bf16.gmra.mxu0 %v6509
    %v6877 = vpop.f32.mrf.mxu0
    %v6878 = vadd.f32 %v6518, %v6877
    %v6879 = vpop.f32.mrf.mxu0
    %v6880 = vadd.f32 %v6522, %v6879
    %v6881 = vpop.f32.mrf.mxu0
    %v6882 = vpop.f32.mrf.mxu0
    %6883 = vdwg.mxu0
    %6884 = vmatprep.subr.bf16.mxu0 %v6762
    %6885 = vmatpush1.bf16.msra.mxu0 %v6761
    %6886 = vmatprep.subr.bf16.mxu0 %v6760
    %6887 = vmatpush1.bf16.msra.mxu0 %v6759
    %6888 = vmatprep.subr.bf16.mxu0 %v6758
    %6889 = vmatpush1.bf16.msra.mxu0 %v6757
    %6890 = vmatprep.subr.bf16.mxu0 %v6756
    %6891 = vmatpush1.bf16.msra.mxu0 %v6755
    %6892 = vmatprep.subr.bf16.mxu0 %v6754
    %6893 = vmatpush1.bf16.msra.mxu0 %v6753
    %6894 = vmatprep.subr.bf16.mxu0 %v6752
    %6895 = vmatpush1.bf16.msra.mxu0 %v6751
    %6896 = vmatprep.subr.bf16.mxu0 %v6750
    %6897 = vmatpush1.bf16.msra.mxu0 %v6749
    %6898 = vmatprep.subr.bf16.mxu0 %v6748
    %6899 = vmatpush1.bf16.msra.mxu0 %v6747
    %6900 = vmatprep.subr.bf16.mxu0 %v6778
    %6901 = vmatpush2.bf16.msra.mxu0 %v6777
    %6902 = vmatprep.subr.bf16.mxu0 %v6776
    %6903 = vmatpush2.bf16.msra.mxu0 %v6775
    %6904 = vmatprep.subr.bf16.mxu0 %v6774
    %6905 = vmatpush2.bf16.msra.mxu0 %v6773
    %6906 = vmatprep.subr.bf16.mxu0 %v6772
    %6907 = vmatpush2.bf16.msra.mxu0 %v6771
    %6908 = vmatprep.subr.bf16.mxu0 %v6770
    %6909 = vmatpush2.bf16.msra.mxu0 %v6769
    %6910 = vmatprep.subr.bf16.mxu0 %v6768
    %6911 = vmatpush2.bf16.msra.mxu0 %v6767
    %6912 = vmatprep.subr.bf16.mxu0 %v6766
    %6913 = vmatpush2.bf16.msra.mxu0 %v6765
    %6914 = vmatprep.subr.bf16.mxu0 %v6764
    %6915 = vmatpush2.bf16.msra.mxu0 %v6763
    %6916 = vmatprep.mubr.bf16.mxu0 %v6512
    %6917 = vmatmul.mubr.bf16.gmra.mxu0 %v6511
    %v6918 = vpop.f32.mrf.mxu0
    %v6919 = vadd.f32 %v6878, %v6918
    %v6920 = vpop.f32.mrf.mxu0
    %v6921 = vadd.f32 %v6880, %v6920
    %v6922 = vpop.f32.mrf.mxu0
    %v6923 = vpop.f32.mrf.mxu0
    %6924 = vdwg.mxu0
    %v6925 = vmax.f32 %v6919, 0.0
    %v6926 = vmax.f32 %v6921, 0.0
    %v6927 = vpack.c.bf16 %v6925, %v6925
    %v6928 = vpack.c.bf16 %v6926, %v6926
    %v6929 = vunpack.c.l.bf16 %v2583
    %v6930 = vlaneseq
    %v6931 = vshrl.u32 %v6930, 7
    %v6932 = vsub.s32 0, %v6931
    %v6933 = vrot.slane %v6929, %v6932
    %v6966 = vunpack.c.l.b16 %v2551
    %v6967 = vunpack.c.l.b16 %v2552
    %v6968 = vunpack.c.l.b16 %v2553
    %v6969 = vunpack.c.l.b16 %v2554
    %v6970 = vunpack.c.l.b16 %v2555
    %v6971 = vunpack.c.l.b16 %v2556
    %v6972 = vunpack.c.l.b16 %v2557
    %v6973 = vunpack.c.l.b16 %v2558
    %v6974 = vunpack.c.l.b16 %v2559
    %v6975 = vunpack.c.l.b16 %v2560
    %v6976 = vunpack.c.l.b16 %v2561
    %v6977 = vunpack.c.l.b16 %v2562
    %v6978 = vunpack.c.l.b16 %v2563
    %v6979 = vunpack.c.l.b16 %v2564
    %v6980 = vunpack.c.l.b16 %v2565
    %v6981 = vunpack.c.l.b16 %v2566
    %v6982 = vunpack.c.l.b16 %v2567
    %v6983 = vunpack.c.l.b16 %v2568
    %v6984 = vunpack.c.l.b16 %v2569
    %v6985 = vunpack.c.l.b16 %v2570
    %v6986 = vunpack.c.l.b16 %v2571
    %v6987 = vunpack.c.l.b16 %v2572
    %v6988 = vunpack.c.l.b16 %v2573
    %v6989 = vunpack.c.l.b16 %v2574
    %v6990 = vunpack.c.l.b16 %v2575
    %v6991 = vunpack.c.l.b16 %v2576
    %v6992 = vunpack.c.l.b16 %v2577
    %v6993 = vunpack.c.l.b16 %v2578
    %v6994 = vunpack.c.l.b16 %v2579
    %v6995 = vunpack.c.l.b16 %v2580
    %v6996 = vunpack.c.l.b16 %v2581
    %v6997 = vunpack.c.l.b16 %v2582
    %v6998 = vpack.c.b16 %v6967, %v6966
    %v6999 = vpack.c.b16 %v6969, %v6968
    %v7000 = vpack.c.b16 %v6971, %v6970
    %v7001 = vpack.c.b16 %v6973, %v6972
    %v7002 = vpack.c.b16 %v6975, %v6974
    %v7003 = vpack.c.b16 %v6977, %v6976
    %v7004 = vpack.c.b16 %v6979, %v6978
    %v7005 = vpack.c.b16 %v6981, %v6980
    %v7006 = vpack.c.b16 %v6983, %v6982
    %v7007 = vpack.c.b16 %v6985, %v6984
    %v7008 = vpack.c.b16 %v6987, %v6986
    %v7009 = vpack.c.b16 %v6989, %v6988
    %v7010 = vpack.c.b16 %v6991, %v6990
    %v7011 = vpack.c.b16 %v6993, %v6992
    %v7012 = vpack.c.b16 %v6995, %v6994
    %v7013 = vpack.c.b16 %v6997, %v6996
    %7030 = vmatprep.subr.bf16.mxu0 0
    %7031 = vmatpush1.bf16.msra.mxu0 %v7005
    %7032 = vmatprep.subr.bf16.mxu0 0
    %7033 = vmatpush1.bf16.msra.mxu0 %v7004
    %7034 = vmatprep.subr.bf16.mxu0 0
    %7035 = vmatpush1.bf16.msra.mxu0 %v7003
    %7036 = vmatprep.subr.bf16.mxu0 0
    %7037 = vmatpush1.bf16.msra.mxu0 %v7002
    %7038 = vmatprep.subr.bf16.mxu0 0
    %7039 = vmatpush1.bf16.msra.mxu0 %v7001
    %7040 = vmatprep.subr.bf16.mxu0 0
    %7041 = vmatpush1.bf16.msra.mxu0 %v7000
    %7042 = vmatprep.subr.bf16.mxu0 0
    %7043 = vmatpush1.bf16.msra.mxu0 %v6999
    %7044 = vmatprep.subr.bf16.mxu0 0
    %7045 = vmatpush1.bf16.msra.mxu0 %v6998
    %7046 = vmatprep.subr.bf16.mxu0 0
    %7047 = vmatpush2.bf16.msra.mxu0 %v7013
    %7048 = vmatprep.subr.bf16.mxu0 0
    %7049 = vmatpush2.bf16.msra.mxu0 %v7012
    %7050 = vmatprep.subr.bf16.mxu0 0
    %7051 = vmatpush2.bf16.msra.mxu0 %v7011
    %7052 = vmatprep.subr.bf16.mxu0 0
    %7053 = vmatpush2.bf16.msra.mxu0 %v7010
    %7054 = vmatprep.subr.bf16.mxu0 0
    %7055 = vmatpush2.bf16.msra.mxu0 %v7009
    %7056 = vmatprep.subr.bf16.mxu0 0
    %7057 = vmatpush2.bf16.msra.mxu0 %v7008
    %7058 = vmatprep.subr.bf16.mxu0 0
    %7059 = vmatpush2.bf16.msra.mxu0 %v7007
    %7060 = vmatprep.subr.bf16.mxu0 0
    %7061 = vmatpush2.bf16.msra.mxu0 %v7006
    %7062 = vmatprep.mubr.bf16.mxu0 %v6928
    %7063 = vmatmul.mubr.bf16.gmra.mxu0 %v6927
    %v7064 = vpop.f32.mrf.mxu0
    %v7065 = vadd.f32 %v6933, %v7064
    %v7066 = vpop.f32.mrf.mxu0
    %v7067 = vpop.f32.mrf.mxu0
    %v7068 = vpop.f32.mrf.mxu0
    %7069 = vdwg.mxu0
    %v7070 = vmax.f32 %v7065, 0.0
    %v7071 = vpack.c.bf16 %v7070, %v7070
    %v7072 = vunpack.c.l.bf16 %v2592
    %v7073 = vlaneseq
    %v7074 = vshrl.u32 %v7073, 7
    %v7075 = vsub.s32 0, %v7074
    %v7076 = vrot.slane %v7072, %v7075
    %v7085 = vunpack.c.l.b16 %v2584
    %v7086 = vunpack.c.l.b16 %v2585
    %v7087 = vunpack.c.l.b16 %v2586
    %v7088 = vunpack.c.l.b16 %v2587
    %v7089 = vunpack.c.l.b16 %v2588
    %v7090 = vunpack.c.l.b16 %v2589
    %v7091 = vunpack.c.l.b16 %v2590
    %v7092 = vunpack.c.l.b16 %v2591
    %v7093 = vpack.c.b16 %v7086, %v7085
    %v7094 = vpack.c.b16 %v7088, %v7087
    %v7095 = vpack.c.b16 %v7090, %v7089
    %v7096 = vpack.c.b16 %v7092, %v7091
    %v7102 = vsel %vm3361, %v7071, 0
    %7104 = vmatprep.subr.bf16.mxu0 0
    %7105 = vmatpush1.bf16.msra.mxu0 0
    %7106 = vmatprep.subr.bf16.mxu0 0
    %7107 = vmatpush1.bf16.msra.mxu0 0
    %7108 = vmatprep.subr.bf16.mxu0 0
    %7109 = vmatpush1.bf16.msra.mxu0 0
    %7110 = vmatprep.subr.bf16.mxu0 0
    %7111 = vmatpush1.bf16.msra.mxu0 0
    %7112 = vmatprep.subr.bf16.mxu0 0
    %7113 = vmatpush1.bf16.msra.mxu0 %v7096
    %7114 = vmatprep.subr.bf16.mxu0 0
    %7115 = vmatpush1.bf16.msra.mxu0 %v7095
    %7116 = vmatprep.subr.bf16.mxu0 0
    %7117 = vmatpush1.bf16.msra.mxu0 %v7094
    %7118 = vmatprep.subr.bf16.mxu0 0
    %7119 = vmatpush1.bf16.msra.mxu0 %v7093
    %7120 = vmatprep.subr.bf16.mxu0 0
    %7121 = vmatpush2.bf16.msra.mxu0 0
    %7122 = vmatprep.subr.bf16.mxu0 0
    %7123 = vmatpush2.bf16.msra.mxu0 0
    %7124 = vmatprep.subr.bf16.mxu0 0
    %7125 = vmatpush2.bf16.msra.mxu0 0
    %7126 = vmatprep.subr.bf16.mxu0 0
    %7127 = vmatpush2.bf16.msra.mxu0 0
    %7128 = vmatprep.subr.bf16.mxu0 0
    %7129 = vmatpush2.bf16.msra.mxu0 0
    %7130 = vmatprep.subr.bf16.mxu0 0
    %7131 = vmatpush2.bf16.msra.mxu0 0
    %7132 = vmatprep.subr.bf16.mxu0 0
    %7133 = vmatpush2.bf16.msra.mxu0 0
    %7134 = vmatprep.subr.bf16.mxu0 0
    %7135 = vmatpush2.bf16.msra.mxu0 0
    %7136 = vmatprep.mubr.bf16.mxu0 0
    %7137 = vmatmul.mubr.bf16.gmra.mxu0 %v7102
    %v7138 = vpop.f32.mrf.mxu0
    %v7139 = vadd.f32 %v7076, %v7138
    %v7140 = vpop.f32.mrf.mxu0
    %v7141 = vpop.f32.mrf.mxu0
    %v7142 = vpop.f32.mrf.mxu0
    %7143 = vdwg.mxu0
    %7144 = vst [vmem:[#allocation8] sm:$0x3] 0.0
    %vm7145 = vcmask 238592
    %7146 = vst.msk [vmem:[#allocation8] sm:$0x3] %vm7145, %v7139
    %7147 = vrot.lane.b32.xlu0 %v2224, 30
    %v7148 = vpop.permute.xlu0 %7147
    %vm7150 = vcmask 263408
    %7151 = vst.msk [vmem:[#allocation8] sm:$0x3] %vm7150, %v7148
    // Predicated region
    $region30: #{tpu_custom_call.1} parent=1 // pred_check
      _
    $region31: #{tpu_custom_call.1} parent=1 // pred_check_branch
      %7153 = sbr.rel (0) target = $region33
    $region32: #{tpu_custom_call.1} parent=1 // pred_region
      %s7155 = ssub.s32 32, 32
      %7156 = vsyncadd [#allocation4], %s7155
      %s7158 = sshll.u32 [#allocation8], 4
      %s7159 = int_to_ptr.vmem [resolvable:$true] %s7158
      %7161 = dma.vmem_to_hbm [thread:$0]  %s7159, 32, %s4, [#allocation4]
    $region33: #{tpu_custom_call.1} parent=1 // pred_fallthru
      _
    // Predicated region
    $region34: #{tpu_custom_call.1} parent=1 // pred_check
      _
    $region35: #{tpu_custom_call.1} parent=1 // pred_check_branch
      %7163 = sbr.rel (0) target = $region37
    $region36: #{tpu_custom_call.1} parent=1 // pred_region
      %7164 = dma.done [#allocation4], 32
    $region37: #{tpu_custom_call.1} parent=1 // pred_fallthru
      _
    %7165 = vsyncpa [#allocation3], 1
    %7166 = vsyncpa [#allocation6], 1
    %7167 = vsyncpa [#allocation4], 1

</llo_original>
